<compile_context>
chip_gen: v7x
topology: tpu7x:2x2x1
jax: 0.10.0
libtpu: 0.0.40
codegen_flags: <defaults>
</compile_context>

<pallas_src>
import jax
import jax.numpy as jnp
import numpy as np
from jax.experimental import pallas as pl
from jax.experimental.pallas import tpu as pltpu


@jax.jit
def lenet5_forward(params, x):
    w1, b1 = params["w1"], params["b1"]
    w2, b2 = params["w2"], params["b2"]
    wf1, bf1 = params["wf1"], params["bf1"]
    wf2, bf2 = params["wf2"], params["bf2"]

    N, CIN, H, W = x.shape
    C1, _, K, _ = w1.shape
    C2 = w2.shape[0]
    F = wf1.shape[1]
    NC = wf2.shape[1]
    KK = K * K

    # Flat lane layout on the input grid: lane(i, j, n) = i*SR0 + j*SC0 + n
    SC0, SR0 = N, W * N                             # (2, 56)
    H1 = H - K + 1                                  # conv1 spatial (24)
    LEN_A1 = H * W * N - (K - 1) * (SR0 + SC0)      # conv1 act lanes (1336)
    LEN_H1 = LEN_A1 - (SR0 + SC0)                   # pooled1 lanes   (1278)
    SC1, SR1 = 2 * SC0, 2 * SR0                     # pool1-grid strides (4,112)
    H2 = H1 // 2 - K + 1                            # conv2 spatial (8)
    LEN_A2 = LEN_H1 - (K - 1) * (SR1 + SC1)         # conv2 act lanes (814)
    LEN_H2 = LEN_A2 - (SR1 + SC1)                   # pooled2 lanes   (698)
    SC2, SR2 = 2 * SC1, 2 * SR1                     # pool2-grid strides (8,224)
    H3 = H2 // 2                                    # pooled2 spatial (4)
    S2 = H3 * H3                                    # 16 spatial positions
    assert CIN == 1 and wf1.shape[0] == C2 * S2
    assert LEN_H2 >= (H3 - 1) * SR2 + (H3 - 1) * SC2 + N

    # ---- wrapper-side layout prep (tiny: weights + one input relayout) ----
    x_flat = x.transpose(2, 3, 0, 1).reshape(1, H * W * N).astype(jnp.float32)
    x_rep = jnp.broadcast_to(x_flat, (C1, H * W * N))        # replicate rows
    w1c = w1.reshape(C1, KK).astype(jnp.float32)             # [co, di*K+dj]
    b1c = b1.reshape(C1, 1).astype(jnp.float32)
    w2t = w2.transpose(2, 3, 0, 1).reshape(KK, C2, C1).astype(jnp.bfloat16)
    b2c = b2.reshape(C2, 1).astype(jnp.float32)
    wf1g = (wf1.reshape(C2, S2, F).transpose(2, 1, 0)
            .reshape(F, S2 * C2).astype(jnp.bfloat16))       # cols = s*C2 + c
    bf1c = bf1.reshape(F, 1).astype(jnp.float32)
    wf2t = wf2.T.astype(jnp.float32)                          # (NC, F)
    bf2c = bf2.reshape(NC, 1).astype(jnp.float32)

    def kernel(x_ref, w1_ref, b1_ref, w2_ref, b2_ref, wf1_ref, bf1_ref,
               wf2_ref, bf2_ref, out_ref, fcp_ref):
        # conv1 + bias + ReLU on the VPU (Cin == 1).  x is replicated across
        # the C1 sublanes, loaded once and reused by all 25 shifted taps.
        xv = x_ref[...]
        w1v = w1_ref[...]
        acc1 = jnp.zeros((C1, LEN_A1), jnp.float32)
        for dd in range(KK):
            d1 = (dd // K) * SR0 + (dd % K) * SC0
            acc1 = acc1 + w1v[:, dd:dd + 1] * xv[:, d1:d1 + LEN_A1]
        a1 = jnp.maximum(acc1 + b1_ref[...], 0.0)

        # maxpool1 fused on the live value (no act1/hv1 VMEM round trip).
        hv1 = jnp.maximum(
            jnp.maximum(a1[:, 0:LEN_H1], a1[:, SC0:SC0 + LEN_H1]),
            jnp.maximum(a1[:, SR0:SR0 + LEN_H1],
                        a1[:, SR0 + SC0:SR0 + SC0 + LEN_H1]))

        # conv2: 25 accumulating (C2,C1)x(C1,LEN_A2) MXU GEMMs on bf16-cast
        # shifted slices of hv1 -- no im2col buffer, no patch store/reload.
        acc2 = jnp.zeros((C2, LEN_A2), jnp.float32)
        for dd in range(KK):
            d2 = (dd // K) * SR1 + (dd % K) * SC1
            acc2 = acc2 + jnp.dot(
                w2_ref[dd], hv1[:, d2:d2 + LEN_A2].astype(jnp.bfloat16),
                preferred_element_type=jnp.float32)
        a2 = jnp.maximum(acc2 + b2_ref[...], 0.0)

        # maxpool2 fused on the live value (no act2 VMEM round trip).
        hv2 = jnp.maximum(
            jnp.maximum(a2[:, 0:LEN_H2], a2[:, SC1:SC1 + LEN_H2]),
            jnp.maximum(a2[:, SR1:SR1 + LEN_H2],
                        a2[:, SR1 + SC1:SR1 + SC1 + LEN_H2]))

        # fc1: gather the 16 pooled positions into a tiny bf16 scratch
        # (16-sublane-aligned stores), then ONE MXU GEMM (+bias, ReLU).
        for s in range(S2):
            ls = (s // H3) * SR2 + (s % H3) * SC2
            fcp_ref[s * C2:(s + 1) * C2, :] = (
                hv2[:, ls:ls + N].astype(jnp.bfloat16))
        f1 = jnp.dot(wf1_ref[...], fcp_ref[...],
                     preferred_element_type=jnp.float32)      # (F, N)
        f1 = jnp.maximum(f1 + bf1_ref[...], 0.0)

        # fc2: ONE f32 MXU dot, single (NC, N) store; wrapper transposes.
        out_ref[...] = jnp.dot(wf2_ref[...], f1,
                               preferred_element_type=jnp.float32) + bf2_ref[...]

    flops = 2 * (KK * C1 * LEN_A1 + C2 * C1 * KK * LEN_A2
                 + F * S2 * C2 * N + NC * F * N)
    bytes_accessed = (4 * (x_rep.size + w1c.size + wf2t.size
                           + C1 + C2 + F + NC + NC * N)
                      + 2 * (w2t.size + wf1g.size))

    out_t = pl.pallas_call(
        kernel,
        out_shape=jax.ShapeDtypeStruct((NC, N), jnp.float32),
        grid=(1,),
        in_specs=[
            pl.BlockSpec((C1, H * W * N), lambda i: (0, 0)),
            pl.BlockSpec((C1, KK), lambda i: (0, 0)),
            pl.BlockSpec((C1, 1), lambda i: (0, 0)),
            pl.BlockSpec((KK, C2, C1), lambda i: (0, 0, 0)),
            pl.BlockSpec((C2, 1), lambda i: (0, 0)),
            pl.BlockSpec((F, S2 * C2), lambda i: (0, 0)),
            pl.BlockSpec((F, 1), lambda i: (0, 0)),
            pl.BlockSpec((NC, F), lambda i: (0, 0)),
            pl.BlockSpec((NC, 1), lambda i: (0, 0)),
        ],
        out_specs=pl.BlockSpec((NC, N), lambda i: (0, 0)),
        scratch_shapes=[
            pltpu.VMEM((S2 * C2, N), jnp.bfloat16),   # fc1 gathered operand
        ],
        compiler_params=pltpu.CompilerParams(
            dimension_semantics=("arbitrary",)),
        cost_estimate=pl.CostEstimate(
            flops=flops, transcendentals=0, bytes_accessed=bytes_accessed),
    )(x_rep, w1c, b1c, w2t, b2c, wf1g, bf1c, wf2t, bf2c)

    return out_t.T                                    # (N, NC)


def reference_forward(params, x):
    """Pure-XLA reference for numerical validation."""
    dn = ("NCHW", "OIHW", "NCHW")
    o = jax.lax.conv_general_dilated(x, params["w1"], (1, 1), "VALID",
                                     dimension_numbers=dn)
    o = jax.nn.relu(o + params["b1"][None, :, None, None])
    o = jax.lax.reduce_window(o, -jnp.inf, jax.lax.max,
                              (1, 1, 2, 2), (1, 1, 2, 2), "VALID")
    o = jax.lax.conv_general_dilated(o, params["w2"], (1, 1), "VALID",
                                     dimension_numbers=dn)
    o = jax.nn.relu(o + params["b2"][None, :, None, None])
    o = jax.lax.reduce_window(o, -jnp.inf, jax.lax.max,
                              (1, 1, 2, 2), (1, 1, 2, 2), "VALID")
    o = o.reshape(o.shape[0], -1)
    o = jax.nn.relu(o @ params["wf1"] + params["bf1"])
    return o @ params["wf2"] + params["bf2"]


def init_params(key, in_ch, conv_dims, fc_dims, num_classes, flat_fts, k=5):
    keys = jax.random.split(key, 8)

    def u(kk, shape, fan_in):
        bound = 1.0 / float(fan_in) ** 0.5
        return jax.random.uniform(kk, shape, jnp.float32, -bound, bound)

    return {
        "w1": u(keys[0], (conv_dims[0], in_ch, k, k), in_ch * k * k),
        "b1": u(keys[1], (conv_dims[0],), in_ch * k * k),
        "w2": u(keys[2], (conv_dims[1], conv_dims[0], k, k), conv_dims[0] * k * k),
        "b2": u(keys[3], (conv_dims[1],), conv_dims[0] * k * k),
        "wf1": u(keys[4], (flat_fts, fc_dims), flat_fts),
        "bf1": u(keys[5], (fc_dims,), flat_fts),
        "wf2": u(keys[6], (fc_dims, num_classes), fc_dims),
        "bf2": u(keys[7], (num_classes,), fc_dims),
    }


if __name__ == "__main__":
    # Small LeNet5-style config: input (1, 28, 28), conv_dims=(8, 16),
    # fc_dims=32, num_classes=10.
    # 28 -> conv5 -> 24 -> pool -> 12 -> conv5 -> 8 -> pool -> 4 ; flat=16*4*4
    batch, in_ch, H, W = 2, 1, 28, 28
    conv_dims, fc_dims, num_classes = (8, 16), 32, 10
    flat_fts = conv_dims[1] * 4 * 4

    key = jax.random.PRNGKey(0)
    kx, kp = jax.random.split(key)
    x = jax.random.normal(kx, (batch, in_ch, H, W), jnp.float32)
    params = init_params(kp, in_ch, conv_dims, fc_dims, num_classes, flat_fts)

    logits = lenet5_forward(params, x)
    jax.block_until_ready(logits)
    assert logits.shape == (batch, num_classes)

    ref = reference_forward(params, x)
    np.testing.assert_allclose(np.asarray(logits), np.asarray(ref),
                               rtol=5e-2, atol=5e-2)
    print("KERNEL_OK")
</pallas_src>

<mosaic_0001>
module attributes {stable_mosaic.version = 11 : i64} {
  func.func @kernel(%arg0: i32, %arg1: memref<8x1568xf32, #tpu.memory_space<vmem>>, %arg2: memref<8x25xf32, #tpu.memory_space<vmem>>, %arg3: memref<8x1xf32, #tpu.memory_space<vmem>>, %arg4: memref<25x16x8xbf16, #tpu.memory_space<vmem>>, %arg5: memref<16x1xf32, #tpu.memory_space<vmem>>, %arg6: memref<32x256xbf16, #tpu.memory_space<vmem>>, %arg7: memref<32x1xf32, #tpu.memory_space<vmem>>, %arg8: memref<10x32xf32, #tpu.memory_space<vmem>>, %arg9: memref<10x1xf32, #tpu.memory_space<vmem>>, %arg10: memref<10x2xf32, #tpu.memory_space<vmem>>, %arg11: memref<256x2xbf16, #tpu.memory_space<vmem>>) attributes {dimension_semantics = [#tpu.dimension_semantics<arbitrary>], iteration_bounds = array<i64: 1>, scalar_prefetch = 0 : i64, scratch_operands = 1 : i64, tpu.core_type = #tpu.core_type<tc>, window_params = [{pipeline_mode = #tpu.pipeline_mode<synchronous>, transform_indices = @transform_0, window_bounds = array<i64: 8, 1568>}, {pipeline_mode = #tpu.pipeline_mode<synchronous>, transform_indices = @transform_1, window_bounds = array<i64: 8, 25>}, {pipeline_mode = #tpu.pipeline_mode<synchronous>, transform_indices = @transform_2, window_bounds = array<i64: 8, 1>}, {pipeline_mode = #tpu.pipeline_mode<synchronous>, transform_indices = @transform_3, window_bounds = array<i64: 25, 16, 8>}, {pipeline_mode = #tpu.pipeline_mode<synchronous>, transform_indices = @transform_4, window_bounds = array<i64: 16, 1>}, {pipeline_mode = #tpu.pipeline_mode<synchronous>, transform_indices = @transform_5, window_bounds = array<i64: 32, 256>}, {pipeline_mode = #tpu.pipeline_mode<synchronous>, transform_indices = @transform_6, window_bounds = array<i64: 32, 1>}, {pipeline_mode = #tpu.pipeline_mode<synchronous>, transform_indices = @transform_7, window_bounds = array<i64: 10, 32>}, {pipeline_mode = #tpu.pipeline_mode<synchronous>, transform_indices = @transform_8, window_bounds = array<i64: 10, 1>}, {pipeline_mode = #tpu.pipeline_mode<synchronous>, transform_indices = @transform_9, window_bounds = array<i64: 10, 2>}]} {
    %c0 = arith.constant 0 : index
    %c0_0 = arith.constant 0 : index
    %0 = vector.load %arg1[%c0, %c0_0] : memref<8x1568xf32, #tpu.memory_space<vmem>>, vector<8x1568xf32>
    %c0_1 = arith.constant 0 : index
    %c0_2 = arith.constant 0 : index
    %1 = vector.load %arg2[%c0_1, %c0_2] : memref<8x25xf32, #tpu.memory_space<vmem>>, vector<8x25xf32>
    %cst = arith.constant 0.000000e+00 : f32
    %2 = vector.broadcast %cst : f32 to vector<8x1336xf32>
    %3 = vector.extract_strided_slice %1 {offsets = [0, 0], sizes = [8, 1], strides = [1, 1]} : vector<8x25xf32> to vector<8x1xf32>
    %4 = vector.extract_strided_slice %0 {offsets = [0, 0], sizes = [8, 1336], strides = [1, 1]} : vector<8x1568xf32> to vector<8x1336xf32>
    %5 = vector.broadcast %3 : vector<8x1xf32> to vector<8x1336xf32>
    %6 = arith.mulf %5, %4 : vector<8x1336xf32>
    %7 = arith.addf %2, %6 : vector<8x1336xf32>
    %8 = vector.extract_strided_slice %1 {offsets = [0, 1], sizes = [8, 1], strides = [1, 1]} : vector<8x25xf32> to vector<8x1xf32>
    %9 = vector.extract_strided_slice %0 {offsets = [0, 2], sizes = [8, 1336], strides = [1, 1]} : vector<8x1568xf32> to vector<8x1336xf32>
    %10 = vector.broadcast %8 : vector<8x1xf32> to vector<8x1336xf32>
    %11 = arith.mulf %10, %9 : vector<8x1336xf32>
    %12 = arith.addf %7, %11 : vector<8x1336xf32>
    %13 = vector.extract_strided_slice %1 {offsets = [0, 2], sizes = [8, 1], strides = [1, 1]} : vector<8x25xf32> to vector<8x1xf32>
    %14 = vector.extract_strided_slice %0 {offsets = [0, 4], sizes = [8, 1336], strides = [1, 1]} : vector<8x1568xf32> to vector<8x1336xf32>
    %15 = vector.broadcast %13 : vector<8x1xf32> to vector<8x1336xf32>
    %16 = arith.mulf %15, %14 : vector<8x1336xf32>
    %17 = arith.addf %12, %16 : vector<8x1336xf32>
    %18 = vector.extract_strided_slice %1 {offsets = [0, 3], sizes = [8, 1], strides = [1, 1]} : vector<8x25xf32> to vector<8x1xf32>
    %19 = vector.extract_strided_slice %0 {offsets = [0, 6], sizes = [8, 1336], strides = [1, 1]} : vector<8x1568xf32> to vector<8x1336xf32>
    %20 = vector.broadcast %18 : vector<8x1xf32> to vector<8x1336xf32>
    %21 = arith.mulf %20, %19 : vector<8x1336xf32>
    %22 = arith.addf %17, %21 : vector<8x1336xf32>
    %23 = vector.extract_strided_slice %1 {offsets = [0, 4], sizes = [8, 1], strides = [1, 1]} : vector<8x25xf32> to vector<8x1xf32>
    %24 = vector.extract_strided_slice %0 {offsets = [0, 8], sizes = [8, 1336], strides = [1, 1]} : vector<8x1568xf32> to vector<8x1336xf32>
    %25 = vector.broadcast %23 : vector<8x1xf32> to vector<8x1336xf32>
    %26 = arith.mulf %25, %24 : vector<8x1336xf32>
    %27 = arith.addf %22, %26 : vector<8x1336xf32>
    %28 = vector.extract_strided_slice %1 {offsets = [0, 5], sizes = [8, 1], strides = [1, 1]} : vector<8x25xf32> to vector<8x1xf32>
    %29 = vector.extract_strided_slice %0 {offsets = [0, 56], sizes = [8, 1336], strides = [1, 1]} : vector<8x1568xf32> to vector<8x1336xf32>
    %30 = vector.broadcast %28 : vector<8x1xf32> to vector<8x1336xf32>
    %31 = arith.mulf %30, %29 : vector<8x1336xf32>
    %32 = arith.addf %27, %31 : vector<8x1336xf32>
    %33 = vector.extract_strided_slice %1 {offsets = [0, 6], sizes = [8, 1], strides = [1, 1]} : vector<8x25xf32> to vector<8x1xf32>
    %34 = vector.extract_strided_slice %0 {offsets = [0, 58], sizes = [8, 1336], strides = [1, 1]} : vector<8x1568xf32> to vector<8x1336xf32>
    %35 = vector.broadcast %33 : vector<8x1xf32> to vector<8x1336xf32>
    %36 = arith.mulf %35, %34 : vector<8x1336xf32>
    %37 = arith.addf %32, %36 : vector<8x1336xf32>
    %38 = vector.extract_strided_slice %1 {offsets = [0, 7], sizes = [8, 1], strides = [1, 1]} : vector<8x25xf32> to vector<8x1xf32>
    %39 = vector.extract_strided_slice %0 {offsets = [0, 60], sizes = [8, 1336], strides = [1, 1]} : vector<8x1568xf32> to vector<8x1336xf32>
    %40 = vector.broadcast %38 : vector<8x1xf32> to vector<8x1336xf32>
    %41 = arith.mulf %40, %39 : vector<8x1336xf32>
    %42 = arith.addf %37, %41 : vector<8x1336xf32>
    %43 = vector.extract_strided_slice %1 {offsets = [0, 8], sizes = [8, 1], strides = [1, 1]} : vector<8x25xf32> to vector<8x1xf32>
    %44 = vector.extract_strided_slice %0 {offsets = [0, 62], sizes = [8, 1336], strides = [1, 1]} : vector<8x1568xf32> to vector<8x1336xf32>
    %45 = vector.broadcast %43 : vector<8x1xf32> to vector<8x1336xf32>
    %46 = arith.mulf %45, %44 : vector<8x1336xf32>
    %47 = arith.addf %42, %46 : vector<8x1336xf32>
    %48 = vector.extract_strided_slice %1 {offsets = [0, 9], sizes = [8, 1], strides = [1, 1]} : vector<8x25xf32> to vector<8x1xf32>
    %49 = vector.extract_strided_slice %0 {offsets = [0, 64], sizes = [8, 1336], strides = [1, 1]} : vector<8x1568xf32> to vector<8x1336xf32>
    %50 = vector.broadcast %48 : vector<8x1xf32> to vector<8x1336xf32>
    %51 = arith.mulf %50, %49 : vector<8x1336xf32>
    %52 = arith.addf %47, %51 : vector<8x1336xf32>
    %53 = vector.extract_strided_slice %1 {offsets = [0, 10], sizes = [8, 1], strides = [1, 1]} : vector<8x25xf32> to vector<8x1xf32>
    %54 = vector.extract_strided_slice %0 {offsets = [0, 112], sizes = [8, 1336], strides = [1, 1]} : vector<8x1568xf32> to vector<8x1336xf32>
    %55 = vector.broadcast %53 : vector<8x1xf32> to vector<8x1336xf32>
    %56 = arith.mulf %55, %54 : vector<8x1336xf32>
    %57 = arith.addf %52, %56 : vector<8x1336xf32>
    %58 = vector.extract_strided_slice %1 {offsets = [0, 11], sizes = [8, 1], strides = [1, 1]} : vector<8x25xf32> to vector<8x1xf32>
    %59 = vector.extract_strided_slice %0 {offsets = [0, 114], sizes = [8, 1336], strides = [1, 1]} : vector<8x1568xf32> to vector<8x1336xf32>
    %60 = vector.broadcast %58 : vector<8x1xf32> to vector<8x1336xf32>
    %61 = arith.mulf %60, %59 : vector<8x1336xf32>
    %62 = arith.addf %57, %61 : vector<8x1336xf32>
    %63 = vector.extract_strided_slice %1 {offsets = [0, 12], sizes = [8, 1], strides = [1, 1]} : vector<8x25xf32> to vector<8x1xf32>
    %64 = vector.extract_strided_slice %0 {offsets = [0, 116], sizes = [8, 1336], strides = [1, 1]} : vector<8x1568xf32> to vector<8x1336xf32>
    %65 = vector.broadcast %63 : vector<8x1xf32> to vector<8x1336xf32>
    %66 = arith.mulf %65, %64 : vector<8x1336xf32>
    %67 = arith.addf %62, %66 : vector<8x1336xf32>
    %68 = vector.extract_strided_slice %1 {offsets = [0, 13], sizes = [8, 1], strides = [1, 1]} : vector<8x25xf32> to vector<8x1xf32>
    %69 = vector.extract_strided_slice %0 {offsets = [0, 118], sizes = [8, 1336], strides = [1, 1]} : vector<8x1568xf32> to vector<8x1336xf32>
    %70 = vector.broadcast %68 : vector<8x1xf32> to vector<8x1336xf32>
    %71 = arith.mulf %70, %69 : vector<8x1336xf32>
    %72 = arith.addf %67, %71 : vector<8x1336xf32>
    %73 = vector.extract_strided_slice %1 {offsets = [0, 14], sizes = [8, 1], strides = [1, 1]} : vector<8x25xf32> to vector<8x1xf32>
    %74 = vector.extract_strided_slice %0 {offsets = [0, 120], sizes = [8, 1336], strides = [1, 1]} : vector<8x1568xf32> to vector<8x1336xf32>
    %75 = vector.broadcast %73 : vector<8x1xf32> to vector<8x1336xf32>
    %76 = arith.mulf %75, %74 : vector<8x1336xf32>
    %77 = arith.addf %72, %76 : vector<8x1336xf32>
    %78 = vector.extract_strided_slice %1 {offsets = [0, 15], sizes = [8, 1], strides = [1, 1]} : vector<8x25xf32> to vector<8x1xf32>
    %79 = vector.extract_strided_slice %0 {offsets = [0, 168], sizes = [8, 1336], strides = [1, 1]} : vector<8x1568xf32> to vector<8x1336xf32>
    %80 = vector.broadcast %78 : vector<8x1xf32> to vector<8x1336xf32>
    %81 = arith.mulf %80, %79 : vector<8x1336xf32>
    %82 = arith.addf %77, %81 : vector<8x1336xf32>
    %83 = vector.extract_strided_slice %1 {offsets = [0, 16], sizes = [8, 1], strides = [1, 1]} : vector<8x25xf32> to vector<8x1xf32>
    %84 = vector.extract_strided_slice %0 {offsets = [0, 170], sizes = [8, 1336], strides = [1, 1]} : vector<8x1568xf32> to vector<8x1336xf32>
    %85 = vector.broadcast %83 : vector<8x1xf32> to vector<8x1336xf32>
    %86 = arith.mulf %85, %84 : vector<8x1336xf32>
    %87 = arith.addf %82, %86 : vector<8x1336xf32>
    %88 = vector.extract_strided_slice %1 {offsets = [0, 17], sizes = [8, 1], strides = [1, 1]} : vector<8x25xf32> to vector<8x1xf32>
    %89 = vector.extract_strided_slice %0 {offsets = [0, 172], sizes = [8, 1336], strides = [1, 1]} : vector<8x1568xf32> to vector<8x1336xf32>
    %90 = vector.broadcast %88 : vector<8x1xf32> to vector<8x1336xf32>
    %91 = arith.mulf %90, %89 : vector<8x1336xf32>
    %92 = arith.addf %87, %91 : vector<8x1336xf32>
    %93 = vector.extract_strided_slice %1 {offsets = [0, 18], sizes = [8, 1], strides = [1, 1]} : vector<8x25xf32> to vector<8x1xf32>
    %94 = vector.extract_strided_slice %0 {offsets = [0, 174], sizes = [8, 1336], strides = [1, 1]} : vector<8x1568xf32> to vector<8x1336xf32>
    %95 = vector.broadcast %93 : vector<8x1xf32> to vector<8x1336xf32>
    %96 = arith.mulf %95, %94 : vector<8x1336xf32>
    %97 = arith.addf %92, %96 : vector<8x1336xf32>
    %98 = vector.extract_strided_slice %1 {offsets = [0, 19], sizes = [8, 1], strides = [1, 1]} : vector<8x25xf32> to vector<8x1xf32>
    %99 = vector.extract_strided_slice %0 {offsets = [0, 176], sizes = [8, 1336], strides = [1, 1]} : vector<8x1568xf32> to vector<8x1336xf32>
    %100 = vector.broadcast %98 : vector<8x1xf32> to vector<8x1336xf32>
    %101 = arith.mulf %100, %99 : vector<8x1336xf32>
    %102 = arith.addf %97, %101 : vector<8x1336xf32>
    %103 = vector.extract_strided_slice %1 {offsets = [0, 20], sizes = [8, 1], strides = [1, 1]} : vector<8x25xf32> to vector<8x1xf32>
    %104 = vector.extract_strided_slice %0 {offsets = [0, 224], sizes = [8, 1336], strides = [1, 1]} : vector<8x1568xf32> to vector<8x1336xf32>
    %105 = vector.broadcast %103 : vector<8x1xf32> to vector<8x1336xf32>
    %106 = arith.mulf %105, %104 : vector<8x1336xf32>
    %107 = arith.addf %102, %106 : vector<8x1336xf32>
    %108 = vector.extract_strided_slice %1 {offsets = [0, 21], sizes = [8, 1], strides = [1, 1]} : vector<8x25xf32> to vector<8x1xf32>
    %109 = vector.extract_strided_slice %0 {offsets = [0, 226], sizes = [8, 1336], strides = [1, 1]} : vector<8x1568xf32> to vector<8x1336xf32>
    %110 = vector.broadcast %108 : vector<8x1xf32> to vector<8x1336xf32>
    %111 = arith.mulf %110, %109 : vector<8x1336xf32>
    %112 = arith.addf %107, %111 : vector<8x1336xf32>
    %113 = vector.extract_strided_slice %1 {offsets = [0, 22], sizes = [8, 1], strides = [1, 1]} : vector<8x25xf32> to vector<8x1xf32>
    %114 = vector.extract_strided_slice %0 {offsets = [0, 228], sizes = [8, 1336], strides = [1, 1]} : vector<8x1568xf32> to vector<8x1336xf32>
    %115 = vector.broadcast %113 : vector<8x1xf32> to vector<8x1336xf32>
    %116 = arith.mulf %115, %114 : vector<8x1336xf32>
    %117 = arith.addf %112, %116 : vector<8x1336xf32>
    %118 = vector.extract_strided_slice %1 {offsets = [0, 23], sizes = [8, 1], strides = [1, 1]} : vector<8x25xf32> to vector<8x1xf32>
    %119 = vector.extract_strided_slice %0 {offsets = [0, 230], sizes = [8, 1336], strides = [1, 1]} : vector<8x1568xf32> to vector<8x1336xf32>
    %120 = vector.broadcast %118 : vector<8x1xf32> to vector<8x1336xf32>
    %121 = arith.mulf %120, %119 : vector<8x1336xf32>
    %122 = arith.addf %117, %121 : vector<8x1336xf32>
    %123 = vector.extract_strided_slice %1 {offsets = [0, 24], sizes = [8, 1], strides = [1, 1]} : vector<8x25xf32> to vector<8x1xf32>
    %124 = vector.extract_strided_slice %0 {offsets = [0, 232], sizes = [8, 1336], strides = [1, 1]} : vector<8x1568xf32> to vector<8x1336xf32>
    %125 = vector.broadcast %123 : vector<8x1xf32> to vector<8x1336xf32>
    %126 = arith.mulf %125, %124 : vector<8x1336xf32>
    %127 = arith.addf %122, %126 : vector<8x1336xf32>
    %c0_3 = arith.constant 0 : index
    %c0_4 = arith.constant 0 : index
    %128 = vector.load %arg3[%c0_3, %c0_4] : memref<8x1xf32, #tpu.memory_space<vmem>>, vector<8x1xf32>
    %129 = vector.broadcast %128 : vector<8x1xf32> to vector<8x1336xf32>
    %130 = arith.addf %127, %129 : vector<8x1336xf32>
    %cst_5 = arith.constant 0.000000e+00 : f32
    %131 = vector.broadcast %cst_5 : f32 to vector<8x1336xf32>
    %132 = arith.maximumf %130, %131 : vector<8x1336xf32>
    %133 = vector.extract_strided_slice %132 {offsets = [0, 0], sizes = [8, 1278], strides = [1, 1]} : vector<8x1336xf32> to vector<8x1278xf32>
    %134 = vector.extract_strided_slice %132 {offsets = [0, 2], sizes = [8, 1278], strides = [1, 1]} : vector<8x1336xf32> to vector<8x1278xf32>
    %135 = arith.maximumf %133, %134 : vector<8x1278xf32>
    %136 = vector.extract_strided_slice %132 {offsets = [0, 56], sizes = [8, 1278], strides = [1, 1]} : vector<8x1336xf32> to vector<8x1278xf32>
    %137 = vector.extract_strided_slice %132 {offsets = [0, 58], sizes = [8, 1278], strides = [1, 1]} : vector<8x1336xf32> to vector<8x1278xf32>
    %138 = arith.maximumf %136, %137 : vector<8x1278xf32>
    %139 = arith.maximumf %135, %138 : vector<8x1278xf32>
    %cst_6 = arith.constant 0.000000e+00 : f32
    %140 = vector.broadcast %cst_6 : f32 to vector<16x814xf32>
    %c0_7 = arith.constant 0 : index
    %c0_8 = arith.constant 0 : index
    %c0_9 = arith.constant 0 : index
    %141 = vector.load %arg4[%c0_7, %c0_8, %c0_9] : memref<25x16x8xbf16, #tpu.memory_space<vmem>>, vector<1x16x8xbf16>
    %142 = vector.shape_cast %141 : vector<1x16x8xbf16> to vector<16x8xbf16>
    %143 = vector.extract_strided_slice %139 {offsets = [0, 0], sizes = [8, 814], strides = [1, 1]} : vector<8x1278xf32> to vector<8x814xf32>
    %144 = arith.truncf %143 : vector<8x814xf32> to vector<8x814xbf16>
    %cst_10 = arith.constant dense<0.000000e+00> : vector<16x814xf32>
    %145 = tpu.matmul %142, %144, %cst_10 {dimension_numbers = #tpu.dot_dimension_numbers<[1], [0], [0], [1], [0, 0, 1, 1], [], []>} : vector<16x8xbf16>, vector<8x814xbf16>, vector<16x814xf32> -> vector<16x814xf32>
    %146 = arith.addf %140, %145 : vector<16x814xf32>
    %c1 = arith.constant 1 : index
    %c0_11 = arith.constant 0 : index
    %c0_12 = arith.constant 0 : index
    %147 = vector.load %arg4[%c1, %c0_11, %c0_12] : memref<25x16x8xbf16, #tpu.memory_space<vmem>>, vector<1x16x8xbf16>
    %148 = vector.shape_cast %147 : vector<1x16x8xbf16> to vector<16x8xbf16>
    %149 = vector.extract_strided_slice %139 {offsets = [0, 4], sizes = [8, 814], strides = [1, 1]} : vector<8x1278xf32> to vector<8x814xf32>
    %150 = arith.truncf %149 : vector<8x814xf32> to vector<8x814xbf16>
    %cst_13 = arith.constant dense<0.000000e+00> : vector<16x814xf32>
    %151 = tpu.matmul %148, %150, %cst_13 {dimension_numbers = #tpu.dot_dimension_numbers<[1], [0], [0], [1], [0, 0, 1, 1], [], []>} : vector<16x8xbf16>, vector<8x814xbf16>, vector<16x814xf32> -> vector<16x814xf32>
    %152 = arith.addf %146, %151 : vector<16x814xf32>
    %c2 = arith.constant 2 : index
    %c0_14 = arith.constant 0 : index
    %c0_15 = arith.constant 0 : index
    %153 = vector.load %arg4[%c2, %c0_14, %c0_15] : memref<25x16x8xbf16, #tpu.memory_space<vmem>>, vector<1x16x8xbf16>
    %154 = vector.shape_cast %153 : vector<1x16x8xbf16> to vector<16x8xbf16>
    %155 = vector.extract_strided_slice %139 {offsets = [0, 8], sizes = [8, 814], strides = [1, 1]} : vector<8x1278xf32> to vector<8x814xf32>
    %156 = arith.truncf %155 : vector<8x814xf32> to vector<8x814xbf16>
    %cst_16 = arith.constant dense<0.000000e+00> : vector<16x814xf32>
    %157 = tpu.matmul %154, %156, %cst_16 {dimension_numbers = #tpu.dot_dimension_numbers<[1], [0], [0], [1], [0, 0, 1, 1], [], []>} : vector<16x8xbf16>, vector<8x814xbf16>, vector<16x814xf32> -> vector<16x814xf32>
    %158 = arith.addf %152, %157 : vector<16x814xf32>
    %c3 = arith.constant 3 : index
    %c0_17 = arith.constant 0 : index
    %c0_18 = arith.constant 0 : index
    %159 = vector.load %arg4[%c3, %c0_17, %c0_18] : memref<25x16x8xbf16, #tpu.memory_space<vmem>>, vector<1x16x8xbf16>
    %160 = vector.shape_cast %159 : vector<1x16x8xbf16> to vector<16x8xbf16>
    %161 = vector.extract_strided_slice %139 {offsets = [0, 12], sizes = [8, 814], strides = [1, 1]} : vector<8x1278xf32> to vector<8x814xf32>
    %162 = arith.truncf %161 : vector<8x814xf32> to vector<8x814xbf16>
    %cst_19 = arith.constant dense<0.000000e+00> : vector<16x814xf32>
    %163 = tpu.matmul %160, %162, %cst_19 {dimension_numbers = #tpu.dot_dimension_numbers<[1], [0], [0], [1], [0, 0, 1, 1], [], []>} : vector<16x8xbf16>, vector<8x814xbf16>, vector<16x814xf32> -> vector<16x814xf32>
    %164 = arith.addf %158, %163 : vector<16x814xf32>
    %c4 = arith.constant 4 : index
    %c0_20 = arith.constant 0 : index
    %c0_21 = arith.constant 0 : index
    %165 = vector.load %arg4[%c4, %c0_20, %c0_21] : memref<25x16x8xbf16, #tpu.memory_space<vmem>>, vector<1x16x8xbf16>
    %166 = vector.shape_cast %165 : vector<1x16x8xbf16> to vector<16x8xbf16>
    %167 = vector.extract_strided_slice %139 {offsets = [0, 16], sizes = [8, 814], strides = [1, 1]} : vector<8x1278xf32> to vector<8x814xf32>
    %168 = arith.truncf %167 : vector<8x814xf32> to vector<8x814xbf16>
    %cst_22 = arith.constant dense<0.000000e+00> : vector<16x814xf32>
    %169 = tpu.matmul %166, %168, %cst_22 {dimension_numbers = #tpu.dot_dimension_numbers<[1], [0], [0], [1], [0, 0, 1, 1], [], []>} : vector<16x8xbf16>, vector<8x814xbf16>, vector<16x814xf32> -> vector<16x814xf32>
    %170 = arith.addf %164, %169 : vector<16x814xf32>
    %c5 = arith.constant 5 : index
    %c0_23 = arith.constant 0 : index
    %c0_24 = arith.constant 0 : index
    %171 = vector.load %arg4[%c5, %c0_23, %c0_24] : memref<25x16x8xbf16, #tpu.memory_space<vmem>>, vector<1x16x8xbf16>
    %172 = vector.shape_cast %171 : vector<1x16x8xbf16> to vector<16x8xbf16>
    %173 = vector.extract_strided_slice %139 {offsets = [0, 112], sizes = [8, 814], strides = [1, 1]} : vector<8x1278xf32> to vector<8x814xf32>
    %174 = arith.truncf %173 : vector<8x814xf32> to vector<8x814xbf16>
    %cst_25 = arith.constant dense<0.000000e+00> : vector<16x814xf32>
    %175 = tpu.matmul %172, %174, %cst_25 {dimension_numbers = #tpu.dot_dimension_numbers<[1], [0], [0], [1], [0, 0, 1, 1], [], []>} : vector<16x8xbf16>, vector<8x814xbf16>, vector<16x814xf32> -> vector<16x814xf32>
    %176 = arith.addf %170, %175 : vector<16x814xf32>
    %c6 = arith.constant 6 : index
    %c0_26 = arith.constant 0 : index
    %c0_27 = arith.constant 0 : index
    %177 = vector.load %arg4[%c6, %c0_26, %c0_27] : memref<25x16x8xbf16, #tpu.memory_space<vmem>>, vector<1x16x8xbf16>
    %178 = vector.shape_cast %177 : vector<1x16x8xbf16> to vector<16x8xbf16>
    %179 = vector.extract_strided_slice %139 {offsets = [0, 116], sizes = [8, 814], strides = [1, 1]} : vector<8x1278xf32> to vector<8x814xf32>
    %180 = arith.truncf %179 : vector<8x814xf32> to vector<8x814xbf16>
    %cst_28 = arith.constant dense<0.000000e+00> : vector<16x814xf32>
    %181 = tpu.matmul %178, %180, %cst_28 {dimension_numbers = #tpu.dot_dimension_numbers<[1], [0], [0], [1], [0, 0, 1, 1], [], []>} : vector<16x8xbf16>, vector<8x814xbf16>, vector<16x814xf32> -> vector<16x814xf32>
    %182 = arith.addf %176, %181 : vector<16x814xf32>
    %c7 = arith.constant 7 : index
    %c0_29 = arith.constant 0 : index
    %c0_30 = arith.constant 0 : index
    %183 = vector.load %arg4[%c7, %c0_29, %c0_30] : memref<25x16x8xbf16, #tpu.memory_space<vmem>>, vector<1x16x8xbf16>
    %184 = vector.shape_cast %183 : vector<1x16x8xbf16> to vector<16x8xbf16>
    %185 = vector.extract_strided_slice %139 {offsets = [0, 120], sizes = [8, 814], strides = [1, 1]} : vector<8x1278xf32> to vector<8x814xf32>
    %186 = arith.truncf %185 : vector<8x814xf32> to vector<8x814xbf16>
    %cst_31 = arith.constant dense<0.000000e+00> : vector<16x814xf32>
    %187 = tpu.matmul %184, %186, %cst_31 {dimension_numbers = #tpu.dot_dimension_numbers<[1], [0], [0], [1], [0, 0, 1, 1], [], []>} : vector<16x8xbf16>, vector<8x814xbf16>, vector<16x814xf32> -> vector<16x814xf32>
    %188 = arith.addf %182, %187 : vector<16x814xf32>
    %c8 = arith.constant 8 : index
    %c0_32 = arith.constant 0 : index
    %c0_33 = arith.constant 0 : index
    %189 = vector.load %arg4[%c8, %c0_32, %c0_33] : memref<25x16x8xbf16, #tpu.memory_space<vmem>>, vector<1x16x8xbf16>
    %190 = vector.shape_cast %189 : vector<1x16x8xbf16> to vector<16x8xbf16>
    %191 = vector.extract_strided_slice %139 {offsets = [0, 124], sizes = [8, 814], strides = [1, 1]} : vector<8x1278xf32> to vector<8x814xf32>
    %192 = arith.truncf %191 : vector<8x814xf32> to vector<8x814xbf16>
    %cst_34 = arith.constant dense<0.000000e+00> : vector<16x814xf32>
    %193 = tpu.matmul %190, %192, %cst_34 {dimension_numbers = #tpu.dot_dimension_numbers<[1], [0], [0], [1], [0, 0, 1, 1], [], []>} : vector<16x8xbf16>, vector<8x814xbf16>, vector<16x814xf32> -> vector<16x814xf32>
    %194 = arith.addf %188, %193 : vector<16x814xf32>
    %c9 = arith.constant 9 : index
    %c0_35 = arith.constant 0 : index
    %c0_36 = arith.constant 0 : index
    %195 = vector.load %arg4[%c9, %c0_35, %c0_36] : memref<25x16x8xbf16, #tpu.memory_space<vmem>>, vector<1x16x8xbf16>
    %196 = vector.shape_cast %195 : vector<1x16x8xbf16> to vector<16x8xbf16>
    %197 = vector.extract_strided_slice %139 {offsets = [0, 128], sizes = [8, 814], strides = [1, 1]} : vector<8x1278xf32> to vector<8x814xf32>
    %198 = arith.truncf %197 : vector<8x814xf32> to vector<8x814xbf16>
    %cst_37 = arith.constant dense<0.000000e+00> : vector<16x814xf32>
    %199 = tpu.matmul %196, %198, %cst_37 {dimension_numbers = #tpu.dot_dimension_numbers<[1], [0], [0], [1], [0, 0, 1, 1], [], []>} : vector<16x8xbf16>, vector<8x814xbf16>, vector<16x814xf32> -> vector<16x814xf32>
    %200 = arith.addf %194, %199 : vector<16x814xf32>
    %c10 = arith.constant 10 : index
    %c0_38 = arith.constant 0 : index
    %c0_39 = arith.constant 0 : index
    %201 = vector.load %arg4[%c10, %c0_38, %c0_39] : memref<25x16x8xbf16, #tpu.memory_space<vmem>>, vector<1x16x8xbf16>
    %202 = vector.shape_cast %201 : vector<1x16x8xbf16> to vector<16x8xbf16>
    %203 = vector.extract_strided_slice %139 {offsets = [0, 224], sizes = [8, 814], strides = [1, 1]} : vector<8x1278xf32> to vector<8x814xf32>
    %204 = arith.truncf %203 : vector<8x814xf32> to vector<8x814xbf16>
    %cst_40 = arith.constant dense<0.000000e+00> : vector<16x814xf32>
    %205 = tpu.matmul %202, %204, %cst_40 {dimension_numbers = #tpu.dot_dimension_numbers<[1], [0], [0], [1], [0, 0, 1, 1], [], []>} : vector<16x8xbf16>, vector<8x814xbf16>, vector<16x814xf32> -> vector<16x814xf32>
    %206 = arith.addf %200, %205 : vector<16x814xf32>
    %c11 = arith.constant 11 : index
    %c0_41 = arith.constant 0 : index
    %c0_42 = arith.constant 0 : index
    %207 = vector.load %arg4[%c11, %c0_41, %c0_42] : memref<25x16x8xbf16, #tpu.memory_space<vmem>>, vector<1x16x8xbf16>
    %208 = vector.shape_cast %207 : vector<1x16x8xbf16> to vector<16x8xbf16>
    %209 = vector.extract_strided_slice %139 {offsets = [0, 228], sizes = [8, 814], strides = [1, 1]} : vector<8x1278xf32> to vector<8x814xf32>
    %210 = arith.truncf %209 : vector<8x814xf32> to vector<8x814xbf16>
    %cst_43 = arith.constant dense<0.000000e+00> : vector<16x814xf32>
    %211 = tpu.matmul %208, %210, %cst_43 {dimension_numbers = #tpu.dot_dimension_numbers<[1], [0], [0], [1], [0, 0, 1, 1], [], []>} : vector<16x8xbf16>, vector<8x814xbf16>, vector<16x814xf32> -> vector<16x814xf32>
    %212 = arith.addf %206, %211 : vector<16x814xf32>
    %c12 = arith.constant 12 : index
    %c0_44 = arith.constant 0 : index
    %c0_45 = arith.constant 0 : index
    %213 = vector.load %arg4[%c12, %c0_44, %c0_45] : memref<25x16x8xbf16, #tpu.memory_space<vmem>>, vector<1x16x8xbf16>
    %214 = vector.shape_cast %213 : vector<1x16x8xbf16> to vector<16x8xbf16>
    %215 = vector.extract_strided_slice %139 {offsets = [0, 232], sizes = [8, 814], strides = [1, 1]} : vector<8x1278xf32> to vector<8x814xf32>
    %216 = arith.truncf %215 : vector<8x814xf32> to vector<8x814xbf16>
    %cst_46 = arith.constant dense<0.000000e+00> : vector<16x814xf32>
    %217 = tpu.matmul %214, %216, %cst_46 {dimension_numbers = #tpu.dot_dimension_numbers<[1], [0], [0], [1], [0, 0, 1, 1], [], []>} : vector<16x8xbf16>, vector<8x814xbf16>, vector<16x814xf32> -> vector<16x814xf32>
    %218 = arith.addf %212, %217 : vector<16x814xf32>
    %c13 = arith.constant 13 : index
    %c0_47 = arith.constant 0 : index
    %c0_48 = arith.constant 0 : index
    %219 = vector.load %arg4[%c13, %c0_47, %c0_48] : memref<25x16x8xbf16, #tpu.memory_space<vmem>>, vector<1x16x8xbf16>
    %220 = vector.shape_cast %219 : vector<1x16x8xbf16> to vector<16x8xbf16>
    %221 = vector.extract_strided_slice %139 {offsets = [0, 236], sizes = [8, 814], strides = [1, 1]} : vector<8x1278xf32> to vector<8x814xf32>
    %222 = arith.truncf %221 : vector<8x814xf32> to vector<8x814xbf16>
    %cst_49 = arith.constant dense<0.000000e+00> : vector<16x814xf32>
    %223 = tpu.matmul %220, %222, %cst_49 {dimension_numbers = #tpu.dot_dimension_numbers<[1], [0], [0], [1], [0, 0, 1, 1], [], []>} : vector<16x8xbf16>, vector<8x814xbf16>, vector<16x814xf32> -> vector<16x814xf32>
    %224 = arith.addf %218, %223 : vector<16x814xf32>
    %c14 = arith.constant 14 : index
    %c0_50 = arith.constant 0 : index
    %c0_51 = arith.constant 0 : index
    %225 = vector.load %arg4[%c14, %c0_50, %c0_51] : memref<25x16x8xbf16, #tpu.memory_space<vmem>>, vector<1x16x8xbf16>
    %226 = vector.shape_cast %225 : vector<1x16x8xbf16> to vector<16x8xbf16>
    %227 = vector.extract_strided_slice %139 {offsets = [0, 240], sizes = [8, 814], strides = [1, 1]} : vector<8x1278xf32> to vector<8x814xf32>
    %228 = arith.truncf %227 : vector<8x814xf32> to vector<8x814xbf16>
    %cst_52 = arith.constant dense<0.000000e+00> : vector<16x814xf32>
    %229 = tpu.matmul %226, %228, %cst_52 {dimension_numbers = #tpu.dot_dimension_numbers<[1], [0], [0], [1], [0, 0, 1, 1], [], []>} : vector<16x8xbf16>, vector<8x814xbf16>, vector<16x814xf32> -> vector<16x814xf32>
    %230 = arith.addf %224, %229 : vector<16x814xf32>
    %c15 = arith.constant 15 : index
    %c0_53 = arith.constant 0 : index
    %c0_54 = arith.constant 0 : index
    %231 = vector.load %arg4[%c15, %c0_53, %c0_54] : memref<25x16x8xbf16, #tpu.memory_space<vmem>>, vector<1x16x8xbf16>
    %232 = vector.shape_cast %231 : vector<1x16x8xbf16> to vector<16x8xbf16>
    %233 = vector.extract_strided_slice %139 {offsets = [0, 336], sizes = [8, 814], strides = [1, 1]} : vector<8x1278xf32> to vector<8x814xf32>
    %234 = arith.truncf %233 : vector<8x814xf32> to vector<8x814xbf16>
    %cst_55 = arith.constant dense<0.000000e+00> : vector<16x814xf32>
    %235 = tpu.matmul %232, %234, %cst_55 {dimension_numbers = #tpu.dot_dimension_numbers<[1], [0], [0], [1], [0, 0, 1, 1], [], []>} : vector<16x8xbf16>, vector<8x814xbf16>, vector<16x814xf32> -> vector<16x814xf32>
    %236 = arith.addf %230, %235 : vector<16x814xf32>
    %c16 = arith.constant 16 : index
    %c0_56 = arith.constant 0 : index
    %c0_57 = arith.constant 0 : index
    %237 = vector.load %arg4[%c16, %c0_56, %c0_57] : memref<25x16x8xbf16, #tpu.memory_space<vmem>>, vector<1x16x8xbf16>
    %238 = vector.shape_cast %237 : vector<1x16x8xbf16> to vector<16x8xbf16>
    %239 = vector.extract_strided_slice %139 {offsets = [0, 340], sizes = [8, 814], strides = [1, 1]} : vector<8x1278xf32> to vector<8x814xf32>
    %240 = arith.truncf %239 : vector<8x814xf32> to vector<8x814xbf16>
    %cst_58 = arith.constant dense<0.000000e+00> : vector<16x814xf32>
    %241 = tpu.matmul %238, %240, %cst_58 {dimension_numbers = #tpu.dot_dimension_numbers<[1], [0], [0], [1], [0, 0, 1, 1], [], []>} : vector<16x8xbf16>, vector<8x814xbf16>, vector<16x814xf32> -> vector<16x814xf32>
    %242 = arith.addf %236, %241 : vector<16x814xf32>
    %c17 = arith.constant 17 : index
    %c0_59 = arith.constant 0 : index
    %c0_60 = arith.constant 0 : index
    %243 = vector.load %arg4[%c17, %c0_59, %c0_60] : memref<25x16x8xbf16, #tpu.memory_space<vmem>>, vector<1x16x8xbf16>
    %244 = vector.shape_cast %243 : vector<1x16x8xbf16> to vector<16x8xbf16>
    %245 = vector.extract_strided_slice %139 {offsets = [0, 344], sizes = [8, 814], strides = [1, 1]} : vector<8x1278xf32> to vector<8x814xf32>
    %246 = arith.truncf %245 : vector<8x814xf32> to vector<8x814xbf16>
    %cst_61 = arith.constant dense<0.000000e+00> : vector<16x814xf32>
    %247 = tpu.matmul %244, %246, %cst_61 {dimension_numbers = #tpu.dot_dimension_numbers<[1], [0], [0], [1], [0, 0, 1, 1], [], []>} : vector<16x8xbf16>, vector<8x814xbf16>, vector<16x814xf32> -> vector<16x814xf32>
    %248 = arith.addf %242, %247 : vector<16x814xf32>
    %c18 = arith.constant 18 : index
    %c0_62 = arith.constant 0 : index
    %c0_63 = arith.constant 0 : index
    %249 = vector.load %arg4[%c18, %c0_62, %c0_63] : memref<25x16x8xbf16, #tpu.memory_space<vmem>>, vector<1x16x8xbf16>
    %250 = vector.shape_cast %249 : vector<1x16x8xbf16> to vector<16x8xbf16>
    %251 = vector.extract_strided_slice %139 {offsets = [0, 348], sizes = [8, 814], strides = [1, 1]} : vector<8x1278xf32> to vector<8x814xf32>
    %252 = arith.truncf %251 : vector<8x814xf32> to vector<8x814xbf16>
    %cst_64 = arith.constant dense<0.000000e+00> : vector<16x814xf32>
    %253 = tpu.matmul %250, %252, %cst_64 {dimension_numbers = #tpu.dot_dimension_numbers<[1], [0], [0], [1], [0, 0, 1, 1], [], []>} : vector<16x8xbf16>, vector<8x814xbf16>, vector<16x814xf32> -> vector<16x814xf32>
    %254 = arith.addf %248, %253 : vector<16x814xf32>
    %c19 = arith.constant 19 : index
    %c0_65 = arith.constant 0 : index
    %c0_66 = arith.constant 0 : index
    %255 = vector.load %arg4[%c19, %c0_65, %c0_66] : memref<25x16x8xbf16, #tpu.memory_space<vmem>>, vector<1x16x8xbf16>
    %256 = vector.shape_cast %255 : vector<1x16x8xbf16> to vector<16x8xbf16>
    %257 = vector.extract_strided_slice %139 {offsets = [0, 352], sizes = [8, 814], strides = [1, 1]} : vector<8x1278xf32> to vector<8x814xf32>
    %258 = arith.truncf %257 : vector<8x814xf32> to vector<8x814xbf16>
    %cst_67 = arith.constant dense<0.000000e+00> : vector<16x814xf32>
    %259 = tpu.matmul %256, %258, %cst_67 {dimension_numbers = #tpu.dot_dimension_numbers<[1], [0], [0], [1], [0, 0, 1, 1], [], []>} : vector<16x8xbf16>, vector<8x814xbf16>, vector<16x814xf32> -> vector<16x814xf32>
    %260 = arith.addf %254, %259 : vector<16x814xf32>
    %c20 = arith.constant 20 : index
    %c0_68 = arith.constant 0 : index
    %c0_69 = arith.constant 0 : index
    %261 = vector.load %arg4[%c20, %c0_68, %c0_69] : memref<25x16x8xbf16, #tpu.memory_space<vmem>>, vector<1x16x8xbf16>
    %262 = vector.shape_cast %261 : vector<1x16x8xbf16> to vector<16x8xbf16>
    %263 = vector.extract_strided_slice %139 {offsets = [0, 448], sizes = [8, 814], strides = [1, 1]} : vector<8x1278xf32> to vector<8x814xf32>
    %264 = arith.truncf %263 : vector<8x814xf32> to vector<8x814xbf16>
    %cst_70 = arith.constant dense<0.000000e+00> : vector<16x814xf32>
    %265 = tpu.matmul %262, %264, %cst_70 {dimension_numbers = #tpu.dot_dimension_numbers<[1], [0], [0], [1], [0, 0, 1, 1], [], []>} : vector<16x8xbf16>, vector<8x814xbf16>, vector<16x814xf32> -> vector<16x814xf32>
    %266 = arith.addf %260, %265 : vector<16x814xf32>
    %c21 = arith.constant 21 : index
    %c0_71 = arith.constant 0 : index
    %c0_72 = arith.constant 0 : index
    %267 = vector.load %arg4[%c21, %c0_71, %c0_72] : memref<25x16x8xbf16, #tpu.memory_space<vmem>>, vector<1x16x8xbf16>
    %268 = vector.shape_cast %267 : vector<1x16x8xbf16> to vector<16x8xbf16>
    %269 = vector.extract_strided_slice %139 {offsets = [0, 452], sizes = [8, 814], strides = [1, 1]} : vector<8x1278xf32> to vector<8x814xf32>
    %270 = arith.truncf %269 : vector<8x814xf32> to vector<8x814xbf16>
    %cst_73 = arith.constant dense<0.000000e+00> : vector<16x814xf32>
    %271 = tpu.matmul %268, %270, %cst_73 {dimension_numbers = #tpu.dot_dimension_numbers<[1], [0], [0], [1], [0, 0, 1, 1], [], []>} : vector<16x8xbf16>, vector<8x814xbf16>, vector<16x814xf32> -> vector<16x814xf32>
    %272 = arith.addf %266, %271 : vector<16x814xf32>
    %c22 = arith.constant 22 : index
    %c0_74 = arith.constant 0 : index
    %c0_75 = arith.constant 0 : index
    %273 = vector.load %arg4[%c22, %c0_74, %c0_75] : memref<25x16x8xbf16, #tpu.memory_space<vmem>>, vector<1x16x8xbf16>
    %274 = vector.shape_cast %273 : vector<1x16x8xbf16> to vector<16x8xbf16>
    %275 = vector.extract_strided_slice %139 {offsets = [0, 456], sizes = [8, 814], strides = [1, 1]} : vector<8x1278xf32> to vector<8x814xf32>
    %276 = arith.truncf %275 : vector<8x814xf32> to vector<8x814xbf16>
    %cst_76 = arith.constant dense<0.000000e+00> : vector<16x814xf32>
    %277 = tpu.matmul %274, %276, %cst_76 {dimension_numbers = #tpu.dot_dimension_numbers<[1], [0], [0], [1], [0, 0, 1, 1], [], []>} : vector<16x8xbf16>, vector<8x814xbf16>, vector<16x814xf32> -> vector<16x814xf32>
    %278 = arith.addf %272, %277 : vector<16x814xf32>
    %c23 = arith.constant 23 : index
    %c0_77 = arith.constant 0 : index
    %c0_78 = arith.constant 0 : index
    %279 = vector.load %arg4[%c23, %c0_77, %c0_78] : memref<25x16x8xbf16, #tpu.memory_space<vmem>>, vector<1x16x8xbf16>
    %280 = vector.shape_cast %279 : vector<1x16x8xbf16> to vector<16x8xbf16>
    %281 = vector.extract_strided_slice %139 {offsets = [0, 460], sizes = [8, 814], strides = [1, 1]} : vector<8x1278xf32> to vector<8x814xf32>
    %282 = arith.truncf %281 : vector<8x814xf32> to vector<8x814xbf16>
    %cst_79 = arith.constant dense<0.000000e+00> : vector<16x814xf32>
    %283 = tpu.matmul %280, %282, %cst_79 {dimension_numbers = #tpu.dot_dimension_numbers<[1], [0], [0], [1], [0, 0, 1, 1], [], []>} : vector<16x8xbf16>, vector<8x814xbf16>, vector<16x814xf32> -> vector<16x814xf32>
    %284 = arith.addf %278, %283 : vector<16x814xf32>
    %c24 = arith.constant 24 : index
    %c0_80 = arith.constant 0 : index
    %c0_81 = arith.constant 0 : index
    %285 = vector.load %arg4[%c24, %c0_80, %c0_81] : memref<25x16x8xbf16, #tpu.memory_space<vmem>>, vector<1x16x8xbf16>
    %286 = vector.shape_cast %285 : vector<1x16x8xbf16> to vector<16x8xbf16>
    %287 = vector.extract_strided_slice %139 {offsets = [0, 464], sizes = [8, 814], strides = [1, 1]} : vector<8x1278xf32> to vector<8x814xf32>
    %288 = arith.truncf %287 : vector<8x814xf32> to vector<8x814xbf16>
    %cst_82 = arith.constant dense<0.000000e+00> : vector<16x814xf32>
    %289 = tpu.matmul %286, %288, %cst_82 {dimension_numbers = #tpu.dot_dimension_numbers<[1], [0], [0], [1], [0, 0, 1, 1], [], []>} : vector<16x8xbf16>, vector<8x814xbf16>, vector<16x814xf32> -> vector<16x814xf32>
    %290 = arith.addf %284, %289 : vector<16x814xf32>
    %c0_83 = arith.constant 0 : index
    %c0_84 = arith.constant 0 : index
    %291 = vector.load %arg5[%c0_83, %c0_84] : memref<16x1xf32, #tpu.memory_space<vmem>>, vector<16x1xf32>
    %292 = vector.broadcast %291 : vector<16x1xf32> to vector<16x814xf32>
    %293 = arith.addf %290, %292 : vector<16x814xf32>
    %cst_85 = arith.constant 0.000000e+00 : f32
    %294 = vector.broadcast %cst_85 : f32 to vector<16x814xf32>
    %295 = arith.maximumf %293, %294 : vector<16x814xf32>
    %296 = vector.extract_strided_slice %295 {offsets = [0, 0], sizes = [16, 698], strides = [1, 1]} : vector<16x814xf32> to vector<16x698xf32>
    %297 = vector.extract_strided_slice %295 {offsets = [0, 4], sizes = [16, 698], strides = [1, 1]} : vector<16x814xf32> to vector<16x698xf32>
    %298 = arith.maximumf %296, %297 : vector<16x698xf32>
    %299 = vector.extract_strided_slice %295 {offsets = [0, 112], sizes = [16, 698], strides = [1, 1]} : vector<16x814xf32> to vector<16x698xf32>
    %300 = vector.extract_strided_slice %295 {offsets = [0, 116], sizes = [16, 698], strides = [1, 1]} : vector<16x814xf32> to vector<16x698xf32>
    %301 = arith.maximumf %299, %300 : vector<16x698xf32>
    %302 = arith.maximumf %298, %301 : vector<16x698xf32>
    %303 = vector.extract_strided_slice %302 {offsets = [0, 0], sizes = [16, 2], strides = [1, 1]} : vector<16x698xf32> to vector<16x2xf32>
    %304 = arith.truncf %303 : vector<16x2xf32> to vector<16x2xbf16>
    %c0_86 = arith.constant 0 : index
    %c0_87 = arith.constant 0 : index
    %305 = vector.load %arg11[%c0_86, %c0_87] : memref<256x2xbf16, #tpu.memory_space<vmem>>, vector<16x2xbf16>
    tpu.vector_store %arg11[%c0_86, %c0_87], %304 {strides = array<i32>} : memref<256x2xbf16, #tpu.memory_space<vmem>>, vector<16x2xbf16>,
    %306 = vector.extract_strided_slice %302 {offsets = [0, 8], sizes = [16, 2], strides = [1, 1]} : vector<16x698xf32> to vector<16x2xf32>
    %307 = arith.truncf %306 : vector<16x2xf32> to vector<16x2xbf16>
    %c16_88 = arith.constant 16 : index
    %c0_89 = arith.constant 0 : index
    %308 = vector.load %arg11[%c16_88, %c0_89] : memref<256x2xbf16, #tpu.memory_space<vmem>>, vector<16x2xbf16>
    tpu.vector_store %arg11[%c16_88, %c0_89], %307 {strides = array<i32>} : memref<256x2xbf16, #tpu.memory_space<vmem>>, vector<16x2xbf16>,
    %309 = vector.extract_strided_slice %302 {offsets = [0, 16], sizes = [16, 2], strides = [1, 1]} : vector<16x698xf32> to vector<16x2xf32>
    %310 = arith.truncf %309 : vector<16x2xf32> to vector<16x2xbf16>
    %c32 = arith.constant 32 : index
    %c0_90 = arith.constant 0 : index
    %311 = vector.load %arg11[%c32, %c0_90] : memref<256x2xbf16, #tpu.memory_space<vmem>>, vector<16x2xbf16>
    tpu.vector_store %arg11[%c32, %c0_90], %310 {strides = array<i32>} : memref<256x2xbf16, #tpu.memory_space<vmem>>, vector<16x2xbf16>,
    %312 = vector.extract_strided_slice %302 {offsets = [0, 24], sizes = [16, 2], strides = [1, 1]} : vector<16x698xf32> to vector<16x2xf32>
    %313 = arith.truncf %312 : vector<16x2xf32> to vector<16x2xbf16>
    %c48 = arith.constant 48 : index
    %c0_91 = arith.constant 0 : index
    %314 = vector.load %arg11[%c48, %c0_91] : memref<256x2xbf16, #tpu.memory_space<vmem>>, vector<16x2xbf16>
    tpu.vector_store %arg11[%c48, %c0_91], %313 {strides = array<i32>} : memref<256x2xbf16, #tpu.memory_space<vmem>>, vector<16x2xbf16>,
    %315 = vector.extract_strided_slice %302 {offsets = [0, 224], sizes = [16, 2], strides = [1, 1]} : vector<16x698xf32> to vector<16x2xf32>
    %316 = arith.truncf %315 : vector<16x2xf32> to vector<16x2xbf16>
    %c64 = arith.constant 64 : index
    %c0_92 = arith.constant 0 : index
    %317 = vector.load %arg11[%c64, %c0_92] : memref<256x2xbf16, #tpu.memory_space<vmem>>, vector<16x2xbf16>
    tpu.vector_store %arg11[%c64, %c0_92], %316 {strides = array<i32>} : memref<256x2xbf16, #tpu.memory_space<vmem>>, vector<16x2xbf16>,
    %318 = vector.extract_strided_slice %302 {offsets = [0, 232], sizes = [16, 2], strides = [1, 1]} : vector<16x698xf32> to vector<16x2xf32>
    %319 = arith.truncf %318 : vector<16x2xf32> to vector<16x2xbf16>
    %c80 = arith.constant 80 : index
    %c0_93 = arith.constant 0 : index
    %320 = vector.load %arg11[%c80, %c0_93] : memref<256x2xbf16, #tpu.memory_space<vmem>>, vector<16x2xbf16>
    tpu.vector_store %arg11[%c80, %c0_93], %319 {strides = array<i32>} : memref<256x2xbf16, #tpu.memory_space<vmem>>, vector<16x2xbf16>,
    %321 = vector.extract_strided_slice %302 {offsets = [0, 240], sizes = [16, 2], strides = [1, 1]} : vector<16x698xf32> to vector<16x2xf32>
    %322 = arith.truncf %321 : vector<16x2xf32> to vector<16x2xbf16>
    %c96 = arith.constant 96 : index
    %c0_94 = arith.constant 0 : index
    %323 = vector.load %arg11[%c96, %c0_94] : memref<256x2xbf16, #tpu.memory_space<vmem>>, vector<16x2xbf16>
    tpu.vector_store %arg11[%c96, %c0_94], %322 {strides = array<i32>} : memref<256x2xbf16, #tpu.memory_space<vmem>>, vector<16x2xbf16>,
    %324 = vector.extract_strided_slice %302 {offsets = [0, 248], sizes = [16, 2], strides = [1, 1]} : vector<16x698xf32> to vector<16x2xf32>
    %325 = arith.truncf %324 : vector<16x2xf32> to vector<16x2xbf16>
    %c112 = arith.constant 112 : index
    %c0_95 = arith.constant 0 : index
    %326 = vector.load %arg11[%c112, %c0_95] : memref<256x2xbf16, #tpu.memory_space<vmem>>, vector<16x2xbf16>
    tpu.vector_store %arg11[%c112, %c0_95], %325 {strides = array<i32>} : memref<256x2xbf16, #tpu.memory_space<vmem>>, vector<16x2xbf16>,
    %327 = vector.extract_strided_slice %302 {offsets = [0, 448], sizes = [16, 2], strides = [1, 1]} : vector<16x698xf32> to vector<16x2xf32>
    %328 = arith.truncf %327 : vector<16x2xf32> to vector<16x2xbf16>
    %c128 = arith.constant 128 : index
    %c0_96 = arith.constant 0 : index
    %329 = vector.load %arg11[%c128, %c0_96] : memref<256x2xbf16, #tpu.memory_space<vmem>>, vector<16x2xbf16>
    tpu.vector_store %arg11[%c128, %c0_96], %328 {strides = array<i32>} : memref<256x2xbf16, #tpu.memory_space<vmem>>, vector<16x2xbf16>,
    %330 = vector.extract_strided_slice %302 {offsets = [0, 456], sizes = [16, 2], strides = [1, 1]} : vector<16x698xf32> to vector<16x2xf32>
    %331 = arith.truncf %330 : vector<16x2xf32> to vector<16x2xbf16>
    %c144 = arith.constant 144 : index
    %c0_97 = arith.constant 0 : index
    %332 = vector.load %arg11[%c144, %c0_97] : memref<256x2xbf16, #tpu.memory_space<vmem>>, vector<16x2xbf16>
    tpu.vector_store %arg11[%c144, %c0_97], %331 {strides = array<i32>} : memref<256x2xbf16, #tpu.memory_space<vmem>>, vector<16x2xbf16>,
    %333 = vector.extract_strided_slice %302 {offsets = [0, 464], sizes = [16, 2], strides = [1, 1]} : vector<16x698xf32> to vector<16x2xf32>
    %334 = arith.truncf %333 : vector<16x2xf32> to vector<16x2xbf16>
    %c160 = arith.constant 160 : index
    %c0_98 = arith.constant 0 : index
    %335 = vector.load %arg11[%c160, %c0_98] : memref<256x2xbf16, #tpu.memory_space<vmem>>, vector<16x2xbf16>
    tpu.vector_store %arg11[%c160, %c0_98], %334 {strides = array<i32>} : memref<256x2xbf16, #tpu.memory_space<vmem>>, vector<16x2xbf16>,
    %336 = vector.extract_strided_slice %302 {offsets = [0, 472], sizes = [16, 2], strides = [1, 1]} : vector<16x698xf32> to vector<16x2xf32>
    %337 = arith.truncf %336 : vector<16x2xf32> to vector<16x2xbf16>
    %c176 = arith.constant 176 : index
    %c0_99 = arith.constant 0 : index
    %338 = vector.load %arg11[%c176, %c0_99] : memref<256x2xbf16, #tpu.memory_space<vmem>>, vector<16x2xbf16>
    tpu.vector_store %arg11[%c176, %c0_99], %337 {strides = array<i32>} : memref<256x2xbf16, #tpu.memory_space<vmem>>, vector<16x2xbf16>,
    %339 = vector.extract_strided_slice %302 {offsets = [0, 672], sizes = [16, 2], strides = [1, 1]} : vector<16x698xf32> to vector<16x2xf32>
    %340 = arith.truncf %339 : vector<16x2xf32> to vector<16x2xbf16>
    %c192 = arith.constant 192 : index
    %c0_100 = arith.constant 0 : index
    %341 = vector.load %arg11[%c192, %c0_100] : memref<256x2xbf16, #tpu.memory_space<vmem>>, vector<16x2xbf16>
    tpu.vector_store %arg11[%c192, %c0_100], %340 {strides = array<i32>} : memref<256x2xbf16, #tpu.memory_space<vmem>>, vector<16x2xbf16>,
    %342 = vector.extract_strided_slice %302 {offsets = [0, 680], sizes = [16, 2], strides = [1, 1]} : vector<16x698xf32> to vector<16x2xf32>
    %343 = arith.truncf %342 : vector<16x2xf32> to vector<16x2xbf16>
    %c208 = arith.constant 208 : index
    %c0_101 = arith.constant 0 : index
    %344 = vector.load %arg11[%c208, %c0_101] : memref<256x2xbf16, #tpu.memory_space<vmem>>, vector<16x2xbf16>
    tpu.vector_store %arg11[%c208, %c0_101], %343 {strides = array<i32>} : memref<256x2xbf16, #tpu.memory_space<vmem>>, vector<16x2xbf16>,
    %345 = vector.extract_strided_slice %302 {offsets = [0, 688], sizes = [16, 2], strides = [1, 1]} : vector<16x698xf32> to vector<16x2xf32>
    %346 = arith.truncf %345 : vector<16x2xf32> to vector<16x2xbf16>
    %c224 = arith.constant 224 : index
    %c0_102 = arith.constant 0 : index
    %347 = vector.load %arg11[%c224, %c0_102] : memref<256x2xbf16, #tpu.memory_space<vmem>>, vector<16x2xbf16>
    tpu.vector_store %arg11[%c224, %c0_102], %346 {strides = array<i32>} : memref<256x2xbf16, #tpu.memory_space<vmem>>, vector<16x2xbf16>,
    %348 = vector.extract_strided_slice %302 {offsets = [0, 696], sizes = [16, 2], strides = [1, 1]} : vector<16x698xf32> to vector<16x2xf32>
    %349 = arith.truncf %348 : vector<16x2xf32> to vector<16x2xbf16>
    %c240 = arith.constant 240 : index
    %c0_103 = arith.constant 0 : index
    %350 = vector.load %arg11[%c240, %c0_103] : memref<256x2xbf16, #tpu.memory_space<vmem>>, vector<16x2xbf16>
    tpu.vector_store %arg11[%c240, %c0_103], %349 {strides = array<i32>} : memref<256x2xbf16, #tpu.memory_space<vmem>>, vector<16x2xbf16>,
    %c0_104 = arith.constant 0 : index
    %c0_105 = arith.constant 0 : index
    %351 = vector.load %arg6[%c0_104, %c0_105] : memref<32x256xbf16, #tpu.memory_space<vmem>>, vector<32x256xbf16>
    %c0_106 = arith.constant 0 : index
    %c0_107 = arith.constant 0 : index
    %352 = vector.load %arg11[%c0_106, %c0_107] : memref<256x2xbf16, #tpu.memory_space<vmem>>, vector<256x2xbf16>
    %cst_108 = arith.constant dense<0.000000e+00> : vector<32x2xf32>
    %353 = tpu.matmul %351, %352, %cst_108 {dimension_numbers = #tpu.dot_dimension_numbers<[1], [0], [0], [1], [0, 0, 1, 1], [], []>} : vector<32x256xbf16>, vector<256x2xbf16>, vector<32x2xf32> -> vector<32x2xf32>
    %c0_109 = arith.constant 0 : index
    %c0_110 = arith.constant 0 : index
    %354 = vector.load %arg7[%c0_109, %c0_110] : memref<32x1xf32, #tpu.memory_space<vmem>>, vector<32x1xf32>
    %355 = vector.broadcast %354 : vector<32x1xf32> to vector<32x2xf32>
    %356 = arith.addf %353, %355 : vector<32x2xf32>
    %cst_111 = arith.constant 0.000000e+00 : f32
    %357 = vector.broadcast %cst_111 : f32 to vector<32x2xf32>
    %358 = arith.maximumf %356, %357 : vector<32x2xf32>
    %c0_112 = arith.constant 0 : index
    %c0_113 = arith.constant 0 : index
    %359 = vector.load %arg8[%c0_112, %c0_113] : memref<10x32xf32, #tpu.memory_space<vmem>>, vector<10x32xf32>
    %cst_114 = arith.constant dense<0.000000e+00> : vector<10x2xf32>
    %360 = tpu.matmul %359, %358, %cst_114 {dimension_numbers = #tpu.dot_dimension_numbers<[1], [0], [0], [1], [0, 0, 1, 1], [], []>} : vector<10x32xf32>, vector<32x2xf32>, vector<10x2xf32> -> vector<10x2xf32>
    %c0_115 = arith.constant 0 : index
    %c0_116 = arith.constant 0 : index
    %361 = vector.load %arg9[%c0_115, %c0_116] : memref<10x1xf32, #tpu.memory_space<vmem>>, vector<10x1xf32>
    %362 = vector.broadcast %361 : vector<10x1xf32> to vector<10x2xf32>
    %363 = arith.addf %360, %362 : vector<10x2xf32>
    %c0_117 = arith.constant 0 : index
    %c0_118 = arith.constant 0 : index
    %364 = vector.load %arg10[%c0_117, %c0_118] : memref<10x2xf32, #tpu.memory_space<vmem>>, vector<10x2xf32>
    tpu.vector_store %arg10[%c0_117, %c0_118], %363 {strides = array<i32>} : memref<10x2xf32, #tpu.memory_space<vmem>>, vector<10x2xf32>,
    return
  }
  func.func @transform_0(%arg0: i32) -> (i32, i32) {
    %c0_i32 = arith.constant 0 : i32
    %c0_i32_0 = arith.constant 0 : i32
    %c0_i32_1 = arith.constant 0 : i32
    return %c0_i32, %c0_i32_0 : i32, i32
  }
  func.func @transform_1(%arg0: i32) -> (i32, i32) {
    %c0_i32 = arith.constant 0 : i32
    %c0_i32_0 = arith.constant 0 : i32
    %c0_i32_1 = arith.constant 0 : i32
    return %c0_i32, %c0_i32_0 : i32, i32
  }
  func.func @transform_2(%arg0: i32) -> (i32, i32) {
    %c0_i32 = arith.constant 0 : i32
    %c0_i32_0 = arith.constant 0 : i32
    %c0_i32_1 = arith.constant 0 : i32
    return %c0_i32, %c0_i32_0 : i32, i32
  }
  func.func @transform_3(%arg0: i32) -> (i32, i32, i32) {
    %c0_i32 = arith.constant 0 : i32
    %c0_i32_0 = arith.constant 0 : i32
    %c0_i32_1 = arith.constant 0 : i32
    %c0_i32_2 = arith.constant 0 : i32
    return %c0_i32, %c0_i32_0, %c0_i32_1 : i32, i32, i32
  }
  func.func @transform_4(%arg0: i32) -> (i32, i32) {
    %c0_i32 = arith.constant 0 : i32
    %c0_i32_0 = arith.constant 0 : i32
    %c0_i32_1 = arith.constant 0 : i32
    return %c0_i32, %c0_i32_0 : i32, i32
  }
  func.func @transform_5(%arg0: i32) -> (i32, i32) {
    %c0_i32 = arith.constant 0 : i32
    %c0_i32_0 = arith.constant 0 : i32
    %c0_i32_1 = arith.constant 0 : i32
    return %c0_i32, %c0_i32_0 : i32, i32
  }
  func.func @transform_6(%arg0: i32) -> (i32, i32) {
    %c0_i32 = arith.constant 0 : i32
    %c0_i32_0 = arith.constant 0 : i32
    %c0_i32_1 = arith.constant 0 : i32
    return %c0_i32, %c0_i32_0 : i32, i32
  }
  func.func @transform_7(%arg0: i32) -> (i32, i32) {
    %c0_i32 = arith.constant 0 : i32
    %c0_i32_0 = arith.constant 0 : i32
    %c0_i32_1 = arith.constant 0 : i32
    return %c0_i32, %c0_i32_0 : i32, i32
  }
  func.func @transform_8(%arg0: i32) -> (i32, i32) {
    %c0_i32 = arith.constant 0 : i32
    %c0_i32_0 = arith.constant 0 : i32
    %c0_i32_1 = arith.constant 0 : i32
    return %c0_i32, %c0_i32_0 : i32, i32
  }
  func.func @transform_9(%arg0: i32) -> (i32, i32) {
    %c0_i32 = arith.constant 0 : i32
    %c0_i32_0 = arith.constant 0 : i32
    %c0_i32_1 = arith.constant 0 : i32
    return %c0_i32, %c0_i32_0 : i32, i32
  }
}

</mosaic_0001>

<llo_original>
// kernel: lenet5_forward.1
$region0: #{lenet5_forward.1}
  #allocation0 [shape = 'u32[]', space=smem, size = 0x4, offset = 0x4, fixed_abs, tag = 'smem constant byte address 0x4 - core index']
  #allocation1 [shape = 'u32[144,128]{1,0:T(1,128)}', space=vmem, size = 0x12000, scoped, tag = 'internal scratch']
  #allocation2 [shape = 'bf16[256,2]{1,0:T(16,128)(2,1)}', space=vmem, size = 0x10000, scoped, tag = 'scratch operand']
  %s0 = inlined_call_operand.vmem [shape: f32[8,1568], index: 0, kind: input, shape index: {}]
  %s1 = inlined_call_operand.vmem [shape: f32[8,25], index: 1, kind: input, shape index: {}]
  %s2 = inlined_call_operand.vmem [shape: f32[8,1], index: 2, kind: input, shape index: {}]
  %s3 = inlined_call_operand.vmem [shape: bf16[25,16,8], index: 3, kind: input, shape index: {}]
  %s4 = inlined_call_operand.vmem [shape: f32[16,1], index: 4, kind: input, shape index: {}]
  %s5 = inlined_call_operand.vmem [shape: bf16[32,256], index: 5, kind: input, shape index: {}]
  %s6 = inlined_call_operand.vmem [shape: f32[32,1], index: 6, kind: input, shape index: {}]
  %s7 = inlined_call_operand.vmem [shape: f32[10,32], index: 7, kind: input, shape index: {}]
  %s8 = inlined_call_operand.vmem [shape: f32[10,1], index: 8, kind: input, shape index: {}]
  %s9 = inlined_call_operand.vmem [shape: f32[10,2], index: 9, kind: output, shape index: {}]
  %s10 = sld [smem:[#allocation0]]
  $region46: #{lenet5_forward.1} parent=0
    _
  %s12 = ssub.s32 1, %s10
  %s13 = scalar_select 0, %s12, %s10
  // Predicated region
  $region2: #{lenet5_forward.1} parent=0 // pred_check
    _
  $region3: #{lenet5_forward.1} parent=0 // pred_check_branch
    %15 = sbr.rel (0) target = $region5
  $region4: #{lenet5_forward.1} parent=0 // pred_region
    _
  $region5: #{lenet5_forward.1} parent=0 // pred_fallthru
    _
  // Predicated region
  $region6: #{lenet5_forward.1} parent=0 // pred_check
    _
  $region7: #{lenet5_forward.1} parent=0 // pred_check_branch
    %17 = sbr.rel (0) target = $region9
  $region8: #{lenet5_forward.1} parent=0 // pred_region
    _
  $region9: #{lenet5_forward.1} parent=0 // pred_fallthru
    _
  // Predicated region
  $region10: #{lenet5_forward.1} parent=0 // pred_check
    _
  $region11: #{lenet5_forward.1} parent=0 // pred_check_branch
    %19 = sbr.rel (0) target = $region13
  $region12: #{lenet5_forward.1} parent=0 // pred_region
    _
  $region13: #{lenet5_forward.1} parent=0 // pred_fallthru
    _
  // Predicated region
  $region14: #{lenet5_forward.1} parent=0 // pred_check
    _
  $region15: #{lenet5_forward.1} parent=0 // pred_check_branch
    %21 = sbr.rel (0) target = $region17
  $region16: #{lenet5_forward.1} parent=0 // pred_region
    _
  $region17: #{lenet5_forward.1} parent=0 // pred_fallthru
    _
  // Predicated region
  $region18: #{lenet5_forward.1} parent=0 // pred_check
    _
  $region19: #{lenet5_forward.1} parent=0 // pred_check_branch
    %23 = sbr.rel (0) target = $region21
  $region20: #{lenet5_forward.1} parent=0 // pred_region
    _
  $region21: #{lenet5_forward.1} parent=0 // pred_fallthru
    _
  // Predicated region
  $region22: #{lenet5_forward.1} parent=0 // pred_check
    _
  $region23: #{lenet5_forward.1} parent=0 // pred_check_branch
    %25 = sbr.rel (0) target = $region25
  $region24: #{lenet5_forward.1} parent=0 // pred_region
    _
  $region25: #{lenet5_forward.1} parent=0 // pred_fallthru
    _
  // Predicated region
  $region26: #{lenet5_forward.1} parent=0 // pred_check
    _
  $region27: #{lenet5_forward.1} parent=0 // pred_check_branch
    %27 = sbr.rel (0) target = $region29
  $region28: #{lenet5_forward.1} parent=0 // pred_region
    _
  $region29: #{lenet5_forward.1} parent=0 // pred_fallthru
    _
  // Predicated region
  $region30: #{lenet5_forward.1} parent=0 // pred_check
    _
  $region31: #{lenet5_forward.1} parent=0 // pred_check_branch
    %29 = sbr.rel (0) target = $region33
  $region32: #{lenet5_forward.1} parent=0 // pred_region
    _
  $region33: #{lenet5_forward.1} parent=0 // pred_fallthru
    _
  // Predicated region
  $region34: #{lenet5_forward.1} parent=0 // pred_check
    _
  $region35: #{lenet5_forward.1} parent=0 // pred_check_branch
    %31 = sbr.rel (0) target = $region37
  $region36: #{lenet5_forward.1} parent=0 // pred_region
    _
  $region37: #{lenet5_forward.1} parent=0 // pred_fallthru
    _
  %v33 = vld [vmem:[%s0] sm:$0xff]
  %v34 = vld [vmem:[%s0 + $0x8] sm:$0xff]
  %v35 = vld [vmem:[%s0 + $0x10] sm:$0xff]
  %v36 = vld [vmem:[%s0 + $0x18] sm:$0xff]
  %v37 = vld [vmem:[%s0 + $0x20] sm:$0xff]
  %v38 = vld [vmem:[%s0 + $0x28] sm:$0xff]
  %v39 = vld [vmem:[%s0 + $0x30] sm:$0xff]
  %v40 = vld [vmem:[%s0 + $0x38] sm:$0xff]
  %v41 = vld [vmem:[%s0 + $0x40] sm:$0xff]
  %v42 = vld [vmem:[%s0 + $0x48] sm:$0xff]
  %v43 = vld [vmem:[%s0 + $0x50] sm:$0xff]
  %v44 = vld [vmem:[%s0 + $0x58] sm:$0xff]
  %v45 = vld [vmem:[%s0 + $0x60] sm:$0xff]
  %v46 = vld [vmem:[%s1] sm:$0xff]
  %48 = vset.pattern.permute.xlu0 0
  %49 = vperm.xlu0 %48, %v46
  %v50 = vpop.permute.xlu0 %49
  %v52 = vmul.f32 %v50, %v33
  %v53 = vmul.f32 %v50, %v34
  %v54 = vmul.f32 %v50, %v35
  %v55 = vmul.f32 %v50, %v36
  %v56 = vmul.f32 %v50, %v37
  %v57 = vmul.f32 %v50, %v38
  %v58 = vmul.f32 %v50, %v39
  %v59 = vmul.f32 %v50, %v40
  %v60 = vmul.f32 %v50, %v41
  %v61 = vmul.f32 %v50, %v42
  %v62 = vmul.f32 %v50, %v43
  %v63 = vadd.f32 %v52, 0.0
  %v64 = vadd.f32 %v53, 0.0
  %v65 = vadd.f32 %v54, 0.0
  %v66 = vadd.f32 %v55, 0.0
  %v67 = vadd.f32 %v56, 0.0
  %v68 = vadd.f32 %v57, 0.0
  %v69 = vadd.f32 %v58, 0.0
  %v70 = vadd.f32 %v59, 0.0
  %v71 = vadd.f32 %v60, 0.0
  %v72 = vadd.f32 %v61, 0.0
  %v73 = vadd.f32 %v62, 0.0
  %74 = vset.pattern.permute.xlu0 1
  %75 = vperm.xlu0 %74, %v46
  %v76 = vpop.permute.xlu0 %75
  %v78 = vmul.f32 %v76, %v33
  %v79 = vmul.f32 %v76, %v34
  %v80 = vmul.f32 %v76, %v35
  %v81 = vmul.f32 %v76, %v36
  %v82 = vmul.f32 %v76, %v37
  %v83 = vmul.f32 %v76, %v38
  %v84 = vmul.f32 %v76, %v39
  %v85 = vmul.f32 %v76, %v40
  %v86 = vmul.f32 %v76, %v41
  %v87 = vmul.f32 %v76, %v42
  %v88 = vmul.f32 %v76, %v43
  %100 = vrot.lane.b32.xlu0 %v78, 126
  %v101 = vpop.permute.xlu0 %100
  %102 = vrot.lane.b32.xlu0 %v79, 126
  %v103 = vpop.permute.xlu0 %102
  %104 = vrot.lane.b32.xlu0 %v80, 126
  %v105 = vpop.permute.xlu0 %104
  %106 = vrot.lane.b32.xlu0 %v81, 126
  %v107 = vpop.permute.xlu0 %106
  %108 = vrot.lane.b32.xlu0 %v82, 126
  %v109 = vpop.permute.xlu0 %108
  %110 = vrot.lane.b32.xlu0 %v83, 126
  %v111 = vpop.permute.xlu0 %110
  %112 = vrot.lane.b32.xlu0 %v84, 126
  %v113 = vpop.permute.xlu0 %112
  %114 = vrot.lane.b32.xlu0 %v85, 126
  %v115 = vpop.permute.xlu0 %114
  %116 = vrot.lane.b32.xlu0 %v86, 126
  %v117 = vpop.permute.xlu0 %116
  %118 = vrot.lane.b32.xlu0 %v87, 126
  %v119 = vpop.permute.xlu0 %118
  %120 = vrot.lane.b32.xlu0 %v88, 126
  %v121 = vpop.permute.xlu0 %120
  %vm122 = vcmask 1031168
  %v123 = vsel %vm122, %v101, %v103
  %v124 = vsel %vm122, %v103, %v105
  %v125 = vsel %vm122, %v105, %v107
  %v126 = vsel %vm122, %v107, %v109
  %v127 = vsel %vm122, %v109, %v111
  %v128 = vsel %vm122, %v111, %v113
  %v129 = vsel %vm122, %v113, %v115
  %v130 = vsel %vm122, %v115, %v117
  %v131 = vsel %vm122, %v117, %v119
  %v132 = vsel %vm122, %v119, %v121
  %v144 = vadd.f32 %v63, %v123
  %v145 = vadd.f32 %v64, %v124
  %v146 = vadd.f32 %v65, %v125
  %v147 = vadd.f32 %v66, %v126
  %v148 = vadd.f32 %v67, %v127
  %v149 = vadd.f32 %v68, %v128
  %v150 = vadd.f32 %v69, %v129
  %v151 = vadd.f32 %v70, %v130
  %v152 = vadd.f32 %v71, %v131
  %v153 = vadd.f32 %v72, %v132
  %v154 = vadd.f32 %v73, %v121
  %155 = vset.pattern.permute.xlu0 2
  %156 = vperm.xlu0 %155, %v46
  %v157 = vpop.permute.xlu0 %156
  %v159 = vmul.f32 %v157, %v33
  %v160 = vmul.f32 %v157, %v34
  %v161 = vmul.f32 %v157, %v35
  %v162 = vmul.f32 %v157, %v36
  %v163 = vmul.f32 %v157, %v37
  %v164 = vmul.f32 %v157, %v38
  %v165 = vmul.f32 %v157, %v39
  %v166 = vmul.f32 %v157, %v40
  %v167 = vmul.f32 %v157, %v41
  %v168 = vmul.f32 %v157, %v42
  %v169 = vmul.f32 %v157, %v43
  %181 = vrot.lane.b32.xlu0 %v159, 124
  %v182 = vpop.permute.xlu0 %181
  %183 = vrot.lane.b32.xlu0 %v160, 124
  %v184 = vpop.permute.xlu0 %183
  %185 = vrot.lane.b32.xlu0 %v161, 124
  %v186 = vpop.permute.xlu0 %185
  %187 = vrot.lane.b32.xlu0 %v162, 124
  %v188 = vpop.permute.xlu0 %187
  %189 = vrot.lane.b32.xlu0 %v163, 124
  %v190 = vpop.permute.xlu0 %189
  %191 = vrot.lane.b32.xlu0 %v164, 124
  %v192 = vpop.permute.xlu0 %191
  %193 = vrot.lane.b32.xlu0 %v165, 124
  %v194 = vpop.permute.xlu0 %193
  %195 = vrot.lane.b32.xlu0 %v166, 124
  %v196 = vpop.permute.xlu0 %195
  %197 = vrot.lane.b32.xlu0 %v167, 124
  %v198 = vpop.permute.xlu0 %197
  %199 = vrot.lane.b32.xlu0 %v168, 124
  %v200 = vpop.permute.xlu0 %199
  %201 = vrot.lane.b32.xlu0 %v169, 124
  %v202 = vpop.permute.xlu0 %201
  %vm203 = vcmask 1014784
  %v204 = vsel %vm203, %v182, %v184
  %v205 = vsel %vm203, %v184, %v186
  %v206 = vsel %vm203, %v186, %v188
  %v207 = vsel %vm203, %v188, %v190
  %v208 = vsel %vm203, %v190, %v192
  %v209 = vsel %vm203, %v192, %v194
  %v210 = vsel %vm203, %v194, %v196
  %v211 = vsel %vm203, %v196, %v198
  %v212 = vsel %vm203, %v198, %v200
  %v213 = vsel %vm203, %v200, %v202
  %v225 = vadd.f32 %v144, %v204
  %v226 = vadd.f32 %v145, %v205
  %v227 = vadd.f32 %v146, %v206
  %v228 = vadd.f32 %v147, %v207
  %v229 = vadd.f32 %v148, %v208
  %v230 = vadd.f32 %v149, %v209
  %v231 = vadd.f32 %v150, %v210
  %v232 = vadd.f32 %v151, %v211
  %v233 = vadd.f32 %v152, %v212
  %v234 = vadd.f32 %v153, %v213
  %v235 = vadd.f32 %v154, %v202
  %236 = vset.pattern.permute.xlu0 3
  %237 = vperm.xlu0 %236, %v46
  %v238 = vpop.permute.xlu0 %237
  %v240 = vmul.f32 %v238, %v33
  %v241 = vmul.f32 %v238, %v34
  %v242 = vmul.f32 %v238, %v35
  %v243 = vmul.f32 %v238, %v36
  %v244 = vmul.f32 %v238, %v37
  %v245 = vmul.f32 %v238, %v38
  %v246 = vmul.f32 %v238, %v39
  %v247 = vmul.f32 %v238, %v40
  %v248 = vmul.f32 %v238, %v41
  %v249 = vmul.f32 %v238, %v42
  %v250 = vmul.f32 %v238, %v43
  %262 = vrot.lane.b32.xlu0 %v240, 122
  %v263 = vpop.permute.xlu0 %262
  %264 = vrot.lane.b32.xlu0 %v241, 122
  %v265 = vpop.permute.xlu0 %264
  %266 = vrot.lane.b32.xlu0 %v242, 122
  %v267 = vpop.permute.xlu0 %266
  %268 = vrot.lane.b32.xlu0 %v243, 122
  %v269 = vpop.permute.xlu0 %268
  %270 = vrot.lane.b32.xlu0 %v244, 122
  %v271 = vpop.permute.xlu0 %270
  %272 = vrot.lane.b32.xlu0 %v245, 122
  %v273 = vpop.permute.xlu0 %272
  %274 = vrot.lane.b32.xlu0 %v246, 122
  %v275 = vpop.permute.xlu0 %274
  %276 = vrot.lane.b32.xlu0 %v247, 122
  %v277 = vpop.permute.xlu0 %276
  %278 = vrot.lane.b32.xlu0 %v248, 122
  %v279 = vpop.permute.xlu0 %278
  %280 = vrot.lane.b32.xlu0 %v249, 122
  %v281 = vpop.permute.xlu0 %280
  %282 = vrot.lane.b32.xlu0 %v250, 122
  %v283 = vpop.permute.xlu0 %282
  %vm284 = vcmask 998400
  %v285 = vsel %vm284, %v263, %v265
  %v286 = vsel %vm284, %v265, %v267
  %v287 = vsel %vm284, %v267, %v269
  %v288 = vsel %vm284, %v269, %v271
  %v289 = vsel %vm284, %v271, %v273
  %v290 = vsel %vm284, %v273, %v275
  %v291 = vsel %vm284, %v275, %v277
  %v292 = vsel %vm284, %v277, %v279
  %v293 = vsel %vm284, %v279, %v281
  %v294 = vsel %vm284, %v281, %v283
  %v306 = vadd.f32 %v225, %v285
  %v307 = vadd.f32 %v226, %v286
  %v308 = vadd.f32 %v227, %v287
  %v309 = vadd.f32 %v228, %v288
  %v310 = vadd.f32 %v229, %v289
  %v311 = vadd.f32 %v230, %v290
  %v312 = vadd.f32 %v231, %v291
  %v313 = vadd.f32 %v232, %v292
  %v314 = vadd.f32 %v233, %v293
  %v315 = vadd.f32 %v234, %v294
  %v316 = vadd.f32 %v235, %v283
  %317 = vset.pattern.permute.xlu0 4
  %318 = vperm.xlu0 %317, %v46
  %v319 = vpop.permute.xlu0 %318
  %v321 = vmul.f32 %v319, %v33
  %v322 = vmul.f32 %v319, %v34
  %v323 = vmul.f32 %v319, %v35
  %v324 = vmul.f32 %v319, %v36
  %v325 = vmul.f32 %v319, %v37
  %v326 = vmul.f32 %v319, %v38
  %v327 = vmul.f32 %v319, %v39
  %v328 = vmul.f32 %v319, %v40
  %v329 = vmul.f32 %v319, %v41
  %v330 = vmul.f32 %v319, %v42
  %v331 = vmul.f32 %v319, %v43
  %343 = vrot.lane.b32.xlu0 %v321, 120
  %v344 = vpop.permute.xlu0 %343
  %345 = vrot.lane.b32.xlu0 %v322, 120
  %v346 = vpop.permute.xlu0 %345
  %347 = vrot.lane.b32.xlu0 %v323, 120
  %v348 = vpop.permute.xlu0 %347
  %349 = vrot.lane.b32.xlu0 %v324, 120
  %v350 = vpop.permute.xlu0 %349
  %351 = vrot.lane.b32.xlu0 %v325, 120
  %v352 = vpop.permute.xlu0 %351
  %353 = vrot.lane.b32.xlu0 %v326, 120
  %v354 = vpop.permute.xlu0 %353
  %355 = vrot.lane.b32.xlu0 %v327, 120
  %v356 = vpop.permute.xlu0 %355
  %357 = vrot.lane.b32.xlu0 %v328, 120
  %v358 = vpop.permute.xlu0 %357
  %359 = vrot.lane.b32.xlu0 %v329, 120
  %v360 = vpop.permute.xlu0 %359
  %361 = vrot.lane.b32.xlu0 %v330, 120
  %v362 = vpop.permute.xlu0 %361
  %363 = vrot.lane.b32.xlu0 %v331, 120
  %v364 = vpop.permute.xlu0 %363
  %vm365 = vcmask 982016
  %v366 = vsel %vm365, %v344, %v346
  %v367 = vsel %vm365, %v346, %v348
  %v368 = vsel %vm365, %v348, %v350
  %v369 = vsel %vm365, %v350, %v352
  %v370 = vsel %vm365, %v352, %v354
  %v371 = vsel %vm365, %v354, %v356
  %v372 = vsel %vm365, %v356, %v358
  %v373 = vsel %vm365, %v358, %v360
  %v374 = vsel %vm365, %v360, %v362
  %v375 = vsel %vm365, %v362, %v364
  %v387 = vadd.f32 %v306, %v366
  %v388 = vadd.f32 %v307, %v367
  %v389 = vadd.f32 %v308, %v368
  %v390 = vadd.f32 %v309, %v369
  %v391 = vadd.f32 %v310, %v370
  %v392 = vadd.f32 %v311, %v371
  %v393 = vadd.f32 %v312, %v372
  %v394 = vadd.f32 %v313, %v373
  %v395 = vadd.f32 %v314, %v374
  %v396 = vadd.f32 %v315, %v375
  %v397 = vadd.f32 %v316, %v364
  %398 = vset.pattern.permute.xlu0 5
  %399 = vperm.xlu0 %398, %v46
  %v400 = vpop.permute.xlu0 %399
  %v402 = vmul.f32 %v400, %v33
  %v403 = vmul.f32 %v400, %v34
  %v404 = vmul.f32 %v400, %v35
  %v405 = vmul.f32 %v400, %v36
  %v406 = vmul.f32 %v400, %v37
  %v407 = vmul.f32 %v400, %v38
  %v408 = vmul.f32 %v400, %v39
  %v409 = vmul.f32 %v400, %v40
  %v410 = vmul.f32 %v400, %v41
  %v411 = vmul.f32 %v400, %v42
  %v412 = vmul.f32 %v400, %v43
  %424 = vrot.lane.b32.xlu0 %v402, 72
  %v425 = vpop.permute.xlu0 %424
  %426 = vrot.lane.b32.xlu0 %v403, 72
  %v427 = vpop.permute.xlu0 %426
  %428 = vrot.lane.b32.xlu0 %v404, 72
  %v429 = vpop.permute.xlu0 %428
  %430 = vrot.lane.b32.xlu0 %v405, 72
  %v431 = vpop.permute.xlu0 %430
  %432 = vrot.lane.b32.xlu0 %v406, 72
  %v433 = vpop.permute.xlu0 %432
  %434 = vrot.lane.b32.xlu0 %v407, 72
  %v435 = vpop.permute.xlu0 %434
  %436 = vrot.lane.b32.xlu0 %v408, 72
  %v437 = vpop.permute.xlu0 %436
  %438 = vrot.lane.b32.xlu0 %v409, 72
  %v439 = vpop.permute.xlu0 %438
  %440 = vrot.lane.b32.xlu0 %v410, 72
  %v441 = vpop.permute.xlu0 %440
  %442 = vrot.lane.b32.xlu0 %v411, 72
  %v443 = vpop.permute.xlu0 %442
  %444 = vrot.lane.b32.xlu0 %v412, 72
  %v445 = vpop.permute.xlu0 %444
  %vm446 = vcmask 588800
  %v447 = vsel %vm446, %v425, %v427
  %v448 = vsel %vm446, %v427, %v429
  %v449 = vsel %vm446, %v429, %v431
  %v450 = vsel %vm446, %v431, %v433
  %v451 = vsel %vm446, %v433, %v435
  %v452 = vsel %vm446, %v435, %v437
  %v453 = vsel %vm446, %v437, %v439
  %v454 = vsel %vm446, %v439, %v441
  %v455 = vsel %vm446, %v441, %v443
  %v456 = vsel %vm446, %v443, %v445
  %v468 = vadd.f32 %v387, %v447
  %v469 = vadd.f32 %v388, %v448
  %v470 = vadd.f32 %v389, %v449
  %v471 = vadd.f32 %v390, %v450
  %v472 = vadd.f32 %v391, %v451
  %v473 = vadd.f32 %v392, %v452
  %v474 = vadd.f32 %v393, %v453
  %v475 = vadd.f32 %v394, %v454
  %v476 = vadd.f32 %v395, %v455
  %v477 = vadd.f32 %v396, %v456
  %v478 = vadd.f32 %v397, %v445
  %479 = vset.pattern.permute.xlu0 6
  %480 = vperm.xlu0 %479, %v46
  %v481 = vpop.permute.xlu0 %480
  %v483 = vmul.f32 %v481, %v33
  %v484 = vmul.f32 %v481, %v34
  %v485 = vmul.f32 %v481, %v35
  %v486 = vmul.f32 %v481, %v36
  %v487 = vmul.f32 %v481, %v37
  %v488 = vmul.f32 %v481, %v38
  %v489 = vmul.f32 %v481, %v39
  %v490 = vmul.f32 %v481, %v40
  %v491 = vmul.f32 %v481, %v41
  %v492 = vmul.f32 %v481, %v42
  %v493 = vmul.f32 %v481, %v43
  %505 = vrot.lane.b32.xlu0 %v483, 70
  %v506 = vpop.permute.xlu0 %505
  %507 = vrot.lane.b32.xlu0 %v484, 70
  %v508 = vpop.permute.xlu0 %507
  %509 = vrot.lane.b32.xlu0 %v485, 70
  %v510 = vpop.permute.xlu0 %509
  %511 = vrot.lane.b32.xlu0 %v486, 70
  %v512 = vpop.permute.xlu0 %511
  %513 = vrot.lane.b32.xlu0 %v487, 70
  %v514 = vpop.permute.xlu0 %513
  %515 = vrot.lane.b32.xlu0 %v488, 70
  %v516 = vpop.permute.xlu0 %515
  %517 = vrot.lane.b32.xlu0 %v489, 70
  %v518 = vpop.permute.xlu0 %517
  %519 = vrot.lane.b32.xlu0 %v490, 70
  %v520 = vpop.permute.xlu0 %519
  %521 = vrot.lane.b32.xlu0 %v491, 70
  %v522 = vpop.permute.xlu0 %521
  %523 = vrot.lane.b32.xlu0 %v492, 70
  %v524 = vpop.permute.xlu0 %523
  %525 = vrot.lane.b32.xlu0 %v493, 70
  %v526 = vpop.permute.xlu0 %525
  %vm527 = vcmask 572416
  %v528 = vsel %vm527, %v506, %v508
  %v529 = vsel %vm527, %v508, %v510
  %v530 = vsel %vm527, %v510, %v512
  %v531 = vsel %vm527, %v512, %v514
  %v532 = vsel %vm527, %v514, %v516
  %v533 = vsel %vm527, %v516, %v518
  %v534 = vsel %vm527, %v518, %v520
  %v535 = vsel %vm527, %v520, %v522
  %v536 = vsel %vm527, %v522, %v524
  %v537 = vsel %vm527, %v524, %v526
  %v549 = vadd.f32 %v468, %v528
  %v550 = vadd.f32 %v469, %v529
  %v551 = vadd.f32 %v470, %v530
  %v552 = vadd.f32 %v471, %v531
  %v553 = vadd.f32 %v472, %v532
  %v554 = vadd.f32 %v473, %v533
  %v555 = vadd.f32 %v474, %v534
  %v556 = vadd.f32 %v475, %v535
  %v557 = vadd.f32 %v476, %v536
  %v558 = vadd.f32 %v477, %v537
  %v559 = vadd.f32 %v478, %v526
  %560 = vset.pattern.permute.xlu0 7
  %561 = vperm.xlu0 %560, %v46
  %v562 = vpop.permute.xlu0 %561
  %v564 = vmul.f32 %v562, %v33
  %v565 = vmul.f32 %v562, %v34
  %v566 = vmul.f32 %v562, %v35
  %v567 = vmul.f32 %v562, %v36
  %v568 = vmul.f32 %v562, %v37
  %v569 = vmul.f32 %v562, %v38
  %v570 = vmul.f32 %v562, %v39
  %v571 = vmul.f32 %v562, %v40
  %v572 = vmul.f32 %v562, %v41
  %v573 = vmul.f32 %v562, %v42
  %v574 = vmul.f32 %v562, %v43
  %586 = vrot.lane.b32.xlu0 %v564, 68
  %v587 = vpop.permute.xlu0 %586
  %588 = vrot.lane.b32.xlu0 %v565, 68
  %v589 = vpop.permute.xlu0 %588
  %590 = vrot.lane.b32.xlu0 %v566, 68
  %v591 = vpop.permute.xlu0 %590
  %592 = vrot.lane.b32.xlu0 %v567, 68
  %v593 = vpop.permute.xlu0 %592
  %594 = vrot.lane.b32.xlu0 %v568, 68
  %v595 = vpop.permute.xlu0 %594
  %596 = vrot.lane.b32.xlu0 %v569, 68
  %v597 = vpop.permute.xlu0 %596
  %598 = vrot.lane.b32.xlu0 %v570, 68
  %v599 = vpop.permute.xlu0 %598
  %600 = vrot.lane.b32.xlu0 %v571, 68
  %v601 = vpop.permute.xlu0 %600
  %602 = vrot.lane.b32.xlu0 %v572, 68
  %v603 = vpop.permute.xlu0 %602
  %604 = vrot.lane.b32.xlu0 %v573, 68
  %v605 = vpop.permute.xlu0 %604
  %606 = vrot.lane.b32.xlu0 %v574, 68
  %v607 = vpop.permute.xlu0 %606
  %vm608 = vcmask 556032
  %v609 = vsel %vm608, %v587, %v589
  %v610 = vsel %vm608, %v589, %v591
  %v611 = vsel %vm608, %v591, %v593
  %v612 = vsel %vm608, %v593, %v595
  %v613 = vsel %vm608, %v595, %v597
  %v614 = vsel %vm608, %v597, %v599
  %v615 = vsel %vm608, %v599, %v601
  %v616 = vsel %vm608, %v601, %v603
  %v617 = vsel %vm608, %v603, %v605
  %v618 = vsel %vm608, %v605, %v607
  %v630 = vadd.f32 %v549, %v609
  %v631 = vadd.f32 %v550, %v610
  %v632 = vadd.f32 %v551, %v611
  %v633 = vadd.f32 %v552, %v612
  %v634 = vadd.f32 %v553, %v613
  %v635 = vadd.f32 %v554, %v614
  %v636 = vadd.f32 %v555, %v615
  %v637 = vadd.f32 %v556, %v616
  %v638 = vadd.f32 %v557, %v617
  %v639 = vadd.f32 %v558, %v618
  %v640 = vadd.f32 %v559, %v607
  %641 = vset.pattern.permute.xlu0 8
  %642 = vperm.xlu0 %641, %v46
  %v643 = vpop.permute.xlu0 %642
  %v645 = vmul.f32 %v643, %v33
  %v646 = vmul.f32 %v643, %v34
  %v647 = vmul.f32 %v643, %v35
  %v648 = vmul.f32 %v643, %v36
  %v649 = vmul.f32 %v643, %v37
  %v650 = vmul.f32 %v643, %v38
  %v651 = vmul.f32 %v643, %v39
  %v652 = vmul.f32 %v643, %v40
  %v653 = vmul.f32 %v643, %v41
  %v654 = vmul.f32 %v643, %v42
  %v655 = vmul.f32 %v643, %v43
  %667 = vrot.lane.b32.xlu0 %v645, 66
  %v668 = vpop.permute.xlu0 %667
  %669 = vrot.lane.b32.xlu0 %v646, 66
  %v670 = vpop.permute.xlu0 %669
  %671 = vrot.lane.b32.xlu0 %v647, 66
  %v672 = vpop.permute.xlu0 %671
  %673 = vrot.lane.b32.xlu0 %v648, 66
  %v674 = vpop.permute.xlu0 %673
  %675 = vrot.lane.b32.xlu0 %v649, 66
  %v676 = vpop.permute.xlu0 %675
  %677 = vrot.lane.b32.xlu0 %v650, 66
  %v678 = vpop.permute.xlu0 %677
  %679 = vrot.lane.b32.xlu0 %v651, 66
  %v680 = vpop.permute.xlu0 %679
  %681 = vrot.lane.b32.xlu0 %v652, 66
  %v682 = vpop.permute.xlu0 %681
  %683 = vrot.lane.b32.xlu0 %v653, 66
  %v684 = vpop.permute.xlu0 %683
  %685 = vrot.lane.b32.xlu0 %v654, 66
  %v686 = vpop.permute.xlu0 %685
  %687 = vrot.lane.b32.xlu0 %v655, 66
  %v688 = vpop.permute.xlu0 %687
  %vm689 = vcmask 539648
  %v690 = vsel %vm689, %v668, %v670
  %v691 = vsel %vm689, %v670, %v672
  %v692 = vsel %vm689, %v672, %v674
  %v693 = vsel %vm689, %v674, %v676
  %v694 = vsel %vm689, %v676, %v678
  %v695 = vsel %vm689, %v678, %v680
  %v696 = vsel %vm689, %v680, %v682
  %v697 = vsel %vm689, %v682, %v684
  %v698 = vsel %vm689, %v684, %v686
  %v699 = vsel %vm689, %v686, %v688
  %v711 = vadd.f32 %v630, %v690
  %v712 = vadd.f32 %v631, %v691
  %v713 = vadd.f32 %v632, %v692
  %v714 = vadd.f32 %v633, %v693
  %v715 = vadd.f32 %v634, %v694
  %v716 = vadd.f32 %v635, %v695
  %v717 = vadd.f32 %v636, %v696
  %v718 = vadd.f32 %v637, %v697
  %v719 = vadd.f32 %v638, %v698
  %v720 = vadd.f32 %v639, %v699
  %v721 = vadd.f32 %v640, %v688
  %722 = vset.pattern.permute.xlu0 9
  %723 = vperm.xlu0 %722, %v46
  %v724 = vpop.permute.xlu0 %723
  %v726 = vmul.f32 %v724, %v33
  %v727 = vmul.f32 %v724, %v34
  %v728 = vmul.f32 %v724, %v35
  %v729 = vmul.f32 %v724, %v36
  %v730 = vmul.f32 %v724, %v37
  %v731 = vmul.f32 %v724, %v38
  %v732 = vmul.f32 %v724, %v39
  %v733 = vmul.f32 %v724, %v40
  %v734 = vmul.f32 %v724, %v41
  %v735 = vmul.f32 %v724, %v42
  %v736 = vmul.f32 %v724, %v43
  %748 = vrot.lane.b32.xlu0 %v726, 64
  %v749 = vpop.permute.xlu0 %748
  %750 = vrot.lane.b32.xlu0 %v727, 64
  %v751 = vpop.permute.xlu0 %750
  %752 = vrot.lane.b32.xlu0 %v728, 64
  %v753 = vpop.permute.xlu0 %752
  %754 = vrot.lane.b32.xlu0 %v729, 64
  %v755 = vpop.permute.xlu0 %754
  %756 = vrot.lane.b32.xlu0 %v730, 64
  %v757 = vpop.permute.xlu0 %756
  %758 = vrot.lane.b32.xlu0 %v731, 64
  %v759 = vpop.permute.xlu0 %758
  %760 = vrot.lane.b32.xlu0 %v732, 64
  %v761 = vpop.permute.xlu0 %760
  %762 = vrot.lane.b32.xlu0 %v733, 64
  %v763 = vpop.permute.xlu0 %762
  %764 = vrot.lane.b32.xlu0 %v734, 64
  %v765 = vpop.permute.xlu0 %764
  %766 = vrot.lane.b32.xlu0 %v735, 64
  %v767 = vpop.permute.xlu0 %766
  %768 = vrot.lane.b32.xlu0 %v736, 64
  %v769 = vpop.permute.xlu0 %768
  %vm770 = vcmask 523264
  %v771 = vsel %vm770, %v749, %v751
  %v772 = vsel %vm770, %v751, %v753
  %v773 = vsel %vm770, %v753, %v755
  %v774 = vsel %vm770, %v755, %v757
  %v775 = vsel %vm770, %v757, %v759
  %v776 = vsel %vm770, %v759, %v761
  %v777 = vsel %vm770, %v761, %v763
  %v778 = vsel %vm770, %v763, %v765
  %v779 = vsel %vm770, %v765, %v767
  %v780 = vsel %vm770, %v767, %v769
  %v792 = vadd.f32 %v711, %v771
  %v793 = vadd.f32 %v712, %v772
  %v794 = vadd.f32 %v713, %v773
  %v795 = vadd.f32 %v714, %v774
  %v796 = vadd.f32 %v715, %v775
  %v797 = vadd.f32 %v716, %v776
  %v798 = vadd.f32 %v717, %v777
  %v799 = vadd.f32 %v718, %v778
  %v800 = vadd.f32 %v719, %v779
  %v801 = vadd.f32 %v720, %v780
  %v802 = vadd.f32 %v721, %v769
  %803 = vset.pattern.permute.xlu0 10
  %804 = vperm.xlu0 %803, %v46
  %v805 = vpop.permute.xlu0 %804
  %v807 = vmul.f32 %v805, %v33
  %v808 = vmul.f32 %v805, %v34
  %v809 = vmul.f32 %v805, %v35
  %v810 = vmul.f32 %v805, %v36
  %v811 = vmul.f32 %v805, %v37
  %v812 = vmul.f32 %v805, %v38
  %v813 = vmul.f32 %v805, %v39
  %v814 = vmul.f32 %v805, %v40
  %v815 = vmul.f32 %v805, %v41
  %v816 = vmul.f32 %v805, %v42
  %v817 = vmul.f32 %v805, %v43
  %v818 = vmul.f32 %v805, %v44
  %831 = vrot.lane.b32.xlu0 %v807, 16
  %v832 = vpop.permute.xlu0 %831
  %833 = vrot.lane.b32.xlu0 %v808, 16
  %v834 = vpop.permute.xlu0 %833
  %835 = vrot.lane.b32.xlu0 %v809, 16
  %v836 = vpop.permute.xlu0 %835
  %837 = vrot.lane.b32.xlu0 %v810, 16
  %v838 = vpop.permute.xlu0 %837
  %839 = vrot.lane.b32.xlu0 %v811, 16
  %v840 = vpop.permute.xlu0 %839
  %841 = vrot.lane.b32.xlu0 %v812, 16
  %v842 = vpop.permute.xlu0 %841
  %843 = vrot.lane.b32.xlu0 %v813, 16
  %v844 = vpop.permute.xlu0 %843
  %845 = vrot.lane.b32.xlu0 %v814, 16
  %v846 = vpop.permute.xlu0 %845
  %847 = vrot.lane.b32.xlu0 %v815, 16
  %v848 = vpop.permute.xlu0 %847
  %849 = vrot.lane.b32.xlu0 %v816, 16
  %v850 = vpop.permute.xlu0 %849
  %851 = vrot.lane.b32.xlu0 %v817, 16
  %v852 = vpop.permute.xlu0 %851
  %853 = vrot.lane.b32.xlu0 %v818, 16
  %v854 = vpop.permute.xlu0 %853
  %vm855 = vcmask 130048
  %v856 = vsel %vm855, %v832, %v834
  %v857 = vsel %vm855, %v834, %v836
  %v858 = vsel %vm855, %v836, %v838
  %v859 = vsel %vm855, %v838, %v840
  %v860 = vsel %vm855, %v840, %v842
  %v861 = vsel %vm855, %v842, %v844
  %v862 = vsel %vm855, %v844, %v846
  %v863 = vsel %vm855, %v846, %v848
  %v864 = vsel %vm855, %v848, %v850
  %v865 = vsel %vm855, %v850, %v852
  %v866 = vsel %vm855, %v852, %v854
  %v878 = vadd.f32 %v792, %v856
  %v879 = vadd.f32 %v793, %v857
  %v880 = vadd.f32 %v794, %v858
  %v881 = vadd.f32 %v795, %v859
  %v882 = vadd.f32 %v796, %v860
  %v883 = vadd.f32 %v797, %v861
  %v884 = vadd.f32 %v798, %v862
  %v885 = vadd.f32 %v799, %v863
  %v886 = vadd.f32 %v800, %v864
  %v887 = vadd.f32 %v801, %v865
  %v888 = vadd.f32 %v802, %v866
  %889 = vset.pattern.permute.xlu0 11
  %890 = vperm.xlu0 %889, %v46
  %v891 = vpop.permute.xlu0 %890
  %v893 = vmul.f32 %v891, %v33
  %v894 = vmul.f32 %v891, %v34
  %v895 = vmul.f32 %v891, %v35
  %v896 = vmul.f32 %v891, %v36
  %v897 = vmul.f32 %v891, %v37
  %v898 = vmul.f32 %v891, %v38
  %v899 = vmul.f32 %v891, %v39
  %v900 = vmul.f32 %v891, %v40
  %v901 = vmul.f32 %v891, %v41
  %v902 = vmul.f32 %v891, %v42
  %v903 = vmul.f32 %v891, %v43
  %v904 = vmul.f32 %v891, %v44
  %917 = vrot.lane.b32.xlu0 %v893, 14
  %v918 = vpop.permute.xlu0 %917
  %919 = vrot.lane.b32.xlu0 %v894, 14
  %v920 = vpop.permute.xlu0 %919
  %921 = vrot.lane.b32.xlu0 %v895, 14
  %v922 = vpop.permute.xlu0 %921
  %923 = vrot.lane.b32.xlu0 %v896, 14
  %v924 = vpop.permute.xlu0 %923
  %925 = vrot.lane.b32.xlu0 %v897, 14
  %v926 = vpop.permute.xlu0 %925
  %927 = vrot.lane.b32.xlu0 %v898, 14
  %v928 = vpop.permute.xlu0 %927
  %929 = vrot.lane.b32.xlu0 %v899, 14
  %v930 = vpop.permute.xlu0 %929
  %931 = vrot.lane.b32.xlu0 %v900, 14
  %v932 = vpop.permute.xlu0 %931
  %933 = vrot.lane.b32.xlu0 %v901, 14
  %v934 = vpop.permute.xlu0 %933
  %935 = vrot.lane.b32.xlu0 %v902, 14
  %v936 = vpop.permute.xlu0 %935
  %937 = vrot.lane.b32.xlu0 %v903, 14
  %v938 = vpop.permute.xlu0 %937
  %939 = vrot.lane.b32.xlu0 %v904, 14
  %v940 = vpop.permute.xlu0 %939
  %vm941 = vcmask 113664
  %v942 = vsel %vm941, %v918, %v920
  %v943 = vsel %vm941, %v920, %v922
  %v944 = vsel %vm941, %v922, %v924
  %v945 = vsel %vm941, %v924, %v926
  %v946 = vsel %vm941, %v926, %v928
  %v947 = vsel %vm941, %v928, %v930
  %v948 = vsel %vm941, %v930, %v932
  %v949 = vsel %vm941, %v932, %v934
  %v950 = vsel %vm941, %v934, %v936
  %v951 = vsel %vm941, %v936, %v938
  %v952 = vsel %vm941, %v938, %v940
  %v964 = vadd.f32 %v878, %v942
  %v965 = vadd.f32 %v879, %v943
  %v966 = vadd.f32 %v880, %v944
  %v967 = vadd.f32 %v881, %v945
  %v968 = vadd.f32 %v882, %v946
  %v969 = vadd.f32 %v883, %v947
  %v970 = vadd.f32 %v884, %v948
  %v971 = vadd.f32 %v885, %v949
  %v972 = vadd.f32 %v886, %v950
  %v973 = vadd.f32 %v887, %v951
  %v974 = vadd.f32 %v888, %v952
  %975 = vset.pattern.permute.xlu0 12
  %976 = vperm.xlu0 %975, %v46
  %v977 = vpop.permute.xlu0 %976
  %v979 = vmul.f32 %v977, %v33
  %v980 = vmul.f32 %v977, %v34
  %v981 = vmul.f32 %v977, %v35
  %v982 = vmul.f32 %v977, %v36
  %v983 = vmul.f32 %v977, %v37
  %v984 = vmul.f32 %v977, %v38
  %v985 = vmul.f32 %v977, %v39
  %v986 = vmul.f32 %v977, %v40
  %v987 = vmul.f32 %v977, %v41
  %v988 = vmul.f32 %v977, %v42
  %v989 = vmul.f32 %v977, %v43
  %v990 = vmul.f32 %v977, %v44
  %1003 = vrot.lane.b32.xlu0 %v979, 12
  %v1004 = vpop.permute.xlu0 %1003
  %1005 = vrot.lane.b32.xlu0 %v980, 12
  %v1006 = vpop.permute.xlu0 %1005
  %1007 = vrot.lane.b32.xlu0 %v981, 12
  %v1008 = vpop.permute.xlu0 %1007
  %1009 = vrot.lane.b32.xlu0 %v982, 12
  %v1010 = vpop.permute.xlu0 %1009
  %1011 = vrot.lane.b32.xlu0 %v983, 12
  %v1012 = vpop.permute.xlu0 %1011
  %1013 = vrot.lane.b32.xlu0 %v984, 12
  %v1014 = vpop.permute.xlu0 %1013
  %1015 = vrot.lane.b32.xlu0 %v985, 12
  %v1016 = vpop.permute.xlu0 %1015
  %1017 = vrot.lane.b32.xlu0 %v986, 12
  %v1018 = vpop.permute.xlu0 %1017
  %1019 = vrot.lane.b32.xlu0 %v987, 12
  %v1020 = vpop.permute.xlu0 %1019
  %1021 = vrot.lane.b32.xlu0 %v988, 12
  %v1022 = vpop.permute.xlu0 %1021
  %1023 = vrot.lane.b32.xlu0 %v989, 12
  %v1024 = vpop.permute.xlu0 %1023
  %1025 = vrot.lane.b32.xlu0 %v990, 12
  %v1026 = vpop.permute.xlu0 %1025
  %vm1027 = vcmask 97280
  %v1028 = vsel %vm1027, %v1004, %v1006
  %v1029 = vsel %vm1027, %v1006, %v1008
  %v1030 = vsel %vm1027, %v1008, %v1010
  %v1031 = vsel %vm1027, %v1010, %v1012
  %v1032 = vsel %vm1027, %v1012, %v1014
  %v1033 = vsel %vm1027, %v1014, %v1016
  %v1034 = vsel %vm1027, %v1016, %v1018
  %v1035 = vsel %vm1027, %v1018, %v1020
  %v1036 = vsel %vm1027, %v1020, %v1022
  %v1037 = vsel %vm1027, %v1022, %v1024
  %v1038 = vsel %vm1027, %v1024, %v1026
  %v1050 = vadd.f32 %v964, %v1028
  %v1051 = vadd.f32 %v965, %v1029
  %v1052 = vadd.f32 %v966, %v1030
  %v1053 = vadd.f32 %v967, %v1031
  %v1054 = vadd.f32 %v968, %v1032
  %v1055 = vadd.f32 %v969, %v1033
  %v1056 = vadd.f32 %v970, %v1034
  %v1057 = vadd.f32 %v971, %v1035
  %v1058 = vadd.f32 %v972, %v1036
  %v1059 = vadd.f32 %v973, %v1037
  %v1060 = vadd.f32 %v974, %v1038
  %1061 = vset.pattern.permute.xlu0 13
  %1062 = vperm.xlu0 %1061, %v46
  %v1063 = vpop.permute.xlu0 %1062
  %v1065 = vmul.f32 %v1063, %v33
  %v1066 = vmul.f32 %v1063, %v34
  %v1067 = vmul.f32 %v1063, %v35
  %v1068 = vmul.f32 %v1063, %v36
  %v1069 = vmul.f32 %v1063, %v37
  %v1070 = vmul.f32 %v1063, %v38
  %v1071 = vmul.f32 %v1063, %v39
  %v1072 = vmul.f32 %v1063, %v40
  %v1073 = vmul.f32 %v1063, %v41
  %v1074 = vmul.f32 %v1063, %v42
  %v1075 = vmul.f32 %v1063, %v43
  %v1076 = vmul.f32 %v1063, %v44
  %1089 = vrot.lane.b32.xlu0 %v1065, 10
  %v1090 = vpop.permute.xlu0 %1089
  %1091 = vrot.lane.b32.xlu0 %v1066, 10
  %v1092 = vpop.permute.xlu0 %1091
  %1093 = vrot.lane.b32.xlu0 %v1067, 10
  %v1094 = vpop.permute.xlu0 %1093
  %1095 = vrot.lane.b32.xlu0 %v1068, 10
  %v1096 = vpop.permute.xlu0 %1095
  %1097 = vrot.lane.b32.xlu0 %v1069, 10
  %v1098 = vpop.permute.xlu0 %1097
  %1099 = vrot.lane.b32.xlu0 %v1070, 10
  %v1100 = vpop.permute.xlu0 %1099
  %1101 = vrot.lane.b32.xlu0 %v1071, 10
  %v1102 = vpop.permute.xlu0 %1101
  %1103 = vrot.lane.b32.xlu0 %v1072, 10
  %v1104 = vpop.permute.xlu0 %1103
  %1105 = vrot.lane.b32.xlu0 %v1073, 10
  %v1106 = vpop.permute.xlu0 %1105
  %1107 = vrot.lane.b32.xlu0 %v1074, 10
  %v1108 = vpop.permute.xlu0 %1107
  %1109 = vrot.lane.b32.xlu0 %v1075, 10
  %v1110 = vpop.permute.xlu0 %1109
  %1111 = vrot.lane.b32.xlu0 %v1076, 10
  %v1112 = vpop.permute.xlu0 %1111
  %vm1113 = vcmask 80896
  %v1114 = vsel %vm1113, %v1090, %v1092
  %v1115 = vsel %vm1113, %v1092, %v1094
  %v1116 = vsel %vm1113, %v1094, %v1096
  %v1117 = vsel %vm1113, %v1096, %v1098
  %v1118 = vsel %vm1113, %v1098, %v1100
  %v1119 = vsel %vm1113, %v1100, %v1102
  %v1120 = vsel %vm1113, %v1102, %v1104
  %v1121 = vsel %vm1113, %v1104, %v1106
  %v1122 = vsel %vm1113, %v1106, %v1108
  %v1123 = vsel %vm1113, %v1108, %v1110
  %v1124 = vsel %vm1113, %v1110, %v1112
  %v1136 = vadd.f32 %v1050, %v1114
  %v1137 = vadd.f32 %v1051, %v1115
  %v1138 = vadd.f32 %v1052, %v1116
  %v1139 = vadd.f32 %v1053, %v1117
  %v1140 = vadd.f32 %v1054, %v1118
  %v1141 = vadd.f32 %v1055, %v1119
  %v1142 = vadd.f32 %v1056, %v1120
  %v1143 = vadd.f32 %v1057, %v1121
  %v1144 = vadd.f32 %v1058, %v1122
  %v1145 = vadd.f32 %v1059, %v1123
  %v1146 = vadd.f32 %v1060, %v1124
  %1147 = vset.pattern.permute.xlu0 14
  %1148 = vperm.xlu0 %1147, %v46
  %v1149 = vpop.permute.xlu0 %1148
  %v1151 = vmul.f32 %v1149, %v33
  %v1152 = vmul.f32 %v1149, %v34
  %v1153 = vmul.f32 %v1149, %v35
  %v1154 = vmul.f32 %v1149, %v36
  %v1155 = vmul.f32 %v1149, %v37
  %v1156 = vmul.f32 %v1149, %v38
  %v1157 = vmul.f32 %v1149, %v39
  %v1158 = vmul.f32 %v1149, %v40
  %v1159 = vmul.f32 %v1149, %v41
  %v1160 = vmul.f32 %v1149, %v42
  %v1161 = vmul.f32 %v1149, %v43
  %v1162 = vmul.f32 %v1149, %v44
  %1175 = vrot.lane.b32.xlu0 %v1151, 8
  %v1176 = vpop.permute.xlu0 %1175
  %1177 = vrot.lane.b32.xlu0 %v1152, 8
  %v1178 = vpop.permute.xlu0 %1177
  %1179 = vrot.lane.b32.xlu0 %v1153, 8
  %v1180 = vpop.permute.xlu0 %1179
  %1181 = vrot.lane.b32.xlu0 %v1154, 8
  %v1182 = vpop.permute.xlu0 %1181
  %1183 = vrot.lane.b32.xlu0 %v1155, 8
  %v1184 = vpop.permute.xlu0 %1183
  %1185 = vrot.lane.b32.xlu0 %v1156, 8
  %v1186 = vpop.permute.xlu0 %1185
  %1187 = vrot.lane.b32.xlu0 %v1157, 8
  %v1188 = vpop.permute.xlu0 %1187
  %1189 = vrot.lane.b32.xlu0 %v1158, 8
  %v1190 = vpop.permute.xlu0 %1189
  %1191 = vrot.lane.b32.xlu0 %v1159, 8
  %v1192 = vpop.permute.xlu0 %1191
  %1193 = vrot.lane.b32.xlu0 %v1160, 8
  %v1194 = vpop.permute.xlu0 %1193
  %1195 = vrot.lane.b32.xlu0 %v1161, 8
  %v1196 = vpop.permute.xlu0 %1195
  %1197 = vrot.lane.b32.xlu0 %v1162, 8
  %v1198 = vpop.permute.xlu0 %1197
  %vm1199 = vcmask 64512
  %v1200 = vsel %vm1199, %v1176, %v1178
  %v1201 = vsel %vm1199, %v1178, %v1180
  %v1202 = vsel %vm1199, %v1180, %v1182
  %v1203 = vsel %vm1199, %v1182, %v1184
  %v1204 = vsel %vm1199, %v1184, %v1186
  %v1205 = vsel %vm1199, %v1186, %v1188
  %v1206 = vsel %vm1199, %v1188, %v1190
  %v1207 = vsel %vm1199, %v1190, %v1192
  %v1208 = vsel %vm1199, %v1192, %v1194
  %v1209 = vsel %vm1199, %v1194, %v1196
  %v1210 = vsel %vm1199, %v1196, %v1198
  %v1222 = vadd.f32 %v1136, %v1200
  %v1223 = vadd.f32 %v1137, %v1201
  %v1224 = vadd.f32 %v1138, %v1202
  %v1225 = vadd.f32 %v1139, %v1203
  %v1226 = vadd.f32 %v1140, %v1204
  %v1227 = vadd.f32 %v1141, %v1205
  %v1228 = vadd.f32 %v1142, %v1206
  %v1229 = vadd.f32 %v1143, %v1207
  %v1230 = vadd.f32 %v1144, %v1208
  %v1231 = vadd.f32 %v1145, %v1209
  %v1232 = vadd.f32 %v1146, %v1210
  %1233 = vset.pattern.permute.xlu0 15
  %1234 = vperm.xlu0 %1233, %v46
  %v1235 = vpop.permute.xlu0 %1234
  %v1237 = vmul.f32 %v1235, %v34
  %v1238 = vmul.f32 %v1235, %v35
  %v1239 = vmul.f32 %v1235, %v36
  %v1240 = vmul.f32 %v1235, %v37
  %v1241 = vmul.f32 %v1235, %v38
  %v1242 = vmul.f32 %v1235, %v39
  %v1243 = vmul.f32 %v1235, %v40
  %v1244 = vmul.f32 %v1235, %v41
  %v1245 = vmul.f32 %v1235, %v42
  %v1246 = vmul.f32 %v1235, %v43
  %v1247 = vmul.f32 %v1235, %v44
  %1259 = vrot.lane.b32.xlu0 %v1237, 88
  %v1260 = vpop.permute.xlu0 %1259
  %1261 = vrot.lane.b32.xlu0 %v1238, 88
  %v1262 = vpop.permute.xlu0 %1261
  %1263 = vrot.lane.b32.xlu0 %v1239, 88
  %v1264 = vpop.permute.xlu0 %1263
  %1265 = vrot.lane.b32.xlu0 %v1240, 88
  %v1266 = vpop.permute.xlu0 %1265
  %1267 = vrot.lane.b32.xlu0 %v1241, 88
  %v1268 = vpop.permute.xlu0 %1267
  %1269 = vrot.lane.b32.xlu0 %v1242, 88
  %v1270 = vpop.permute.xlu0 %1269
  %1271 = vrot.lane.b32.xlu0 %v1243, 88
  %v1272 = vpop.permute.xlu0 %1271
  %1273 = vrot.lane.b32.xlu0 %v1244, 88
  %v1274 = vpop.permute.xlu0 %1273
  %1275 = vrot.lane.b32.xlu0 %v1245, 88
  %v1276 = vpop.permute.xlu0 %1275
  %1277 = vrot.lane.b32.xlu0 %v1246, 88
  %v1278 = vpop.permute.xlu0 %1277
  %1279 = vrot.lane.b32.xlu0 %v1247, 88
  %v1280 = vpop.permute.xlu0 %1279
  %vm1281 = vcmask 719872
  %v1282 = vsel %vm1281, %v1260, %v1262
  %v1283 = vsel %vm1281, %v1262, %v1264
  %v1284 = vsel %vm1281, %v1264, %v1266
  %v1285 = vsel %vm1281, %v1266, %v1268
  %v1286 = vsel %vm1281, %v1268, %v1270
  %v1287 = vsel %vm1281, %v1270, %v1272
  %v1288 = vsel %vm1281, %v1272, %v1274
  %v1289 = vsel %vm1281, %v1274, %v1276
  %v1290 = vsel %vm1281, %v1276, %v1278
  %v1291 = vsel %vm1281, %v1278, %v1280
  %v1303 = vadd.f32 %v1222, %v1282
  %v1304 = vadd.f32 %v1223, %v1283
  %v1305 = vadd.f32 %v1224, %v1284
  %v1306 = vadd.f32 %v1225, %v1285
  %v1307 = vadd.f32 %v1226, %v1286
  %v1308 = vadd.f32 %v1227, %v1287
  %v1309 = vadd.f32 %v1228, %v1288
  %v1310 = vadd.f32 %v1229, %v1289
  %v1311 = vadd.f32 %v1230, %v1290
  %v1312 = vadd.f32 %v1231, %v1291
  %v1313 = vadd.f32 %v1232, %v1280
  %1314 = vset.pattern.permute.xlu0 16
  %1315 = vperm.xlu0 %1314, %v46
  %v1316 = vpop.permute.xlu0 %1315
  %v1318 = vmul.f32 %v1316, %v34
  %v1319 = vmul.f32 %v1316, %v35
  %v1320 = vmul.f32 %v1316, %v36
  %v1321 = vmul.f32 %v1316, %v37
  %v1322 = vmul.f32 %v1316, %v38
  %v1323 = vmul.f32 %v1316, %v39
  %v1324 = vmul.f32 %v1316, %v40
  %v1325 = vmul.f32 %v1316, %v41
  %v1326 = vmul.f32 %v1316, %v42
  %v1327 = vmul.f32 %v1316, %v43
  %v1328 = vmul.f32 %v1316, %v44
  %1340 = vrot.lane.b32.xlu0 %v1318, 86
  %v1341 = vpop.permute.xlu0 %1340
  %1342 = vrot.lane.b32.xlu0 %v1319, 86
  %v1343 = vpop.permute.xlu0 %1342
  %1344 = vrot.lane.b32.xlu0 %v1320, 86
  %v1345 = vpop.permute.xlu0 %1344
  %1346 = vrot.lane.b32.xlu0 %v1321, 86
  %v1347 = vpop.permute.xlu0 %1346
  %1348 = vrot.lane.b32.xlu0 %v1322, 86
  %v1349 = vpop.permute.xlu0 %1348
  %1350 = vrot.lane.b32.xlu0 %v1323, 86
  %v1351 = vpop.permute.xlu0 %1350
  %1352 = vrot.lane.b32.xlu0 %v1324, 86
  %v1353 = vpop.permute.xlu0 %1352
  %1354 = vrot.lane.b32.xlu0 %v1325, 86
  %v1355 = vpop.permute.xlu0 %1354
  %1356 = vrot.lane.b32.xlu0 %v1326, 86
  %v1357 = vpop.permute.xlu0 %1356
  %1358 = vrot.lane.b32.xlu0 %v1327, 86
  %v1359 = vpop.permute.xlu0 %1358
  %1360 = vrot.lane.b32.xlu0 %v1328, 86
  %v1361 = vpop.permute.xlu0 %1360
  %vm1362 = vcmask 703488
  %v1363 = vsel %vm1362, %v1341, %v1343
  %v1364 = vsel %vm1362, %v1343, %v1345
  %v1365 = vsel %vm1362, %v1345, %v1347
  %v1366 = vsel %vm1362, %v1347, %v1349
  %v1367 = vsel %vm1362, %v1349, %v1351
  %v1368 = vsel %vm1362, %v1351, %v1353
  %v1369 = vsel %vm1362, %v1353, %v1355
  %v1370 = vsel %vm1362, %v1355, %v1357
  %v1371 = vsel %vm1362, %v1357, %v1359
  %v1372 = vsel %vm1362, %v1359, %v1361
  %v1384 = vadd.f32 %v1303, %v1363
  %v1385 = vadd.f32 %v1304, %v1364
  %v1386 = vadd.f32 %v1305, %v1365
  %v1387 = vadd.f32 %v1306, %v1366
  %v1388 = vadd.f32 %v1307, %v1367
  %v1389 = vadd.f32 %v1308, %v1368
  %v1390 = vadd.f32 %v1309, %v1369
  %v1391 = vadd.f32 %v1310, %v1370
  %v1392 = vadd.f32 %v1311, %v1371
  %v1393 = vadd.f32 %v1312, %v1372
  %v1394 = vadd.f32 %v1313, %v1361
  %1395 = vset.pattern.permute.xlu0 17
  %1396 = vperm.xlu0 %1395, %v46
  %v1397 = vpop.permute.xlu0 %1396
  %v1399 = vmul.f32 %v1397, %v34
  %v1400 = vmul.f32 %v1397, %v35
  %v1401 = vmul.f32 %v1397, %v36
  %v1402 = vmul.f32 %v1397, %v37
  %v1403 = vmul.f32 %v1397, %v38
  %v1404 = vmul.f32 %v1397, %v39
  %v1405 = vmul.f32 %v1397, %v40
  %v1406 = vmul.f32 %v1397, %v41
  %v1407 = vmul.f32 %v1397, %v42
  %v1408 = vmul.f32 %v1397, %v43
  %v1409 = vmul.f32 %v1397, %v44
  %1421 = vrot.lane.b32.xlu0 %v1399, 84
  %v1422 = vpop.permute.xlu0 %1421
  %1423 = vrot.lane.b32.xlu0 %v1400, 84
  %v1424 = vpop.permute.xlu0 %1423
  %1425 = vrot.lane.b32.xlu0 %v1401, 84
  %v1426 = vpop.permute.xlu0 %1425
  %1427 = vrot.lane.b32.xlu0 %v1402, 84
  %v1428 = vpop.permute.xlu0 %1427
  %1429 = vrot.lane.b32.xlu0 %v1403, 84
  %v1430 = vpop.permute.xlu0 %1429
  %1431 = vrot.lane.b32.xlu0 %v1404, 84
  %v1432 = vpop.permute.xlu0 %1431
  %1433 = vrot.lane.b32.xlu0 %v1405, 84
  %v1434 = vpop.permute.xlu0 %1433
  %1435 = vrot.lane.b32.xlu0 %v1406, 84
  %v1436 = vpop.permute.xlu0 %1435
  %1437 = vrot.lane.b32.xlu0 %v1407, 84
  %v1438 = vpop.permute.xlu0 %1437
  %1439 = vrot.lane.b32.xlu0 %v1408, 84
  %v1440 = vpop.permute.xlu0 %1439
  %1441 = vrot.lane.b32.xlu0 %v1409, 84
  %v1442 = vpop.permute.xlu0 %1441
  %vm1443 = vcmask 687104
  %v1444 = vsel %vm1443, %v1422, %v1424
  %v1445 = vsel %vm1443, %v1424, %v1426
  %v1446 = vsel %vm1443, %v1426, %v1428
  %v1447 = vsel %vm1443, %v1428, %v1430
  %v1448 = vsel %vm1443, %v1430, %v1432
  %v1449 = vsel %vm1443, %v1432, %v1434
  %v1450 = vsel %vm1443, %v1434, %v1436
  %v1451 = vsel %vm1443, %v1436, %v1438
  %v1452 = vsel %vm1443, %v1438, %v1440
  %v1453 = vsel %vm1443, %v1440, %v1442
  %v1465 = vadd.f32 %v1384, %v1444
  %v1466 = vadd.f32 %v1385, %v1445
  %v1467 = vadd.f32 %v1386, %v1446
  %v1468 = vadd.f32 %v1387, %v1447
  %v1469 = vadd.f32 %v1388, %v1448
  %v1470 = vadd.f32 %v1389, %v1449
  %v1471 = vadd.f32 %v1390, %v1450
  %v1472 = vadd.f32 %v1391, %v1451
  %v1473 = vadd.f32 %v1392, %v1452
  %v1474 = vadd.f32 %v1393, %v1453
  %v1475 = vadd.f32 %v1394, %v1442
  %1476 = vset.pattern.permute.xlu0 18
  %1477 = vperm.xlu0 %1476, %v46
  %v1478 = vpop.permute.xlu0 %1477
  %v1480 = vmul.f32 %v1478, %v34
  %v1481 = vmul.f32 %v1478, %v35
  %v1482 = vmul.f32 %v1478, %v36
  %v1483 = vmul.f32 %v1478, %v37
  %v1484 = vmul.f32 %v1478, %v38
  %v1485 = vmul.f32 %v1478, %v39
  %v1486 = vmul.f32 %v1478, %v40
  %v1487 = vmul.f32 %v1478, %v41
  %v1488 = vmul.f32 %v1478, %v42
  %v1489 = vmul.f32 %v1478, %v43
  %v1490 = vmul.f32 %v1478, %v44
  %1502 = vrot.lane.b32.xlu0 %v1480, 82
  %v1503 = vpop.permute.xlu0 %1502
  %1504 = vrot.lane.b32.xlu0 %v1481, 82
  %v1505 = vpop.permute.xlu0 %1504
  %1506 = vrot.lane.b32.xlu0 %v1482, 82
  %v1507 = vpop.permute.xlu0 %1506
  %1508 = vrot.lane.b32.xlu0 %v1483, 82
  %v1509 = vpop.permute.xlu0 %1508
  %1510 = vrot.lane.b32.xlu0 %v1484, 82
  %v1511 = vpop.permute.xlu0 %1510
  %1512 = vrot.lane.b32.xlu0 %v1485, 82
  %v1513 = vpop.permute.xlu0 %1512
  %1514 = vrot.lane.b32.xlu0 %v1486, 82
  %v1515 = vpop.permute.xlu0 %1514
  %1516 = vrot.lane.b32.xlu0 %v1487, 82
  %v1517 = vpop.permute.xlu0 %1516
  %1518 = vrot.lane.b32.xlu0 %v1488, 82
  %v1519 = vpop.permute.xlu0 %1518
  %1520 = vrot.lane.b32.xlu0 %v1489, 82
  %v1521 = vpop.permute.xlu0 %1520
  %1522 = vrot.lane.b32.xlu0 %v1490, 82
  %v1523 = vpop.permute.xlu0 %1522
  %vm1524 = vcmask 670720
  %v1525 = vsel %vm1524, %v1503, %v1505
  %v1526 = vsel %vm1524, %v1505, %v1507
  %v1527 = vsel %vm1524, %v1507, %v1509
  %v1528 = vsel %vm1524, %v1509, %v1511
  %v1529 = vsel %vm1524, %v1511, %v1513
  %v1530 = vsel %vm1524, %v1513, %v1515
  %v1531 = vsel %vm1524, %v1515, %v1517
  %v1532 = vsel %vm1524, %v1517, %v1519
  %v1533 = vsel %vm1524, %v1519, %v1521
  %v1534 = vsel %vm1524, %v1521, %v1523
  %v1546 = vadd.f32 %v1465, %v1525
  %v1547 = vadd.f32 %v1466, %v1526
  %v1548 = vadd.f32 %v1467, %v1527
  %v1549 = vadd.f32 %v1468, %v1528
  %v1550 = vadd.f32 %v1469, %v1529
  %v1551 = vadd.f32 %v1470, %v1530
  %v1552 = vadd.f32 %v1471, %v1531
  %v1553 = vadd.f32 %v1472, %v1532
  %v1554 = vadd.f32 %v1473, %v1533
  %v1555 = vadd.f32 %v1474, %v1534
  %v1556 = vadd.f32 %v1475, %v1523
  %1557 = vset.pattern.permute.xlu0 19
  %1558 = vperm.xlu0 %1557, %v46
  %v1559 = vpop.permute.xlu0 %1558
  %v1561 = vmul.f32 %v1559, %v34
  %v1562 = vmul.f32 %v1559, %v35
  %v1563 = vmul.f32 %v1559, %v36
  %v1564 = vmul.f32 %v1559, %v37
  %v1565 = vmul.f32 %v1559, %v38
  %v1566 = vmul.f32 %v1559, %v39
  %v1567 = vmul.f32 %v1559, %v40
  %v1568 = vmul.f32 %v1559, %v41
  %v1569 = vmul.f32 %v1559, %v42
  %v1570 = vmul.f32 %v1559, %v43
  %v1571 = vmul.f32 %v1559, %v44
  %1583 = vrot.lane.b32.xlu0 %v1561, 80
  %v1584 = vpop.permute.xlu0 %1583
  %1585 = vrot.lane.b32.xlu0 %v1562, 80
  %v1586 = vpop.permute.xlu0 %1585
  %1587 = vrot.lane.b32.xlu0 %v1563, 80
  %v1588 = vpop.permute.xlu0 %1587
  %1589 = vrot.lane.b32.xlu0 %v1564, 80
  %v1590 = vpop.permute.xlu0 %1589
  %1591 = vrot.lane.b32.xlu0 %v1565, 80
  %v1592 = vpop.permute.xlu0 %1591
  %1593 = vrot.lane.b32.xlu0 %v1566, 80
  %v1594 = vpop.permute.xlu0 %1593
  %1595 = vrot.lane.b32.xlu0 %v1567, 80
  %v1596 = vpop.permute.xlu0 %1595
  %1597 = vrot.lane.b32.xlu0 %v1568, 80
  %v1598 = vpop.permute.xlu0 %1597
  %1599 = vrot.lane.b32.xlu0 %v1569, 80
  %v1600 = vpop.permute.xlu0 %1599
  %1601 = vrot.lane.b32.xlu0 %v1570, 80
  %v1602 = vpop.permute.xlu0 %1601
  %1603 = vrot.lane.b32.xlu0 %v1571, 80
  %v1604 = vpop.permute.xlu0 %1603
  %vm1605 = vcmask 654336
  %v1606 = vsel %vm1605, %v1584, %v1586
  %v1607 = vsel %vm1605, %v1586, %v1588
  %v1608 = vsel %vm1605, %v1588, %v1590
  %v1609 = vsel %vm1605, %v1590, %v1592
  %v1610 = vsel %vm1605, %v1592, %v1594
  %v1611 = vsel %vm1605, %v1594, %v1596
  %v1612 = vsel %vm1605, %v1596, %v1598
  %v1613 = vsel %vm1605, %v1598, %v1600
  %v1614 = vsel %vm1605, %v1600, %v1602
  %v1615 = vsel %vm1605, %v1602, %v1604
  %v1627 = vadd.f32 %v1546, %v1606
  %v1628 = vadd.f32 %v1547, %v1607
  %v1629 = vadd.f32 %v1548, %v1608
  %v1630 = vadd.f32 %v1549, %v1609
  %v1631 = vadd.f32 %v1550, %v1610
  %v1632 = vadd.f32 %v1551, %v1611
  %v1633 = vadd.f32 %v1552, %v1612
  %v1634 = vadd.f32 %v1553, %v1613
  %v1635 = vadd.f32 %v1554, %v1614
  %v1636 = vadd.f32 %v1555, %v1615
  %v1637 = vadd.f32 %v1556, %v1604
  %1638 = vset.pattern.permute.xlu0 20
  %1639 = vperm.xlu0 %1638, %v46
  %v1640 = vpop.permute.xlu0 %1639
  %v1642 = vmul.f32 %v1640, %v34
  %v1643 = vmul.f32 %v1640, %v35
  %v1644 = vmul.f32 %v1640, %v36
  %v1645 = vmul.f32 %v1640, %v37
  %v1646 = vmul.f32 %v1640, %v38
  %v1647 = vmul.f32 %v1640, %v39
  %v1648 = vmul.f32 %v1640, %v40
  %v1649 = vmul.f32 %v1640, %v41
  %v1650 = vmul.f32 %v1640, %v42
  %v1651 = vmul.f32 %v1640, %v43
  %v1652 = vmul.f32 %v1640, %v44
  %v1653 = vmul.f32 %v1640, %v45
  %1666 = vrot.lane.b32.xlu0 %v1642, 32
  %v1667 = vpop.permute.xlu0 %1666
  %1668 = vrot.lane.b32.xlu0 %v1643, 32
  %v1669 = vpop.permute.xlu0 %1668
  %1670 = vrot.lane.b32.xlu0 %v1644, 32
  %v1671 = vpop.permute.xlu0 %1670
  %1672 = vrot.lane.b32.xlu0 %v1645, 32
  %v1673 = vpop.permute.xlu0 %1672
  %1674 = vrot.lane.b32.xlu0 %v1646, 32
  %v1675 = vpop.permute.xlu0 %1674
  %1676 = vrot.lane.b32.xlu0 %v1647, 32
  %v1677 = vpop.permute.xlu0 %1676
  %1678 = vrot.lane.b32.xlu0 %v1648, 32
  %v1679 = vpop.permute.xlu0 %1678
  %1680 = vrot.lane.b32.xlu0 %v1649, 32
  %v1681 = vpop.permute.xlu0 %1680
  %1682 = vrot.lane.b32.xlu0 %v1650, 32
  %v1683 = vpop.permute.xlu0 %1682
  %1684 = vrot.lane.b32.xlu0 %v1651, 32
  %v1685 = vpop.permute.xlu0 %1684
  %1686 = vrot.lane.b32.xlu0 %v1652, 32
  %v1687 = vpop.permute.xlu0 %1686
  %1688 = vrot.lane.b32.xlu0 %v1653, 32
  %v1689 = vpop.permute.xlu0 %1688
  %vm1690 = vcmask 261120
  %v1691 = vsel %vm1690, %v1667, %v1669
  %v1692 = vsel %vm1690, %v1669, %v1671
  %v1693 = vsel %vm1690, %v1671, %v1673
  %v1694 = vsel %vm1690, %v1673, %v1675
  %v1695 = vsel %vm1690, %v1675, %v1677
  %v1696 = vsel %vm1690, %v1677, %v1679
  %v1697 = vsel %vm1690, %v1679, %v1681
  %v1698 = vsel %vm1690, %v1681, %v1683
  %v1699 = vsel %vm1690, %v1683, %v1685
  %v1700 = vsel %vm1690, %v1685, %v1687
  %v1701 = vsel %vm1690, %v1687, %v1689
  %v1713 = vadd.f32 %v1627, %v1691
  %v1714 = vadd.f32 %v1628, %v1692
  %v1715 = vadd.f32 %v1629, %v1693
  %v1716 = vadd.f32 %v1630, %v1694
  %v1717 = vadd.f32 %v1631, %v1695
  %v1718 = vadd.f32 %v1632, %v1696
  %v1719 = vadd.f32 %v1633, %v1697
  %v1720 = vadd.f32 %v1634, %v1698
  %v1721 = vadd.f32 %v1635, %v1699
  %v1722 = vadd.f32 %v1636, %v1700
  %v1723 = vadd.f32 %v1637, %v1701
  %1724 = vset.pattern.permute.xlu0 21
  %1725 = vperm.xlu0 %1724, %v46
  %v1726 = vpop.permute.xlu0 %1725
  %v1728 = vmul.f32 %v1726, %v34
  %v1729 = vmul.f32 %v1726, %v35
  %v1730 = vmul.f32 %v1726, %v36
  %v1731 = vmul.f32 %v1726, %v37
  %v1732 = vmul.f32 %v1726, %v38
  %v1733 = vmul.f32 %v1726, %v39
  %v1734 = vmul.f32 %v1726, %v40
  %v1735 = vmul.f32 %v1726, %v41
  %v1736 = vmul.f32 %v1726, %v42
  %v1737 = vmul.f32 %v1726, %v43
  %v1738 = vmul.f32 %v1726, %v44
  %v1739 = vmul.f32 %v1726, %v45
  %1752 = vrot.lane.b32.xlu0 %v1728, 30
  %v1753 = vpop.permute.xlu0 %1752
  %1754 = vrot.lane.b32.xlu0 %v1729, 30
  %v1755 = vpop.permute.xlu0 %1754
  %1756 = vrot.lane.b32.xlu0 %v1730, 30
  %v1757 = vpop.permute.xlu0 %1756
  %1758 = vrot.lane.b32.xlu0 %v1731, 30
  %v1759 = vpop.permute.xlu0 %1758
  %1760 = vrot.lane.b32.xlu0 %v1732, 30
  %v1761 = vpop.permute.xlu0 %1760
  %1762 = vrot.lane.b32.xlu0 %v1733, 30
  %v1763 = vpop.permute.xlu0 %1762
  %1764 = vrot.lane.b32.xlu0 %v1734, 30
  %v1765 = vpop.permute.xlu0 %1764
  %1766 = vrot.lane.b32.xlu0 %v1735, 30
  %v1767 = vpop.permute.xlu0 %1766
  %1768 = vrot.lane.b32.xlu0 %v1736, 30
  %v1769 = vpop.permute.xlu0 %1768
  %1770 = vrot.lane.b32.xlu0 %v1737, 30
  %v1771 = vpop.permute.xlu0 %1770
  %1772 = vrot.lane.b32.xlu0 %v1738, 30
  %v1773 = vpop.permute.xlu0 %1772
  %1774 = vrot.lane.b32.xlu0 %v1739, 30
  %v1775 = vpop.permute.xlu0 %1774
  %vm1776 = vcmask 244736
  %v1777 = vsel %vm1776, %v1753, %v1755
  %v1778 = vsel %vm1776, %v1755, %v1757
  %v1779 = vsel %vm1776, %v1757, %v1759
  %v1780 = vsel %vm1776, %v1759, %v1761
  %v1781 = vsel %vm1776, %v1761, %v1763
  %v1782 = vsel %vm1776, %v1763, %v1765
  %v1783 = vsel %vm1776, %v1765, %v1767
  %v1784 = vsel %vm1776, %v1767, %v1769
  %v1785 = vsel %vm1776, %v1769, %v1771
  %v1786 = vsel %vm1776, %v1771, %v1773
  %v1787 = vsel %vm1776, %v1773, %v1775
  %v1799 = vadd.f32 %v1713, %v1777
  %v1800 = vadd.f32 %v1714, %v1778
  %v1801 = vadd.f32 %v1715, %v1779
  %v1802 = vadd.f32 %v1716, %v1780
  %v1803 = vadd.f32 %v1717, %v1781
  %v1804 = vadd.f32 %v1718, %v1782
  %v1805 = vadd.f32 %v1719, %v1783
  %v1806 = vadd.f32 %v1720, %v1784
  %v1807 = vadd.f32 %v1721, %v1785
  %v1808 = vadd.f32 %v1722, %v1786
  %v1809 = vadd.f32 %v1723, %v1787
  %1810 = vset.pattern.permute.xlu0 22
  %1811 = vperm.xlu0 %1810, %v46
  %v1812 = vpop.permute.xlu0 %1811
  %v1814 = vmul.f32 %v1812, %v34
  %v1815 = vmul.f32 %v1812, %v35
  %v1816 = vmul.f32 %v1812, %v36
  %v1817 = vmul.f32 %v1812, %v37
  %v1818 = vmul.f32 %v1812, %v38
  %v1819 = vmul.f32 %v1812, %v39
  %v1820 = vmul.f32 %v1812, %v40
  %v1821 = vmul.f32 %v1812, %v41
  %v1822 = vmul.f32 %v1812, %v42
  %v1823 = vmul.f32 %v1812, %v43
  %v1824 = vmul.f32 %v1812, %v44
  %v1825 = vmul.f32 %v1812, %v45
  %1838 = vrot.lane.b32.xlu0 %v1814, 28
  %v1839 = vpop.permute.xlu0 %1838
  %1840 = vrot.lane.b32.xlu0 %v1815, 28
  %v1841 = vpop.permute.xlu0 %1840
  %1842 = vrot.lane.b32.xlu0 %v1816, 28
  %v1843 = vpop.permute.xlu0 %1842
  %1844 = vrot.lane.b32.xlu0 %v1817, 28
  %v1845 = vpop.permute.xlu0 %1844
  %1846 = vrot.lane.b32.xlu0 %v1818, 28
  %v1847 = vpop.permute.xlu0 %1846
  %1848 = vrot.lane.b32.xlu0 %v1819, 28
  %v1849 = vpop.permute.xlu0 %1848
  %1850 = vrot.lane.b32.xlu0 %v1820, 28
  %v1851 = vpop.permute.xlu0 %1850
  %1852 = vrot.lane.b32.xlu0 %v1821, 28
  %v1853 = vpop.permute.xlu0 %1852
  %1854 = vrot.lane.b32.xlu0 %v1822, 28
  %v1855 = vpop.permute.xlu0 %1854
  %1856 = vrot.lane.b32.xlu0 %v1823, 28
  %v1857 = vpop.permute.xlu0 %1856
  %1858 = vrot.lane.b32.xlu0 %v1824, 28
  %v1859 = vpop.permute.xlu0 %1858
  %1860 = vrot.lane.b32.xlu0 %v1825, 28
  %v1861 = vpop.permute.xlu0 %1860
  %vm1862 = vcmask 228352
  %v1863 = vsel %vm1862, %v1839, %v1841
  %v1864 = vsel %vm1862, %v1841, %v1843
  %v1865 = vsel %vm1862, %v1843, %v1845
  %v1866 = vsel %vm1862, %v1845, %v1847
  %v1867 = vsel %vm1862, %v1847, %v1849
  %v1868 = vsel %vm1862, %v1849, %v1851
  %v1869 = vsel %vm1862, %v1851, %v1853
  %v1870 = vsel %vm1862, %v1853, %v1855
  %v1871 = vsel %vm1862, %v1855, %v1857
  %v1872 = vsel %vm1862, %v1857, %v1859
  %v1873 = vsel %vm1862, %v1859, %v1861
  %v1885 = vadd.f32 %v1799, %v1863
  %v1886 = vadd.f32 %v1800, %v1864
  %v1887 = vadd.f32 %v1801, %v1865
  %v1888 = vadd.f32 %v1802, %v1866
  %v1889 = vadd.f32 %v1803, %v1867
  %v1890 = vadd.f32 %v1804, %v1868
  %v1891 = vadd.f32 %v1805, %v1869
  %v1892 = vadd.f32 %v1806, %v1870
  %v1893 = vadd.f32 %v1807, %v1871
  %v1894 = vadd.f32 %v1808, %v1872
  %v1895 = vadd.f32 %v1809, %v1873
  %1896 = vset.pattern.permute.xlu0 23
  %1897 = vperm.xlu0 %1896, %v46
  %v1898 = vpop.permute.xlu0 %1897
  %v1900 = vmul.f32 %v1898, %v34
  %v1901 = vmul.f32 %v1898, %v35
  %v1902 = vmul.f32 %v1898, %v36
  %v1903 = vmul.f32 %v1898, %v37
  %v1904 = vmul.f32 %v1898, %v38
  %v1905 = vmul.f32 %v1898, %v39
  %v1906 = vmul.f32 %v1898, %v40
  %v1907 = vmul.f32 %v1898, %v41
  %v1908 = vmul.f32 %v1898, %v42
  %v1909 = vmul.f32 %v1898, %v43
  %v1910 = vmul.f32 %v1898, %v44
  %v1911 = vmul.f32 %v1898, %v45
  %1924 = vrot.lane.b32.xlu0 %v1900, 26
  %v1925 = vpop.permute.xlu0 %1924
  %1926 = vrot.lane.b32.xlu0 %v1901, 26
  %v1927 = vpop.permute.xlu0 %1926
  %1928 = vrot.lane.b32.xlu0 %v1902, 26
  %v1929 = vpop.permute.xlu0 %1928
  %1930 = vrot.lane.b32.xlu0 %v1903, 26
  %v1931 = vpop.permute.xlu0 %1930
  %1932 = vrot.lane.b32.xlu0 %v1904, 26
  %v1933 = vpop.permute.xlu0 %1932
  %1934 = vrot.lane.b32.xlu0 %v1905, 26
  %v1935 = vpop.permute.xlu0 %1934
  %1936 = vrot.lane.b32.xlu0 %v1906, 26
  %v1937 = vpop.permute.xlu0 %1936
  %1938 = vrot.lane.b32.xlu0 %v1907, 26
  %v1939 = vpop.permute.xlu0 %1938
  %1940 = vrot.lane.b32.xlu0 %v1908, 26
  %v1941 = vpop.permute.xlu0 %1940
  %1942 = vrot.lane.b32.xlu0 %v1909, 26
  %v1943 = vpop.permute.xlu0 %1942
  %1944 = vrot.lane.b32.xlu0 %v1910, 26
  %v1945 = vpop.permute.xlu0 %1944
  %1946 = vrot.lane.b32.xlu0 %v1911, 26
  %v1947 = vpop.permute.xlu0 %1946
  %vm1948 = vcmask 211968
  %v1949 = vsel %vm1948, %v1925, %v1927
  %v1950 = vsel %vm1948, %v1927, %v1929
  %v1951 = vsel %vm1948, %v1929, %v1931
  %v1952 = vsel %vm1948, %v1931, %v1933
  %v1953 = vsel %vm1948, %v1933, %v1935
  %v1954 = vsel %vm1948, %v1935, %v1937
  %v1955 = vsel %vm1948, %v1937, %v1939
  %v1956 = vsel %vm1948, %v1939, %v1941
  %v1957 = vsel %vm1948, %v1941, %v1943
  %v1958 = vsel %vm1948, %v1943, %v1945
  %v1959 = vsel %vm1948, %v1945, %v1947
  %v1971 = vadd.f32 %v1885, %v1949
  %v1972 = vadd.f32 %v1886, %v1950
  %v1973 = vadd.f32 %v1887, %v1951
  %v1974 = vadd.f32 %v1888, %v1952
  %v1975 = vadd.f32 %v1889, %v1953
  %v1976 = vadd.f32 %v1890, %v1954
  %v1977 = vadd.f32 %v1891, %v1955
  %v1978 = vadd.f32 %v1892, %v1956
  %v1979 = vadd.f32 %v1893, %v1957
  %v1980 = vadd.f32 %v1894, %v1958
  %v1981 = vadd.f32 %v1895, %v1959
  %1982 = vset.pattern.permute.xlu0 24
  %1983 = vperm.xlu0 %1982, %v46
  %v1984 = vpop.permute.xlu0 %1983
  %v1986 = vmul.f32 %v1984, %v34
  %v1987 = vmul.f32 %v1984, %v35
  %v1988 = vmul.f32 %v1984, %v36
  %v1989 = vmul.f32 %v1984, %v37
  %v1990 = vmul.f32 %v1984, %v38
  %v1991 = vmul.f32 %v1984, %v39
  %v1992 = vmul.f32 %v1984, %v40
  %v1993 = vmul.f32 %v1984, %v41
  %v1994 = vmul.f32 %v1984, %v42
  %v1995 = vmul.f32 %v1984, %v43
  %v1996 = vmul.f32 %v1984, %v44
  %v1997 = vmul.f32 %v1984, %v45
  %2010 = vrot.lane.b32.xlu0 %v1986, 24
  %v2011 = vpop.permute.xlu0 %2010
  %2012 = vrot.lane.b32.xlu0 %v1987, 24
  %v2013 = vpop.permute.xlu0 %2012
  %2014 = vrot.lane.b32.xlu0 %v1988, 24
  %v2015 = vpop.permute.xlu0 %2014
  %2016 = vrot.lane.b32.xlu0 %v1989, 24
  %v2017 = vpop.permute.xlu0 %2016
  %2018 = vrot.lane.b32.xlu0 %v1990, 24
  %v2019 = vpop.permute.xlu0 %2018
  %2020 = vrot.lane.b32.xlu0 %v1991, 24
  %v2021 = vpop.permute.xlu0 %2020
  %2022 = vrot.lane.b32.xlu0 %v1992, 24
  %v2023 = vpop.permute.xlu0 %2022
  %2024 = vrot.lane.b32.xlu0 %v1993, 24
  %v2025 = vpop.permute.xlu0 %2024
  %2026 = vrot.lane.b32.xlu0 %v1994, 24
  %v2027 = vpop.permute.xlu0 %2026
  %2028 = vrot.lane.b32.xlu0 %v1995, 24
  %v2029 = vpop.permute.xlu0 %2028
  %2030 = vrot.lane.b32.xlu0 %v1996, 24
  %v2031 = vpop.permute.xlu0 %2030
  %2032 = vrot.lane.b32.xlu0 %v1997, 24
  %v2033 = vpop.permute.xlu0 %2032
  %vm2034 = vcmask 195584
  %v2035 = vsel %vm2034, %v2011, %v2013
  %v2036 = vsel %vm2034, %v2013, %v2015
  %v2037 = vsel %vm2034, %v2015, %v2017
  %v2038 = vsel %vm2034, %v2017, %v2019
  %v2039 = vsel %vm2034, %v2019, %v2021
  %v2040 = vsel %vm2034, %v2021, %v2023
  %v2041 = vsel %vm2034, %v2023, %v2025
  %v2042 = vsel %vm2034, %v2025, %v2027
  %v2043 = vsel %vm2034, %v2027, %v2029
  %v2044 = vsel %vm2034, %v2029, %v2031
  %v2045 = vsel %vm2034, %v2031, %v2033
  %v2057 = vadd.f32 %v1971, %v2035
  %v2058 = vadd.f32 %v1972, %v2036
  %v2059 = vadd.f32 %v1973, %v2037
  %v2060 = vadd.f32 %v1974, %v2038
  %v2061 = vadd.f32 %v1975, %v2039
  %v2062 = vadd.f32 %v1976, %v2040
  %v2063 = vadd.f32 %v1977, %v2041
  %v2064 = vadd.f32 %v1978, %v2042
  %v2065 = vadd.f32 %v1979, %v2043
  %v2066 = vadd.f32 %v1980, %v2044
  %v2067 = vadd.f32 %v1981, %v2045
  %v2068 = vld [vmem:[%s2] sm:$0xff]
  %2070 = vset.pattern.permute.xlu0 0
  %2071 = vperm.xlu0 %2070, %v2068
  %v2072 = vpop.permute.xlu0 %2071
  %v2074 = vadd.f32 %v2057, %v2072
  %v2075 = vadd.f32 %v2058, %v2072
  %v2076 = vadd.f32 %v2059, %v2072
  %v2077 = vadd.f32 %v2060, %v2072
  %v2078 = vadd.f32 %v2061, %v2072
  %v2079 = vadd.f32 %v2062, %v2072
  %v2080 = vadd.f32 %v2063, %v2072
  %v2081 = vadd.f32 %v2064, %v2072
  %v2082 = vadd.f32 %v2065, %v2072
  %v2083 = vadd.f32 %v2066, %v2072
  %v2084 = vadd.f32 %v2067, %v2072
  %v2085 = vmax.f32 %v2074, 0.0
  %v2086 = vmax.f32 %v2075, 0.0
  %v2087 = vmax.f32 %v2076, 0.0
  %v2088 = vmax.f32 %v2077, 0.0
  %v2089 = vmax.f32 %v2078, 0.0
  %v2090 = vmax.f32 %v2079, 0.0
  %v2091 = vmax.f32 %v2080, 0.0
  %v2092 = vmax.f32 %v2081, 0.0
  %v2093 = vmax.f32 %v2082, 0.0
  %v2094 = vmax.f32 %v2083, 0.0
  %v2095 = vmax.f32 %v2084, 0.0
  %2106 = vrot.lane.b32.xlu0 %v2085, 126
  %v2107 = vpop.permute.xlu0 %2106
  %2108 = vrot.lane.b32.xlu0 %v2086, 126
  %v2109 = vpop.permute.xlu0 %2108
  %2110 = vrot.lane.b32.xlu0 %v2087, 126
  %v2111 = vpop.permute.xlu0 %2110
  %2112 = vrot.lane.b32.xlu0 %v2088, 126
  %v2113 = vpop.permute.xlu0 %2112
  %2114 = vrot.lane.b32.xlu0 %v2089, 126
  %v2115 = vpop.permute.xlu0 %2114
  %2116 = vrot.lane.b32.xlu0 %v2090, 126
  %v2117 = vpop.permute.xlu0 %2116
  %2118 = vrot.lane.b32.xlu0 %v2091, 126
  %v2119 = vpop.permute.xlu0 %2118
  %2120 = vrot.lane.b32.xlu0 %v2092, 126
  %v2121 = vpop.permute.xlu0 %2120
  %2122 = vrot.lane.b32.xlu0 %v2093, 126
  %v2123 = vpop.permute.xlu0 %2122
  %2124 = vrot.lane.b32.xlu0 %v2094, 126
  %v2125 = vpop.permute.xlu0 %2124
  %v2126 = vsel %vm122, %v2107, %v2109
  %v2127 = vsel %vm122, %v2109, %v2111
  %v2128 = vsel %vm122, %v2111, %v2113
  %v2129 = vsel %vm122, %v2113, %v2115
  %v2130 = vsel %vm122, %v2115, %v2117
  %v2131 = vsel %vm122, %v2117, %v2119
  %v2132 = vsel %vm122, %v2119, %v2121
  %v2133 = vsel %vm122, %v2121, %v2123
  %v2134 = vsel %vm122, %v2123, %v2125
  %v2145 = vmax.f32 %v2085, %v2126
  %v2146 = vmax.f32 %v2086, %v2127
  %v2147 = vmax.f32 %v2087, %v2128
  %v2148 = vmax.f32 %v2088, %v2129
  %v2149 = vmax.f32 %v2089, %v2130
  %v2150 = vmax.f32 %v2090, %v2131
  %v2151 = vmax.f32 %v2091, %v2132
  %v2152 = vmax.f32 %v2092, %v2133
  %v2153 = vmax.f32 %v2093, %v2134
  %v2154 = vmax.f32 %v2094, %v2125
  %2156 = vrot.lane.b32.xlu0 %v2095, 126
  %v2157 = vpop.permute.xlu0 %2156
  %v2158 = vsel %vm122, %v2125, %v2157
  %v2161 = vmax.f32 %v2094, %v2158
  %v2162 = vmax.f32 %v2095, %v2157
  %2174 = vrot.lane.b32.xlu0 %v2145, 72
  %v2175 = vpop.permute.xlu0 %2174
  %2176 = vrot.lane.b32.xlu0 %v2146, 72
  %v2177 = vpop.permute.xlu0 %2176
  %2178 = vrot.lane.b32.xlu0 %v2147, 72
  %v2179 = vpop.permute.xlu0 %2178
  %2180 = vrot.lane.b32.xlu0 %v2148, 72
  %v2181 = vpop.permute.xlu0 %2180
  %2182 = vrot.lane.b32.xlu0 %v2149, 72
  %v2183 = vpop.permute.xlu0 %2182
  %2184 = vrot.lane.b32.xlu0 %v2150, 72
  %v2185 = vpop.permute.xlu0 %2184
  %2186 = vrot.lane.b32.xlu0 %v2151, 72
  %v2187 = vpop.permute.xlu0 %2186
  %2188 = vrot.lane.b32.xlu0 %v2152, 72
  %v2189 = vpop.permute.xlu0 %2188
  %2190 = vrot.lane.b32.xlu0 %v2153, 72
  %v2191 = vpop.permute.xlu0 %2190
  %2192 = vrot.lane.b32.xlu0 %v2161, 72
  %v2193 = vpop.permute.xlu0 %2192
  %2194 = vrot.lane.b32.xlu0 %v2162, 72
  %v2195 = vpop.permute.xlu0 %2194
  %v2196 = vsel %vm446, %v2175, %v2177
  %v2197 = vsel %vm446, %v2177, %v2179
  %v2198 = vsel %vm446, %v2179, %v2181
  %v2199 = vsel %vm446, %v2181, %v2183
  %v2200 = vsel %vm446, %v2183, %v2185
  %v2201 = vsel %vm446, %v2185, %v2187
  %v2202 = vsel %vm446, %v2187, %v2189
  %v2203 = vsel %vm446, %v2189, %v2191
  %v2204 = vsel %vm446, %v2191, %v2193
  %v2205 = vsel %vm446, %v2193, %v2195
  %v2216 = vmax.f32 %v2145, %v2196
  %v2217 = vmax.f32 %v2146, %v2197
  %v2218 = vmax.f32 %v2147, %v2198
  %v2219 = vmax.f32 %v2148, %v2199
  %v2220 = vmax.f32 %v2149, %v2200
  %v2221 = vmax.f32 %v2150, %v2201
  %v2222 = vmax.f32 %v2151, %v2202
  %v2223 = vmax.f32 %v2152, %v2203
  %v2224 = vmax.f32 %v2153, %v2204
  %v2225 = vmax.f32 %v2154, %v2205
  %v2226 = vld [vmem:[%s3] sm:$0xf]
  %v2227 = vld [vmem:[%s3 + $0x4] sm:$0xf]
  %v2228 = vpack.c.bf16 %v2216, %v2216
  %v2229 = vpack.c.bf16 %v2217, %v2217
  %v2230 = vpack.c.bf16 %v2218, %v2218
  %v2231 = vpack.c.bf16 %v2219, %v2219
  %v2232 = vpack.c.bf16 %v2220, %v2220
  %v2233 = vpack.c.bf16 %v2221, %v2221
  %v2234 = vpack.c.bf16 %v2222, %v2222
  %s2235 = scalar_lea.vmem %s3, 8
  %v2236 = vld [vmem:[%s2235] sm:$0xf]
  %v2237 = vld [vmem:[%s2235 + $0x4] sm:$0xf]
  %v2240 = vunpack.c.l.b16 %v2236
  %v2241 = vunpack.c.l.b16 %v2237
  %v2242 = vpack.c.b16 %v2241, %v2240
  %2250 = vrot.lane.b32.xlu0 %v2228, 124
  %v2251 = vpop.permute.xlu0 %2250
  %2252 = vrot.lane.b32.xlu0 %v2229, 124
  %v2253 = vpop.permute.xlu0 %2252
  %2254 = vrot.lane.b32.xlu0 %v2230, 124
  %v2255 = vpop.permute.xlu0 %2254
  %2256 = vrot.lane.b32.xlu0 %v2231, 124
  %v2257 = vpop.permute.xlu0 %2256
  %2258 = vrot.lane.b32.xlu0 %v2232, 124
  %v2259 = vpop.permute.xlu0 %2258
  %2260 = vrot.lane.b32.xlu0 %v2233, 124
  %v2261 = vpop.permute.xlu0 %2260
  %2262 = vrot.lane.b32.xlu0 %v2234, 124
  %v2263 = vpop.permute.xlu0 %2262
  %vm2264 = vcmask 1014784
  %v2265 = vsel %vm2264, %v2251, %v2253
  %v2266 = vsel %vm2264, %v2253, %v2255
  %v2267 = vsel %vm2264, %v2255, %v2257
  %v2268 = vsel %vm2264, %v2257, %v2259
  %v2269 = vsel %vm2264, %v2259, %v2261
  %v2270 = vsel %vm2264, %v2261, %v2263
  %v2272 = vsel %vm1199, %v2242, 0
  %vm2274 = vcmask 1043456
  %v2276 = vsel %vm2274, %v2265, 0
  %v2279 = vsel %vm2274, %v2266, 0
  %v2282 = vsel %vm2274, %v2267, 0
  %v2285 = vsel %vm2274, %v2268, 0
  %v2288 = vsel %vm2274, %v2269, 0
  %v2291 = vsel %vm2274, %v2270, 0
  %v2294 = vsel %vm2274, %v2263, 0
  %2296 = vmatprep.subr.bf16.mxu0 %v2279
  %2297 = vmatpush1.bf16.msra.mxu0 %v2276
  %2298 = vmatprep.subr.bf16.mxu0 0
  %2299 = vmatpush1.bf16.msra.mxu0 0
  %2300 = vmatprep.subr.bf16.mxu0 0
  %2301 = vmatpush1.bf16.msra.mxu0 0
  %2302 = vmatprep.subr.bf16.mxu0 0
  %2303 = vmatpush1.bf16.msra.mxu0 0
  %2304 = vmatprep.subr.bf16.mxu0 0
  %2305 = vmatpush1.bf16.msra.mxu0 0
  %2306 = vmatprep.subr.bf16.mxu0 0
  %2307 = vmatpush1.bf16.msra.mxu0 0
  %2308 = vmatprep.subr.bf16.mxu0 0
  %2309 = vmatpush1.bf16.msra.mxu0 0
  %2310 = vmatprep.subr.bf16.mxu0 0
  %2311 = vmatpush1.bf16.msra.mxu0 0
  %2312 = vmatprep.subr.bf16.mxu0 0
  %2313 = vmatpush1.bf16.msra.mxu0 0
  %2314 = vmatprep.subr.bf16.mxu0 0
  %2315 = vmatpush1.bf16.msra.mxu0 0
  %2316 = vmatprep.subr.bf16.mxu0 0
  %2317 = vmatpush1.bf16.msra.mxu0 0
  %2318 = vmatprep.subr.bf16.mxu0 0
  %2319 = vmatpush1.bf16.msra.mxu0 0
  %2320 = vmatprep.subr.bf16.mxu0 0
  %2321 = vmatpush1.bf16.msra.mxu0 0
  %2322 = vmatprep.subr.bf16.mxu0 0
  %2323 = vmatpush1.bf16.msra.mxu0 0
  %2324 = vmatprep.subr.bf16.mxu0 0
  %2325 = vmatpush1.bf16.msra.mxu0 0
  %2326 = vmatprep.subr.bf16.mxu0 0
  %2327 = vmatpush1.bf16.msra.mxu0 0
  %2328 = vmatprep.mubr.bf16.mxu0 0
  %2329 = vmatmul.mubr.bf16.gmra.mrb[0].mxu0 %v2272
  %v2330 = vpop.f32.mrb[0].mxu0
  %v2331 = vadd.f32 0.0, %v2330
  %v2332 = vpop.f32.mrb[0].mxu0
  %v2333 = vadd.f32 0.0, %v2332
  %v2334 = vpop.f32.mrb[0].mxu0
  %v2335 = vadd.f32 0.0, %v2334
  %v2336 = vpop.f32.mrb[0].mxu0
  %v2337 = vadd.f32 0.0, %v2336
  %2338 = vdwg.mxu0
  %2339 = vmatprep.subr.bf16.mxu0 %v2285
  %2340 = vmatpush1.bf16.msra.mxu0 %v2282
  %2341 = vmatprep.subr.bf16.mxu0 0
  %2342 = vmatpush1.bf16.msra.mxu0 0
  %2343 = vmatprep.subr.bf16.mxu0 0
  %2344 = vmatpush1.bf16.msra.mxu0 0
  %2345 = vmatprep.subr.bf16.mxu0 0
  %2346 = vmatpush1.bf16.msra.mxu0 0
  %2347 = vmatprep.subr.bf16.mxu0 0
  %2348 = vmatpush1.bf16.msra.mxu0 0
  %2349 = vmatprep.subr.bf16.mxu0 0
  %2350 = vmatpush1.bf16.msra.mxu0 0
  %2351 = vmatprep.subr.bf16.mxu0 0
  %2352 = vmatpush1.bf16.msra.mxu0 0
  %2353 = vmatprep.subr.bf16.mxu0 0
  %2354 = vmatpush1.bf16.msra.mxu0 0
  %2355 = vmatprep.subr.bf16.mxu0 0
  %2356 = vmatpush1.bf16.msra.mxu0 0
  %2357 = vmatprep.subr.bf16.mxu0 0
  %2358 = vmatpush1.bf16.msra.mxu0 0
  %2359 = vmatprep.subr.bf16.mxu0 0
  %2360 = vmatpush1.bf16.msra.mxu0 0
  %2361 = vmatprep.subr.bf16.mxu0 0
  %2362 = vmatpush1.bf16.msra.mxu0 0
  %2363 = vmatprep.subr.bf16.mxu0 0
  %2364 = vmatpush1.bf16.msra.mxu0 0
  %2365 = vmatprep.subr.bf16.mxu0 0
  %2366 = vmatpush1.bf16.msra.mxu0 0
  %2367 = vmatprep.subr.bf16.mxu0 0
  %2368 = vmatpush1.bf16.msra.mxu0 0
  %2369 = vmatprep.subr.bf16.mxu0 0
  %2370 = vmatpush1.bf16.msra.mxu0 0
  %2371 = vmatprep.mubr.bf16.mxu0 0
  %2372 = vmatmul.mubr.bf16.gmra.mrb[0].mxu0 %v2272
  %v2373 = vpop.f32.mrb[0].mxu0
  %v2374 = vadd.f32 0.0, %v2373
  %v2375 = vpop.f32.mrb[0].mxu0
  %v2376 = vadd.f32 0.0, %v2375
  %v2377 = vpop.f32.mrb[0].mxu0
  %v2378 = vadd.f32 0.0, %v2377
  %v2379 = vpop.f32.mrb[0].mxu0
  %v2380 = vadd.f32 0.0, %v2379
  %2381 = vdwg.mxu0
  %2382 = vmatprep.subr.bf16.mxu0 %v2291
  %2383 = vmatpush1.bf16.msra.mxu0 %v2288
  %2384 = vmatprep.subr.bf16.mxu0 0
  %2385 = vmatpush1.bf16.msra.mxu0 0
  %2386 = vmatprep.subr.bf16.mxu0 0
  %2387 = vmatpush1.bf16.msra.mxu0 0
  %2388 = vmatprep.subr.bf16.mxu0 0
  %2389 = vmatpush1.bf16.msra.mxu0 0
  %2390 = vmatprep.subr.bf16.mxu0 0
  %2391 = vmatpush1.bf16.msra.mxu0 0
  %2392 = vmatprep.subr.bf16.mxu0 0
  %2393 = vmatpush1.bf16.msra.mxu0 0
  %2394 = vmatprep.subr.bf16.mxu0 0
  %2395 = vmatpush1.bf16.msra.mxu0 0
  %2396 = vmatprep.subr.bf16.mxu0 0
  %2397 = vmatpush1.bf16.msra.mxu0 0
  %2398 = vmatprep.subr.bf16.mxu0 0
  %2399 = vmatpush1.bf16.msra.mxu0 0
  %2400 = vmatprep.subr.bf16.mxu0 0
  %2401 = vmatpush1.bf16.msra.mxu0 0
  %2402 = vmatprep.subr.bf16.mxu0 0
  %2403 = vmatpush1.bf16.msra.mxu0 0
  %2404 = vmatprep.subr.bf16.mxu0 0
  %2405 = vmatpush1.bf16.msra.mxu0 0
  %2406 = vmatprep.subr.bf16.mxu0 0
  %2407 = vmatpush1.bf16.msra.mxu0 0
  %2408 = vmatprep.subr.bf16.mxu0 0
  %2409 = vmatpush1.bf16.msra.mxu0 0
  %2410 = vmatprep.subr.bf16.mxu0 0
  %2411 = vmatpush1.bf16.msra.mxu0 0
  %2412 = vmatprep.subr.bf16.mxu0 0
  %2413 = vmatpush1.bf16.msra.mxu0 0
  %2414 = vmatprep.mubr.bf16.mxu0 0
  %2415 = vmatmul.mubr.bf16.gmra.mrb[0].mxu0 %v2272
  %v2416 = vpop.f32.mrb[0].mxu0
  %v2417 = vadd.f32 0.0, %v2416
  %v2418 = vpop.f32.mrb[0].mxu0
  %v2419 = vadd.f32 0.0, %v2418
  %v2420 = vpop.f32.mrb[0].mxu0
  %v2421 = vadd.f32 0.0, %v2420
  %v2422 = vpop.f32.mrb[0].mxu0
  %v2423 = vadd.f32 0.0, %v2422
  %2424 = vdwg.mxu0
  %2425 = vmatprep.subr.bf16.mxu0 0
  %2426 = vmatpush1.bf16.msra.mxu0 %v2294
  %2427 = vmatprep.subr.bf16.mxu0 0
  %2428 = vmatpush1.bf16.msra.mxu0 0
  %2429 = vmatprep.subr.bf16.mxu0 0
  %2430 = vmatpush1.bf16.msra.mxu0 0
  %2431 = vmatprep.subr.bf16.mxu0 0
  %2432 = vmatpush1.bf16.msra.mxu0 0
  %2433 = vmatprep.subr.bf16.mxu0 0
  %2434 = vmatpush1.bf16.msra.mxu0 0
  %2435 = vmatprep.subr.bf16.mxu0 0
  %2436 = vmatpush1.bf16.msra.mxu0 0
  %2437 = vmatprep.subr.bf16.mxu0 0
  %2438 = vmatpush1.bf16.msra.mxu0 0
  %2439 = vmatprep.subr.bf16.mxu0 0
  %2440 = vmatpush1.bf16.msra.mxu0 0
  %2441 = vmatprep.subr.bf16.mxu0 0
  %2442 = vmatpush1.bf16.msra.mxu0 0
  %2443 = vmatprep.subr.bf16.mxu0 0
  %2444 = vmatpush1.bf16.msra.mxu0 0
  %2445 = vmatprep.subr.bf16.mxu0 0
  %2446 = vmatpush1.bf16.msra.mxu0 0
  %2447 = vmatprep.subr.bf16.mxu0 0
  %2448 = vmatpush1.bf16.msra.mxu0 0
  %2449 = vmatprep.subr.bf16.mxu0 0
  %2450 = vmatpush1.bf16.msra.mxu0 0
  %2451 = vmatprep.subr.bf16.mxu0 0
  %2452 = vmatpush1.bf16.msra.mxu0 0
  %2453 = vmatprep.subr.bf16.mxu0 0
  %2454 = vmatpush1.bf16.msra.mxu0 0
  %2455 = vmatprep.subr.bf16.mxu0 0
  %2456 = vmatpush1.bf16.msra.mxu0 0
  %2457 = vmatprep.mubr.bf16.mxu0 0
  %2458 = vmatmul.mubr.bf16.gmra.mrb[0].mxu0 %v2272
  %v2459 = vpop.f32.mrb[0].mxu0
  %v2460 = vadd.f32 0.0, %v2459
  %v2461 = vpop.f32.mrb[0].mxu0
  %v2462 = vpop.f32.mrb[0].mxu0
  %v2463 = vadd.f32 0.0, %v2462
  %v2464 = vpop.f32.mrb[0].mxu0
  %2465 = vdwg.mxu0
  %v2468 = vunpack.c.l.b16 %v2226
  %v2469 = vunpack.c.l.b16 %v2227
  %v2470 = vpack.c.b16 %v2469, %v2468
  %v2472 = vsel %vm1199, %v2470, 0
  %v2475 = vsel %vm2274, %v2228, 0
  %v2478 = vsel %vm2274, %v2229, 0
  %v2481 = vsel %vm2274, %v2230, 0
  %v2484 = vsel %vm2274, %v2231, 0
  %v2487 = vsel %vm2274, %v2232, 0
  %v2490 = vsel %vm2274, %v2233, 0
  %v2493 = vsel %vm2274, %v2234, 0
  %2495 = vmatprep.subr.bf16.mxu0 %v2478
  %2496 = vmatpush1.bf16.msra.mxu0 %v2475
  %2497 = vmatprep.subr.bf16.mxu0 0
  %2498 = vmatpush1.bf16.msra.mxu0 0
  %2499 = vmatprep.subr.bf16.mxu0 0
  %2500 = vmatpush1.bf16.msra.mxu0 0
  %2501 = vmatprep.subr.bf16.mxu0 0
  %2502 = vmatpush1.bf16.msra.mxu0 0
  %2503 = vmatprep.subr.bf16.mxu0 0
  %2504 = vmatpush1.bf16.msra.mxu0 0
  %2505 = vmatprep.subr.bf16.mxu0 0
  %2506 = vmatpush1.bf16.msra.mxu0 0
  %2507 = vmatprep.subr.bf16.mxu0 0
  %2508 = vmatpush1.bf16.msra.mxu0 0
  %2509 = vmatprep.subr.bf16.mxu0 0
  %2510 = vmatpush1.bf16.msra.mxu0 0
  %2511 = vmatprep.subr.bf16.mxu0 0
  %2512 = vmatpush1.bf16.msra.mxu0 0
  %2513 = vmatprep.subr.bf16.mxu0 0
  %2514 = vmatpush1.bf16.msra.mxu0 0
  %2515 = vmatprep.subr.bf16.mxu0 0
  %2516 = vmatpush1.bf16.msra.mxu0 0
  %2517 = vmatprep.subr.bf16.mxu0 0
  %2518 = vmatpush1.bf16.msra.mxu0 0
  %2519 = vmatprep.subr.bf16.mxu0 0
  %2520 = vmatpush1.bf16.msra.mxu0 0
  %2521 = vmatprep.subr.bf16.mxu0 0
  %2522 = vmatpush1.bf16.msra.mxu0 0
  %2523 = vmatprep.subr.bf16.mxu0 0
  %2524 = vmatpush1.bf16.msra.mxu0 0
  %2525 = vmatprep.subr.bf16.mxu0 0
  %2526 = vmatpush1.bf16.msra.mxu0 0
  %2527 = vmatprep.mubr.bf16.mxu0 0
  %2528 = vmatmul.mubr.bf16.gmra.mrb[0].mxu0 %v2472
  %v2529 = vpop.f32.mrb[0].mxu0
  %v2530 = vadd.f32 %v2331, %v2529
  %v2531 = vpop.f32.mrb[0].mxu0
  %v2532 = vadd.f32 %v2333, %v2531
  %v2533 = vpop.f32.mrb[0].mxu0
  %v2534 = vadd.f32 %v2335, %v2533
  %v2535 = vpop.f32.mrb[0].mxu0
  %v2536 = vadd.f32 %v2337, %v2535
  %2537 = vdwg.mxu0
  %2538 = vmatprep.subr.bf16.mxu0 %v2484
  %2539 = vmatpush1.bf16.msra.mxu0 %v2481
  %2540 = vmatprep.subr.bf16.mxu0 0
  %2541 = vmatpush1.bf16.msra.mxu0 0
  %2542 = vmatprep.subr.bf16.mxu0 0
  %2543 = vmatpush1.bf16.msra.mxu0 0
  %2544 = vmatprep.subr.bf16.mxu0 0
  %2545 = vmatpush1.bf16.msra.mxu0 0
  %2546 = vmatprep.subr.bf16.mxu0 0
  %2547 = vmatpush1.bf16.msra.mxu0 0
  %2548 = vmatprep.subr.bf16.mxu0 0
  %2549 = vmatpush1.bf16.msra.mxu0 0
  %2550 = vmatprep.subr.bf16.mxu0 0
  %2551 = vmatpush1.bf16.msra.mxu0 0
  %2552 = vmatprep.subr.bf16.mxu0 0
  %2553 = vmatpush1.bf16.msra.mxu0 0
  %2554 = vmatprep.subr.bf16.mxu0 0
  %2555 = vmatpush1.bf16.msra.mxu0 0
  %2556 = vmatprep.subr.bf16.mxu0 0
  %2557 = vmatpush1.bf16.msra.mxu0 0
  %2558 = vmatprep.subr.bf16.mxu0 0
  %2559 = vmatpush1.bf16.msra.mxu0 0
  %2560 = vmatprep.subr.bf16.mxu0 0
  %2561 = vmatpush1.bf16.msra.mxu0 0
  %2562 = vmatprep.subr.bf16.mxu0 0
  %2563 = vmatpush1.bf16.msra.mxu0 0
  %2564 = vmatprep.subr.bf16.mxu0 0
  %2565 = vmatpush1.bf16.msra.mxu0 0
  %2566 = vmatprep.subr.bf16.mxu0 0
  %2567 = vmatpush1.bf16.msra.mxu0 0
  %2568 = vmatprep.subr.bf16.mxu0 0
  %2569 = vmatpush1.bf16.msra.mxu0 0
  %2570 = vmatprep.mubr.bf16.mxu0 0
  %2571 = vmatmul.mubr.bf16.gmra.mrb[0].mxu0 %v2472
  %v2572 = vpop.f32.mrb[0].mxu0
  %v2573 = vadd.f32 %v2374, %v2572
  %v2574 = vpop.f32.mrb[0].mxu0
  %v2575 = vadd.f32 %v2376, %v2574
  %v2576 = vpop.f32.mrb[0].mxu0
  %v2577 = vadd.f32 %v2378, %v2576
  %v2578 = vpop.f32.mrb[0].mxu0
  %v2579 = vadd.f32 %v2380, %v2578
  %2580 = vdwg.mxu0
  %2581 = vmatprep.subr.bf16.mxu0 %v2490
  %2582 = vmatpush1.bf16.msra.mxu0 %v2487
  %2583 = vmatprep.subr.bf16.mxu0 0
  %2584 = vmatpush1.bf16.msra.mxu0 0
  %2585 = vmatprep.subr.bf16.mxu0 0
  %2586 = vmatpush1.bf16.msra.mxu0 0
  %2587 = vmatprep.subr.bf16.mxu0 0
  %2588 = vmatpush1.bf16.msra.mxu0 0
  %2589 = vmatprep.subr.bf16.mxu0 0
  %2590 = vmatpush1.bf16.msra.mxu0 0
  %2591 = vmatprep.subr.bf16.mxu0 0
  %2592 = vmatpush1.bf16.msra.mxu0 0
  %2593 = vmatprep.subr.bf16.mxu0 0
  %2594 = vmatpush1.bf16.msra.mxu0 0
  %2595 = vmatprep.subr.bf16.mxu0 0
  %2596 = vmatpush1.bf16.msra.mxu0 0
  %2597 = vmatprep.subr.bf16.mxu0 0
  %2598 = vmatpush1.bf16.msra.mxu0 0
  %2599 = vmatprep.subr.bf16.mxu0 0
  %2600 = vmatpush1.bf16.msra.mxu0 0
  %2601 = vmatprep.subr.bf16.mxu0 0
  %2602 = vmatpush1.bf16.msra.mxu0 0
  %2603 = vmatprep.subr.bf16.mxu0 0
  %2604 = vmatpush1.bf16.msra.mxu0 0
  %2605 = vmatprep.subr.bf16.mxu0 0
  %2606 = vmatpush1.bf16.msra.mxu0 0
  %2607 = vmatprep.subr.bf16.mxu0 0
  %2608 = vmatpush1.bf16.msra.mxu0 0
  %2609 = vmatprep.subr.bf16.mxu0 0
  %2610 = vmatpush1.bf16.msra.mxu0 0
  %2611 = vmatprep.subr.bf16.mxu0 0
  %2612 = vmatpush1.bf16.msra.mxu0 0
  %2613 = vmatprep.mubr.bf16.mxu0 0
  %2614 = vmatmul.mubr.bf16.gmra.mrb[0].mxu0 %v2472
  %v2615 = vpop.f32.mrb[0].mxu0
  %v2616 = vadd.f32 %v2417, %v2615
  %v2617 = vpop.f32.mrb[0].mxu0
  %v2618 = vadd.f32 %v2419, %v2617
  %v2619 = vpop.f32.mrb[0].mxu0
  %v2620 = vadd.f32 %v2421, %v2619
  %v2621 = vpop.f32.mrb[0].mxu0
  %v2622 = vadd.f32 %v2423, %v2621
  %2623 = vdwg.mxu0
  %2624 = vmatprep.subr.bf16.mxu0 0
  %2625 = vmatpush1.bf16.msra.mxu0 %v2493
  %2626 = vmatprep.subr.bf16.mxu0 0
  %2627 = vmatpush1.bf16.msra.mxu0 0
  %2628 = vmatprep.subr.bf16.mxu0 0
  %2629 = vmatpush1.bf16.msra.mxu0 0
  %2630 = vmatprep.subr.bf16.mxu0 0
  %2631 = vmatpush1.bf16.msra.mxu0 0
  %2632 = vmatprep.subr.bf16.mxu0 0
  %2633 = vmatpush1.bf16.msra.mxu0 0
  %2634 = vmatprep.subr.bf16.mxu0 0
  %2635 = vmatpush1.bf16.msra.mxu0 0
  %2636 = vmatprep.subr.bf16.mxu0 0
  %2637 = vmatpush1.bf16.msra.mxu0 0
  %2638 = vmatprep.subr.bf16.mxu0 0
  %2639 = vmatpush1.bf16.msra.mxu0 0
  %2640 = vmatprep.subr.bf16.mxu0 0
  %2641 = vmatpush1.bf16.msra.mxu0 0
  %2642 = vmatprep.subr.bf16.mxu0 0
  %2643 = vmatpush1.bf16.msra.mxu0 0
  %2644 = vmatprep.subr.bf16.mxu0 0
  %2645 = vmatpush1.bf16.msra.mxu0 0
  %2646 = vmatprep.subr.bf16.mxu0 0
  %2647 = vmatpush1.bf16.msra.mxu0 0
  %2648 = vmatprep.subr.bf16.mxu0 0
  %2649 = vmatpush1.bf16.msra.mxu0 0
  %2650 = vmatprep.subr.bf16.mxu0 0
  %2651 = vmatpush1.bf16.msra.mxu0 0
  %2652 = vmatprep.subr.bf16.mxu0 0
  %2653 = vmatpush1.bf16.msra.mxu0 0
  %2654 = vmatprep.subr.bf16.mxu0 0
  %2655 = vmatpush1.bf16.msra.mxu0 0
  %2656 = vmatprep.mubr.bf16.mxu0 0
  %2657 = vmatmul.mubr.bf16.gmra.mrb[0].mxu0 %v2472
  %v2658 = vpop.f32.mrb[0].mxu0
  %v2659 = vadd.f32 %v2460, %v2658
  %v2660 = vpop.f32.mrb[0].mxu0
  %v2661 = vpop.f32.mrb[0].mxu0
  %v2662 = vadd.f32 %v2463, %v2661
  %v2663 = vpop.f32.mrb[0].mxu0
  %2664 = vdwg.mxu0
  %s2665 = scalar_lea.vmem %s3, 16
  %v2666 = vld [vmem:[%s2665] sm:$0xf]
  %v2667 = vld [vmem:[%s2665 + $0x4] sm:$0xf]
  %v2670 = vunpack.c.l.b16 %v2666
  %v2671 = vunpack.c.l.b16 %v2667
  %v2672 = vpack.c.b16 %v2671, %v2670
  %2673 = vrot.lane.b32.xlu0 %v2228, 120
  %v2674 = vpop.permute.xlu0 %2673
  %2675 = vrot.lane.b32.xlu0 %v2229, 120
  %v2676 = vpop.permute.xlu0 %2675
  %2677 = vrot.lane.b32.xlu0 %v2230, 120
  %v2678 = vpop.permute.xlu0 %2677
  %2679 = vrot.lane.b32.xlu0 %v2231, 120
  %v2680 = vpop.permute.xlu0 %2679
  %2681 = vrot.lane.b32.xlu0 %v2232, 120
  %v2682 = vpop.permute.xlu0 %2681
  %2683 = vrot.lane.b32.xlu0 %v2233, 120
  %v2684 = vpop.permute.xlu0 %2683
  %2685 = vrot.lane.b32.xlu0 %v2234, 120
  %v2686 = vpop.permute.xlu0 %2685
  %vm2687 = vcmask 982016
  %v2688 = vsel %vm2687, %v2674, %v2676
  %v2689 = vsel %vm2687, %v2676, %v2678
  %v2690 = vsel %vm2687, %v2678, %v2680
  %v2691 = vsel %vm2687, %v2680, %v2682
  %v2692 = vsel %vm2687, %v2682, %v2684
  %v2693 = vsel %vm2687, %v2684, %v2686
  %v2695 = vsel %vm1199, %v2672, 0
  %v2698 = vsel %vm2274, %v2688, 0
  %v2701 = vsel %vm2274, %v2689, 0
  %v2704 = vsel %vm2274, %v2690, 0
  %v2707 = vsel %vm2274, %v2691, 0
  %v2710 = vsel %vm2274, %v2692, 0
  %v2713 = vsel %vm2274, %v2693, 0
  %v2716 = vsel %vm2274, %v2686, 0
  %2718 = vmatprep.subr.bf16.mxu0 %v2701
  %2719 = vmatpush1.bf16.msra.mxu0 %v2698
  %2720 = vmatprep.subr.bf16.mxu0 0
  %2721 = vmatpush1.bf16.msra.mxu0 0
  %2722 = vmatprep.subr.bf16.mxu0 0
  %2723 = vmatpush1.bf16.msra.mxu0 0
  %2724 = vmatprep.subr.bf16.mxu0 0
  %2725 = vmatpush1.bf16.msra.mxu0 0
  %2726 = vmatprep.subr.bf16.mxu0 0
  %2727 = vmatpush1.bf16.msra.mxu0 0
  %2728 = vmatprep.subr.bf16.mxu0 0
  %2729 = vmatpush1.bf16.msra.mxu0 0
  %2730 = vmatprep.subr.bf16.mxu0 0
  %2731 = vmatpush1.bf16.msra.mxu0 0
  %2732 = vmatprep.subr.bf16.mxu0 0
  %2733 = vmatpush1.bf16.msra.mxu0 0
  %2734 = vmatprep.subr.bf16.mxu0 0
  %2735 = vmatpush1.bf16.msra.mxu0 0
  %2736 = vmatprep.subr.bf16.mxu0 0
  %2737 = vmatpush1.bf16.msra.mxu0 0
  %2738 = vmatprep.subr.bf16.mxu0 0
  %2739 = vmatpush1.bf16.msra.mxu0 0
  %2740 = vmatprep.subr.bf16.mxu0 0
  %2741 = vmatpush1.bf16.msra.mxu0 0
  %2742 = vmatprep.subr.bf16.mxu0 0
  %2743 = vmatpush1.bf16.msra.mxu0 0
  %2744 = vmatprep.subr.bf16.mxu0 0
  %2745 = vmatpush1.bf16.msra.mxu0 0
  %2746 = vmatprep.subr.bf16.mxu0 0
  %2747 = vmatpush1.bf16.msra.mxu0 0
  %2748 = vmatprep.subr.bf16.mxu0 0
  %2749 = vmatpush1.bf16.msra.mxu0 0
  %2750 = vmatprep.mubr.bf16.mxu0 0
  %2751 = vmatmul.mubr.bf16.gmra.mrb[0].mxu0 %v2695
  %v2752 = vpop.f32.mrb[0].mxu0
  %v2753 = vadd.f32 0.0, %v2752
  %v2754 = vpop.f32.mrb[0].mxu0
  %v2755 = vadd.f32 0.0, %v2754
  %v2756 = vpop.f32.mrb[0].mxu0
  %v2757 = vadd.f32 0.0, %v2756
  %v2758 = vpop.f32.mrb[0].mxu0
  %v2759 = vadd.f32 0.0, %v2758
  %2760 = vdwg.mxu0
  %2761 = vmatprep.subr.bf16.mxu0 %v2707
  %2762 = vmatpush1.bf16.msra.mxu0 %v2704
  %2763 = vmatprep.subr.bf16.mxu0 0
  %2764 = vmatpush1.bf16.msra.mxu0 0
  %2765 = vmatprep.subr.bf16.mxu0 0
  %2766 = vmatpush1.bf16.msra.mxu0 0
  %2767 = vmatprep.subr.bf16.mxu0 0
  %2768 = vmatpush1.bf16.msra.mxu0 0
  %2769 = vmatprep.subr.bf16.mxu0 0
  %2770 = vmatpush1.bf16.msra.mxu0 0
  %2771 = vmatprep.subr.bf16.mxu0 0
  %2772 = vmatpush1.bf16.msra.mxu0 0
  %2773 = vmatprep.subr.bf16.mxu0 0
  %2774 = vmatpush1.bf16.msra.mxu0 0
  %2775 = vmatprep.subr.bf16.mxu0 0
  %2776 = vmatpush1.bf16.msra.mxu0 0
  %2777 = vmatprep.subr.bf16.mxu0 0
  %2778 = vmatpush1.bf16.msra.mxu0 0
  %2779 = vmatprep.subr.bf16.mxu0 0
  %2780 = vmatpush1.bf16.msra.mxu0 0
  %2781 = vmatprep.subr.bf16.mxu0 0
  %2782 = vmatpush1.bf16.msra.mxu0 0
  %2783 = vmatprep.subr.bf16.mxu0 0
  %2784 = vmatpush1.bf16.msra.mxu0 0
  %2785 = vmatprep.subr.bf16.mxu0 0
  %2786 = vmatpush1.bf16.msra.mxu0 0
  %2787 = vmatprep.subr.bf16.mxu0 0
  %2788 = vmatpush1.bf16.msra.mxu0 0
  %2789 = vmatprep.subr.bf16.mxu0 0
  %2790 = vmatpush1.bf16.msra.mxu0 0
  %2791 = vmatprep.subr.bf16.mxu0 0
  %2792 = vmatpush1.bf16.msra.mxu0 0
  %2793 = vmatprep.mubr.bf16.mxu0 0
  %2794 = vmatmul.mubr.bf16.gmra.mrb[0].mxu0 %v2695
  %v2795 = vpop.f32.mrb[0].mxu0
  %v2796 = vadd.f32 0.0, %v2795
  %v2797 = vpop.f32.mrb[0].mxu0
  %v2798 = vadd.f32 0.0, %v2797
  %v2799 = vpop.f32.mrb[0].mxu0
  %v2800 = vadd.f32 0.0, %v2799
  %v2801 = vpop.f32.mrb[0].mxu0
  %v2802 = vadd.f32 0.0, %v2801
  %2803 = vdwg.mxu0
  %2804 = vmatprep.subr.bf16.mxu0 %v2713
  %2805 = vmatpush1.bf16.msra.mxu0 %v2710
  %2806 = vmatprep.subr.bf16.mxu0 0
  %2807 = vmatpush1.bf16.msra.mxu0 0
  %2808 = vmatprep.subr.bf16.mxu0 0
  %2809 = vmatpush1.bf16.msra.mxu0 0
  %2810 = vmatprep.subr.bf16.mxu0 0
  %2811 = vmatpush1.bf16.msra.mxu0 0
  %2812 = vmatprep.subr.bf16.mxu0 0
  %2813 = vmatpush1.bf16.msra.mxu0 0
  %2814 = vmatprep.subr.bf16.mxu0 0
  %2815 = vmatpush1.bf16.msra.mxu0 0
  %2816 = vmatprep.subr.bf16.mxu0 0
  %2817 = vmatpush1.bf16.msra.mxu0 0
  %2818 = vmatprep.subr.bf16.mxu0 0
  %2819 = vmatpush1.bf16.msra.mxu0 0
  %2820 = vmatprep.subr.bf16.mxu0 0
  %2821 = vmatpush1.bf16.msra.mxu0 0
  %2822 = vmatprep.subr.bf16.mxu0 0
  %2823 = vmatpush1.bf16.msra.mxu0 0
  %2824 = vmatprep.subr.bf16.mxu0 0
  %2825 = vmatpush1.bf16.msra.mxu0 0
  %2826 = vmatprep.subr.bf16.mxu0 0
  %2827 = vmatpush1.bf16.msra.mxu0 0
  %2828 = vmatprep.subr.bf16.mxu0 0
  %2829 = vmatpush1.bf16.msra.mxu0 0
  %2830 = vmatprep.subr.bf16.mxu0 0
  %2831 = vmatpush1.bf16.msra.mxu0 0
  %2832 = vmatprep.subr.bf16.mxu0 0
  %2833 = vmatpush1.bf16.msra.mxu0 0
  %2834 = vmatprep.subr.bf16.mxu0 0
  %2835 = vmatpush1.bf16.msra.mxu0 0
  %2836 = vmatprep.mubr.bf16.mxu0 0
  %2837 = vmatmul.mubr.bf16.gmra.mrb[0].mxu0 %v2695
  %v2838 = vpop.f32.mrb[0].mxu0
  %v2839 = vadd.f32 0.0, %v2838
  %v2840 = vpop.f32.mrb[0].mxu0
  %v2841 = vadd.f32 0.0, %v2840
  %v2842 = vpop.f32.mrb[0].mxu0
  %v2843 = vadd.f32 0.0, %v2842
  %v2844 = vpop.f32.mrb[0].mxu0
  %v2845 = vadd.f32 0.0, %v2844
  %2846 = vdwg.mxu0
  %2847 = vmatprep.subr.bf16.mxu0 0
  %2848 = vmatpush1.bf16.msra.mxu0 %v2716
  %2849 = vmatprep.subr.bf16.mxu0 0
  %2850 = vmatpush1.bf16.msra.mxu0 0
  %2851 = vmatprep.subr.bf16.mxu0 0
  %2852 = vmatpush1.bf16.msra.mxu0 0
  %2853 = vmatprep.subr.bf16.mxu0 0
  %2854 = vmatpush1.bf16.msra.mxu0 0
  %2855 = vmatprep.subr.bf16.mxu0 0
  %2856 = vmatpush1.bf16.msra.mxu0 0
  %2857 = vmatprep.subr.bf16.mxu0 0
  %2858 = vmatpush1.bf16.msra.mxu0 0
  %2859 = vmatprep.subr.bf16.mxu0 0
  %2860 = vmatpush1.bf16.msra.mxu0 0
  %2861 = vmatprep.subr.bf16.mxu0 0
  %2862 = vmatpush1.bf16.msra.mxu0 0
  %2863 = vmatprep.subr.bf16.mxu0 0
  %2864 = vmatpush1.bf16.msra.mxu0 0
  %2865 = vmatprep.subr.bf16.mxu0 0
  %2866 = vmatpush1.bf16.msra.mxu0 0
  %2867 = vmatprep.subr.bf16.mxu0 0
  %2868 = vmatpush1.bf16.msra.mxu0 0
  %2869 = vmatprep.subr.bf16.mxu0 0
  %2870 = vmatpush1.bf16.msra.mxu0 0
  %2871 = vmatprep.subr.bf16.mxu0 0
  %2872 = vmatpush1.bf16.msra.mxu0 0
  %2873 = vmatprep.subr.bf16.mxu0 0
  %2874 = vmatpush1.bf16.msra.mxu0 0
  %2875 = vmatprep.subr.bf16.mxu0 0
  %2876 = vmatpush1.bf16.msra.mxu0 0
  %2877 = vmatprep.subr.bf16.mxu0 0
  %2878 = vmatpush1.bf16.msra.mxu0 0
  %2879 = vmatprep.mubr.bf16.mxu0 0
  %2880 = vmatmul.mubr.bf16.gmra.mrb[0].mxu0 %v2695
  %v2881 = vpop.f32.mrb[0].mxu0
  %v2882 = vadd.f32 0.0, %v2881
  %v2883 = vpop.f32.mrb[0].mxu0
  %v2884 = vpop.f32.mrb[0].mxu0
  %v2885 = vadd.f32 0.0, %v2884
  %v2886 = vpop.f32.mrb[0].mxu0
  %2887 = vdwg.mxu0
  %v2888 = vadd.f32 %v2530, %v2753
  %v2889 = vadd.f32 %v2532, %v2755
  %v2890 = vadd.f32 %v2573, %v2796
  %v2891 = vadd.f32 %v2575, %v2798
  %v2892 = vadd.f32 %v2616, %v2839
  %v2893 = vadd.f32 %v2618, %v2841
  %v2894 = vadd.f32 %v2659, %v2882
  %v2895 = vadd.f32 %v2534, %v2757
  %v2896 = vadd.f32 %v2536, %v2759
  %v2897 = vadd.f32 %v2577, %v2800
  %v2898 = vadd.f32 %v2579, %v2802
  %v2899 = vadd.f32 %v2620, %v2843
  %v2900 = vadd.f32 %v2622, %v2845
  %v2901 = vadd.f32 %v2662, %v2885
  %s2902 = scalar_lea.vmem %s3, 24
  %v2903 = vld [vmem:[%s2902] sm:$0xf]
  %v2904 = vld [vmem:[%s2902 + $0x4] sm:$0xf]
  %v2907 = vunpack.c.l.b16 %v2903
  %v2908 = vunpack.c.l.b16 %v2904
  %v2909 = vpack.c.b16 %v2908, %v2907
  %2910 = vrot.lane.b32.xlu0 %v2228, 116
  %v2911 = vpop.permute.xlu0 %2910
  %2912 = vrot.lane.b32.xlu0 %v2229, 116
  %v2913 = vpop.permute.xlu0 %2912
  %2914 = vrot.lane.b32.xlu0 %v2230, 116
  %v2915 = vpop.permute.xlu0 %2914
  %2916 = vrot.lane.b32.xlu0 %v2231, 116
  %v2917 = vpop.permute.xlu0 %2916
  %2918 = vrot.lane.b32.xlu0 %v2232, 116
  %v2919 = vpop.permute.xlu0 %2918
  %2920 = vrot.lane.b32.xlu0 %v2233, 116
  %v2921 = vpop.permute.xlu0 %2920
  %2922 = vrot.lane.b32.xlu0 %v2234, 116
  %v2923 = vpop.permute.xlu0 %2922
  %vm2924 = vcmask 949248
  %v2925 = vsel %vm2924, %v2911, %v2913
  %v2926 = vsel %vm2924, %v2913, %v2915
  %v2927 = vsel %vm2924, %v2915, %v2917
  %v2928 = vsel %vm2924, %v2917, %v2919
  %v2929 = vsel %vm2924, %v2919, %v2921
  %v2930 = vsel %vm2924, %v2921, %v2923
  %v2932 = vsel %vm1199, %v2909, 0
  %v2935 = vsel %vm2274, %v2925, 0
  %v2938 = vsel %vm2274, %v2926, 0
  %v2941 = vsel %vm2274, %v2927, 0
  %v2944 = vsel %vm2274, %v2928, 0
  %v2947 = vsel %vm2274, %v2929, 0
  %v2950 = vsel %vm2274, %v2930, 0
  %v2953 = vsel %vm2274, %v2923, 0
  %2955 = vmatprep.subr.bf16.mxu0 %v2938
  %2956 = vmatpush1.bf16.msra.mxu0 %v2935
  %2957 = vmatprep.subr.bf16.mxu0 0
  %2958 = vmatpush1.bf16.msra.mxu0 0
  %2959 = vmatprep.subr.bf16.mxu0 0
  %2960 = vmatpush1.bf16.msra.mxu0 0
  %2961 = vmatprep.subr.bf16.mxu0 0
  %2962 = vmatpush1.bf16.msra.mxu0 0
  %2963 = vmatprep.subr.bf16.mxu0 0
  %2964 = vmatpush1.bf16.msra.mxu0 0
  %2965 = vmatprep.subr.bf16.mxu0 0
  %2966 = vmatpush1.bf16.msra.mxu0 0
  %2967 = vmatprep.subr.bf16.mxu0 0
  %2968 = vmatpush1.bf16.msra.mxu0 0
  %2969 = vmatprep.subr.bf16.mxu0 0
  %2970 = vmatpush1.bf16.msra.mxu0 0
  %2971 = vmatprep.subr.bf16.mxu0 0
  %2972 = vmatpush1.bf16.msra.mxu0 0
  %2973 = vmatprep.subr.bf16.mxu0 0
  %2974 = vmatpush1.bf16.msra.mxu0 0
  %2975 = vmatprep.subr.bf16.mxu0 0
  %2976 = vmatpush1.bf16.msra.mxu0 0
  %2977 = vmatprep.subr.bf16.mxu0 0
  %2978 = vmatpush1.bf16.msra.mxu0 0
  %2979 = vmatprep.subr.bf16.mxu0 0
  %2980 = vmatpush1.bf16.msra.mxu0 0
  %2981 = vmatprep.subr.bf16.mxu0 0
  %2982 = vmatpush1.bf16.msra.mxu0 0
  %2983 = vmatprep.subr.bf16.mxu0 0
  %2984 = vmatpush1.bf16.msra.mxu0 0
  %2985 = vmatprep.subr.bf16.mxu0 0
  %2986 = vmatpush1.bf16.msra.mxu0 0
  %2987 = vmatprep.mubr.bf16.mxu0 0
  %2988 = vmatmul.mubr.bf16.gmra.mrb[0].mxu0 %v2932
  %v2989 = vpop.f32.mrb[0].mxu0
  %v2990 = vadd.f32 0.0, %v2989
  %v2991 = vpop.f32.mrb[0].mxu0
  %v2992 = vadd.f32 0.0, %v2991
  %v2993 = vpop.f32.mrb[0].mxu0
  %v2994 = vadd.f32 0.0, %v2993
  %v2995 = vpop.f32.mrb[0].mxu0
  %v2996 = vadd.f32 0.0, %v2995
  %2997 = vdwg.mxu0
  %2998 = vmatprep.subr.bf16.mxu0 %v2944
  %2999 = vmatpush1.bf16.msra.mxu0 %v2941
  %3000 = vmatprep.subr.bf16.mxu0 0
  %3001 = vmatpush1.bf16.msra.mxu0 0
  %3002 = vmatprep.subr.bf16.mxu0 0
  %3003 = vmatpush1.bf16.msra.mxu0 0
  %3004 = vmatprep.subr.bf16.mxu0 0
  %3005 = vmatpush1.bf16.msra.mxu0 0
  %3006 = vmatprep.subr.bf16.mxu0 0
  %3007 = vmatpush1.bf16.msra.mxu0 0
  %3008 = vmatprep.subr.bf16.mxu0 0
  %3009 = vmatpush1.bf16.msra.mxu0 0
  %3010 = vmatprep.subr.bf16.mxu0 0
  %3011 = vmatpush1.bf16.msra.mxu0 0
  %3012 = vmatprep.subr.bf16.mxu0 0
  %3013 = vmatpush1.bf16.msra.mxu0 0
  %3014 = vmatprep.subr.bf16.mxu0 0
  %3015 = vmatpush1.bf16.msra.mxu0 0
  %3016 = vmatprep.subr.bf16.mxu0 0
  %3017 = vmatpush1.bf16.msra.mxu0 0
  %3018 = vmatprep.subr.bf16.mxu0 0
  %3019 = vmatpush1.bf16.msra.mxu0 0
  %3020 = vmatprep.subr.bf16.mxu0 0
  %3021 = vmatpush1.bf16.msra.mxu0 0
  %3022 = vmatprep.subr.bf16.mxu0 0
  %3023 = vmatpush1.bf16.msra.mxu0 0
  %3024 = vmatprep.subr.bf16.mxu0 0
  %3025 = vmatpush1.bf16.msra.mxu0 0
  %3026 = vmatprep.subr.bf16.mxu0 0
  %3027 = vmatpush1.bf16.msra.mxu0 0
  %3028 = vmatprep.subr.bf16.mxu0 0
  %3029 = vmatpush1.bf16.msra.mxu0 0
  %3030 = vmatprep.mubr.bf16.mxu0 0
  %3031 = vmatmul.mubr.bf16.gmra.mrb[0].mxu0 %v2932
  %v3032 = vpop.f32.mrb[0].mxu0
  %v3033 = vadd.f32 0.0, %v3032
  %v3034 = vpop.f32.mrb[0].mxu0
  %v3035 = vadd.f32 0.0, %v3034
  %v3036 = vpop.f32.mrb[0].mxu0
  %v3037 = vadd.f32 0.0, %v3036
  %v3038 = vpop.f32.mrb[0].mxu0
  %v3039 = vadd.f32 0.0, %v3038
  %3040 = vdwg.mxu0
  %3041 = vmatprep.subr.bf16.mxu0 %v2950
  %3042 = vmatpush1.bf16.msra.mxu0 %v2947
  %3043 = vmatprep.subr.bf16.mxu0 0
  %3044 = vmatpush1.bf16.msra.mxu0 0
  %3045 = vmatprep.subr.bf16.mxu0 0
  %3046 = vmatpush1.bf16.msra.mxu0 0
  %3047 = vmatprep.subr.bf16.mxu0 0
  %3048 = vmatpush1.bf16.msra.mxu0 0
  %3049 = vmatprep.subr.bf16.mxu0 0
  %3050 = vmatpush1.bf16.msra.mxu0 0
  %3051 = vmatprep.subr.bf16.mxu0 0
  %3052 = vmatpush1.bf16.msra.mxu0 0
  %3053 = vmatprep.subr.bf16.mxu0 0
  %3054 = vmatpush1.bf16.msra.mxu0 0
  %3055 = vmatprep.subr.bf16.mxu0 0
  %3056 = vmatpush1.bf16.msra.mxu0 0
  %3057 = vmatprep.subr.bf16.mxu0 0
  %3058 = vmatpush1.bf16.msra.mxu0 0
  %3059 = vmatprep.subr.bf16.mxu0 0
  %3060 = vmatpush1.bf16.msra.mxu0 0
  %3061 = vmatprep.subr.bf16.mxu0 0
  %3062 = vmatpush1.bf16.msra.mxu0 0
  %3063 = vmatprep.subr.bf16.mxu0 0
  %3064 = vmatpush1.bf16.msra.mxu0 0
  %3065 = vmatprep.subr.bf16.mxu0 0
  %3066 = vmatpush1.bf16.msra.mxu0 0
  %3067 = vmatprep.subr.bf16.mxu0 0
  %3068 = vmatpush1.bf16.msra.mxu0 0
  %3069 = vmatprep.subr.bf16.mxu0 0
  %3070 = vmatpush1.bf16.msra.mxu0 0
  %3071 = vmatprep.subr.bf16.mxu0 0
  %3072 = vmatpush1.bf16.msra.mxu0 0
  %3073 = vmatprep.mubr.bf16.mxu0 0
  %3074 = vmatmul.mubr.bf16.gmra.mrb[0].mxu0 %v2932
  %v3075 = vpop.f32.mrb[0].mxu0
  %v3076 = vadd.f32 0.0, %v3075
  %v3077 = vpop.f32.mrb[0].mxu0
  %v3078 = vadd.f32 0.0, %v3077
  %v3079 = vpop.f32.mrb[0].mxu0
  %v3080 = vadd.f32 0.0, %v3079
  %v3081 = vpop.f32.mrb[0].mxu0
  %v3082 = vadd.f32 0.0, %v3081
  %3083 = vdwg.mxu0
  %3084 = vmatprep.subr.bf16.mxu0 0
  %3085 = vmatpush1.bf16.msra.mxu0 %v2953
  %3086 = vmatprep.subr.bf16.mxu0 0
  %3087 = vmatpush1.bf16.msra.mxu0 0
  %3088 = vmatprep.subr.bf16.mxu0 0
  %3089 = vmatpush1.bf16.msra.mxu0 0
  %3090 = vmatprep.subr.bf16.mxu0 0
  %3091 = vmatpush1.bf16.msra.mxu0 0
  %3092 = vmatprep.subr.bf16.mxu0 0
  %3093 = vmatpush1.bf16.msra.mxu0 0
  %3094 = vmatprep.subr.bf16.mxu0 0
  %3095 = vmatpush1.bf16.msra.mxu0 0
  %3096 = vmatprep.subr.bf16.mxu0 0
  %3097 = vmatpush1.bf16.msra.mxu0 0
  %3098 = vmatprep.subr.bf16.mxu0 0
  %3099 = vmatpush1.bf16.msra.mxu0 0
  %3100 = vmatprep.subr.bf16.mxu0 0
  %3101 = vmatpush1.bf16.msra.mxu0 0
  %3102 = vmatprep.subr.bf16.mxu0 0
  %3103 = vmatpush1.bf16.msra.mxu0 0
  %3104 = vmatprep.subr.bf16.mxu0 0
  %3105 = vmatpush1.bf16.msra.mxu0 0
  %3106 = vmatprep.subr.bf16.mxu0 0
  %3107 = vmatpush1.bf16.msra.mxu0 0
  %3108 = vmatprep.subr.bf16.mxu0 0
  %3109 = vmatpush1.bf16.msra.mxu0 0
  %3110 = vmatprep.subr.bf16.mxu0 0
  %3111 = vmatpush1.bf16.msra.mxu0 0
  %3112 = vmatprep.subr.bf16.mxu0 0
  %3113 = vmatpush1.bf16.msra.mxu0 0
  %3114 = vmatprep.subr.bf16.mxu0 0
  %3115 = vmatpush1.bf16.msra.mxu0 0
  %3116 = vmatprep.mubr.bf16.mxu0 0
  %3117 = vmatmul.mubr.bf16.gmra.mrb[0].mxu0 %v2932
  %v3118 = vpop.f32.mrb[0].mxu0
  %v3119 = vadd.f32 0.0, %v3118
  %v3120 = vpop.f32.mrb[0].mxu0
  %v3121 = vpop.f32.mrb[0].mxu0
  %v3122 = vadd.f32 0.0, %v3121
  %v3123 = vpop.f32.mrb[0].mxu0
  %3124 = vdwg.mxu0
  %v3125 = vadd.f32 %v2888, %v2990
  %v3126 = vadd.f32 %v2889, %v2992
  %v3127 = vadd.f32 %v2890, %v3033
  %v3128 = vadd.f32 %v2891, %v3035
  %v3129 = vadd.f32 %v2892, %v3076
  %v3130 = vadd.f32 %v2893, %v3078
  %v3131 = vadd.f32 %v2894, %v3119
  %v3132 = vadd.f32 %v2895, %v2994
  %v3133 = vadd.f32 %v2896, %v2996
  %v3134 = vadd.f32 %v2897, %v3037
  %v3135 = vadd.f32 %v2898, %v3039
  %v3136 = vadd.f32 %v2899, %v3080
  %v3137 = vadd.f32 %v2900, %v3082
  %v3138 = vadd.f32 %v2901, %v3122
  %s3139 = scalar_lea.vmem %s3, 32
  %v3140 = vld [vmem:[%s3139] sm:$0xf]
  %v3141 = vld [vmem:[%s3139 + $0x4] sm:$0xf]
  %v3144 = vunpack.c.l.b16 %v3140
  %v3145 = vunpack.c.l.b16 %v3141
  %v3146 = vpack.c.b16 %v3145, %v3144
  %3147 = vrot.lane.b32.xlu0 %v2228, 112
  %v3148 = vpop.permute.xlu0 %3147
  %3149 = vrot.lane.b32.xlu0 %v2229, 112
  %v3150 = vpop.permute.xlu0 %3149
  %3151 = vrot.lane.b32.xlu0 %v2230, 112
  %v3152 = vpop.permute.xlu0 %3151
  %3153 = vrot.lane.b32.xlu0 %v2231, 112
  %v3154 = vpop.permute.xlu0 %3153
  %3155 = vrot.lane.b32.xlu0 %v2232, 112
  %v3156 = vpop.permute.xlu0 %3155
  %3157 = vrot.lane.b32.xlu0 %v2233, 112
  %v3158 = vpop.permute.xlu0 %3157
  %3159 = vrot.lane.b32.xlu0 %v2234, 112
  %v3160 = vpop.permute.xlu0 %3159
  %vm3161 = vcmask 916480
  %v3162 = vsel %vm3161, %v3148, %v3150
  %v3163 = vsel %vm3161, %v3150, %v3152
  %v3164 = vsel %vm3161, %v3152, %v3154
  %v3165 = vsel %vm3161, %v3154, %v3156
  %v3166 = vsel %vm3161, %v3156, %v3158
  %v3167 = vsel %vm3161, %v3158, %v3160
  %v3169 = vsel %vm1199, %v3146, 0
  %v3172 = vsel %vm2274, %v3162, 0
  %v3175 = vsel %vm2274, %v3163, 0
  %v3178 = vsel %vm2274, %v3164, 0
  %v3181 = vsel %vm2274, %v3165, 0
  %v3184 = vsel %vm2274, %v3166, 0
  %v3187 = vsel %vm2274, %v3167, 0
  %v3190 = vsel %vm2274, %v3160, 0
  %3192 = vmatprep.subr.bf16.mxu0 %v3175
  %3193 = vmatpush1.bf16.msra.mxu0 %v3172
  %3194 = vmatprep.subr.bf16.mxu0 0
  %3195 = vmatpush1.bf16.msra.mxu0 0
  %3196 = vmatprep.subr.bf16.mxu0 0
  %3197 = vmatpush1.bf16.msra.mxu0 0
  %3198 = vmatprep.subr.bf16.mxu0 0
  %3199 = vmatpush1.bf16.msra.mxu0 0
  %3200 = vmatprep.subr.bf16.mxu0 0
  %3201 = vmatpush1.bf16.msra.mxu0 0
  %3202 = vmatprep.subr.bf16.mxu0 0
  %3203 = vmatpush1.bf16.msra.mxu0 0
  %3204 = vmatprep.subr.bf16.mxu0 0
  %3205 = vmatpush1.bf16.msra.mxu0 0
  %3206 = vmatprep.subr.bf16.mxu0 0
  %3207 = vmatpush1.bf16.msra.mxu0 0
  %3208 = vmatprep.subr.bf16.mxu0 0
  %3209 = vmatpush1.bf16.msra.mxu0 0
  %3210 = vmatprep.subr.bf16.mxu0 0
  %3211 = vmatpush1.bf16.msra.mxu0 0
  %3212 = vmatprep.subr.bf16.mxu0 0
  %3213 = vmatpush1.bf16.msra.mxu0 0
  %3214 = vmatprep.subr.bf16.mxu0 0
  %3215 = vmatpush1.bf16.msra.mxu0 0
  %3216 = vmatprep.subr.bf16.mxu0 0
  %3217 = vmatpush1.bf16.msra.mxu0 0
  %3218 = vmatprep.subr.bf16.mxu0 0
  %3219 = vmatpush1.bf16.msra.mxu0 0
  %3220 = vmatprep.subr.bf16.mxu0 0
  %3221 = vmatpush1.bf16.msra.mxu0 0
  %3222 = vmatprep.subr.bf16.mxu0 0
  %3223 = vmatpush1.bf16.msra.mxu0 0
  %3224 = vmatprep.mubr.bf16.mxu0 0
  %3225 = vmatmul.mubr.bf16.gmra.mrb[0].mxu0 %v3169
  %v3226 = vpop.f32.mrb[0].mxu0
  %v3227 = vadd.f32 0.0, %v3226
  %v3228 = vpop.f32.mrb[0].mxu0
  %v3229 = vadd.f32 0.0, %v3228
  %v3230 = vpop.f32.mrb[0].mxu0
  %v3231 = vadd.f32 0.0, %v3230
  %v3232 = vpop.f32.mrb[0].mxu0
  %v3233 = vadd.f32 0.0, %v3232
  %3234 = vdwg.mxu0
  %3235 = vmatprep.subr.bf16.mxu0 %v3181
  %3236 = vmatpush1.bf16.msra.mxu0 %v3178
  %3237 = vmatprep.subr.bf16.mxu0 0
  %3238 = vmatpush1.bf16.msra.mxu0 0
  %3239 = vmatprep.subr.bf16.mxu0 0
  %3240 = vmatpush1.bf16.msra.mxu0 0
  %3241 = vmatprep.subr.bf16.mxu0 0
  %3242 = vmatpush1.bf16.msra.mxu0 0
  %3243 = vmatprep.subr.bf16.mxu0 0
  %3244 = vmatpush1.bf16.msra.mxu0 0
  %3245 = vmatprep.subr.bf16.mxu0 0
  %3246 = vmatpush1.bf16.msra.mxu0 0
  %3247 = vmatprep.subr.bf16.mxu0 0
  %3248 = vmatpush1.bf16.msra.mxu0 0
  %3249 = vmatprep.subr.bf16.mxu0 0
  %3250 = vmatpush1.bf16.msra.mxu0 0
  %3251 = vmatprep.subr.bf16.mxu0 0
  %3252 = vmatpush1.bf16.msra.mxu0 0
  %3253 = vmatprep.subr.bf16.mxu0 0
  %3254 = vmatpush1.bf16.msra.mxu0 0
  %3255 = vmatprep.subr.bf16.mxu0 0
  %3256 = vmatpush1.bf16.msra.mxu0 0
  %3257 = vmatprep.subr.bf16.mxu0 0
  %3258 = vmatpush1.bf16.msra.mxu0 0
  %3259 = vmatprep.subr.bf16.mxu0 0
  %3260 = vmatpush1.bf16.msra.mxu0 0
  %3261 = vmatprep.subr.bf16.mxu0 0
  %3262 = vmatpush1.bf16.msra.mxu0 0
  %3263 = vmatprep.subr.bf16.mxu0 0
  %3264 = vmatpush1.bf16.msra.mxu0 0
  %3265 = vmatprep.subr.bf16.mxu0 0
  %3266 = vmatpush1.bf16.msra.mxu0 0
  %3267 = vmatprep.mubr.bf16.mxu0 0
  %3268 = vmatmul.mubr.bf16.gmra.mrb[0].mxu0 %v3169
  %v3269 = vpop.f32.mrb[0].mxu0
  %v3270 = vadd.f32 0.0, %v3269
  %v3271 = vpop.f32.mrb[0].mxu0
  %v3272 = vadd.f32 0.0, %v3271
  %v3273 = vpop.f32.mrb[0].mxu0
  %v3274 = vadd.f32 0.0, %v3273
  %v3275 = vpop.f32.mrb[0].mxu0
  %v3276 = vadd.f32 0.0, %v3275
  %3277 = vdwg.mxu0
  %3278 = vmatprep.subr.bf16.mxu0 %v3187
  %3279 = vmatpush1.bf16.msra.mxu0 %v3184
  %3280 = vmatprep.subr.bf16.mxu0 0
  %3281 = vmatpush1.bf16.msra.mxu0 0
  %3282 = vmatprep.subr.bf16.mxu0 0
  %3283 = vmatpush1.bf16.msra.mxu0 0
  %3284 = vmatprep.subr.bf16.mxu0 0
  %3285 = vmatpush1.bf16.msra.mxu0 0
  %3286 = vmatprep.subr.bf16.mxu0 0
  %3287 = vmatpush1.bf16.msra.mxu0 0
  %3288 = vmatprep.subr.bf16.mxu0 0
  %3289 = vmatpush1.bf16.msra.mxu0 0
  %3290 = vmatprep.subr.bf16.mxu0 0
  %3291 = vmatpush1.bf16.msra.mxu0 0
  %3292 = vmatprep.subr.bf16.mxu0 0
  %3293 = vmatpush1.bf16.msra.mxu0 0
  %3294 = vmatprep.subr.bf16.mxu0 0
  %3295 = vmatpush1.bf16.msra.mxu0 0
  %3296 = vmatprep.subr.bf16.mxu0 0
  %3297 = vmatpush1.bf16.msra.mxu0 0
  %3298 = vmatprep.subr.bf16.mxu0 0
  %3299 = vmatpush1.bf16.msra.mxu0 0
  %3300 = vmatprep.subr.bf16.mxu0 0
  %3301 = vmatpush1.bf16.msra.mxu0 0
  %3302 = vmatprep.subr.bf16.mxu0 0
  %3303 = vmatpush1.bf16.msra.mxu0 0
  %3304 = vmatprep.subr.bf16.mxu0 0
  %3305 = vmatpush1.bf16.msra.mxu0 0
  %3306 = vmatprep.subr.bf16.mxu0 0
  %3307 = vmatpush1.bf16.msra.mxu0 0
  %3308 = vmatprep.subr.bf16.mxu0 0
  %3309 = vmatpush1.bf16.msra.mxu0 0
  %3310 = vmatprep.mubr.bf16.mxu0 0
  %3311 = vmatmul.mubr.bf16.gmra.mrb[0].mxu0 %v3169
  %v3312 = vpop.f32.mrb[0].mxu0
  %v3313 = vadd.f32 0.0, %v3312
  %v3314 = vpop.f32.mrb[0].mxu0
  %v3315 = vadd.f32 0.0, %v3314
  %v3316 = vpop.f32.mrb[0].mxu0
  %v3317 = vadd.f32 0.0, %v3316
  %v3318 = vpop.f32.mrb[0].mxu0
  %v3319 = vadd.f32 0.0, %v3318
  %3320 = vdwg.mxu0
  %3321 = vmatprep.subr.bf16.mxu0 0
  %3322 = vmatpush1.bf16.msra.mxu0 %v3190
  %3323 = vmatprep.subr.bf16.mxu0 0
  %3324 = vmatpush1.bf16.msra.mxu0 0
  %3325 = vmatprep.subr.bf16.mxu0 0
  %3326 = vmatpush1.bf16.msra.mxu0 0
  %3327 = vmatprep.subr.bf16.mxu0 0
  %3328 = vmatpush1.bf16.msra.mxu0 0
  %3329 = vmatprep.subr.bf16.mxu0 0
  %3330 = vmatpush1.bf16.msra.mxu0 0
  %3331 = vmatprep.subr.bf16.mxu0 0
  %3332 = vmatpush1.bf16.msra.mxu0 0
  %3333 = vmatprep.subr.bf16.mxu0 0
  %3334 = vmatpush1.bf16.msra.mxu0 0
  %3335 = vmatprep.subr.bf16.mxu0 0
  %3336 = vmatpush1.bf16.msra.mxu0 0
  %3337 = vmatprep.subr.bf16.mxu0 0
  %3338 = vmatpush1.bf16.msra.mxu0 0
  %3339 = vmatprep.subr.bf16.mxu0 0
  %3340 = vmatpush1.bf16.msra.mxu0 0
  %3341 = vmatprep.subr.bf16.mxu0 0
  %3342 = vmatpush1.bf16.msra.mxu0 0
  %3343 = vmatprep.subr.bf16.mxu0 0
  %3344 = vmatpush1.bf16.msra.mxu0 0
  %3345 = vmatprep.subr.bf16.mxu0 0
  %3346 = vmatpush1.bf16.msra.mxu0 0
  %3347 = vmatprep.subr.bf16.mxu0 0
  %3348 = vmatpush1.bf16.msra.mxu0 0
  %3349 = vmatprep.subr.bf16.mxu0 0
  %3350 = vmatpush1.bf16.msra.mxu0 0
  %3351 = vmatprep.subr.bf16.mxu0 0
  %3352 = vmatpush1.bf16.msra.mxu0 0
  %3353 = vmatprep.mubr.bf16.mxu0 0
  %3354 = vmatmul.mubr.bf16.gmra.mrb[0].mxu0 %v3169
  %v3355 = vpop.f32.mrb[0].mxu0
  %v3356 = vadd.f32 0.0, %v3355
  %v3357 = vpop.f32.mrb[0].mxu0
  %v3358 = vpop.f32.mrb[0].mxu0
  %v3359 = vadd.f32 0.0, %v3358
  %v3360 = vpop.f32.mrb[0].mxu0
  %3361 = vdwg.mxu0
  %v3362 = vadd.f32 %v3125, %v3227
  %v3363 = vadd.f32 %v3126, %v3229
  %v3364 = vadd.f32 %v3127, %v3270
  %v3365 = vadd.f32 %v3128, %v3272
  %v3366 = vadd.f32 %v3129, %v3313
  %v3367 = vadd.f32 %v3130, %v3315
  %v3368 = vadd.f32 %v3131, %v3356
  %v3369 = vadd.f32 %v3132, %v3231
  %v3370 = vadd.f32 %v3133, %v3233
  %v3371 = vadd.f32 %v3134, %v3274
  %v3372 = vadd.f32 %v3135, %v3276
  %v3373 = vadd.f32 %v3136, %v3317
  %v3374 = vadd.f32 %v3137, %v3319
  %v3375 = vadd.f32 %v3138, %v3359
  %s3376 = scalar_lea.vmem %s3, 40
  %v3377 = vld [vmem:[%s3376] sm:$0xf]
  %v3378 = vld [vmem:[%s3376 + $0x4] sm:$0xf]
  %v3379 = vpack.c.bf16 %v2223, %v2223
  %v3382 = vunpack.c.l.b16 %v3377
  %v3383 = vunpack.c.l.b16 %v3378
  %v3384 = vpack.c.b16 %v3383, %v3382
  %3386 = vrot.lane.b32.xlu0 %v2228, 16
  %v3387 = vpop.permute.xlu0 %3386
  %3388 = vrot.lane.b32.xlu0 %v2229, 16
  %v3389 = vpop.permute.xlu0 %3388
  %3390 = vrot.lane.b32.xlu0 %v2230, 16
  %v3391 = vpop.permute.xlu0 %3390
  %3392 = vrot.lane.b32.xlu0 %v2231, 16
  %v3393 = vpop.permute.xlu0 %3392
  %3394 = vrot.lane.b32.xlu0 %v2232, 16
  %v3395 = vpop.permute.xlu0 %3394
  %3396 = vrot.lane.b32.xlu0 %v2233, 16
  %v3397 = vpop.permute.xlu0 %3396
  %3398 = vrot.lane.b32.xlu0 %v2234, 16
  %v3399 = vpop.permute.xlu0 %3398
  %3400 = vrot.lane.b32.xlu0 %v3379, 16
  %v3401 = vpop.permute.xlu0 %3400
  %vm3402 = vcmask 130048
  %v3403 = vsel %vm3402, %v3387, %v3389
  %v3404 = vsel %vm3402, %v3389, %v3391
  %v3405 = vsel %vm3402, %v3391, %v3393
  %v3406 = vsel %vm3402, %v3393, %v3395
  %v3407 = vsel %vm3402, %v3395, %v3397
  %v3408 = vsel %vm3402, %v3397, %v3399
  %v3409 = vsel %vm3402, %v3399, %v3401
  %v3411 = vsel %vm1199, %v3384, 0
  %v3414 = vsel %vm2274, %v3403, 0
  %v3417 = vsel %vm2274, %v3404, 0
  %v3420 = vsel %vm2274, %v3405, 0
  %v3423 = vsel %vm2274, %v3406, 0
  %v3426 = vsel %vm2274, %v3407, 0
  %v3429 = vsel %vm2274, %v3408, 0
  %v3432 = vsel %vm2274, %v3409, 0
  %3434 = vmatprep.subr.bf16.mxu0 %v3417
  %3435 = vmatpush1.bf16.msra.mxu0 %v3414
  %3436 = vmatprep.subr.bf16.mxu0 0
  %3437 = vmatpush1.bf16.msra.mxu0 0
  %3438 = vmatprep.subr.bf16.mxu0 0
  %3439 = vmatpush1.bf16.msra.mxu0 0
  %3440 = vmatprep.subr.bf16.mxu0 0
  %3441 = vmatpush1.bf16.msra.mxu0 0
  %3442 = vmatprep.subr.bf16.mxu0 0
  %3443 = vmatpush1.bf16.msra.mxu0 0
  %3444 = vmatprep.subr.bf16.mxu0 0
  %3445 = vmatpush1.bf16.msra.mxu0 0
  %3446 = vmatprep.subr.bf16.mxu0 0
  %3447 = vmatpush1.bf16.msra.mxu0 0
  %3448 = vmatprep.subr.bf16.mxu0 0
  %3449 = vmatpush1.bf16.msra.mxu0 0
  %3450 = vmatprep.subr.bf16.mxu0 0
  %3451 = vmatpush1.bf16.msra.mxu0 0
  %3452 = vmatprep.subr.bf16.mxu0 0
  %3453 = vmatpush1.bf16.msra.mxu0 0
  %3454 = vmatprep.subr.bf16.mxu0 0
  %3455 = vmatpush1.bf16.msra.mxu0 0
  %3456 = vmatprep.subr.bf16.mxu0 0
  %3457 = vmatpush1.bf16.msra.mxu0 0
  %3458 = vmatprep.subr.bf16.mxu0 0
  %3459 = vmatpush1.bf16.msra.mxu0 0
  %3460 = vmatprep.subr.bf16.mxu0 0
  %3461 = vmatpush1.bf16.msra.mxu0 0
  %3462 = vmatprep.subr.bf16.mxu0 0
  %3463 = vmatpush1.bf16.msra.mxu0 0
  %3464 = vmatprep.subr.bf16.mxu0 0
  %3465 = vmatpush1.bf16.msra.mxu0 0
  %3466 = vmatprep.mubr.bf16.mxu0 0
  %3467 = vmatmul.mubr.bf16.gmra.mrb[0].mxu0 %v3411
  %v3468 = vpop.f32.mrb[0].mxu0
  %v3469 = vadd.f32 0.0, %v3468
  %v3470 = vpop.f32.mrb[0].mxu0
  %v3471 = vadd.f32 0.0, %v3470
  %v3472 = vpop.f32.mrb[0].mxu0
  %v3473 = vadd.f32 0.0, %v3472
  %v3474 = vpop.f32.mrb[0].mxu0
  %v3475 = vadd.f32 0.0, %v3474
  %3476 = vdwg.mxu0
  %3477 = vmatprep.subr.bf16.mxu0 %v3423
  %3478 = vmatpush1.bf16.msra.mxu0 %v3420
  %3479 = vmatprep.subr.bf16.mxu0 0
  %3480 = vmatpush1.bf16.msra.mxu0 0
  %3481 = vmatprep.subr.bf16.mxu0 0
  %3482 = vmatpush1.bf16.msra.mxu0 0
  %3483 = vmatprep.subr.bf16.mxu0 0
  %3484 = vmatpush1.bf16.msra.mxu0 0
  %3485 = vmatprep.subr.bf16.mxu0 0
  %3486 = vmatpush1.bf16.msra.mxu0 0
  %3487 = vmatprep.subr.bf16.mxu0 0
  %3488 = vmatpush1.bf16.msra.mxu0 0
  %3489 = vmatprep.subr.bf16.mxu0 0
  %3490 = vmatpush1.bf16.msra.mxu0 0
  %3491 = vmatprep.subr.bf16.mxu0 0
  %3492 = vmatpush1.bf16.msra.mxu0 0
  %3493 = vmatprep.subr.bf16.mxu0 0
  %3494 = vmatpush1.bf16.msra.mxu0 0
  %3495 = vmatprep.subr.bf16.mxu0 0
  %3496 = vmatpush1.bf16.msra.mxu0 0
  %3497 = vmatprep.subr.bf16.mxu0 0
  %3498 = vmatpush1.bf16.msra.mxu0 0
  %3499 = vmatprep.subr.bf16.mxu0 0
  %3500 = vmatpush1.bf16.msra.mxu0 0
  %3501 = vmatprep.subr.bf16.mxu0 0
  %3502 = vmatpush1.bf16.msra.mxu0 0
  %3503 = vmatprep.subr.bf16.mxu0 0
  %3504 = vmatpush1.bf16.msra.mxu0 0
  %3505 = vmatprep.subr.bf16.mxu0 0
  %3506 = vmatpush1.bf16.msra.mxu0 0
  %3507 = vmatprep.subr.bf16.mxu0 0
  %3508 = vmatpush1.bf16.msra.mxu0 0
  %3509 = vmatprep.mubr.bf16.mxu0 0
  %3510 = vmatmul.mubr.bf16.gmra.mrb[0].mxu0 %v3411
  %v3511 = vpop.f32.mrb[0].mxu0
  %v3512 = vadd.f32 0.0, %v3511
  %v3513 = vpop.f32.mrb[0].mxu0
  %v3514 = vadd.f32 0.0, %v3513
  %v3515 = vpop.f32.mrb[0].mxu0
  %v3516 = vadd.f32 0.0, %v3515
  %v3517 = vpop.f32.mrb[0].mxu0
  %v3518 = vadd.f32 0.0, %v3517
  %3519 = vdwg.mxu0
  %3520 = vmatprep.subr.bf16.mxu0 %v3429
  %3521 = vmatpush1.bf16.msra.mxu0 %v3426
  %3522 = vmatprep.subr.bf16.mxu0 0
  %3523 = vmatpush1.bf16.msra.mxu0 0
  %3524 = vmatprep.subr.bf16.mxu0 0
  %3525 = vmatpush1.bf16.msra.mxu0 0
  %3526 = vmatprep.subr.bf16.mxu0 0
  %3527 = vmatpush1.bf16.msra.mxu0 0
  %3528 = vmatprep.subr.bf16.mxu0 0
  %3529 = vmatpush1.bf16.msra.mxu0 0
  %3530 = vmatprep.subr.bf16.mxu0 0
  %3531 = vmatpush1.bf16.msra.mxu0 0
  %3532 = vmatprep.subr.bf16.mxu0 0
  %3533 = vmatpush1.bf16.msra.mxu0 0
  %3534 = vmatprep.subr.bf16.mxu0 0
  %3535 = vmatpush1.bf16.msra.mxu0 0
  %3536 = vmatprep.subr.bf16.mxu0 0
  %3537 = vmatpush1.bf16.msra.mxu0 0
  %3538 = vmatprep.subr.bf16.mxu0 0
  %3539 = vmatpush1.bf16.msra.mxu0 0
  %3540 = vmatprep.subr.bf16.mxu0 0
  %3541 = vmatpush1.bf16.msra.mxu0 0
  %3542 = vmatprep.subr.bf16.mxu0 0
  %3543 = vmatpush1.bf16.msra.mxu0 0
  %3544 = vmatprep.subr.bf16.mxu0 0
  %3545 = vmatpush1.bf16.msra.mxu0 0
  %3546 = vmatprep.subr.bf16.mxu0 0
  %3547 = vmatpush1.bf16.msra.mxu0 0
  %3548 = vmatprep.subr.bf16.mxu0 0
  %3549 = vmatpush1.bf16.msra.mxu0 0
  %3550 = vmatprep.subr.bf16.mxu0 0
  %3551 = vmatpush1.bf16.msra.mxu0 0
  %3552 = vmatprep.mubr.bf16.mxu0 0
  %3553 = vmatmul.mubr.bf16.gmra.mrb[0].mxu0 %v3411
  %v3554 = vpop.f32.mrb[0].mxu0
  %v3555 = vadd.f32 0.0, %v3554
  %v3556 = vpop.f32.mrb[0].mxu0
  %v3557 = vadd.f32 0.0, %v3556
  %v3558 = vpop.f32.mrb[0].mxu0
  %v3559 = vadd.f32 0.0, %v3558
  %v3560 = vpop.f32.mrb[0].mxu0
  %v3561 = vadd.f32 0.0, %v3560
  %3562 = vdwg.mxu0
  %3563 = vmatprep.subr.bf16.mxu0 0
  %3564 = vmatpush1.bf16.msra.mxu0 %v3432
  %3565 = vmatprep.subr.bf16.mxu0 0
  %3566 = vmatpush1.bf16.msra.mxu0 0
  %3567 = vmatprep.subr.bf16.mxu0 0
  %3568 = vmatpush1.bf16.msra.mxu0 0
  %3569 = vmatprep.subr.bf16.mxu0 0
  %3570 = vmatpush1.bf16.msra.mxu0 0
  %3571 = vmatprep.subr.bf16.mxu0 0
  %3572 = vmatpush1.bf16.msra.mxu0 0
  %3573 = vmatprep.subr.bf16.mxu0 0
  %3574 = vmatpush1.bf16.msra.mxu0 0
  %3575 = vmatprep.subr.bf16.mxu0 0
  %3576 = vmatpush1.bf16.msra.mxu0 0
  %3577 = vmatprep.subr.bf16.mxu0 0
  %3578 = vmatpush1.bf16.msra.mxu0 0
  %3579 = vmatprep.subr.bf16.mxu0 0
  %3580 = vmatpush1.bf16.msra.mxu0 0
  %3581 = vmatprep.subr.bf16.mxu0 0
  %3582 = vmatpush1.bf16.msra.mxu0 0
  %3583 = vmatprep.subr.bf16.mxu0 0
  %3584 = vmatpush1.bf16.msra.mxu0 0
  %3585 = vmatprep.subr.bf16.mxu0 0
  %3586 = vmatpush1.bf16.msra.mxu0 0
  %3587 = vmatprep.subr.bf16.mxu0 0
  %3588 = vmatpush1.bf16.msra.mxu0 0
  %3589 = vmatprep.subr.bf16.mxu0 0
  %3590 = vmatpush1.bf16.msra.mxu0 0
  %3591 = vmatprep.subr.bf16.mxu0 0
  %3592 = vmatpush1.bf16.msra.mxu0 0
  %3593 = vmatprep.subr.bf16.mxu0 0
  %3594 = vmatpush1.bf16.msra.mxu0 0
  %3595 = vmatprep.mubr.bf16.mxu0 0
  %3596 = vmatmul.mubr.bf16.gmra.mrb[0].mxu0 %v3411
  %v3597 = vpop.f32.mrb[0].mxu0
  %v3598 = vadd.f32 0.0, %v3597
  %v3599 = vpop.f32.mrb[0].mxu0
  %v3600 = vpop.f32.mrb[0].mxu0
  %v3601 = vadd.f32 0.0, %v3600
  %v3602 = vpop.f32.mrb[0].mxu0
  %3603 = vdwg.mxu0
  %v3604 = vadd.f32 %v3362, %v3469
  %v3605 = vadd.f32 %v3363, %v3471
  %v3606 = vadd.f32 %v3364, %v3512
  %v3607 = vadd.f32 %v3365, %v3514
  %v3608 = vadd.f32 %v3366, %v3555
  %v3609 = vadd.f32 %v3367, %v3557
  %v3610 = vadd.f32 %v3368, %v3598
  %v3611 = vadd.f32 %v3369, %v3473
  %v3612 = vadd.f32 %v3370, %v3475
  %v3613 = vadd.f32 %v3371, %v3516
  %v3614 = vadd.f32 %v3372, %v3518
  %v3615 = vadd.f32 %v3373, %v3559
  %v3616 = vadd.f32 %v3374, %v3561
  %v3617 = vadd.f32 %v3375, %v3601
  %s3618 = scalar_lea.vmem %s3, 48
  %v3619 = vld [vmem:[%s3618] sm:$0xf]
  %v3620 = vld [vmem:[%s3618 + $0x4] sm:$0xf]
  %v3623 = vunpack.c.l.b16 %v3619
  %v3624 = vunpack.c.l.b16 %v3620
  %v3625 = vpack.c.b16 %v3624, %v3623
  %3626 = vrot.lane.b32.xlu0 %v2228, 12
  %v3627 = vpop.permute.xlu0 %3626
  %3628 = vrot.lane.b32.xlu0 %v2229, 12
  %v3629 = vpop.permute.xlu0 %3628
  %3630 = vrot.lane.b32.xlu0 %v2230, 12
  %v3631 = vpop.permute.xlu0 %3630
  %3632 = vrot.lane.b32.xlu0 %v2231, 12
  %v3633 = vpop.permute.xlu0 %3632
  %3634 = vrot.lane.b32.xlu0 %v2232, 12
  %v3635 = vpop.permute.xlu0 %3634
  %3636 = vrot.lane.b32.xlu0 %v2233, 12
  %v3637 = vpop.permute.xlu0 %3636
  %3638 = vrot.lane.b32.xlu0 %v2234, 12
  %v3639 = vpop.permute.xlu0 %3638
  %3640 = vrot.lane.b32.xlu0 %v3379, 12
  %v3641 = vpop.permute.xlu0 %3640
  %vm3642 = vcmask 97280
  %v3643 = vsel %vm3642, %v3627, %v3629
  %v3644 = vsel %vm3642, %v3629, %v3631
  %v3645 = vsel %vm3642, %v3631, %v3633
  %v3646 = vsel %vm3642, %v3633, %v3635
  %v3647 = vsel %vm3642, %v3635, %v3637
  %v3648 = vsel %vm3642, %v3637, %v3639
  %v3649 = vsel %vm3642, %v3639, %v3641
  %v3651 = vsel %vm1199, %v3625, 0
  %v3654 = vsel %vm2274, %v3643, 0
  %v3657 = vsel %vm2274, %v3644, 0
  %v3660 = vsel %vm2274, %v3645, 0
  %v3663 = vsel %vm2274, %v3646, 0
  %v3666 = vsel %vm2274, %v3647, 0
  %v3669 = vsel %vm2274, %v3648, 0
  %v3672 = vsel %vm2274, %v3649, 0
  %3674 = vmatprep.subr.bf16.mxu0 %v3657
  %3675 = vmatpush1.bf16.msra.mxu0 %v3654
  %3676 = vmatprep.subr.bf16.mxu0 0
  %3677 = vmatpush1.bf16.msra.mxu0 0
  %3678 = vmatprep.subr.bf16.mxu0 0
  %3679 = vmatpush1.bf16.msra.mxu0 0
  %3680 = vmatprep.subr.bf16.mxu0 0
  %3681 = vmatpush1.bf16.msra.mxu0 0
  %3682 = vmatprep.subr.bf16.mxu0 0
  %3683 = vmatpush1.bf16.msra.mxu0 0
  %3684 = vmatprep.subr.bf16.mxu0 0
  %3685 = vmatpush1.bf16.msra.mxu0 0
  %3686 = vmatprep.subr.bf16.mxu0 0
  %3687 = vmatpush1.bf16.msra.mxu0 0
  %3688 = vmatprep.subr.bf16.mxu0 0
  %3689 = vmatpush1.bf16.msra.mxu0 0
  %3690 = vmatprep.subr.bf16.mxu0 0
  %3691 = vmatpush1.bf16.msra.mxu0 0
  %3692 = vmatprep.subr.bf16.mxu0 0
  %3693 = vmatpush1.bf16.msra.mxu0 0
  %3694 = vmatprep.subr.bf16.mxu0 0
  %3695 = vmatpush1.bf16.msra.mxu0 0
  %3696 = vmatprep.subr.bf16.mxu0 0
  %3697 = vmatpush1.bf16.msra.mxu0 0
  %3698 = vmatprep.subr.bf16.mxu0 0
  %3699 = vmatpush1.bf16.msra.mxu0 0
  %3700 = vmatprep.subr.bf16.mxu0 0
  %3701 = vmatpush1.bf16.msra.mxu0 0
  %3702 = vmatprep.subr.bf16.mxu0 0
  %3703 = vmatpush1.bf16.msra.mxu0 0
  %3704 = vmatprep.subr.bf16.mxu0 0
  %3705 = vmatpush1.bf16.msra.mxu0 0
  %3706 = vmatprep.mubr.bf16.mxu0 0
  %3707 = vmatmul.mubr.bf16.gmra.mrb[0].mxu0 %v3651
  %v3708 = vpop.f32.mrb[0].mxu0
  %v3709 = vadd.f32 0.0, %v3708
  %v3710 = vpop.f32.mrb[0].mxu0
  %v3711 = vadd.f32 0.0, %v3710
  %v3712 = vpop.f32.mrb[0].mxu0
  %v3713 = vadd.f32 0.0, %v3712
  %v3714 = vpop.f32.mrb[0].mxu0
  %v3715 = vadd.f32 0.0, %v3714
  %3716 = vdwg.mxu0
  %3717 = vmatprep.subr.bf16.mxu0 %v3663
  %3718 = vmatpush1.bf16.msra.mxu0 %v3660
  %3719 = vmatprep.subr.bf16.mxu0 0
  %3720 = vmatpush1.bf16.msra.mxu0 0
  %3721 = vmatprep.subr.bf16.mxu0 0
  %3722 = vmatpush1.bf16.msra.mxu0 0
  %3723 = vmatprep.subr.bf16.mxu0 0
  %3724 = vmatpush1.bf16.msra.mxu0 0
  %3725 = vmatprep.subr.bf16.mxu0 0
  %3726 = vmatpush1.bf16.msra.mxu0 0
  %3727 = vmatprep.subr.bf16.mxu0 0
  %3728 = vmatpush1.bf16.msra.mxu0 0
  %3729 = vmatprep.subr.bf16.mxu0 0
  %3730 = vmatpush1.bf16.msra.mxu0 0
  %3731 = vmatprep.subr.bf16.mxu0 0
  %3732 = vmatpush1.bf16.msra.mxu0 0
  %3733 = vmatprep.subr.bf16.mxu0 0
  %3734 = vmatpush1.bf16.msra.mxu0 0
  %3735 = vmatprep.subr.bf16.mxu0 0
  %3736 = vmatpush1.bf16.msra.mxu0 0
  %3737 = vmatprep.subr.bf16.mxu0 0
  %3738 = vmatpush1.bf16.msra.mxu0 0
  %3739 = vmatprep.subr.bf16.mxu0 0
  %3740 = vmatpush1.bf16.msra.mxu0 0
  %3741 = vmatprep.subr.bf16.mxu0 0
  %3742 = vmatpush1.bf16.msra.mxu0 0
  %3743 = vmatprep.subr.bf16.mxu0 0
  %3744 = vmatpush1.bf16.msra.mxu0 0
  %3745 = vmatprep.subr.bf16.mxu0 0
  %3746 = vmatpush1.bf16.msra.mxu0 0
  %3747 = vmatprep.subr.bf16.mxu0 0
  %3748 = vmatpush1.bf16.msra.mxu0 0
  %3749 = vmatprep.mubr.bf16.mxu0 0
  %3750 = vmatmul.mubr.bf16.gmra.mrb[0].mxu0 %v3651
  %v3751 = vpop.f32.mrb[0].mxu0
  %v3752 = vadd.f32 0.0, %v3751
  %v3753 = vpop.f32.mrb[0].mxu0
  %v3754 = vadd.f32 0.0, %v3753
  %v3755 = vpop.f32.mrb[0].mxu0
  %v3756 = vadd.f32 0.0, %v3755
  %v3757 = vpop.f32.mrb[0].mxu0
  %v3758 = vadd.f32 0.0, %v3757
  %3759 = vdwg.mxu0
  %3760 = vmatprep.subr.bf16.mxu0 %v3669
  %3761 = vmatpush1.bf16.msra.mxu0 %v3666
  %3762 = vmatprep.subr.bf16.mxu0 0
  %3763 = vmatpush1.bf16.msra.mxu0 0
  %3764 = vmatprep.subr.bf16.mxu0 0
  %3765 = vmatpush1.bf16.msra.mxu0 0
  %3766 = vmatprep.subr.bf16.mxu0 0
  %3767 = vmatpush1.bf16.msra.mxu0 0
  %3768 = vmatprep.subr.bf16.mxu0 0
  %3769 = vmatpush1.bf16.msra.mxu0 0
  %3770 = vmatprep.subr.bf16.mxu0 0
  %3771 = vmatpush1.bf16.msra.mxu0 0
  %3772 = vmatprep.subr.bf16.mxu0 0
  %3773 = vmatpush1.bf16.msra.mxu0 0
  %3774 = vmatprep.subr.bf16.mxu0 0
  %3775 = vmatpush1.bf16.msra.mxu0 0
  %3776 = vmatprep.subr.bf16.mxu0 0
  %3777 = vmatpush1.bf16.msra.mxu0 0
  %3778 = vmatprep.subr.bf16.mxu0 0
  %3779 = vmatpush1.bf16.msra.mxu0 0
  %3780 = vmatprep.subr.bf16.mxu0 0
  %3781 = vmatpush1.bf16.msra.mxu0 0
  %3782 = vmatprep.subr.bf16.mxu0 0
  %3783 = vmatpush1.bf16.msra.mxu0 0
  %3784 = vmatprep.subr.bf16.mxu0 0
  %3785 = vmatpush1.bf16.msra.mxu0 0
  %3786 = vmatprep.subr.bf16.mxu0 0
  %3787 = vmatpush1.bf16.msra.mxu0 0
  %3788 = vmatprep.subr.bf16.mxu0 0
  %3789 = vmatpush1.bf16.msra.mxu0 0
  %3790 = vmatprep.subr.bf16.mxu0 0
  %3791 = vmatpush1.bf16.msra.mxu0 0
  %3792 = vmatprep.mubr.bf16.mxu0 0
  %3793 = vmatmul.mubr.bf16.gmra.mrb[0].mxu0 %v3651
  %v3794 = vpop.f32.mrb[0].mxu0
  %v3795 = vadd.f32 0.0, %v3794
  %v3796 = vpop.f32.mrb[0].mxu0
  %v3797 = vadd.f32 0.0, %v3796
  %v3798 = vpop.f32.mrb[0].mxu0
  %v3799 = vadd.f32 0.0, %v3798
  %v3800 = vpop.f32.mrb[0].mxu0
  %v3801 = vadd.f32 0.0, %v3800
  %3802 = vdwg.mxu0
  %3803 = vmatprep.subr.bf16.mxu0 0
  %3804 = vmatpush1.bf16.msra.mxu0 %v3672
  %3805 = vmatprep.subr.bf16.mxu0 0
  %3806 = vmatpush1.bf16.msra.mxu0 0
  %3807 = vmatprep.subr.bf16.mxu0 0
  %3808 = vmatpush1.bf16.msra.mxu0 0
  %3809 = vmatprep.subr.bf16.mxu0 0
  %3810 = vmatpush1.bf16.msra.mxu0 0
  %3811 = vmatprep.subr.bf16.mxu0 0
  %3812 = vmatpush1.bf16.msra.mxu0 0
  %3813 = vmatprep.subr.bf16.mxu0 0
  %3814 = vmatpush1.bf16.msra.mxu0 0
  %3815 = vmatprep.subr.bf16.mxu0 0
  %3816 = vmatpush1.bf16.msra.mxu0 0
  %3817 = vmatprep.subr.bf16.mxu0 0
  %3818 = vmatpush1.bf16.msra.mxu0 0
  %3819 = vmatprep.subr.bf16.mxu0 0
  %3820 = vmatpush1.bf16.msra.mxu0 0
  %3821 = vmatprep.subr.bf16.mxu0 0
  %3822 = vmatpush1.bf16.msra.mxu0 0
  %3823 = vmatprep.subr.bf16.mxu0 0
  %3824 = vmatpush1.bf16.msra.mxu0 0
  %3825 = vmatprep.subr.bf16.mxu0 0
  %3826 = vmatpush1.bf16.msra.mxu0 0
  %3827 = vmatprep.subr.bf16.mxu0 0
  %3828 = vmatpush1.bf16.msra.mxu0 0
  %3829 = vmatprep.subr.bf16.mxu0 0
  %3830 = vmatpush1.bf16.msra.mxu0 0
  %3831 = vmatprep.subr.bf16.mxu0 0
  %3832 = vmatpush1.bf16.msra.mxu0 0
  %3833 = vmatprep.subr.bf16.mxu0 0
  %3834 = vmatpush1.bf16.msra.mxu0 0
  %3835 = vmatprep.mubr.bf16.mxu0 0
  %3836 = vmatmul.mubr.bf16.gmra.mrb[0].mxu0 %v3651
  %v3837 = vpop.f32.mrb[0].mxu0
  %v3838 = vadd.f32 0.0, %v3837
  %v3839 = vpop.f32.mrb[0].mxu0
  %v3840 = vpop.f32.mrb[0].mxu0
  %v3841 = vadd.f32 0.0, %v3840
  %v3842 = vpop.f32.mrb[0].mxu0
  %3843 = vdwg.mxu0
  %v3844 = vadd.f32 %v3604, %v3709
  %v3845 = vadd.f32 %v3605, %v3711
  %v3846 = vadd.f32 %v3606, %v3752
  %v3847 = vadd.f32 %v3607, %v3754
  %v3848 = vadd.f32 %v3608, %v3795
  %v3849 = vadd.f32 %v3609, %v3797
  %v3850 = vadd.f32 %v3610, %v3838
  %v3851 = vadd.f32 %v3611, %v3713
  %v3852 = vadd.f32 %v3612, %v3715
  %v3853 = vadd.f32 %v3613, %v3756
  %v3854 = vadd.f32 %v3614, %v3758
  %v3855 = vadd.f32 %v3615, %v3799
  %v3856 = vadd.f32 %v3616, %v3801
  %v3857 = vadd.f32 %v3617, %v3841
  %s3858 = scalar_lea.vmem %s3, 56
  %v3859 = vld [vmem:[%s3858] sm:$0xf]
  %v3860 = vld [vmem:[%s3858 + $0x4] sm:$0xf]
  %v3863 = vunpack.c.l.b16 %v3859
  %v3864 = vunpack.c.l.b16 %v3860
  %v3865 = vpack.c.b16 %v3864, %v3863
  %3866 = vrot.lane.b32.xlu0 %v2228, 8
  %v3867 = vpop.permute.xlu0 %3866
  %3868 = vrot.lane.b32.xlu0 %v2229, 8
  %v3869 = vpop.permute.xlu0 %3868
  %3870 = vrot.lane.b32.xlu0 %v2230, 8
  %v3871 = vpop.permute.xlu0 %3870
  %3872 = vrot.lane.b32.xlu0 %v2231, 8
  %v3873 = vpop.permute.xlu0 %3872
  %3874 = vrot.lane.b32.xlu0 %v2232, 8
  %v3875 = vpop.permute.xlu0 %3874
  %3876 = vrot.lane.b32.xlu0 %v2233, 8
  %v3877 = vpop.permute.xlu0 %3876
  %3878 = vrot.lane.b32.xlu0 %v2234, 8
  %v3879 = vpop.permute.xlu0 %3878
  %3880 = vrot.lane.b32.xlu0 %v3379, 8
  %v3881 = vpop.permute.xlu0 %3880
  %vm3882 = vcmask 64512
  %v3883 = vsel %vm3882, %v3867, %v3869
  %v3884 = vsel %vm3882, %v3869, %v3871
  %v3885 = vsel %vm3882, %v3871, %v3873
  %v3886 = vsel %vm3882, %v3873, %v3875
  %v3887 = vsel %vm3882, %v3875, %v3877
  %v3888 = vsel %vm3882, %v3877, %v3879
  %v3889 = vsel %vm3882, %v3879, %v3881
  %v3891 = vsel %vm1199, %v3865, 0
  %v3894 = vsel %vm2274, %v3883, 0
  %v3897 = vsel %vm2274, %v3884, 0
  %v3900 = vsel %vm2274, %v3885, 0
  %v3903 = vsel %vm2274, %v3886, 0
  %v3906 = vsel %vm2274, %v3887, 0
  %v3909 = vsel %vm2274, %v3888, 0
  %v3912 = vsel %vm2274, %v3889, 0
  %3914 = vmatprep.subr.bf16.mxu0 %v3897
  %3915 = vmatpush1.bf16.msra.mxu0 %v3894
  %3916 = vmatprep.subr.bf16.mxu0 0
  %3917 = vmatpush1.bf16.msra.mxu0 0
  %3918 = vmatprep.subr.bf16.mxu0 0
  %3919 = vmatpush1.bf16.msra.mxu0 0
  %3920 = vmatprep.subr.bf16.mxu0 0
  %3921 = vmatpush1.bf16.msra.mxu0 0
  %3922 = vmatprep.subr.bf16.mxu0 0
  %3923 = vmatpush1.bf16.msra.mxu0 0
  %3924 = vmatprep.subr.bf16.mxu0 0
  %3925 = vmatpush1.bf16.msra.mxu0 0
  %3926 = vmatprep.subr.bf16.mxu0 0
  %3927 = vmatpush1.bf16.msra.mxu0 0
  %3928 = vmatprep.subr.bf16.mxu0 0
  %3929 = vmatpush1.bf16.msra.mxu0 0
  %3930 = vmatprep.subr.bf16.mxu0 0
  %3931 = vmatpush1.bf16.msra.mxu0 0
  %3932 = vmatprep.subr.bf16.mxu0 0
  %3933 = vmatpush1.bf16.msra.mxu0 0
  %3934 = vmatprep.subr.bf16.mxu0 0
  %3935 = vmatpush1.bf16.msra.mxu0 0
  %3936 = vmatprep.subr.bf16.mxu0 0
  %3937 = vmatpush1.bf16.msra.mxu0 0
  %3938 = vmatprep.subr.bf16.mxu0 0
  %3939 = vmatpush1.bf16.msra.mxu0 0
  %3940 = vmatprep.subr.bf16.mxu0 0
  %3941 = vmatpush1.bf16.msra.mxu0 0
  %3942 = vmatprep.subr.bf16.mxu0 0
  %3943 = vmatpush1.bf16.msra.mxu0 0
  %3944 = vmatprep.subr.bf16.mxu0 0
  %3945 = vmatpush1.bf16.msra.mxu0 0
  %3946 = vmatprep.mubr.bf16.mxu0 0
  %3947 = vmatmul.mubr.bf16.gmra.mrb[0].mxu0 %v3891
  %v3948 = vpop.f32.mrb[0].mxu0
  %v3949 = vadd.f32 0.0, %v3948
  %v3950 = vpop.f32.mrb[0].mxu0
  %v3951 = vadd.f32 0.0, %v3950
  %v3952 = vpop.f32.mrb[0].mxu0
  %v3953 = vadd.f32 0.0, %v3952
  %v3954 = vpop.f32.mrb[0].mxu0
  %v3955 = vadd.f32 0.0, %v3954
  %3956 = vdwg.mxu0
  %3957 = vmatprep.subr.bf16.mxu0 %v3903
  %3958 = vmatpush1.bf16.msra.mxu0 %v3900
  %3959 = vmatprep.subr.bf16.mxu0 0
  %3960 = vmatpush1.bf16.msra.mxu0 0
  %3961 = vmatprep.subr.bf16.mxu0 0
  %3962 = vmatpush1.bf16.msra.mxu0 0
  %3963 = vmatprep.subr.bf16.mxu0 0
  %3964 = vmatpush1.bf16.msra.mxu0 0
  %3965 = vmatprep.subr.bf16.mxu0 0
  %3966 = vmatpush1.bf16.msra.mxu0 0
  %3967 = vmatprep.subr.bf16.mxu0 0
  %3968 = vmatpush1.bf16.msra.mxu0 0
  %3969 = vmatprep.subr.bf16.mxu0 0
  %3970 = vmatpush1.bf16.msra.mxu0 0
  %3971 = vmatprep.subr.bf16.mxu0 0
  %3972 = vmatpush1.bf16.msra.mxu0 0
  %3973 = vmatprep.subr.bf16.mxu0 0
  %3974 = vmatpush1.bf16.msra.mxu0 0
  %3975 = vmatprep.subr.bf16.mxu0 0
  %3976 = vmatpush1.bf16.msra.mxu0 0
  %3977 = vmatprep.subr.bf16.mxu0 0
  %3978 = vmatpush1.bf16.msra.mxu0 0
  %3979 = vmatprep.subr.bf16.mxu0 0
  %3980 = vmatpush1.bf16.msra.mxu0 0
  %3981 = vmatprep.subr.bf16.mxu0 0
  %3982 = vmatpush1.bf16.msra.mxu0 0
  %3983 = vmatprep.subr.bf16.mxu0 0
  %3984 = vmatpush1.bf16.msra.mxu0 0
  %3985 = vmatprep.subr.bf16.mxu0 0
  %3986 = vmatpush1.bf16.msra.mxu0 0
  %3987 = vmatprep.subr.bf16.mxu0 0
  %3988 = vmatpush1.bf16.msra.mxu0 0
  %3989 = vmatprep.mubr.bf16.mxu0 0
  %3990 = vmatmul.mubr.bf16.gmra.mrb[0].mxu0 %v3891
  %v3991 = vpop.f32.mrb[0].mxu0
  %v3992 = vadd.f32 0.0, %v3991
  %v3993 = vpop.f32.mrb[0].mxu0
  %v3994 = vadd.f32 0.0, %v3993
  %v3995 = vpop.f32.mrb[0].mxu0
  %v3996 = vadd.f32 0.0, %v3995
  %v3997 = vpop.f32.mrb[0].mxu0
  %v3998 = vadd.f32 0.0, %v3997
  %3999 = vdwg.mxu0
  %4000 = vmatprep.subr.bf16.mxu0 %v3909
  %4001 = vmatpush1.bf16.msra.mxu0 %v3906
  %4002 = vmatprep.subr.bf16.mxu0 0
  %4003 = vmatpush1.bf16.msra.mxu0 0
  %4004 = vmatprep.subr.bf16.mxu0 0
  %4005 = vmatpush1.bf16.msra.mxu0 0
  %4006 = vmatprep.subr.bf16.mxu0 0
  %4007 = vmatpush1.bf16.msra.mxu0 0
  %4008 = vmatprep.subr.bf16.mxu0 0
  %4009 = vmatpush1.bf16.msra.mxu0 0
  %4010 = vmatprep.subr.bf16.mxu0 0
  %4011 = vmatpush1.bf16.msra.mxu0 0
  %4012 = vmatprep.subr.bf16.mxu0 0
  %4013 = vmatpush1.bf16.msra.mxu0 0
  %4014 = vmatprep.subr.bf16.mxu0 0
  %4015 = vmatpush1.bf16.msra.mxu0 0
  %4016 = vmatprep.subr.bf16.mxu0 0
  %4017 = vmatpush1.bf16.msra.mxu0 0
  %4018 = vmatprep.subr.bf16.mxu0 0
  %4019 = vmatpush1.bf16.msra.mxu0 0
  %4020 = vmatprep.subr.bf16.mxu0 0
  %4021 = vmatpush1.bf16.msra.mxu0 0
  %4022 = vmatprep.subr.bf16.mxu0 0
  %4023 = vmatpush1.bf16.msra.mxu0 0
  %4024 = vmatprep.subr.bf16.mxu0 0
  %4025 = vmatpush1.bf16.msra.mxu0 0
  %4026 = vmatprep.subr.bf16.mxu0 0
  %4027 = vmatpush1.bf16.msra.mxu0 0
  %4028 = vmatprep.subr.bf16.mxu0 0
  %4029 = vmatpush1.bf16.msra.mxu0 0
  %4030 = vmatprep.subr.bf16.mxu0 0
  %4031 = vmatpush1.bf16.msra.mxu0 0
  %4032 = vmatprep.mubr.bf16.mxu0 0
  %4033 = vmatmul.mubr.bf16.gmra.mrb[0].mxu0 %v3891
  %v4034 = vpop.f32.mrb[0].mxu0
  %v4035 = vadd.f32 0.0, %v4034
  %v4036 = vpop.f32.mrb[0].mxu0
  %v4037 = vadd.f32 0.0, %v4036
  %v4038 = vpop.f32.mrb[0].mxu0
  %v4039 = vadd.f32 0.0, %v4038
  %v4040 = vpop.f32.mrb[0].mxu0
  %v4041 = vadd.f32 0.0, %v4040
  %4042 = vdwg.mxu0
  %4043 = vmatprep.subr.bf16.mxu0 0
  %4044 = vmatpush1.bf16.msra.mxu0 %v3912
  %4045 = vmatprep.subr.bf16.mxu0 0
  %4046 = vmatpush1.bf16.msra.mxu0 0
  %4047 = vmatprep.subr.bf16.mxu0 0
  %4048 = vmatpush1.bf16.msra.mxu0 0
  %4049 = vmatprep.subr.bf16.mxu0 0
  %4050 = vmatpush1.bf16.msra.mxu0 0
  %4051 = vmatprep.subr.bf16.mxu0 0
  %4052 = vmatpush1.bf16.msra.mxu0 0
  %4053 = vmatprep.subr.bf16.mxu0 0
  %4054 = vmatpush1.bf16.msra.mxu0 0
  %4055 = vmatprep.subr.bf16.mxu0 0
  %4056 = vmatpush1.bf16.msra.mxu0 0
  %4057 = vmatprep.subr.bf16.mxu0 0
  %4058 = vmatpush1.bf16.msra.mxu0 0
  %4059 = vmatprep.subr.bf16.mxu0 0
  %4060 = vmatpush1.bf16.msra.mxu0 0
  %4061 = vmatprep.subr.bf16.mxu0 0
  %4062 = vmatpush1.bf16.msra.mxu0 0
  %4063 = vmatprep.subr.bf16.mxu0 0
  %4064 = vmatpush1.bf16.msra.mxu0 0
  %4065 = vmatprep.subr.bf16.mxu0 0
  %4066 = vmatpush1.bf16.msra.mxu0 0
  %4067 = vmatprep.subr.bf16.mxu0 0
  %4068 = vmatpush1.bf16.msra.mxu0 0
  %4069 = vmatprep.subr.bf16.mxu0 0
  %4070 = vmatpush1.bf16.msra.mxu0 0
  %4071 = vmatprep.subr.bf16.mxu0 0
  %4072 = vmatpush1.bf16.msra.mxu0 0
  %4073 = vmatprep.subr.bf16.mxu0 0
  %4074 = vmatpush1.bf16.msra.mxu0 0
  %4075 = vmatprep.mubr.bf16.mxu0 0
  %4076 = vmatmul.mubr.bf16.gmra.mrb[0].mxu0 %v3891
  %v4077 = vpop.f32.mrb[0].mxu0
  %v4078 = vadd.f32 0.0, %v4077
  %v4079 = vpop.f32.mrb[0].mxu0
  %v4080 = vpop.f32.mrb[0].mxu0
  %v4081 = vadd.f32 0.0, %v4080
  %v4082 = vpop.f32.mrb[0].mxu0
  %4083 = vdwg.mxu0
  %v4084 = vadd.f32 %v3844, %v3949
  %v4085 = vadd.f32 %v3845, %v3951
  %v4086 = vadd.f32 %v3846, %v3992
  %v4087 = vadd.f32 %v3847, %v3994
  %v4088 = vadd.f32 %v3848, %v4035
  %v4089 = vadd.f32 %v3849, %v4037
  %v4090 = vadd.f32 %v3850, %v4078
  %v4091 = vadd.f32 %v3851, %v3953
  %v4092 = vadd.f32 %v3852, %v3955
  %v4093 = vadd.f32 %v3853, %v3996
  %v4094 = vadd.f32 %v3854, %v3998
  %v4095 = vadd.f32 %v3855, %v4039
  %v4096 = vadd.f32 %v3856, %v4041
  %v4097 = vadd.f32 %v3857, %v4081
  %s4098 = scalar_lea.vmem %s3, 64
  %v4099 = vld [vmem:[%s4098] sm:$0xf]
  %v4100 = vld [vmem:[%s4098 + $0x4] sm:$0xf]
  %v4103 = vunpack.c.l.b16 %v4099
  %v4104 = vunpack.c.l.b16 %v4100
  %v4105 = vpack.c.b16 %v4104, %v4103
  %4106 = vrot.lane.b32.xlu0 %v2228, 4
  %v4107 = vpop.permute.xlu0 %4106
  %4108 = vrot.lane.b32.xlu0 %v2229, 4
  %v4109 = vpop.permute.xlu0 %4108
  %4110 = vrot.lane.b32.xlu0 %v2230, 4
  %v4111 = vpop.permute.xlu0 %4110
  %4112 = vrot.lane.b32.xlu0 %v2231, 4
  %v4113 = vpop.permute.xlu0 %4112
  %4114 = vrot.lane.b32.xlu0 %v2232, 4
  %v4115 = vpop.permute.xlu0 %4114
  %4116 = vrot.lane.b32.xlu0 %v2233, 4
  %v4117 = vpop.permute.xlu0 %4116
  %4118 = vrot.lane.b32.xlu0 %v2234, 4
  %v4119 = vpop.permute.xlu0 %4118
  %4120 = vrot.lane.b32.xlu0 %v3379, 4
  %v4121 = vpop.permute.xlu0 %4120
  %vm4122 = vcmask 31744
  %v4123 = vsel %vm4122, %v4107, %v4109
  %v4124 = vsel %vm4122, %v4109, %v4111
  %v4125 = vsel %vm4122, %v4111, %v4113
  %v4126 = vsel %vm4122, %v4113, %v4115
  %v4127 = vsel %vm4122, %v4115, %v4117
  %v4128 = vsel %vm4122, %v4117, %v4119
  %v4129 = vsel %vm4122, %v4119, %v4121
  %v4131 = vsel %vm1199, %v4105, 0
  %v4134 = vsel %vm2274, %v4123, 0
  %v4137 = vsel %vm2274, %v4124, 0
  %v4140 = vsel %vm2274, %v4125, 0
  %v4143 = vsel %vm2274, %v4126, 0
  %v4146 = vsel %vm2274, %v4127, 0
  %v4149 = vsel %vm2274, %v4128, 0
  %v4152 = vsel %vm2274, %v4129, 0
  %4154 = vmatprep.subr.bf16.mxu0 %v4137
  %4155 = vmatpush1.bf16.msra.mxu0 %v4134
  %4156 = vmatprep.subr.bf16.mxu0 0
  %4157 = vmatpush1.bf16.msra.mxu0 0
  %4158 = vmatprep.subr.bf16.mxu0 0
  %4159 = vmatpush1.bf16.msra.mxu0 0
  %4160 = vmatprep.subr.bf16.mxu0 0
  %4161 = vmatpush1.bf16.msra.mxu0 0
  %4162 = vmatprep.subr.bf16.mxu0 0
  %4163 = vmatpush1.bf16.msra.mxu0 0
  %4164 = vmatprep.subr.bf16.mxu0 0
  %4165 = vmatpush1.bf16.msra.mxu0 0
  %4166 = vmatprep.subr.bf16.mxu0 0
  %4167 = vmatpush1.bf16.msra.mxu0 0
  %4168 = vmatprep.subr.bf16.mxu0 0
  %4169 = vmatpush1.bf16.msra.mxu0 0
  %4170 = vmatprep.subr.bf16.mxu0 0
  %4171 = vmatpush1.bf16.msra.mxu0 0
  %4172 = vmatprep.subr.bf16.mxu0 0
  %4173 = vmatpush1.bf16.msra.mxu0 0
  %4174 = vmatprep.subr.bf16.mxu0 0
  %4175 = vmatpush1.bf16.msra.mxu0 0
  %4176 = vmatprep.subr.bf16.mxu0 0
  %4177 = vmatpush1.bf16.msra.mxu0 0
  %4178 = vmatprep.subr.bf16.mxu0 0
  %4179 = vmatpush1.bf16.msra.mxu0 0
  %4180 = vmatprep.subr.bf16.mxu0 0
  %4181 = vmatpush1.bf16.msra.mxu0 0
  %4182 = vmatprep.subr.bf16.mxu0 0
  %4183 = vmatpush1.bf16.msra.mxu0 0
  %4184 = vmatprep.subr.bf16.mxu0 0
  %4185 = vmatpush1.bf16.msra.mxu0 0
  %4186 = vmatprep.mubr.bf16.mxu0 0
  %4187 = vmatmul.mubr.bf16.gmra.mrb[0].mxu0 %v4131
  %v4188 = vpop.f32.mrb[0].mxu0
  %v4189 = vadd.f32 0.0, %v4188
  %v4190 = vpop.f32.mrb[0].mxu0
  %v4191 = vadd.f32 0.0, %v4190
  %v4192 = vpop.f32.mrb[0].mxu0
  %v4193 = vadd.f32 0.0, %v4192
  %v4194 = vpop.f32.mrb[0].mxu0
  %v4195 = vadd.f32 0.0, %v4194
  %4196 = vdwg.mxu0
  %4197 = vmatprep.subr.bf16.mxu0 %v4143
  %4198 = vmatpush1.bf16.msra.mxu0 %v4140
  %4199 = vmatprep.subr.bf16.mxu0 0
  %4200 = vmatpush1.bf16.msra.mxu0 0
  %4201 = vmatprep.subr.bf16.mxu0 0
  %4202 = vmatpush1.bf16.msra.mxu0 0
  %4203 = vmatprep.subr.bf16.mxu0 0
  %4204 = vmatpush1.bf16.msra.mxu0 0
  %4205 = vmatprep.subr.bf16.mxu0 0
  %4206 = vmatpush1.bf16.msra.mxu0 0
  %4207 = vmatprep.subr.bf16.mxu0 0
  %4208 = vmatpush1.bf16.msra.mxu0 0
  %4209 = vmatprep.subr.bf16.mxu0 0
  %4210 = vmatpush1.bf16.msra.mxu0 0
  %4211 = vmatprep.subr.bf16.mxu0 0
  %4212 = vmatpush1.bf16.msra.mxu0 0
  %4213 = vmatprep.subr.bf16.mxu0 0
  %4214 = vmatpush1.bf16.msra.mxu0 0
  %4215 = vmatprep.subr.bf16.mxu0 0
  %4216 = vmatpush1.bf16.msra.mxu0 0
  %4217 = vmatprep.subr.bf16.mxu0 0
  %4218 = vmatpush1.bf16.msra.mxu0 0
  %4219 = vmatprep.subr.bf16.mxu0 0
  %4220 = vmatpush1.bf16.msra.mxu0 0
  %4221 = vmatprep.subr.bf16.mxu0 0
  %4222 = vmatpush1.bf16.msra.mxu0 0
  %4223 = vmatprep.subr.bf16.mxu0 0
  %4224 = vmatpush1.bf16.msra.mxu0 0
  %4225 = vmatprep.subr.bf16.mxu0 0
  %4226 = vmatpush1.bf16.msra.mxu0 0
  %4227 = vmatprep.subr.bf16.mxu0 0
  %4228 = vmatpush1.bf16.msra.mxu0 0
  %4229 = vmatprep.mubr.bf16.mxu0 0
  %4230 = vmatmul.mubr.bf16.gmra.mrb[0].mxu0 %v4131
  %v4231 = vpop.f32.mrb[0].mxu0
  %v4232 = vadd.f32 0.0, %v4231
  %v4233 = vpop.f32.mrb[0].mxu0
  %v4234 = vadd.f32 0.0, %v4233
  %v4235 = vpop.f32.mrb[0].mxu0
  %v4236 = vadd.f32 0.0, %v4235
  %v4237 = vpop.f32.mrb[0].mxu0
  %v4238 = vadd.f32 0.0, %v4237
  %4239 = vdwg.mxu0
  %4240 = vmatprep.subr.bf16.mxu0 %v4149
  %4241 = vmatpush1.bf16.msra.mxu0 %v4146
  %4242 = vmatprep.subr.bf16.mxu0 0
  %4243 = vmatpush1.bf16.msra.mxu0 0
  %4244 = vmatprep.subr.bf16.mxu0 0
  %4245 = vmatpush1.bf16.msra.mxu0 0
  %4246 = vmatprep.subr.bf16.mxu0 0
  %4247 = vmatpush1.bf16.msra.mxu0 0
  %4248 = vmatprep.subr.bf16.mxu0 0
  %4249 = vmatpush1.bf16.msra.mxu0 0
  %4250 = vmatprep.subr.bf16.mxu0 0
  %4251 = vmatpush1.bf16.msra.mxu0 0
  %4252 = vmatprep.subr.bf16.mxu0 0
  %4253 = vmatpush1.bf16.msra.mxu0 0
  %4254 = vmatprep.subr.bf16.mxu0 0
  %4255 = vmatpush1.bf16.msra.mxu0 0
  %4256 = vmatprep.subr.bf16.mxu0 0
  %4257 = vmatpush1.bf16.msra.mxu0 0
  %4258 = vmatprep.subr.bf16.mxu0 0
  %4259 = vmatpush1.bf16.msra.mxu0 0
  %4260 = vmatprep.subr.bf16.mxu0 0
  %4261 = vmatpush1.bf16.msra.mxu0 0
  %4262 = vmatprep.subr.bf16.mxu0 0
  %4263 = vmatpush1.bf16.msra.mxu0 0
  %4264 = vmatprep.subr.bf16.mxu0 0
  %4265 = vmatpush1.bf16.msra.mxu0 0
  %4266 = vmatprep.subr.bf16.mxu0 0
  %4267 = vmatpush1.bf16.msra.mxu0 0
  %4268 = vmatprep.subr.bf16.mxu0 0
  %4269 = vmatpush1.bf16.msra.mxu0 0
  %4270 = vmatprep.subr.bf16.mxu0 0
  %4271 = vmatpush1.bf16.msra.mxu0 0
  %4272 = vmatprep.mubr.bf16.mxu0 0
  %4273 = vmatmul.mubr.bf16.gmra.mrb[0].mxu0 %v4131
  %v4274 = vpop.f32.mrb[0].mxu0
  %v4275 = vadd.f32 0.0, %v4274
  %v4276 = vpop.f32.mrb[0].mxu0
  %v4277 = vadd.f32 0.0, %v4276
  %v4278 = vpop.f32.mrb[0].mxu0
  %v4279 = vadd.f32 0.0, %v4278
  %v4280 = vpop.f32.mrb[0].mxu0
  %v4281 = vadd.f32 0.0, %v4280
  %4282 = vdwg.mxu0
  %4283 = vmatprep.subr.bf16.mxu0 0
  %4284 = vmatpush1.bf16.msra.mxu0 %v4152
  %4285 = vmatprep.subr.bf16.mxu0 0
  %4286 = vmatpush1.bf16.msra.mxu0 0
  %4287 = vmatprep.subr.bf16.mxu0 0
  %4288 = vmatpush1.bf16.msra.mxu0 0
  %4289 = vmatprep.subr.bf16.mxu0 0
  %4290 = vmatpush1.bf16.msra.mxu0 0
  %4291 = vmatprep.subr.bf16.mxu0 0
  %4292 = vmatpush1.bf16.msra.mxu0 0
  %4293 = vmatprep.subr.bf16.mxu0 0
  %4294 = vmatpush1.bf16.msra.mxu0 0
  %4295 = vmatprep.subr.bf16.mxu0 0
  %4296 = vmatpush1.bf16.msra.mxu0 0
  %4297 = vmatprep.subr.bf16.mxu0 0
  %4298 = vmatpush1.bf16.msra.mxu0 0
  %4299 = vmatprep.subr.bf16.mxu0 0
  %4300 = vmatpush1.bf16.msra.mxu0 0
  %4301 = vmatprep.subr.bf16.mxu0 0
  %4302 = vmatpush1.bf16.msra.mxu0 0
  %4303 = vmatprep.subr.bf16.mxu0 0
  %4304 = vmatpush1.bf16.msra.mxu0 0
  %4305 = vmatprep.subr.bf16.mxu0 0
  %4306 = vmatpush1.bf16.msra.mxu0 0
  %4307 = vmatprep.subr.bf16.mxu0 0
  %4308 = vmatpush1.bf16.msra.mxu0 0
  %4309 = vmatprep.subr.bf16.mxu0 0
  %4310 = vmatpush1.bf16.msra.mxu0 0
  %4311 = vmatprep.subr.bf16.mxu0 0
  %4312 = vmatpush1.bf16.msra.mxu0 0
  %4313 = vmatprep.subr.bf16.mxu0 0
  %4314 = vmatpush1.bf16.msra.mxu0 0
  %4315 = vmatprep.mubr.bf16.mxu0 0
  %4316 = vmatmul.mubr.bf16.gmra.mrb[0].mxu0 %v4131
  %v4317 = vpop.f32.mrb[0].mxu0
  %v4318 = vadd.f32 0.0, %v4317
  %v4319 = vpop.f32.mrb[0].mxu0
  %v4320 = vpop.f32.mrb[0].mxu0
  %v4321 = vadd.f32 0.0, %v4320
  %v4322 = vpop.f32.mrb[0].mxu0
  %4323 = vdwg.mxu0
  %v4324 = vadd.f32 %v4084, %v4189
  %v4325 = vadd.f32 %v4085, %v4191
  %v4326 = vadd.f32 %v4086, %v4232
  %v4327 = vadd.f32 %v4087, %v4234
  %v4328 = vadd.f32 %v4088, %v4275
  %v4329 = vadd.f32 %v4089, %v4277
  %v4330 = vadd.f32 %v4090, %v4318
  %v4331 = vadd.f32 %v4091, %v4193
  %v4332 = vadd.f32 %v4092, %v4195
  %v4333 = vadd.f32 %v4093, %v4236
  %v4334 = vadd.f32 %v4094, %v4238
  %v4335 = vadd.f32 %v4095, %v4279
  %v4336 = vadd.f32 %v4096, %v4281
  %v4337 = vadd.f32 %v4097, %v4321
  %s4338 = scalar_lea.vmem %s3, 72
  %v4339 = vld [vmem:[%s4338] sm:$0xf]
  %v4340 = vld [vmem:[%s4338 + $0x4] sm:$0xf]
  %v4343 = vunpack.c.l.b16 %v4339
  %v4344 = vunpack.c.l.b16 %v4340
  %v4345 = vpack.c.b16 %v4344, %v4343
  %v4347 = vsel %vm1199, %v4345, 0
  %v4350 = vsel %vm2274, %v3379, 0
  %4352 = vmatprep.subr.bf16.mxu0 %v2481
  %4353 = vmatpush1.bf16.msra.mxu0 %v2478
  %4354 = vmatprep.subr.bf16.mxu0 0
  %4355 = vmatpush1.bf16.msra.mxu0 0
  %4356 = vmatprep.subr.bf16.mxu0 0
  %4357 = vmatpush1.bf16.msra.mxu0 0
  %4358 = vmatprep.subr.bf16.mxu0 0
  %4359 = vmatpush1.bf16.msra.mxu0 0
  %4360 = vmatprep.subr.bf16.mxu0 0
  %4361 = vmatpush1.bf16.msra.mxu0 0
  %4362 = vmatprep.subr.bf16.mxu0 0
  %4363 = vmatpush1.bf16.msra.mxu0 0
  %4364 = vmatprep.subr.bf16.mxu0 0
  %4365 = vmatpush1.bf16.msra.mxu0 0
  %4366 = vmatprep.subr.bf16.mxu0 0
  %4367 = vmatpush1.bf16.msra.mxu0 0
  %4368 = vmatprep.subr.bf16.mxu0 0
  %4369 = vmatpush1.bf16.msra.mxu0 0
  %4370 = vmatprep.subr.bf16.mxu0 0
  %4371 = vmatpush1.bf16.msra.mxu0 0
  %4372 = vmatprep.subr.bf16.mxu0 0
  %4373 = vmatpush1.bf16.msra.mxu0 0
  %4374 = vmatprep.subr.bf16.mxu0 0
  %4375 = vmatpush1.bf16.msra.mxu0 0
  %4376 = vmatprep.subr.bf16.mxu0 0
  %4377 = vmatpush1.bf16.msra.mxu0 0
  %4378 = vmatprep.subr.bf16.mxu0 0
  %4379 = vmatpush1.bf16.msra.mxu0 0
  %4380 = vmatprep.subr.bf16.mxu0 0
  %4381 = vmatpush1.bf16.msra.mxu0 0
  %4382 = vmatprep.subr.bf16.mxu0 0
  %4383 = vmatpush1.bf16.msra.mxu0 0
  %4384 = vmatprep.mubr.bf16.mxu0 0
  %4385 = vmatmul.mubr.bf16.gmra.mrb[0].mxu0 %v4347
  %v4386 = vpop.f32.mrb[0].mxu0
  %v4387 = vadd.f32 0.0, %v4386
  %v4388 = vpop.f32.mrb[0].mxu0
  %v4389 = vadd.f32 0.0, %v4388
  %v4390 = vpop.f32.mrb[0].mxu0
  %v4391 = vadd.f32 0.0, %v4390
  %v4392 = vpop.f32.mrb[0].mxu0
  %v4393 = vadd.f32 0.0, %v4392
  %4394 = vdwg.mxu0
  %4395 = vmatprep.subr.bf16.mxu0 %v2487
  %4396 = vmatpush1.bf16.msra.mxu0 %v2484
  %4397 = vmatprep.subr.bf16.mxu0 0
  %4398 = vmatpush1.bf16.msra.mxu0 0
  %4399 = vmatprep.subr.bf16.mxu0 0
  %4400 = vmatpush1.bf16.msra.mxu0 0
  %4401 = vmatprep.subr.bf16.mxu0 0
  %4402 = vmatpush1.bf16.msra.mxu0 0
  %4403 = vmatprep.subr.bf16.mxu0 0
  %4404 = vmatpush1.bf16.msra.mxu0 0
  %4405 = vmatprep.subr.bf16.mxu0 0
  %4406 = vmatpush1.bf16.msra.mxu0 0
  %4407 = vmatprep.subr.bf16.mxu0 0
  %4408 = vmatpush1.bf16.msra.mxu0 0
  %4409 = vmatprep.subr.bf16.mxu0 0
  %4410 = vmatpush1.bf16.msra.mxu0 0
  %4411 = vmatprep.subr.bf16.mxu0 0
  %4412 = vmatpush1.bf16.msra.mxu0 0
  %4413 = vmatprep.subr.bf16.mxu0 0
  %4414 = vmatpush1.bf16.msra.mxu0 0
  %4415 = vmatprep.subr.bf16.mxu0 0
  %4416 = vmatpush1.bf16.msra.mxu0 0
  %4417 = vmatprep.subr.bf16.mxu0 0
  %4418 = vmatpush1.bf16.msra.mxu0 0
  %4419 = vmatprep.subr.bf16.mxu0 0
  %4420 = vmatpush1.bf16.msra.mxu0 0
  %4421 = vmatprep.subr.bf16.mxu0 0
  %4422 = vmatpush1.bf16.msra.mxu0 0
  %4423 = vmatprep.subr.bf16.mxu0 0
  %4424 = vmatpush1.bf16.msra.mxu0 0
  %4425 = vmatprep.subr.bf16.mxu0 0
  %4426 = vmatpush1.bf16.msra.mxu0 0
  %4427 = vmatprep.mubr.bf16.mxu0 0
  %4428 = vmatmul.mubr.bf16.gmra.mrb[0].mxu0 %v4347
  %v4429 = vpop.f32.mrb[0].mxu0
  %v4430 = vadd.f32 0.0, %v4429
  %v4431 = vpop.f32.mrb[0].mxu0
  %v4432 = vadd.f32 0.0, %v4431
  %v4433 = vpop.f32.mrb[0].mxu0
  %v4434 = vadd.f32 0.0, %v4433
  %v4435 = vpop.f32.mrb[0].mxu0
  %v4436 = vadd.f32 0.0, %v4435
  %4437 = vdwg.mxu0
  %4438 = vmatprep.subr.bf16.mxu0 %v2493
  %4439 = vmatpush1.bf16.msra.mxu0 %v2490
  %4440 = vmatprep.subr.bf16.mxu0 0
  %4441 = vmatpush1.bf16.msra.mxu0 0
  %4442 = vmatprep.subr.bf16.mxu0 0
  %4443 = vmatpush1.bf16.msra.mxu0 0
  %4444 = vmatprep.subr.bf16.mxu0 0
  %4445 = vmatpush1.bf16.msra.mxu0 0
  %4446 = vmatprep.subr.bf16.mxu0 0
  %4447 = vmatpush1.bf16.msra.mxu0 0
  %4448 = vmatprep.subr.bf16.mxu0 0
  %4449 = vmatpush1.bf16.msra.mxu0 0
  %4450 = vmatprep.subr.bf16.mxu0 0
  %4451 = vmatpush1.bf16.msra.mxu0 0
  %4452 = vmatprep.subr.bf16.mxu0 0
  %4453 = vmatpush1.bf16.msra.mxu0 0
  %4454 = vmatprep.subr.bf16.mxu0 0
  %4455 = vmatpush1.bf16.msra.mxu0 0
  %4456 = vmatprep.subr.bf16.mxu0 0
  %4457 = vmatpush1.bf16.msra.mxu0 0
  %4458 = vmatprep.subr.bf16.mxu0 0
  %4459 = vmatpush1.bf16.msra.mxu0 0
  %4460 = vmatprep.subr.bf16.mxu0 0
  %4461 = vmatpush1.bf16.msra.mxu0 0
  %4462 = vmatprep.subr.bf16.mxu0 0
  %4463 = vmatpush1.bf16.msra.mxu0 0
  %4464 = vmatprep.subr.bf16.mxu0 0
  %4465 = vmatpush1.bf16.msra.mxu0 0
  %4466 = vmatprep.subr.bf16.mxu0 0
  %4467 = vmatpush1.bf16.msra.mxu0 0
  %4468 = vmatprep.subr.bf16.mxu0 0
  %4469 = vmatpush1.bf16.msra.mxu0 0
  %4470 = vmatprep.mubr.bf16.mxu0 0
  %4471 = vmatmul.mubr.bf16.gmra.mrb[0].mxu0 %v4347
  %v4472 = vpop.f32.mrb[0].mxu0
  %v4473 = vadd.f32 0.0, %v4472
  %v4474 = vpop.f32.mrb[0].mxu0
  %v4475 = vadd.f32 0.0, %v4474
  %v4476 = vpop.f32.mrb[0].mxu0
  %v4477 = vadd.f32 0.0, %v4476
  %v4478 = vpop.f32.mrb[0].mxu0
  %v4479 = vadd.f32 0.0, %v4478
  %4480 = vdwg.mxu0
  %4481 = vmatprep.subr.bf16.mxu0 0
  %4482 = vmatpush1.bf16.msra.mxu0 %v4350
  %4483 = vmatprep.subr.bf16.mxu0 0
  %4484 = vmatpush1.bf16.msra.mxu0 0
  %4485 = vmatprep.subr.bf16.mxu0 0
  %4486 = vmatpush1.bf16.msra.mxu0 0
  %4487 = vmatprep.subr.bf16.mxu0 0
  %4488 = vmatpush1.bf16.msra.mxu0 0
  %4489 = vmatprep.subr.bf16.mxu0 0
  %4490 = vmatpush1.bf16.msra.mxu0 0
  %4491 = vmatprep.subr.bf16.mxu0 0
  %4492 = vmatpush1.bf16.msra.mxu0 0
  %4493 = vmatprep.subr.bf16.mxu0 0
  %4494 = vmatpush1.bf16.msra.mxu0 0
  %4495 = vmatprep.subr.bf16.mxu0 0
  %4496 = vmatpush1.bf16.msra.mxu0 0
  %4497 = vmatprep.subr.bf16.mxu0 0
  %4498 = vmatpush1.bf16.msra.mxu0 0
  %4499 = vmatprep.subr.bf16.mxu0 0
  %4500 = vmatpush1.bf16.msra.mxu0 0
  %4501 = vmatprep.subr.bf16.mxu0 0
  %4502 = vmatpush1.bf16.msra.mxu0 0
  %4503 = vmatprep.subr.bf16.mxu0 0
  %4504 = vmatpush1.bf16.msra.mxu0 0
  %4505 = vmatprep.subr.bf16.mxu0 0
  %4506 = vmatpush1.bf16.msra.mxu0 0
  %4507 = vmatprep.subr.bf16.mxu0 0
  %4508 = vmatpush1.bf16.msra.mxu0 0
  %4509 = vmatprep.subr.bf16.mxu0 0
  %4510 = vmatpush1.bf16.msra.mxu0 0
  %4511 = vmatprep.subr.bf16.mxu0 0
  %4512 = vmatpush1.bf16.msra.mxu0 0
  %4513 = vmatprep.mubr.bf16.mxu0 0
  %4514 = vmatmul.mubr.bf16.gmra.mrb[0].mxu0 %v4347
  %v4515 = vpop.f32.mrb[0].mxu0
  %v4516 = vadd.f32 0.0, %v4515
  %v4517 = vpop.f32.mrb[0].mxu0
  %v4518 = vpop.f32.mrb[0].mxu0
  %v4519 = vadd.f32 0.0, %v4518
  %v4520 = vpop.f32.mrb[0].mxu0
  %4521 = vdwg.mxu0
  %v4522 = vadd.f32 %v4324, %v4387
  %v4523 = vadd.f32 %v4325, %v4389
  %v4524 = vadd.f32 %v4326, %v4430
  %v4525 = vadd.f32 %v4327, %v4432
  %v4526 = vadd.f32 %v4328, %v4473
  %v4527 = vadd.f32 %v4329, %v4475
  %v4528 = vadd.f32 %v4330, %v4516
  %v4529 = vadd.f32 %v4331, %v4391
  %v4530 = vadd.f32 %v4332, %v4393
  %v4531 = vadd.f32 %v4333, %v4434
  %v4532 = vadd.f32 %v4334, %v4436
  %v4533 = vadd.f32 %v4335, %v4477
  %v4534 = vadd.f32 %v4336, %v4479
  %v4535 = vadd.f32 %v4337, %v4519
  %s4536 = scalar_lea.vmem %s3, 80
  %v4537 = vld [vmem:[%s4536] sm:$0xf]
  %v4538 = vld [vmem:[%s4536 + $0x4] sm:$0xf]
  %v4539 = vpack.c.bf16 %v2224, %v2224
  %v4542 = vunpack.c.l.b16 %v4537
  %v4543 = vunpack.c.l.b16 %v4538
  %v4544 = vpack.c.b16 %v4543, %v4542
  %4546 = vrot.lane.b32.xlu0 %v2229, 32
  %v4547 = vpop.permute.xlu0 %4546
  %4548 = vrot.lane.b32.xlu0 %v2230, 32
  %v4549 = vpop.permute.xlu0 %4548
  %4550 = vrot.lane.b32.xlu0 %v2231, 32
  %v4551 = vpop.permute.xlu0 %4550
  %4552 = vrot.lane.b32.xlu0 %v2232, 32
  %v4553 = vpop.permute.xlu0 %4552
  %4554 = vrot.lane.b32.xlu0 %v2233, 32
  %v4555 = vpop.permute.xlu0 %4554
  %4556 = vrot.lane.b32.xlu0 %v2234, 32
  %v4557 = vpop.permute.xlu0 %4556
  %4558 = vrot.lane.b32.xlu0 %v3379, 32
  %v4559 = vpop.permute.xlu0 %4558
  %4560 = vrot.lane.b32.xlu0 %v4539, 32
  %v4561 = vpop.permute.xlu0 %4560
  %vm4562 = vcmask 261120
  %v4563 = vsel %vm4562, %v4547, %v4549
  %v4564 = vsel %vm4562, %v4549, %v4551
  %v4565 = vsel %vm4562, %v4551, %v4553
  %v4566 = vsel %vm4562, %v4553, %v4555
  %v4567 = vsel %vm4562, %v4555, %v4557
  %v4568 = vsel %vm4562, %v4557, %v4559
  %v4569 = vsel %vm4562, %v4559, %v4561
  %v4571 = vsel %vm1199, %v4544, 0
  %v4574 = vsel %vm2274, %v4563, 0
  %v4577 = vsel %vm2274, %v4564, 0
  %v4580 = vsel %vm2274, %v4565, 0
  %v4583 = vsel %vm2274, %v4566, 0
  %v4586 = vsel %vm2274, %v4567, 0
  %v4589 = vsel %vm2274, %v4568, 0
  %v4592 = vsel %vm2274, %v4569, 0
  %4594 = vmatprep.subr.bf16.mxu0 %v4577
  %4595 = vmatpush1.bf16.msra.mxu0 %v4574
  %4596 = vmatprep.subr.bf16.mxu0 0
  %4597 = vmatpush1.bf16.msra.mxu0 0
  %4598 = vmatprep.subr.bf16.mxu0 0
  %4599 = vmatpush1.bf16.msra.mxu0 0
  %4600 = vmatprep.subr.bf16.mxu0 0
  %4601 = vmatpush1.bf16.msra.mxu0 0
  %4602 = vmatprep.subr.bf16.mxu0 0
  %4603 = vmatpush1.bf16.msra.mxu0 0
  %4604 = vmatprep.subr.bf16.mxu0 0
  %4605 = vmatpush1.bf16.msra.mxu0 0
  %4606 = vmatprep.subr.bf16.mxu0 0
  %4607 = vmatpush1.bf16.msra.mxu0 0
  %4608 = vmatprep.subr.bf16.mxu0 0
  %4609 = vmatpush1.bf16.msra.mxu0 0
  %4610 = vmatprep.subr.bf16.mxu0 0
  %4611 = vmatpush1.bf16.msra.mxu0 0
  %4612 = vmatprep.subr.bf16.mxu0 0
  %4613 = vmatpush1.bf16.msra.mxu0 0
  %4614 = vmatprep.subr.bf16.mxu0 0
  %4615 = vmatpush1.bf16.msra.mxu0 0
  %4616 = vmatprep.subr.bf16.mxu0 0
  %4617 = vmatpush1.bf16.msra.mxu0 0
  %4618 = vmatprep.subr.bf16.mxu0 0
  %4619 = vmatpush1.bf16.msra.mxu0 0
  %4620 = vmatprep.subr.bf16.mxu0 0
  %4621 = vmatpush1.bf16.msra.mxu0 0
  %4622 = vmatprep.subr.bf16.mxu0 0
  %4623 = vmatpush1.bf16.msra.mxu0 0
  %4624 = vmatprep.subr.bf16.mxu0 0
  %4625 = vmatpush1.bf16.msra.mxu0 0
  %4626 = vmatprep.mubr.bf16.mxu0 0
  %4627 = vmatmul.mubr.bf16.gmra.mrb[0].mxu0 %v4571
  %v4628 = vpop.f32.mrb[0].mxu0
  %v4629 = vadd.f32 0.0, %v4628
  %v4630 = vpop.f32.mrb[0].mxu0
  %v4631 = vadd.f32 0.0, %v4630
  %v4632 = vpop.f32.mrb[0].mxu0
  %v4633 = vadd.f32 0.0, %v4632
  %v4634 = vpop.f32.mrb[0].mxu0
  %v4635 = vadd.f32 0.0, %v4634
  %4636 = vdwg.mxu0
  %4637 = vmatprep.subr.bf16.mxu0 %v4583
  %4638 = vmatpush1.bf16.msra.mxu0 %v4580
  %4639 = vmatprep.subr.bf16.mxu0 0
  %4640 = vmatpush1.bf16.msra.mxu0 0
  %4641 = vmatprep.subr.bf16.mxu0 0
  %4642 = vmatpush1.bf16.msra.mxu0 0
  %4643 = vmatprep.subr.bf16.mxu0 0
  %4644 = vmatpush1.bf16.msra.mxu0 0
  %4645 = vmatprep.subr.bf16.mxu0 0
  %4646 = vmatpush1.bf16.msra.mxu0 0
  %4647 = vmatprep.subr.bf16.mxu0 0
  %4648 = vmatpush1.bf16.msra.mxu0 0
  %4649 = vmatprep.subr.bf16.mxu0 0
  %4650 = vmatpush1.bf16.msra.mxu0 0
  %4651 = vmatprep.subr.bf16.mxu0 0
  %4652 = vmatpush1.bf16.msra.mxu0 0
  %4653 = vmatprep.subr.bf16.mxu0 0
  %4654 = vmatpush1.bf16.msra.mxu0 0
  %4655 = vmatprep.subr.bf16.mxu0 0
  %4656 = vmatpush1.bf16.msra.mxu0 0
  %4657 = vmatprep.subr.bf16.mxu0 0
  %4658 = vmatpush1.bf16.msra.mxu0 0
  %4659 = vmatprep.subr.bf16.mxu0 0
  %4660 = vmatpush1.bf16.msra.mxu0 0
  %4661 = vmatprep.subr.bf16.mxu0 0
  %4662 = vmatpush1.bf16.msra.mxu0 0
  %4663 = vmatprep.subr.bf16.mxu0 0
  %4664 = vmatpush1.bf16.msra.mxu0 0
  %4665 = vmatprep.subr.bf16.mxu0 0
  %4666 = vmatpush1.bf16.msra.mxu0 0
  %4667 = vmatprep.subr.bf16.mxu0 0
  %4668 = vmatpush1.bf16.msra.mxu0 0
  %4669 = vmatprep.mubr.bf16.mxu0 0
  %4670 = vmatmul.mubr.bf16.gmra.mrb[0].mxu0 %v4571
  %v4671 = vpop.f32.mrb[0].mxu0
  %v4672 = vadd.f32 0.0, %v4671
  %v4673 = vpop.f32.mrb[0].mxu0
  %v4674 = vadd.f32 0.0, %v4673
  %v4675 = vpop.f32.mrb[0].mxu0
  %v4676 = vadd.f32 0.0, %v4675
  %v4677 = vpop.f32.mrb[0].mxu0
  %v4678 = vadd.f32 0.0, %v4677
  %4679 = vdwg.mxu0
  %4680 = vmatprep.subr.bf16.mxu0 %v4589
  %4681 = vmatpush1.bf16.msra.mxu0 %v4586
  %4682 = vmatprep.subr.bf16.mxu0 0
  %4683 = vmatpush1.bf16.msra.mxu0 0
  %4684 = vmatprep.subr.bf16.mxu0 0
  %4685 = vmatpush1.bf16.msra.mxu0 0
  %4686 = vmatprep.subr.bf16.mxu0 0
  %4687 = vmatpush1.bf16.msra.mxu0 0
  %4688 = vmatprep.subr.bf16.mxu0 0
  %4689 = vmatpush1.bf16.msra.mxu0 0
  %4690 = vmatprep.subr.bf16.mxu0 0
  %4691 = vmatpush1.bf16.msra.mxu0 0
  %4692 = vmatprep.subr.bf16.mxu0 0
  %4693 = vmatpush1.bf16.msra.mxu0 0
  %4694 = vmatprep.subr.bf16.mxu0 0
  %4695 = vmatpush1.bf16.msra.mxu0 0
  %4696 = vmatprep.subr.bf16.mxu0 0
  %4697 = vmatpush1.bf16.msra.mxu0 0
  %4698 = vmatprep.subr.bf16.mxu0 0
  %4699 = vmatpush1.bf16.msra.mxu0 0
  %4700 = vmatprep.subr.bf16.mxu0 0
  %4701 = vmatpush1.bf16.msra.mxu0 0
  %4702 = vmatprep.subr.bf16.mxu0 0
  %4703 = vmatpush1.bf16.msra.mxu0 0
  %4704 = vmatprep.subr.bf16.mxu0 0
  %4705 = vmatpush1.bf16.msra.mxu0 0
  %4706 = vmatprep.subr.bf16.mxu0 0
  %4707 = vmatpush1.bf16.msra.mxu0 0
  %4708 = vmatprep.subr.bf16.mxu0 0
  %4709 = vmatpush1.bf16.msra.mxu0 0
  %4710 = vmatprep.subr.bf16.mxu0 0
  %4711 = vmatpush1.bf16.msra.mxu0 0
  %4712 = vmatprep.mubr.bf16.mxu0 0
  %4713 = vmatmul.mubr.bf16.gmra.mrb[0].mxu0 %v4571
  %v4714 = vpop.f32.mrb[0].mxu0
  %v4715 = vadd.f32 0.0, %v4714
  %v4716 = vpop.f32.mrb[0].mxu0
  %v4717 = vadd.f32 0.0, %v4716
  %v4718 = vpop.f32.mrb[0].mxu0
  %v4719 = vadd.f32 0.0, %v4718
  %v4720 = vpop.f32.mrb[0].mxu0
  %v4721 = vadd.f32 0.0, %v4720
  %4722 = vdwg.mxu0
  %4723 = vmatprep.subr.bf16.mxu0 0
  %4724 = vmatpush1.bf16.msra.mxu0 %v4592
  %4725 = vmatprep.subr.bf16.mxu0 0
  %4726 = vmatpush1.bf16.msra.mxu0 0
  %4727 = vmatprep.subr.bf16.mxu0 0
  %4728 = vmatpush1.bf16.msra.mxu0 0
  %4729 = vmatprep.subr.bf16.mxu0 0
  %4730 = vmatpush1.bf16.msra.mxu0 0
  %4731 = vmatprep.subr.bf16.mxu0 0
  %4732 = vmatpush1.bf16.msra.mxu0 0
  %4733 = vmatprep.subr.bf16.mxu0 0
  %4734 = vmatpush1.bf16.msra.mxu0 0
  %4735 = vmatprep.subr.bf16.mxu0 0
  %4736 = vmatpush1.bf16.msra.mxu0 0
  %4737 = vmatprep.subr.bf16.mxu0 0
  %4738 = vmatpush1.bf16.msra.mxu0 0
  %4739 = vmatprep.subr.bf16.mxu0 0
  %4740 = vmatpush1.bf16.msra.mxu0 0
  %4741 = vmatprep.subr.bf16.mxu0 0
  %4742 = vmatpush1.bf16.msra.mxu0 0
  %4743 = vmatprep.subr.bf16.mxu0 0
  %4744 = vmatpush1.bf16.msra.mxu0 0
  %4745 = vmatprep.subr.bf16.mxu0 0
  %4746 = vmatpush1.bf16.msra.mxu0 0
  %4747 = vmatprep.subr.bf16.mxu0 0
  %4748 = vmatpush1.bf16.msra.mxu0 0
  %4749 = vmatprep.subr.bf16.mxu0 0
  %4750 = vmatpush1.bf16.msra.mxu0 0
  %4751 = vmatprep.subr.bf16.mxu0 0
  %4752 = vmatpush1.bf16.msra.mxu0 0
  %4753 = vmatprep.subr.bf16.mxu0 0
  %4754 = vmatpush1.bf16.msra.mxu0 0
  %4755 = vmatprep.mubr.bf16.mxu0 0
  %4756 = vmatmul.mubr.bf16.gmra.mrb[0].mxu0 %v4571
  %v4757 = vpop.f32.mrb[0].mxu0
  %v4758 = vadd.f32 0.0, %v4757
  %v4759 = vpop.f32.mrb[0].mxu0
  %v4760 = vpop.f32.mrb[0].mxu0
  %v4761 = vadd.f32 0.0, %v4760
  %v4762 = vpop.f32.mrb[0].mxu0
  %4763 = vdwg.mxu0
  %v4764 = vadd.f32 %v4522, %v4629
  %v4765 = vadd.f32 %v4523, %v4631
  %v4766 = vadd.f32 %v4524, %v4672
  %v4767 = vadd.f32 %v4525, %v4674
  %v4768 = vadd.f32 %v4526, %v4715
  %v4769 = vadd.f32 %v4527, %v4717
  %v4770 = vadd.f32 %v4528, %v4758
  %v4771 = vadd.f32 %v4529, %v4633
  %v4772 = vadd.f32 %v4530, %v4635
  %v4773 = vadd.f32 %v4531, %v4676
  %v4774 = vadd.f32 %v4532, %v4678
  %v4775 = vadd.f32 %v4533, %v4719
  %v4776 = vadd.f32 %v4534, %v4721
  %v4777 = vadd.f32 %v4535, %v4761
  %s4778 = scalar_lea.vmem %s3, 88
  %v4779 = vld [vmem:[%s4778] sm:$0xf]
  %v4780 = vld [vmem:[%s4778 + $0x4] sm:$0xf]
  %v4783 = vunpack.c.l.b16 %v4779
  %v4784 = vunpack.c.l.b16 %v4780
  %v4785 = vpack.c.b16 %v4784, %v4783
  %4786 = vrot.lane.b32.xlu0 %v2229, 28
  %v4787 = vpop.permute.xlu0 %4786
  %4788 = vrot.lane.b32.xlu0 %v2230, 28
  %v4789 = vpop.permute.xlu0 %4788
  %4790 = vrot.lane.b32.xlu0 %v2231, 28
  %v4791 = vpop.permute.xlu0 %4790
  %4792 = vrot.lane.b32.xlu0 %v2232, 28
  %v4793 = vpop.permute.xlu0 %4792
  %4794 = vrot.lane.b32.xlu0 %v2233, 28
  %v4795 = vpop.permute.xlu0 %4794
  %4796 = vrot.lane.b32.xlu0 %v2234, 28
  %v4797 = vpop.permute.xlu0 %4796
  %4798 = vrot.lane.b32.xlu0 %v3379, 28
  %v4799 = vpop.permute.xlu0 %4798
  %4800 = vrot.lane.b32.xlu0 %v4539, 28
  %v4801 = vpop.permute.xlu0 %4800
  %vm4802 = vcmask 228352
  %v4803 = vsel %vm4802, %v4787, %v4789
  %v4804 = vsel %vm4802, %v4789, %v4791
  %v4805 = vsel %vm4802, %v4791, %v4793
  %v4806 = vsel %vm4802, %v4793, %v4795
  %v4807 = vsel %vm4802, %v4795, %v4797
  %v4808 = vsel %vm4802, %v4797, %v4799
  %v4809 = vsel %vm4802, %v4799, %v4801
  %v4811 = vsel %vm1199, %v4785, 0
  %v4814 = vsel %vm2274, %v4803, 0
  %v4817 = vsel %vm2274, %v4804, 0
  %v4820 = vsel %vm2274, %v4805, 0
  %v4823 = vsel %vm2274, %v4806, 0
  %v4826 = vsel %vm2274, %v4807, 0
  %v4829 = vsel %vm2274, %v4808, 0
  %v4832 = vsel %vm2274, %v4809, 0
  %4834 = vmatprep.subr.bf16.mxu0 %v4817
  %4835 = vmatpush1.bf16.msra.mxu0 %v4814
  %4836 = vmatprep.subr.bf16.mxu0 0
  %4837 = vmatpush1.bf16.msra.mxu0 0
  %4838 = vmatprep.subr.bf16.mxu0 0
  %4839 = vmatpush1.bf16.msra.mxu0 0
  %4840 = vmatprep.subr.bf16.mxu0 0
  %4841 = vmatpush1.bf16.msra.mxu0 0
  %4842 = vmatprep.subr.bf16.mxu0 0
  %4843 = vmatpush1.bf16.msra.mxu0 0
  %4844 = vmatprep.subr.bf16.mxu0 0
  %4845 = vmatpush1.bf16.msra.mxu0 0
  %4846 = vmatprep.subr.bf16.mxu0 0
  %4847 = vmatpush1.bf16.msra.mxu0 0
  %4848 = vmatprep.subr.bf16.mxu0 0
  %4849 = vmatpush1.bf16.msra.mxu0 0
  %4850 = vmatprep.subr.bf16.mxu0 0
  %4851 = vmatpush1.bf16.msra.mxu0 0
  %4852 = vmatprep.subr.bf16.mxu0 0
  %4853 = vmatpush1.bf16.msra.mxu0 0
  %4854 = vmatprep.subr.bf16.mxu0 0
  %4855 = vmatpush1.bf16.msra.mxu0 0
  %4856 = vmatprep.subr.bf16.mxu0 0
  %4857 = vmatpush1.bf16.msra.mxu0 0
  %4858 = vmatprep.subr.bf16.mxu0 0
  %4859 = vmatpush1.bf16.msra.mxu0 0
  %4860 = vmatprep.subr.bf16.mxu0 0
  %4861 = vmatpush1.bf16.msra.mxu0 0
  %4862 = vmatprep.subr.bf16.mxu0 0
  %4863 = vmatpush1.bf16.msra.mxu0 0
  %4864 = vmatprep.subr.bf16.mxu0 0
  %4865 = vmatpush1.bf16.msra.mxu0 0
  %4866 = vmatprep.mubr.bf16.mxu0 0
  %4867 = vmatmul.mubr.bf16.gmra.mrb[0].mxu0 %v4811
  %v4868 = vpop.f32.mrb[0].mxu0
  %v4869 = vadd.f32 0.0, %v4868
  %v4870 = vpop.f32.mrb[0].mxu0
  %v4871 = vadd.f32 0.0, %v4870
  %v4872 = vpop.f32.mrb[0].mxu0
  %v4873 = vadd.f32 0.0, %v4872
  %v4874 = vpop.f32.mrb[0].mxu0
  %v4875 = vadd.f32 0.0, %v4874
  %4876 = vdwg.mxu0
  %4877 = vmatprep.subr.bf16.mxu0 %v4823
  %4878 = vmatpush1.bf16.msra.mxu0 %v4820
  %4879 = vmatprep.subr.bf16.mxu0 0
  %4880 = vmatpush1.bf16.msra.mxu0 0
  %4881 = vmatprep.subr.bf16.mxu0 0
  %4882 = vmatpush1.bf16.msra.mxu0 0
  %4883 = vmatprep.subr.bf16.mxu0 0
  %4884 = vmatpush1.bf16.msra.mxu0 0
  %4885 = vmatprep.subr.bf16.mxu0 0
  %4886 = vmatpush1.bf16.msra.mxu0 0
  %4887 = vmatprep.subr.bf16.mxu0 0
  %4888 = vmatpush1.bf16.msra.mxu0 0
  %4889 = vmatprep.subr.bf16.mxu0 0
  %4890 = vmatpush1.bf16.msra.mxu0 0
  %4891 = vmatprep.subr.bf16.mxu0 0
  %4892 = vmatpush1.bf16.msra.mxu0 0
  %4893 = vmatprep.subr.bf16.mxu0 0
  %4894 = vmatpush1.bf16.msra.mxu0 0
  %4895 = vmatprep.subr.bf16.mxu0 0
  %4896 = vmatpush1.bf16.msra.mxu0 0
  %4897 = vmatprep.subr.bf16.mxu0 0
  %4898 = vmatpush1.bf16.msra.mxu0 0
  %4899 = vmatprep.subr.bf16.mxu0 0
  %4900 = vmatpush1.bf16.msra.mxu0 0
  %4901 = vmatprep.subr.bf16.mxu0 0
  %4902 = vmatpush1.bf16.msra.mxu0 0
  %4903 = vmatprep.subr.bf16.mxu0 0
  %4904 = vmatpush1.bf16.msra.mxu0 0
  %4905 = vmatprep.subr.bf16.mxu0 0
  %4906 = vmatpush1.bf16.msra.mxu0 0
  %4907 = vmatprep.subr.bf16.mxu0 0
  %4908 = vmatpush1.bf16.msra.mxu0 0
  %4909 = vmatprep.mubr.bf16.mxu0 0
  %4910 = vmatmul.mubr.bf16.gmra.mrb[0].mxu0 %v4811
  %v4911 = vpop.f32.mrb[0].mxu0
  %v4912 = vadd.f32 0.0, %v4911
  %v4913 = vpop.f32.mrb[0].mxu0
  %v4914 = vadd.f32 0.0, %v4913
  %v4915 = vpop.f32.mrb[0].mxu0
  %v4916 = vadd.f32 0.0, %v4915
  %v4917 = vpop.f32.mrb[0].mxu0
  %v4918 = vadd.f32 0.0, %v4917
  %4919 = vdwg.mxu0
  %4920 = vmatprep.subr.bf16.mxu0 %v4829
  %4921 = vmatpush1.bf16.msra.mxu0 %v4826
  %4922 = vmatprep.subr.bf16.mxu0 0
  %4923 = vmatpush1.bf16.msra.mxu0 0
  %4924 = vmatprep.subr.bf16.mxu0 0
  %4925 = vmatpush1.bf16.msra.mxu0 0
  %4926 = vmatprep.subr.bf16.mxu0 0
  %4927 = vmatpush1.bf16.msra.mxu0 0
  %4928 = vmatprep.subr.bf16.mxu0 0
  %4929 = vmatpush1.bf16.msra.mxu0 0
  %4930 = vmatprep.subr.bf16.mxu0 0
  %4931 = vmatpush1.bf16.msra.mxu0 0
  %4932 = vmatprep.subr.bf16.mxu0 0
  %4933 = vmatpush1.bf16.msra.mxu0 0
  %4934 = vmatprep.subr.bf16.mxu0 0
  %4935 = vmatpush1.bf16.msra.mxu0 0
  %4936 = vmatprep.subr.bf16.mxu0 0
  %4937 = vmatpush1.bf16.msra.mxu0 0
  %4938 = vmatprep.subr.bf16.mxu0 0
  %4939 = vmatpush1.bf16.msra.mxu0 0
  %4940 = vmatprep.subr.bf16.mxu0 0
  %4941 = vmatpush1.bf16.msra.mxu0 0
  %4942 = vmatprep.subr.bf16.mxu0 0
  %4943 = vmatpush1.bf16.msra.mxu0 0
  %4944 = vmatprep.subr.bf16.mxu0 0
  %4945 = vmatpush1.bf16.msra.mxu0 0
  %4946 = vmatprep.subr.bf16.mxu0 0
  %4947 = vmatpush1.bf16.msra.mxu0 0
  %4948 = vmatprep.subr.bf16.mxu0 0
  %4949 = vmatpush1.bf16.msra.mxu0 0
  %4950 = vmatprep.subr.bf16.mxu0 0
  %4951 = vmatpush1.bf16.msra.mxu0 0
  %4952 = vmatprep.mubr.bf16.mxu0 0
  %4953 = vmatmul.mubr.bf16.gmra.mrb[0].mxu0 %v4811
  %v4954 = vpop.f32.mrb[0].mxu0
  %v4955 = vadd.f32 0.0, %v4954
  %v4956 = vpop.f32.mrb[0].mxu0
  %v4957 = vadd.f32 0.0, %v4956
  %v4958 = vpop.f32.mrb[0].mxu0
  %v4959 = vadd.f32 0.0, %v4958
  %v4960 = vpop.f32.mrb[0].mxu0
  %v4961 = vadd.f32 0.0, %v4960
  %4962 = vdwg.mxu0
  %4963 = vmatprep.subr.bf16.mxu0 0
  %4964 = vmatpush1.bf16.msra.mxu0 %v4832
  %4965 = vmatprep.subr.bf16.mxu0 0
  %4966 = vmatpush1.bf16.msra.mxu0 0
  %4967 = vmatprep.subr.bf16.mxu0 0
  %4968 = vmatpush1.bf16.msra.mxu0 0
  %4969 = vmatprep.subr.bf16.mxu0 0
  %4970 = vmatpush1.bf16.msra.mxu0 0
  %4971 = vmatprep.subr.bf16.mxu0 0
  %4972 = vmatpush1.bf16.msra.mxu0 0
  %4973 = vmatprep.subr.bf16.mxu0 0
  %4974 = vmatpush1.bf16.msra.mxu0 0
  %4975 = vmatprep.subr.bf16.mxu0 0
  %4976 = vmatpush1.bf16.msra.mxu0 0
  %4977 = vmatprep.subr.bf16.mxu0 0
  %4978 = vmatpush1.bf16.msra.mxu0 0
  %4979 = vmatprep.subr.bf16.mxu0 0
  %4980 = vmatpush1.bf16.msra.mxu0 0
  %4981 = vmatprep.subr.bf16.mxu0 0
  %4982 = vmatpush1.bf16.msra.mxu0 0
  %4983 = vmatprep.subr.bf16.mxu0 0
  %4984 = vmatpush1.bf16.msra.mxu0 0
  %4985 = vmatprep.subr.bf16.mxu0 0
  %4986 = vmatpush1.bf16.msra.mxu0 0
  %4987 = vmatprep.subr.bf16.mxu0 0
  %4988 = vmatpush1.bf16.msra.mxu0 0
  %4989 = vmatprep.subr.bf16.mxu0 0
  %4990 = vmatpush1.bf16.msra.mxu0 0
  %4991 = vmatprep.subr.bf16.mxu0 0
  %4992 = vmatpush1.bf16.msra.mxu0 0
  %4993 = vmatprep.subr.bf16.mxu0 0
  %4994 = vmatpush1.bf16.msra.mxu0 0
  %4995 = vmatprep.mubr.bf16.mxu0 0
  %4996 = vmatmul.mubr.bf16.gmra.mrb[0].mxu0 %v4811
  %v4997 = vpop.f32.mrb[0].mxu0
  %v4998 = vadd.f32 0.0, %v4997
  %v4999 = vpop.f32.mrb[0].mxu0
  %v5000 = vpop.f32.mrb[0].mxu0
  %v5001 = vadd.f32 0.0, %v5000
  %v5002 = vpop.f32.mrb[0].mxu0
  %5003 = vdwg.mxu0
  %v5004 = vadd.f32 %v4764, %v4869
  %v5005 = vadd.f32 %v4765, %v4871
  %v5006 = vadd.f32 %v4766, %v4912
  %v5007 = vadd.f32 %v4767, %v4914
  %v5008 = vadd.f32 %v4768, %v4955
  %v5009 = vadd.f32 %v4769, %v4957
  %v5010 = vadd.f32 %v4770, %v4998
  %v5011 = vadd.f32 %v4771, %v4873
  %v5012 = vadd.f32 %v4772, %v4875
  %v5013 = vadd.f32 %v4773, %v4916
  %v5014 = vadd.f32 %v4774, %v4918
  %v5015 = vadd.f32 %v4775, %v4959
  %v5016 = vadd.f32 %v4776, %v4961
  %v5017 = vadd.f32 %v4777, %v5001
  %s5018 = scalar_lea.vmem %s3, 96
  %v5019 = vld [vmem:[%s5018] sm:$0xf]
  %v5020 = vld [vmem:[%s5018 + $0x4] sm:$0xf]
  %v5023 = vunpack.c.l.b16 %v5019
  %v5024 = vunpack.c.l.b16 %v5020
  %v5025 = vpack.c.b16 %v5024, %v5023
  %5026 = vrot.lane.b32.xlu0 %v2229, 24
  %v5027 = vpop.permute.xlu0 %5026
  %5028 = vrot.lane.b32.xlu0 %v2230, 24
  %v5029 = vpop.permute.xlu0 %5028
  %5030 = vrot.lane.b32.xlu0 %v2231, 24
  %v5031 = vpop.permute.xlu0 %5030
  %5032 = vrot.lane.b32.xlu0 %v2232, 24
  %v5033 = vpop.permute.xlu0 %5032
  %5034 = vrot.lane.b32.xlu0 %v2233, 24
  %v5035 = vpop.permute.xlu0 %5034
  %5036 = vrot.lane.b32.xlu0 %v2234, 24
  %v5037 = vpop.permute.xlu0 %5036
  %5038 = vrot.lane.b32.xlu0 %v3379, 24
  %v5039 = vpop.permute.xlu0 %5038
  %5040 = vrot.lane.b32.xlu0 %v4539, 24
  %v5041 = vpop.permute.xlu0 %5040
  %vm5042 = vcmask 195584
  %v5043 = vsel %vm5042, %v5027, %v5029
  %v5044 = vsel %vm5042, %v5029, %v5031
  %v5045 = vsel %vm5042, %v5031, %v5033
  %v5046 = vsel %vm5042, %v5033, %v5035
  %v5047 = vsel %vm5042, %v5035, %v5037
  %v5048 = vsel %vm5042, %v5037, %v5039
  %v5049 = vsel %vm5042, %v5039, %v5041
  %v5051 = vsel %vm1199, %v5025, 0
  %v5054 = vsel %vm2274, %v5043, 0
  %v5057 = vsel %vm2274, %v5044, 0
  %v5060 = vsel %vm2274, %v5045, 0
  %v5063 = vsel %vm2274, %v5046, 0
  %v5066 = vsel %vm2274, %v5047, 0
  %v5069 = vsel %vm2274, %v5048, 0
  %v5072 = vsel %vm2274, %v5049, 0
  %5074 = vmatprep.subr.bf16.mxu0 %v5057
  %5075 = vmatpush1.bf16.msra.mxu0 %v5054
  %5076 = vmatprep.subr.bf16.mxu0 0
  %5077 = vmatpush1.bf16.msra.mxu0 0
  %5078 = vmatprep.subr.bf16.mxu0 0
  %5079 = vmatpush1.bf16.msra.mxu0 0
  %5080 = vmatprep.subr.bf16.mxu0 0
  %5081 = vmatpush1.bf16.msra.mxu0 0
  %5082 = vmatprep.subr.bf16.mxu0 0
  %5083 = vmatpush1.bf16.msra.mxu0 0
  %5084 = vmatprep.subr.bf16.mxu0 0
  %5085 = vmatpush1.bf16.msra.mxu0 0
  %5086 = vmatprep.subr.bf16.mxu0 0
  %5087 = vmatpush1.bf16.msra.mxu0 0
  %5088 = vmatprep.subr.bf16.mxu0 0
  %5089 = vmatpush1.bf16.msra.mxu0 0
  %5090 = vmatprep.subr.bf16.mxu0 0
  %5091 = vmatpush1.bf16.msra.mxu0 0
  %5092 = vmatprep.subr.bf16.mxu0 0
  %5093 = vmatpush1.bf16.msra.mxu0 0
  %5094 = vmatprep.subr.bf16.mxu0 0
  %5095 = vmatpush1.bf16.msra.mxu0 0
  %5096 = vmatprep.subr.bf16.mxu0 0
  %5097 = vmatpush1.bf16.msra.mxu0 0
  %5098 = vmatprep.subr.bf16.mxu0 0
  %5099 = vmatpush1.bf16.msra.mxu0 0
  %5100 = vmatprep.subr.bf16.mxu0 0
  %5101 = vmatpush1.bf16.msra.mxu0 0
  %5102 = vmatprep.subr.bf16.mxu0 0
  %5103 = vmatpush1.bf16.msra.mxu0 0
  %5104 = vmatprep.subr.bf16.mxu0 0
  %5105 = vmatpush1.bf16.msra.mxu0 0
  %5106 = vmatprep.mubr.bf16.mxu0 0
  %5107 = vmatmul.mubr.bf16.gmra.mrb[0].mxu0 %v5051
  %v5108 = vpop.f32.mrb[0].mxu0
  %v5109 = vadd.f32 0.0, %v5108
  %v5110 = vpop.f32.mrb[0].mxu0
  %v5111 = vadd.f32 0.0, %v5110
  %v5112 = vpop.f32.mrb[0].mxu0
  %v5113 = vadd.f32 0.0, %v5112
  %v5114 = vpop.f32.mrb[0].mxu0
  %v5115 = vadd.f32 0.0, %v5114
  %5116 = vdwg.mxu0
  %5117 = vmatprep.subr.bf16.mxu0 %v5063
  %5118 = vmatpush1.bf16.msra.mxu0 %v5060
  %5119 = vmatprep.subr.bf16.mxu0 0
  %5120 = vmatpush1.bf16.msra.mxu0 0
  %5121 = vmatprep.subr.bf16.mxu0 0
  %5122 = vmatpush1.bf16.msra.mxu0 0
  %5123 = vmatprep.subr.bf16.mxu0 0
  %5124 = vmatpush1.bf16.msra.mxu0 0
  %5125 = vmatprep.subr.bf16.mxu0 0
  %5126 = vmatpush1.bf16.msra.mxu0 0
  %5127 = vmatprep.subr.bf16.mxu0 0
  %5128 = vmatpush1.bf16.msra.mxu0 0
  %5129 = vmatprep.subr.bf16.mxu0 0
  %5130 = vmatpush1.bf16.msra.mxu0 0
  %5131 = vmatprep.subr.bf16.mxu0 0
  %5132 = vmatpush1.bf16.msra.mxu0 0
  %5133 = vmatprep.subr.bf16.mxu0 0
  %5134 = vmatpush1.bf16.msra.mxu0 0
  %5135 = vmatprep.subr.bf16.mxu0 0
  %5136 = vmatpush1.bf16.msra.mxu0 0
  %5137 = vmatprep.subr.bf16.mxu0 0
  %5138 = vmatpush1.bf16.msra.mxu0 0
  %5139 = vmatprep.subr.bf16.mxu0 0
  %5140 = vmatpush1.bf16.msra.mxu0 0
  %5141 = vmatprep.subr.bf16.mxu0 0
  %5142 = vmatpush1.bf16.msra.mxu0 0
  %5143 = vmatprep.subr.bf16.mxu0 0
  %5144 = vmatpush1.bf16.msra.mxu0 0
  %5145 = vmatprep.subr.bf16.mxu0 0
  %5146 = vmatpush1.bf16.msra.mxu0 0
  %5147 = vmatprep.subr.bf16.mxu0 0
  %5148 = vmatpush1.bf16.msra.mxu0 0
  %5149 = vmatprep.mubr.bf16.mxu0 0
  %5150 = vmatmul.mubr.bf16.gmra.mrb[0].mxu0 %v5051
  %v5151 = vpop.f32.mrb[0].mxu0
  %v5152 = vadd.f32 0.0, %v5151
  %v5153 = vpop.f32.mrb[0].mxu0
  %v5154 = vadd.f32 0.0, %v5153
  %v5155 = vpop.f32.mrb[0].mxu0
  %v5156 = vadd.f32 0.0, %v5155
  %v5157 = vpop.f32.mrb[0].mxu0
  %v5158 = vadd.f32 0.0, %v5157
  %5159 = vdwg.mxu0
  %5160 = vmatprep.subr.bf16.mxu0 %v5069
  %5161 = vmatpush1.bf16.msra.mxu0 %v5066
  %5162 = vmatprep.subr.bf16.mxu0 0
  %5163 = vmatpush1.bf16.msra.mxu0 0
  %5164 = vmatprep.subr.bf16.mxu0 0
  %5165 = vmatpush1.bf16.msra.mxu0 0
  %5166 = vmatprep.subr.bf16.mxu0 0
  %5167 = vmatpush1.bf16.msra.mxu0 0
  %5168 = vmatprep.subr.bf16.mxu0 0
  %5169 = vmatpush1.bf16.msra.mxu0 0
  %5170 = vmatprep.subr.bf16.mxu0 0
  %5171 = vmatpush1.bf16.msra.mxu0 0
  %5172 = vmatprep.subr.bf16.mxu0 0
  %5173 = vmatpush1.bf16.msra.mxu0 0
  %5174 = vmatprep.subr.bf16.mxu0 0
  %5175 = vmatpush1.bf16.msra.mxu0 0
  %5176 = vmatprep.subr.bf16.mxu0 0
  %5177 = vmatpush1.bf16.msra.mxu0 0
  %5178 = vmatprep.subr.bf16.mxu0 0
  %5179 = vmatpush1.bf16.msra.mxu0 0
  %5180 = vmatprep.subr.bf16.mxu0 0
  %5181 = vmatpush1.bf16.msra.mxu0 0
  %5182 = vmatprep.subr.bf16.mxu0 0
  %5183 = vmatpush1.bf16.msra.mxu0 0
  %5184 = vmatprep.subr.bf16.mxu0 0
  %5185 = vmatpush1.bf16.msra.mxu0 0
  %5186 = vmatprep.subr.bf16.mxu0 0
  %5187 = vmatpush1.bf16.msra.mxu0 0
  %5188 = vmatprep.subr.bf16.mxu0 0
  %5189 = vmatpush1.bf16.msra.mxu0 0
  %5190 = vmatprep.subr.bf16.mxu0 0
  %5191 = vmatpush1.bf16.msra.mxu0 0
  %5192 = vmatprep.mubr.bf16.mxu0 0
  %5193 = vmatmul.mubr.bf16.gmra.mrb[0].mxu0 %v5051
  %v5194 = vpop.f32.mrb[0].mxu0
  %v5195 = vadd.f32 0.0, %v5194
  %v5196 = vpop.f32.mrb[0].mxu0
  %v5197 = vadd.f32 0.0, %v5196
  %v5198 = vpop.f32.mrb[0].mxu0
  %v5199 = vadd.f32 0.0, %v5198
  %v5200 = vpop.f32.mrb[0].mxu0
  %v5201 = vadd.f32 0.0, %v5200
  %5202 = vdwg.mxu0
  %5203 = vmatprep.subr.bf16.mxu0 0
  %5204 = vmatpush1.bf16.msra.mxu0 %v5072
  %5205 = vmatprep.subr.bf16.mxu0 0
  %5206 = vmatpush1.bf16.msra.mxu0 0
  %5207 = vmatprep.subr.bf16.mxu0 0
  %5208 = vmatpush1.bf16.msra.mxu0 0
  %5209 = vmatprep.subr.bf16.mxu0 0
  %5210 = vmatpush1.bf16.msra.mxu0 0
  %5211 = vmatprep.subr.bf16.mxu0 0
  %5212 = vmatpush1.bf16.msra.mxu0 0
  %5213 = vmatprep.subr.bf16.mxu0 0
  %5214 = vmatpush1.bf16.msra.mxu0 0
  %5215 = vmatprep.subr.bf16.mxu0 0
  %5216 = vmatpush1.bf16.msra.mxu0 0
  %5217 = vmatprep.subr.bf16.mxu0 0
  %5218 = vmatpush1.bf16.msra.mxu0 0
  %5219 = vmatprep.subr.bf16.mxu0 0
  %5220 = vmatpush1.bf16.msra.mxu0 0
  %5221 = vmatprep.subr.bf16.mxu0 0
  %5222 = vmatpush1.bf16.msra.mxu0 0
  %5223 = vmatprep.subr.bf16.mxu0 0
  %5224 = vmatpush1.bf16.msra.mxu0 0
  %5225 = vmatprep.subr.bf16.mxu0 0
  %5226 = vmatpush1.bf16.msra.mxu0 0
  %5227 = vmatprep.subr.bf16.mxu0 0
  %5228 = vmatpush1.bf16.msra.mxu0 0
  %5229 = vmatprep.subr.bf16.mxu0 0
  %5230 = vmatpush1.bf16.msra.mxu0 0
  %5231 = vmatprep.subr.bf16.mxu0 0
  %5232 = vmatpush1.bf16.msra.mxu0 0
  %5233 = vmatprep.subr.bf16.mxu0 0
  %5234 = vmatpush1.bf16.msra.mxu0 0
  %5235 = vmatprep.mubr.bf16.mxu0 0
  %5236 = vmatmul.mubr.bf16.gmra.mrb[0].mxu0 %v5051
  %v5237 = vpop.f32.mrb[0].mxu0
  %v5238 = vadd.f32 0.0, %v5237
  %v5239 = vpop.f32.mrb[0].mxu0
  %v5240 = vpop.f32.mrb[0].mxu0
  %v5241 = vadd.f32 0.0, %v5240
  %v5242 = vpop.f32.mrb[0].mxu0
  %5243 = vdwg.mxu0
  %v5244 = vadd.f32 %v5004, %v5109
  %v5245 = vadd.f32 %v5005, %v5111
  %v5246 = vadd.f32 %v5006, %v5152
  %v5247 = vadd.f32 %v5007, %v5154
  %v5248 = vadd.f32 %v5008, %v5195
  %v5249 = vadd.f32 %v5009, %v5197
  %v5250 = vadd.f32 %v5010, %v5238
  %v5251 = vadd.f32 %v5011, %v5113
  %v5252 = vadd.f32 %v5012, %v5115
  %v5253 = vadd.f32 %v5013, %v5156
  %v5254 = vadd.f32 %v5014, %v5158
  %v5255 = vadd.f32 %v5015, %v5199
  %v5256 = vadd.f32 %v5016, %v5201
  %v5257 = vadd.f32 %v5017, %v5241
  %s5258 = scalar_lea.vmem %s3, 104
  %v5259 = vld [vmem:[%s5258] sm:$0xf]
  %v5260 = vld [vmem:[%s5258 + $0x4] sm:$0xf]
  %v5263 = vunpack.c.l.b16 %v5259
  %v5264 = vunpack.c.l.b16 %v5260
  %v5265 = vpack.c.b16 %v5264, %v5263
  %5266 = vrot.lane.b32.xlu0 %v2229, 20
  %v5267 = vpop.permute.xlu0 %5266
  %5268 = vrot.lane.b32.xlu0 %v2230, 20
  %v5269 = vpop.permute.xlu0 %5268
  %5270 = vrot.lane.b32.xlu0 %v2231, 20
  %v5271 = vpop.permute.xlu0 %5270
  %5272 = vrot.lane.b32.xlu0 %v2232, 20
  %v5273 = vpop.permute.xlu0 %5272
  %5274 = vrot.lane.b32.xlu0 %v2233, 20
  %v5275 = vpop.permute.xlu0 %5274
  %5276 = vrot.lane.b32.xlu0 %v2234, 20
  %v5277 = vpop.permute.xlu0 %5276
  %5278 = vrot.lane.b32.xlu0 %v3379, 20
  %v5279 = vpop.permute.xlu0 %5278
  %5280 = vrot.lane.b32.xlu0 %v4539, 20
  %v5281 = vpop.permute.xlu0 %5280
  %vm5282 = vcmask 162816
  %v5283 = vsel %vm5282, %v5267, %v5269
  %v5284 = vsel %vm5282, %v5269, %v5271
  %v5285 = vsel %vm5282, %v5271, %v5273
  %v5286 = vsel %vm5282, %v5273, %v5275
  %v5287 = vsel %vm5282, %v5275, %v5277
  %v5288 = vsel %vm5282, %v5277, %v5279
  %v5289 = vsel %vm5282, %v5279, %v5281
  %v5291 = vsel %vm1199, %v5265, 0
  %v5294 = vsel %vm2274, %v5283, 0
  %v5297 = vsel %vm2274, %v5284, 0
  %v5300 = vsel %vm2274, %v5285, 0
  %v5303 = vsel %vm2274, %v5286, 0
  %v5306 = vsel %vm2274, %v5287, 0
  %v5309 = vsel %vm2274, %v5288, 0
  %v5312 = vsel %vm2274, %v5289, 0
  %5314 = vmatprep.subr.bf16.mxu0 %v5297
  %5315 = vmatpush1.bf16.msra.mxu0 %v5294
  %5316 = vmatprep.subr.bf16.mxu0 0
  %5317 = vmatpush1.bf16.msra.mxu0 0
  %5318 = vmatprep.subr.bf16.mxu0 0
  %5319 = vmatpush1.bf16.msra.mxu0 0
  %5320 = vmatprep.subr.bf16.mxu0 0
  %5321 = vmatpush1.bf16.msra.mxu0 0
  %5322 = vmatprep.subr.bf16.mxu0 0
  %5323 = vmatpush1.bf16.msra.mxu0 0
  %5324 = vmatprep.subr.bf16.mxu0 0
  %5325 = vmatpush1.bf16.msra.mxu0 0
  %5326 = vmatprep.subr.bf16.mxu0 0
  %5327 = vmatpush1.bf16.msra.mxu0 0
  %5328 = vmatprep.subr.bf16.mxu0 0
  %5329 = vmatpush1.bf16.msra.mxu0 0
  %5330 = vmatprep.subr.bf16.mxu0 0
  %5331 = vmatpush1.bf16.msra.mxu0 0
  %5332 = vmatprep.subr.bf16.mxu0 0
  %5333 = vmatpush1.bf16.msra.mxu0 0
  %5334 = vmatprep.subr.bf16.mxu0 0
  %5335 = vmatpush1.bf16.msra.mxu0 0
  %5336 = vmatprep.subr.bf16.mxu0 0
  %5337 = vmatpush1.bf16.msra.mxu0 0
  %5338 = vmatprep.subr.bf16.mxu0 0
  %5339 = vmatpush1.bf16.msra.mxu0 0
  %5340 = vmatprep.subr.bf16.mxu0 0
  %5341 = vmatpush1.bf16.msra.mxu0 0
  %5342 = vmatprep.subr.bf16.mxu0 0
  %5343 = vmatpush1.bf16.msra.mxu0 0
  %5344 = vmatprep.subr.bf16.mxu0 0
  %5345 = vmatpush1.bf16.msra.mxu0 0
  %5346 = vmatprep.mubr.bf16.mxu0 0
  %5347 = vmatmul.mubr.bf16.gmra.mrb[0].mxu0 %v5291
  %v5348 = vpop.f32.mrb[0].mxu0
  %v5349 = vadd.f32 0.0, %v5348
  %v5350 = vpop.f32.mrb[0].mxu0
  %v5351 = vadd.f32 0.0, %v5350
  %v5352 = vpop.f32.mrb[0].mxu0
  %v5353 = vadd.f32 0.0, %v5352
  %v5354 = vpop.f32.mrb[0].mxu0
  %v5355 = vadd.f32 0.0, %v5354
  %5356 = vdwg.mxu0
  %5357 = vmatprep.subr.bf16.mxu0 %v5303
  %5358 = vmatpush1.bf16.msra.mxu0 %v5300
  %5359 = vmatprep.subr.bf16.mxu0 0
  %5360 = vmatpush1.bf16.msra.mxu0 0
  %5361 = vmatprep.subr.bf16.mxu0 0
  %5362 = vmatpush1.bf16.msra.mxu0 0
  %5363 = vmatprep.subr.bf16.mxu0 0
  %5364 = vmatpush1.bf16.msra.mxu0 0
  %5365 = vmatprep.subr.bf16.mxu0 0
  %5366 = vmatpush1.bf16.msra.mxu0 0
  %5367 = vmatprep.subr.bf16.mxu0 0
  %5368 = vmatpush1.bf16.msra.mxu0 0
  %5369 = vmatprep.subr.bf16.mxu0 0
  %5370 = vmatpush1.bf16.msra.mxu0 0
  %5371 = vmatprep.subr.bf16.mxu0 0
  %5372 = vmatpush1.bf16.msra.mxu0 0
  %5373 = vmatprep.subr.bf16.mxu0 0
  %5374 = vmatpush1.bf16.msra.mxu0 0
  %5375 = vmatprep.subr.bf16.mxu0 0
  %5376 = vmatpush1.bf16.msra.mxu0 0
  %5377 = vmatprep.subr.bf16.mxu0 0
  %5378 = vmatpush1.bf16.msra.mxu0 0
  %5379 = vmatprep.subr.bf16.mxu0 0
  %5380 = vmatpush1.bf16.msra.mxu0 0
  %5381 = vmatprep.subr.bf16.mxu0 0
  %5382 = vmatpush1.bf16.msra.mxu0 0
  %5383 = vmatprep.subr.bf16.mxu0 0
  %5384 = vmatpush1.bf16.msra.mxu0 0
  %5385 = vmatprep.subr.bf16.mxu0 0
  %5386 = vmatpush1.bf16.msra.mxu0 0
  %5387 = vmatprep.subr.bf16.mxu0 0
  %5388 = vmatpush1.bf16.msra.mxu0 0
  %5389 = vmatprep.mubr.bf16.mxu0 0
  %5390 = vmatmul.mubr.bf16.gmra.mrb[0].mxu0 %v5291
  %v5391 = vpop.f32.mrb[0].mxu0
  %v5392 = vadd.f32 0.0, %v5391
  %v5393 = vpop.f32.mrb[0].mxu0
  %v5394 = vadd.f32 0.0, %v5393
  %v5395 = vpop.f32.mrb[0].mxu0
  %v5396 = vadd.f32 0.0, %v5395
  %v5397 = vpop.f32.mrb[0].mxu0
  %v5398 = vadd.f32 0.0, %v5397
  %5399 = vdwg.mxu0
  %5400 = vmatprep.subr.bf16.mxu0 %v5309
  %5401 = vmatpush1.bf16.msra.mxu0 %v5306
  %5402 = vmatprep.subr.bf16.mxu0 0
  %5403 = vmatpush1.bf16.msra.mxu0 0
  %5404 = vmatprep.subr.bf16.mxu0 0
  %5405 = vmatpush1.bf16.msra.mxu0 0
  %5406 = vmatprep.subr.bf16.mxu0 0
  %5407 = vmatpush1.bf16.msra.mxu0 0
  %5408 = vmatprep.subr.bf16.mxu0 0
  %5409 = vmatpush1.bf16.msra.mxu0 0
  %5410 = vmatprep.subr.bf16.mxu0 0
  %5411 = vmatpush1.bf16.msra.mxu0 0
  %5412 = vmatprep.subr.bf16.mxu0 0
  %5413 = vmatpush1.bf16.msra.mxu0 0
  %5414 = vmatprep.subr.bf16.mxu0 0
  %5415 = vmatpush1.bf16.msra.mxu0 0
  %5416 = vmatprep.subr.bf16.mxu0 0
  %5417 = vmatpush1.bf16.msra.mxu0 0
  %5418 = vmatprep.subr.bf16.mxu0 0
  %5419 = vmatpush1.bf16.msra.mxu0 0
  %5420 = vmatprep.subr.bf16.mxu0 0
  %5421 = vmatpush1.bf16.msra.mxu0 0
  %5422 = vmatprep.subr.bf16.mxu0 0
  %5423 = vmatpush1.bf16.msra.mxu0 0
  %5424 = vmatprep.subr.bf16.mxu0 0
  %5425 = vmatpush1.bf16.msra.mxu0 0
  %5426 = vmatprep.subr.bf16.mxu0 0
  %5427 = vmatpush1.bf16.msra.mxu0 0
  %5428 = vmatprep.subr.bf16.mxu0 0
  %5429 = vmatpush1.bf16.msra.mxu0 0
  %5430 = vmatprep.subr.bf16.mxu0 0
  %5431 = vmatpush1.bf16.msra.mxu0 0
  %5432 = vmatprep.mubr.bf16.mxu0 0
  %5433 = vmatmul.mubr.bf16.gmra.mrb[0].mxu0 %v5291
  %v5434 = vpop.f32.mrb[0].mxu0
  %v5435 = vadd.f32 0.0, %v5434
  %v5436 = vpop.f32.mrb[0].mxu0
  %v5437 = vadd.f32 0.0, %v5436
  %v5438 = vpop.f32.mrb[0].mxu0
  %v5439 = vadd.f32 0.0, %v5438
  %v5440 = vpop.f32.mrb[0].mxu0
  %v5441 = vadd.f32 0.0, %v5440
  %5442 = vdwg.mxu0
  %5443 = vmatprep.subr.bf16.mxu0 0
  %5444 = vmatpush1.bf16.msra.mxu0 %v5312
  %5445 = vmatprep.subr.bf16.mxu0 0
  %5446 = vmatpush1.bf16.msra.mxu0 0
  %5447 = vmatprep.subr.bf16.mxu0 0
  %5448 = vmatpush1.bf16.msra.mxu0 0
  %5449 = vmatprep.subr.bf16.mxu0 0
  %5450 = vmatpush1.bf16.msra.mxu0 0
  %5451 = vmatprep.subr.bf16.mxu0 0
  %5452 = vmatpush1.bf16.msra.mxu0 0
  %5453 = vmatprep.subr.bf16.mxu0 0
  %5454 = vmatpush1.bf16.msra.mxu0 0
  %5455 = vmatprep.subr.bf16.mxu0 0
  %5456 = vmatpush1.bf16.msra.mxu0 0
  %5457 = vmatprep.subr.bf16.mxu0 0
  %5458 = vmatpush1.bf16.msra.mxu0 0
  %5459 = vmatprep.subr.bf16.mxu0 0
  %5460 = vmatpush1.bf16.msra.mxu0 0
  %5461 = vmatprep.subr.bf16.mxu0 0
  %5462 = vmatpush1.bf16.msra.mxu0 0
  %5463 = vmatprep.subr.bf16.mxu0 0
  %5464 = vmatpush1.bf16.msra.mxu0 0
  %5465 = vmatprep.subr.bf16.mxu0 0
  %5466 = vmatpush1.bf16.msra.mxu0 0
  %5467 = vmatprep.subr.bf16.mxu0 0
  %5468 = vmatpush1.bf16.msra.mxu0 0
  %5469 = vmatprep.subr.bf16.mxu0 0
  %5470 = vmatpush1.bf16.msra.mxu0 0
  %5471 = vmatprep.subr.bf16.mxu0 0
  %5472 = vmatpush1.bf16.msra.mxu0 0
  %5473 = vmatprep.subr.bf16.mxu0 0
  %5474 = vmatpush1.bf16.msra.mxu0 0
  %5475 = vmatprep.mubr.bf16.mxu0 0
  %5476 = vmatmul.mubr.bf16.gmra.mrb[0].mxu0 %v5291
  %v5477 = vpop.f32.mrb[0].mxu0
  %v5478 = vadd.f32 0.0, %v5477
  %v5479 = vpop.f32.mrb[0].mxu0
  %v5480 = vpop.f32.mrb[0].mxu0
  %v5481 = vadd.f32 0.0, %v5480
  %v5482 = vpop.f32.mrb[0].mxu0
  %5483 = vdwg.mxu0
  %v5484 = vadd.f32 %v5244, %v5349
  %v5485 = vadd.f32 %v5245, %v5351
  %v5486 = vadd.f32 %v5246, %v5392
  %v5487 = vadd.f32 %v5247, %v5394
  %v5488 = vadd.f32 %v5248, %v5435
  %v5489 = vadd.f32 %v5249, %v5437
  %v5490 = vadd.f32 %v5250, %v5478
  %v5491 = vadd.f32 %v5251, %v5353
  %v5492 = vadd.f32 %v5252, %v5355
  %v5493 = vadd.f32 %v5253, %v5396
  %v5494 = vadd.f32 %v5254, %v5398
  %v5495 = vadd.f32 %v5255, %v5439
  %v5496 = vadd.f32 %v5256, %v5441
  %v5497 = vadd.f32 %v5257, %v5481
  %s5498 = scalar_lea.vmem %s3, 112
  %v5499 = vld [vmem:[%s5498] sm:$0xf]
  %v5500 = vld [vmem:[%s5498 + $0x4] sm:$0xf]
  %v5503 = vunpack.c.l.b16 %v5499
  %v5504 = vunpack.c.l.b16 %v5500
  %v5505 = vpack.c.b16 %v5504, %v5503
  %5506 = vrot.lane.b32.xlu0 %v4539, 16
  %v5507 = vpop.permute.xlu0 %5506
  %v5508 = vsel %vm3402, %v3401, %v5507
  %v5510 = vsel %vm1199, %v5505, 0
  %v5513 = vsel %vm2274, %v5508, 0
  %5515 = vmatprep.subr.bf16.mxu0 %v3420
  %5516 = vmatpush1.bf16.msra.mxu0 %v3417
  %5517 = vmatprep.subr.bf16.mxu0 0
  %5518 = vmatpush1.bf16.msra.mxu0 0
  %5519 = vmatprep.subr.bf16.mxu0 0
  %5520 = vmatpush1.bf16.msra.mxu0 0
  %5521 = vmatprep.subr.bf16.mxu0 0
  %5522 = vmatpush1.bf16.msra.mxu0 0
  %5523 = vmatprep.subr.bf16.mxu0 0
  %5524 = vmatpush1.bf16.msra.mxu0 0
  %5525 = vmatprep.subr.bf16.mxu0 0
  %5526 = vmatpush1.bf16.msra.mxu0 0
  %5527 = vmatprep.subr.bf16.mxu0 0
  %5528 = vmatpush1.bf16.msra.mxu0 0
  %5529 = vmatprep.subr.bf16.mxu0 0
  %5530 = vmatpush1.bf16.msra.mxu0 0
  %5531 = vmatprep.subr.bf16.mxu0 0
  %5532 = vmatpush1.bf16.msra.mxu0 0
  %5533 = vmatprep.subr.bf16.mxu0 0
  %5534 = vmatpush1.bf16.msra.mxu0 0
  %5535 = vmatprep.subr.bf16.mxu0 0
  %5536 = vmatpush1.bf16.msra.mxu0 0
  %5537 = vmatprep.subr.bf16.mxu0 0
  %5538 = vmatpush1.bf16.msra.mxu0 0
  %5539 = vmatprep.subr.bf16.mxu0 0
  %5540 = vmatpush1.bf16.msra.mxu0 0
  %5541 = vmatprep.subr.bf16.mxu0 0
  %5542 = vmatpush1.bf16.msra.mxu0 0
  %5543 = vmatprep.subr.bf16.mxu0 0
  %5544 = vmatpush1.bf16.msra.mxu0 0
  %5545 = vmatprep.subr.bf16.mxu0 0
  %5546 = vmatpush1.bf16.msra.mxu0 0
  %5547 = vmatprep.mubr.bf16.mxu0 0
  %5548 = vmatmul.mubr.bf16.gmra.mrb[0].mxu0 %v5510
  %v5549 = vpop.f32.mrb[0].mxu0
  %v5550 = vadd.f32 0.0, %v5549
  %v5551 = vpop.f32.mrb[0].mxu0
  %v5552 = vadd.f32 0.0, %v5551
  %v5553 = vpop.f32.mrb[0].mxu0
  %v5554 = vadd.f32 0.0, %v5553
  %v5555 = vpop.f32.mrb[0].mxu0
  %v5556 = vadd.f32 0.0, %v5555
  %5557 = vdwg.mxu0
  %5558 = vmatprep.subr.bf16.mxu0 %v3426
  %5559 = vmatpush1.bf16.msra.mxu0 %v3423
  %5560 = vmatprep.subr.bf16.mxu0 0
  %5561 = vmatpush1.bf16.msra.mxu0 0
  %5562 = vmatprep.subr.bf16.mxu0 0
  %5563 = vmatpush1.bf16.msra.mxu0 0
  %5564 = vmatprep.subr.bf16.mxu0 0
  %5565 = vmatpush1.bf16.msra.mxu0 0
  %5566 = vmatprep.subr.bf16.mxu0 0
  %5567 = vmatpush1.bf16.msra.mxu0 0
  %5568 = vmatprep.subr.bf16.mxu0 0
  %5569 = vmatpush1.bf16.msra.mxu0 0
  %5570 = vmatprep.subr.bf16.mxu0 0
  %5571 = vmatpush1.bf16.msra.mxu0 0
  %5572 = vmatprep.subr.bf16.mxu0 0
  %5573 = vmatpush1.bf16.msra.mxu0 0
  %5574 = vmatprep.subr.bf16.mxu0 0
  %5575 = vmatpush1.bf16.msra.mxu0 0
  %5576 = vmatprep.subr.bf16.mxu0 0
  %5577 = vmatpush1.bf16.msra.mxu0 0
  %5578 = vmatprep.subr.bf16.mxu0 0
  %5579 = vmatpush1.bf16.msra.mxu0 0
  %5580 = vmatprep.subr.bf16.mxu0 0
  %5581 = vmatpush1.bf16.msra.mxu0 0
  %5582 = vmatprep.subr.bf16.mxu0 0
  %5583 = vmatpush1.bf16.msra.mxu0 0
  %5584 = vmatprep.subr.bf16.mxu0 0
  %5585 = vmatpush1.bf16.msra.mxu0 0
  %5586 = vmatprep.subr.bf16.mxu0 0
  %5587 = vmatpush1.bf16.msra.mxu0 0
  %5588 = vmatprep.subr.bf16.mxu0 0
  %5589 = vmatpush1.bf16.msra.mxu0 0
  %5590 = vmatprep.mubr.bf16.mxu0 0
  %5591 = vmatmul.mubr.bf16.gmra.mrb[0].mxu0 %v5510
  %v5592 = vpop.f32.mrb[0].mxu0
  %v5593 = vadd.f32 0.0, %v5592
  %v5594 = vpop.f32.mrb[0].mxu0
  %v5595 = vadd.f32 0.0, %v5594
  %v5596 = vpop.f32.mrb[0].mxu0
  %v5597 = vadd.f32 0.0, %v5596
  %v5598 = vpop.f32.mrb[0].mxu0
  %v5599 = vadd.f32 0.0, %v5598
  %5600 = vdwg.mxu0
  %5601 = vmatprep.subr.bf16.mxu0 %v3432
  %5602 = vmatpush1.bf16.msra.mxu0 %v3429
  %5603 = vmatprep.subr.bf16.mxu0 0
  %5604 = vmatpush1.bf16.msra.mxu0 0
  %5605 = vmatprep.subr.bf16.mxu0 0
  %5606 = vmatpush1.bf16.msra.mxu0 0
  %5607 = vmatprep.subr.bf16.mxu0 0
  %5608 = vmatpush1.bf16.msra.mxu0 0
  %5609 = vmatprep.subr.bf16.mxu0 0
  %5610 = vmatpush1.bf16.msra.mxu0 0
  %5611 = vmatprep.subr.bf16.mxu0 0
  %5612 = vmatpush1.bf16.msra.mxu0 0
  %5613 = vmatprep.subr.bf16.mxu0 0
  %5614 = vmatpush1.bf16.msra.mxu0 0
  %5615 = vmatprep.subr.bf16.mxu0 0
  %5616 = vmatpush1.bf16.msra.mxu0 0
  %5617 = vmatprep.subr.bf16.mxu0 0
  %5618 = vmatpush1.bf16.msra.mxu0 0
  %5619 = vmatprep.subr.bf16.mxu0 0
  %5620 = vmatpush1.bf16.msra.mxu0 0
  %5621 = vmatprep.subr.bf16.mxu0 0
  %5622 = vmatpush1.bf16.msra.mxu0 0
  %5623 = vmatprep.subr.bf16.mxu0 0
  %5624 = vmatpush1.bf16.msra.mxu0 0
  %5625 = vmatprep.subr.bf16.mxu0 0
  %5626 = vmatpush1.bf16.msra.mxu0 0
  %5627 = vmatprep.subr.bf16.mxu0 0
  %5628 = vmatpush1.bf16.msra.mxu0 0
  %5629 = vmatprep.subr.bf16.mxu0 0
  %5630 = vmatpush1.bf16.msra.mxu0 0
  %5631 = vmatprep.subr.bf16.mxu0 0
  %5632 = vmatpush1.bf16.msra.mxu0 0
  %5633 = vmatprep.mubr.bf16.mxu0 0
  %5634 = vmatmul.mubr.bf16.gmra.mrb[0].mxu0 %v5510
  %v5635 = vpop.f32.mrb[0].mxu0
  %v5636 = vadd.f32 0.0, %v5635
  %v5637 = vpop.f32.mrb[0].mxu0
  %v5638 = vadd.f32 0.0, %v5637
  %v5639 = vpop.f32.mrb[0].mxu0
  %v5640 = vadd.f32 0.0, %v5639
  %v5641 = vpop.f32.mrb[0].mxu0
  %v5642 = vadd.f32 0.0, %v5641
  %5643 = vdwg.mxu0
  %5644 = vmatprep.subr.bf16.mxu0 0
  %5645 = vmatpush1.bf16.msra.mxu0 %v5513
  %5646 = vmatprep.subr.bf16.mxu0 0
  %5647 = vmatpush1.bf16.msra.mxu0 0
  %5648 = vmatprep.subr.bf16.mxu0 0
  %5649 = vmatpush1.bf16.msra.mxu0 0
  %5650 = vmatprep.subr.bf16.mxu0 0
  %5651 = vmatpush1.bf16.msra.mxu0 0
  %5652 = vmatprep.subr.bf16.mxu0 0
  %5653 = vmatpush1.bf16.msra.mxu0 0
  %5654 = vmatprep.subr.bf16.mxu0 0
  %5655 = vmatpush1.bf16.msra.mxu0 0
  %5656 = vmatprep.subr.bf16.mxu0 0
  %5657 = vmatpush1.bf16.msra.mxu0 0
  %5658 = vmatprep.subr.bf16.mxu0 0
  %5659 = vmatpush1.bf16.msra.mxu0 0
  %5660 = vmatprep.subr.bf16.mxu0 0
  %5661 = vmatpush1.bf16.msra.mxu0 0
  %5662 = vmatprep.subr.bf16.mxu0 0
  %5663 = vmatpush1.bf16.msra.mxu0 0
  %5664 = vmatprep.subr.bf16.mxu0 0
  %5665 = vmatpush1.bf16.msra.mxu0 0
  %5666 = vmatprep.subr.bf16.mxu0 0
  %5667 = vmatpush1.bf16.msra.mxu0 0
  %5668 = vmatprep.subr.bf16.mxu0 0
  %5669 = vmatpush1.bf16.msra.mxu0 0
  %5670 = vmatprep.subr.bf16.mxu0 0
  %5671 = vmatpush1.bf16.msra.mxu0 0
  %5672 = vmatprep.subr.bf16.mxu0 0
  %5673 = vmatpush1.bf16.msra.mxu0 0
  %5674 = vmatprep.subr.bf16.mxu0 0
  %5675 = vmatpush1.bf16.msra.mxu0 0
  %5676 = vmatprep.mubr.bf16.mxu0 0
  %5677 = vmatmul.mubr.bf16.gmra.mrb[0].mxu0 %v5510
  %v5678 = vpop.f32.mrb[0].mxu0
  %v5679 = vadd.f32 0.0, %v5678
  %v5680 = vpop.f32.mrb[0].mxu0
  %v5681 = vpop.f32.mrb[0].mxu0
  %v5682 = vadd.f32 0.0, %v5681
  %v5683 = vpop.f32.mrb[0].mxu0
  %5684 = vdwg.mxu0
  %v5685 = vadd.f32 %v5484, %v5550
  %v5686 = vadd.f32 %v5485, %v5552
  %v5687 = vadd.f32 %v5486, %v5593
  %v5688 = vadd.f32 %v5487, %v5595
  %v5689 = vadd.f32 %v5488, %v5636
  %v5690 = vadd.f32 %v5489, %v5638
  %v5691 = vadd.f32 %v5490, %v5679
  %v5692 = vadd.f32 %v5491, %v5554
  %v5693 = vadd.f32 %v5492, %v5556
  %v5694 = vadd.f32 %v5493, %v5597
  %v5695 = vadd.f32 %v5494, %v5599
  %v5696 = vadd.f32 %v5495, %v5640
  %v5697 = vadd.f32 %v5496, %v5642
  %v5698 = vadd.f32 %v5497, %v5682
  %s5699 = scalar_lea.vmem %s3, 120
  %v5700 = vld [vmem:[%s5699] sm:$0xf]
  %v5701 = vld [vmem:[%s5699 + $0x4] sm:$0xf]
  %v5704 = vunpack.c.l.b16 %v5700
  %v5705 = vunpack.c.l.b16 %v5701
  %v5706 = vpack.c.b16 %v5705, %v5704
  %5707 = vrot.lane.b32.xlu0 %v2230, 48
  %v5708 = vpop.permute.xlu0 %5707
  %5709 = vrot.lane.b32.xlu0 %v2231, 48
  %v5710 = vpop.permute.xlu0 %5709
  %5711 = vrot.lane.b32.xlu0 %v2232, 48
  %v5712 = vpop.permute.xlu0 %5711
  %5713 = vrot.lane.b32.xlu0 %v2233, 48
  %v5714 = vpop.permute.xlu0 %5713
  %5715 = vrot.lane.b32.xlu0 %v2234, 48
  %v5716 = vpop.permute.xlu0 %5715
  %5717 = vrot.lane.b32.xlu0 %v3379, 48
  %v5718 = vpop.permute.xlu0 %5717
  %5719 = vrot.lane.b32.xlu0 %v4539, 48
  %v5720 = vpop.permute.xlu0 %5719
  %vm5721 = vcmask 392192
  %v5722 = vsel %vm5721, %v5708, %v5710
  %v5723 = vsel %vm5721, %v5710, %v5712
  %v5724 = vsel %vm5721, %v5712, %v5714
  %v5725 = vsel %vm5721, %v5714, %v5716
  %v5726 = vsel %vm5721, %v5716, %v5718
  %v5727 = vsel %vm5721, %v5718, %v5720
  %v5729 = vsel %vm1199, %v5706, 0
  %v5732 = vsel %vm2274, %v5722, 0
  %v5735 = vsel %vm2274, %v5723, 0
  %v5738 = vsel %vm2274, %v5724, 0
  %v5741 = vsel %vm2274, %v5725, 0
  %v5744 = vsel %vm2274, %v5726, 0
  %v5747 = vsel %vm2274, %v5727, 0
  %v5750 = vsel %vm2274, %v5720, 0
  %5752 = vmatprep.subr.bf16.mxu0 %v5735
  %5753 = vmatpush1.bf16.msra.mxu0 %v5732
  %5754 = vmatprep.subr.bf16.mxu0 0
  %5755 = vmatpush1.bf16.msra.mxu0 0
  %5756 = vmatprep.subr.bf16.mxu0 0
  %5757 = vmatpush1.bf16.msra.mxu0 0
  %5758 = vmatprep.subr.bf16.mxu0 0
  %5759 = vmatpush1.bf16.msra.mxu0 0
  %5760 = vmatprep.subr.bf16.mxu0 0
  %5761 = vmatpush1.bf16.msra.mxu0 0
  %5762 = vmatprep.subr.bf16.mxu0 0
  %5763 = vmatpush1.bf16.msra.mxu0 0
  %5764 = vmatprep.subr.bf16.mxu0 0
  %5765 = vmatpush1.bf16.msra.mxu0 0
  %5766 = vmatprep.subr.bf16.mxu0 0
  %5767 = vmatpush1.bf16.msra.mxu0 0
  %5768 = vmatprep.subr.bf16.mxu0 0
  %5769 = vmatpush1.bf16.msra.mxu0 0
  %5770 = vmatprep.subr.bf16.mxu0 0
  %5771 = vmatpush1.bf16.msra.mxu0 0
  %5772 = vmatprep.subr.bf16.mxu0 0
  %5773 = vmatpush1.bf16.msra.mxu0 0
  %5774 = vmatprep.subr.bf16.mxu0 0
  %5775 = vmatpush1.bf16.msra.mxu0 0
  %5776 = vmatprep.subr.bf16.mxu0 0
  %5777 = vmatpush1.bf16.msra.mxu0 0
  %5778 = vmatprep.subr.bf16.mxu0 0
  %5779 = vmatpush1.bf16.msra.mxu0 0
  %5780 = vmatprep.subr.bf16.mxu0 0
  %5781 = vmatpush1.bf16.msra.mxu0 0
  %5782 = vmatprep.subr.bf16.mxu0 0
  %5783 = vmatpush1.bf16.msra.mxu0 0
  %5784 = vmatprep.mubr.bf16.mxu0 0
  %5785 = vmatmul.mubr.bf16.gmra.mrb[0].mxu0 %v5729
  %v5786 = vpop.f32.mrb[0].mxu0
  %v5787 = vadd.f32 0.0, %v5786
  %v5788 = vpop.f32.mrb[0].mxu0
  %v5789 = vadd.f32 0.0, %v5788
  %v5790 = vpop.f32.mrb[0].mxu0
  %v5791 = vadd.f32 0.0, %v5790
  %v5792 = vpop.f32.mrb[0].mxu0
  %v5793 = vadd.f32 0.0, %v5792
  %5794 = vdwg.mxu0
  %5795 = vmatprep.subr.bf16.mxu0 %v5741
  %5796 = vmatpush1.bf16.msra.mxu0 %v5738
  %5797 = vmatprep.subr.bf16.mxu0 0
  %5798 = vmatpush1.bf16.msra.mxu0 0
  %5799 = vmatprep.subr.bf16.mxu0 0
  %5800 = vmatpush1.bf16.msra.mxu0 0
  %5801 = vmatprep.subr.bf16.mxu0 0
  %5802 = vmatpush1.bf16.msra.mxu0 0
  %5803 = vmatprep.subr.bf16.mxu0 0
  %5804 = vmatpush1.bf16.msra.mxu0 0
  %5805 = vmatprep.subr.bf16.mxu0 0
  %5806 = vmatpush1.bf16.msra.mxu0 0
  %5807 = vmatprep.subr.bf16.mxu0 0
  %5808 = vmatpush1.bf16.msra.mxu0 0
  %5809 = vmatprep.subr.bf16.mxu0 0
  %5810 = vmatpush1.bf16.msra.mxu0 0
  %5811 = vmatprep.subr.bf16.mxu0 0
  %5812 = vmatpush1.bf16.msra.mxu0 0
  %5813 = vmatprep.subr.bf16.mxu0 0
  %5814 = vmatpush1.bf16.msra.mxu0 0
  %5815 = vmatprep.subr.bf16.mxu0 0
  %5816 = vmatpush1.bf16.msra.mxu0 0
  %5817 = vmatprep.subr.bf16.mxu0 0
  %5818 = vmatpush1.bf16.msra.mxu0 0
  %5819 = vmatprep.subr.bf16.mxu0 0
  %5820 = vmatpush1.bf16.msra.mxu0 0
  %5821 = vmatprep.subr.bf16.mxu0 0
  %5822 = vmatpush1.bf16.msra.mxu0 0
  %5823 = vmatprep.subr.bf16.mxu0 0
  %5824 = vmatpush1.bf16.msra.mxu0 0
  %5825 = vmatprep.subr.bf16.mxu0 0
  %5826 = vmatpush1.bf16.msra.mxu0 0
  %5827 = vmatprep.mubr.bf16.mxu0 0
  %5828 = vmatmul.mubr.bf16.gmra.mrb[0].mxu0 %v5729
  %v5829 = vpop.f32.mrb[0].mxu0
  %v5830 = vadd.f32 0.0, %v5829
  %v5831 = vpop.f32.mrb[0].mxu0
  %v5832 = vadd.f32 0.0, %v5831
  %v5833 = vpop.f32.mrb[0].mxu0
  %v5834 = vadd.f32 0.0, %v5833
  %v5835 = vpop.f32.mrb[0].mxu0
  %v5836 = vadd.f32 0.0, %v5835
  %5837 = vdwg.mxu0
  %5838 = vmatprep.subr.bf16.mxu0 %v5747
  %5839 = vmatpush1.bf16.msra.mxu0 %v5744
  %5840 = vmatprep.subr.bf16.mxu0 0
  %5841 = vmatpush1.bf16.msra.mxu0 0
  %5842 = vmatprep.subr.bf16.mxu0 0
  %5843 = vmatpush1.bf16.msra.mxu0 0
  %5844 = vmatprep.subr.bf16.mxu0 0
  %5845 = vmatpush1.bf16.msra.mxu0 0
  %5846 = vmatprep.subr.bf16.mxu0 0
  %5847 = vmatpush1.bf16.msra.mxu0 0
  %5848 = vmatprep.subr.bf16.mxu0 0
  %5849 = vmatpush1.bf16.msra.mxu0 0
  %5850 = vmatprep.subr.bf16.mxu0 0
  %5851 = vmatpush1.bf16.msra.mxu0 0
  %5852 = vmatprep.subr.bf16.mxu0 0
  %5853 = vmatpush1.bf16.msra.mxu0 0
  %5854 = vmatprep.subr.bf16.mxu0 0
  %5855 = vmatpush1.bf16.msra.mxu0 0
  %5856 = vmatprep.subr.bf16.mxu0 0
  %5857 = vmatpush1.bf16.msra.mxu0 0
  %5858 = vmatprep.subr.bf16.mxu0 0
  %5859 = vmatpush1.bf16.msra.mxu0 0
  %5860 = vmatprep.subr.bf16.mxu0 0
  %5861 = vmatpush1.bf16.msra.mxu0 0
  %5862 = vmatprep.subr.bf16.mxu0 0
  %5863 = vmatpush1.bf16.msra.mxu0 0
  %5864 = vmatprep.subr.bf16.mxu0 0
  %5865 = vmatpush1.bf16.msra.mxu0 0
  %5866 = vmatprep.subr.bf16.mxu0 0
  %5867 = vmatpush1.bf16.msra.mxu0 0
  %5868 = vmatprep.subr.bf16.mxu0 0
  %5869 = vmatpush1.bf16.msra.mxu0 0
  %5870 = vmatprep.mubr.bf16.mxu0 0
  %5871 = vmatmul.mubr.bf16.gmra.mrb[0].mxu0 %v5729
  %v5872 = vpop.f32.mrb[0].mxu0
  %v5873 = vadd.f32 0.0, %v5872
  %v5874 = vpop.f32.mrb[0].mxu0
  %v5875 = vadd.f32 0.0, %v5874
  %v5876 = vpop.f32.mrb[0].mxu0
  %v5877 = vadd.f32 0.0, %v5876
  %v5878 = vpop.f32.mrb[0].mxu0
  %v5879 = vadd.f32 0.0, %v5878
  %5880 = vdwg.mxu0
  %5881 = vmatprep.subr.bf16.mxu0 0
  %5882 = vmatpush1.bf16.msra.mxu0 %v5750
  %5883 = vmatprep.subr.bf16.mxu0 0
  %5884 = vmatpush1.bf16.msra.mxu0 0
  %5885 = vmatprep.subr.bf16.mxu0 0
  %5886 = vmatpush1.bf16.msra.mxu0 0
  %5887 = vmatprep.subr.bf16.mxu0 0
  %5888 = vmatpush1.bf16.msra.mxu0 0
  %5889 = vmatprep.subr.bf16.mxu0 0
  %5890 = vmatpush1.bf16.msra.mxu0 0
  %5891 = vmatprep.subr.bf16.mxu0 0
  %5892 = vmatpush1.bf16.msra.mxu0 0
  %5893 = vmatprep.subr.bf16.mxu0 0
  %5894 = vmatpush1.bf16.msra.mxu0 0
  %5895 = vmatprep.subr.bf16.mxu0 0
  %5896 = vmatpush1.bf16.msra.mxu0 0
  %5897 = vmatprep.subr.bf16.mxu0 0
  %5898 = vmatpush1.bf16.msra.mxu0 0
  %5899 = vmatprep.subr.bf16.mxu0 0
  %5900 = vmatpush1.bf16.msra.mxu0 0
  %5901 = vmatprep.subr.bf16.mxu0 0
  %5902 = vmatpush1.bf16.msra.mxu0 0
  %5903 = vmatprep.subr.bf16.mxu0 0
  %5904 = vmatpush1.bf16.msra.mxu0 0
  %5905 = vmatprep.subr.bf16.mxu0 0
  %5906 = vmatpush1.bf16.msra.mxu0 0
  %5907 = vmatprep.subr.bf16.mxu0 0
  %5908 = vmatpush1.bf16.msra.mxu0 0
  %5909 = vmatprep.subr.bf16.mxu0 0
  %5910 = vmatpush1.bf16.msra.mxu0 0
  %5911 = vmatprep.subr.bf16.mxu0 0
  %5912 = vmatpush1.bf16.msra.mxu0 0
  %5913 = vmatprep.mubr.bf16.mxu0 0
  %5914 = vmatmul.mubr.bf16.gmra.mrb[0].mxu0 %v5729
  %v5915 = vpop.f32.mrb[0].mxu0
  %v5916 = vadd.f32 0.0, %v5915
  %v5917 = vpop.f32.mrb[0].mxu0
  %v5918 = vpop.f32.mrb[0].mxu0
  %v5919 = vadd.f32 0.0, %v5918
  %v5920 = vpop.f32.mrb[0].mxu0
  %5921 = vdwg.mxu0
  %v5922 = vadd.f32 %v5685, %v5787
  %v5923 = vadd.f32 %v5686, %v5789
  %v5924 = vadd.f32 %v5687, %v5830
  %v5925 = vadd.f32 %v5688, %v5832
  %v5926 = vadd.f32 %v5689, %v5873
  %v5927 = vadd.f32 %v5690, %v5875
  %v5928 = vadd.f32 %v5691, %v5916
  %v5929 = vadd.f32 %v5692, %v5791
  %v5930 = vadd.f32 %v5693, %v5793
  %v5931 = vadd.f32 %v5694, %v5834
  %v5932 = vadd.f32 %v5695, %v5836
  %v5933 = vadd.f32 %v5696, %v5877
  %v5934 = vadd.f32 %v5697, %v5879
  %v5935 = vadd.f32 %v5698, %v5919
  %s5936 = scalar_lea.vmem %s3, 128
  %v5937 = vld [vmem:[%s5936] sm:$0xf]
  %v5938 = vld [vmem:[%s5936 + $0x4] sm:$0xf]
  %v5939 = vpack.c.bf16 %v2225, %v2225
  %v5942 = vunpack.c.l.b16 %v5937
  %v5943 = vunpack.c.l.b16 %v5938
  %v5944 = vpack.c.b16 %v5943, %v5942
  %5946 = vrot.lane.b32.xlu0 %v2230, 44
  %v5947 = vpop.permute.xlu0 %5946
  %5948 = vrot.lane.b32.xlu0 %v2231, 44
  %v5949 = vpop.permute.xlu0 %5948
  %5950 = vrot.lane.b32.xlu0 %v2232, 44
  %v5951 = vpop.permute.xlu0 %5950
  %5952 = vrot.lane.b32.xlu0 %v2233, 44
  %v5953 = vpop.permute.xlu0 %5952
  %5954 = vrot.lane.b32.xlu0 %v2234, 44
  %v5955 = vpop.permute.xlu0 %5954
  %5956 = vrot.lane.b32.xlu0 %v3379, 44
  %v5957 = vpop.permute.xlu0 %5956
  %5958 = vrot.lane.b32.xlu0 %v4539, 44
  %v5959 = vpop.permute.xlu0 %5958
  %5960 = vrot.lane.b32.xlu0 %v5939, 44
  %v5961 = vpop.permute.xlu0 %5960
  %vm5962 = vcmask 359424
  %v5963 = vsel %vm5962, %v5947, %v5949
  %v5964 = vsel %vm5962, %v5949, %v5951
  %v5965 = vsel %vm5962, %v5951, %v5953
  %v5966 = vsel %vm5962, %v5953, %v5955
  %v5967 = vsel %vm5962, %v5955, %v5957
  %v5968 = vsel %vm5962, %v5957, %v5959
  %v5969 = vsel %vm5962, %v5959, %v5961
  %v5971 = vsel %vm1199, %v5944, 0
  %v5974 = vsel %vm2274, %v5963, 0
  %v5977 = vsel %vm2274, %v5964, 0
  %v5980 = vsel %vm2274, %v5965, 0
  %v5983 = vsel %vm2274, %v5966, 0
  %v5986 = vsel %vm2274, %v5967, 0
  %v5989 = vsel %vm2274, %v5968, 0
  %v5992 = vsel %vm2274, %v5969, 0
  %5994 = vmatprep.subr.bf16.mxu0 %v5977
  %5995 = vmatpush1.bf16.msra.mxu0 %v5974
  %5996 = vmatprep.subr.bf16.mxu0 0
  %5997 = vmatpush1.bf16.msra.mxu0 0
  %5998 = vmatprep.subr.bf16.mxu0 0
  %5999 = vmatpush1.bf16.msra.mxu0 0
  %6000 = vmatprep.subr.bf16.mxu0 0
  %6001 = vmatpush1.bf16.msra.mxu0 0
  %6002 = vmatprep.subr.bf16.mxu0 0
  %6003 = vmatpush1.bf16.msra.mxu0 0
  %6004 = vmatprep.subr.bf16.mxu0 0
  %6005 = vmatpush1.bf16.msra.mxu0 0
  %6006 = vmatprep.subr.bf16.mxu0 0
  %6007 = vmatpush1.bf16.msra.mxu0 0
  %6008 = vmatprep.subr.bf16.mxu0 0
  %6009 = vmatpush1.bf16.msra.mxu0 0
  %6010 = vmatprep.subr.bf16.mxu0 0
  %6011 = vmatpush1.bf16.msra.mxu0 0
  %6012 = vmatprep.subr.bf16.mxu0 0
  %6013 = vmatpush1.bf16.msra.mxu0 0
  %6014 = vmatprep.subr.bf16.mxu0 0
  %6015 = vmatpush1.bf16.msra.mxu0 0
  %6016 = vmatprep.subr.bf16.mxu0 0
  %6017 = vmatpush1.bf16.msra.mxu0 0
  %6018 = vmatprep.subr.bf16.mxu0 0
  %6019 = vmatpush1.bf16.msra.mxu0 0
  %6020 = vmatprep.subr.bf16.mxu0 0
  %6021 = vmatpush1.bf16.msra.mxu0 0
  %6022 = vmatprep.subr.bf16.mxu0 0
  %6023 = vmatpush1.bf16.msra.mxu0 0
  %6024 = vmatprep.subr.bf16.mxu0 0
  %6025 = vmatpush1.bf16.msra.mxu0 0
  %6026 = vmatprep.mubr.bf16.mxu0 0
  %6027 = vmatmul.mubr.bf16.gmra.mrb[0].mxu0 %v5971
  %v6028 = vpop.f32.mrb[0].mxu0
  %v6029 = vadd.f32 0.0, %v6028
  %v6030 = vpop.f32.mrb[0].mxu0
  %v6031 = vadd.f32 0.0, %v6030
  %v6032 = vpop.f32.mrb[0].mxu0
  %v6033 = vadd.f32 0.0, %v6032
  %v6034 = vpop.f32.mrb[0].mxu0
  %v6035 = vadd.f32 0.0, %v6034
  %6036 = vdwg.mxu0
  %6037 = vmatprep.subr.bf16.mxu0 %v5983
  %6038 = vmatpush1.bf16.msra.mxu0 %v5980
  %6039 = vmatprep.subr.bf16.mxu0 0
  %6040 = vmatpush1.bf16.msra.mxu0 0
  %6041 = vmatprep.subr.bf16.mxu0 0
  %6042 = vmatpush1.bf16.msra.mxu0 0
  %6043 = vmatprep.subr.bf16.mxu0 0
  %6044 = vmatpush1.bf16.msra.mxu0 0
  %6045 = vmatprep.subr.bf16.mxu0 0
  %6046 = vmatpush1.bf16.msra.mxu0 0
  %6047 = vmatprep.subr.bf16.mxu0 0
  %6048 = vmatpush1.bf16.msra.mxu0 0
  %6049 = vmatprep.subr.bf16.mxu0 0
  %6050 = vmatpush1.bf16.msra.mxu0 0
  %6051 = vmatprep.subr.bf16.mxu0 0
  %6052 = vmatpush1.bf16.msra.mxu0 0
  %6053 = vmatprep.subr.bf16.mxu0 0
  %6054 = vmatpush1.bf16.msra.mxu0 0
  %6055 = vmatprep.subr.bf16.mxu0 0
  %6056 = vmatpush1.bf16.msra.mxu0 0
  %6057 = vmatprep.subr.bf16.mxu0 0
  %6058 = vmatpush1.bf16.msra.mxu0 0
  %6059 = vmatprep.subr.bf16.mxu0 0
  %6060 = vmatpush1.bf16.msra.mxu0 0
  %6061 = vmatprep.subr.bf16.mxu0 0
  %6062 = vmatpush1.bf16.msra.mxu0 0
  %6063 = vmatprep.subr.bf16.mxu0 0
  %6064 = vmatpush1.bf16.msra.mxu0 0
  %6065 = vmatprep.subr.bf16.mxu0 0
  %6066 = vmatpush1.bf16.msra.mxu0 0
  %6067 = vmatprep.subr.bf16.mxu0 0
  %6068 = vmatpush1.bf16.msra.mxu0 0
  %6069 = vmatprep.mubr.bf16.mxu0 0
  %6070 = vmatmul.mubr.bf16.gmra.mrb[0].mxu0 %v5971
  %v6071 = vpop.f32.mrb[0].mxu0
  %v6072 = vadd.f32 0.0, %v6071
  %v6073 = vpop.f32.mrb[0].mxu0
  %v6074 = vadd.f32 0.0, %v6073
  %v6075 = vpop.f32.mrb[0].mxu0
  %v6076 = vadd.f32 0.0, %v6075
  %v6077 = vpop.f32.mrb[0].mxu0
  %v6078 = vadd.f32 0.0, %v6077
  %6079 = vdwg.mxu0
  %6080 = vmatprep.subr.bf16.mxu0 %v5989
  %6081 = vmatpush1.bf16.msra.mxu0 %v5986
  %6082 = vmatprep.subr.bf16.mxu0 0
  %6083 = vmatpush1.bf16.msra.mxu0 0
  %6084 = vmatprep.subr.bf16.mxu0 0
  %6085 = vmatpush1.bf16.msra.mxu0 0
  %6086 = vmatprep.subr.bf16.mxu0 0
  %6087 = vmatpush1.bf16.msra.mxu0 0
  %6088 = vmatprep.subr.bf16.mxu0 0
  %6089 = vmatpush1.bf16.msra.mxu0 0
  %6090 = vmatprep.subr.bf16.mxu0 0
  %6091 = vmatpush1.bf16.msra.mxu0 0
  %6092 = vmatprep.subr.bf16.mxu0 0
  %6093 = vmatpush1.bf16.msra.mxu0 0
  %6094 = vmatprep.subr.bf16.mxu0 0
  %6095 = vmatpush1.bf16.msra.mxu0 0
  %6096 = vmatprep.subr.bf16.mxu0 0
  %6097 = vmatpush1.bf16.msra.mxu0 0
  %6098 = vmatprep.subr.bf16.mxu0 0
  %6099 = vmatpush1.bf16.msra.mxu0 0
  %6100 = vmatprep.subr.bf16.mxu0 0
  %6101 = vmatpush1.bf16.msra.mxu0 0
  %6102 = vmatprep.subr.bf16.mxu0 0
  %6103 = vmatpush1.bf16.msra.mxu0 0
  %6104 = vmatprep.subr.bf16.mxu0 0
  %6105 = vmatpush1.bf16.msra.mxu0 0
  %6106 = vmatprep.subr.bf16.mxu0 0
  %6107 = vmatpush1.bf16.msra.mxu0 0
  %6108 = vmatprep.subr.bf16.mxu0 0
  %6109 = vmatpush1.bf16.msra.mxu0 0
  %6110 = vmatprep.subr.bf16.mxu0 0
  %6111 = vmatpush1.bf16.msra.mxu0 0
  %6112 = vmatprep.mubr.bf16.mxu0 0
  %6113 = vmatmul.mubr.bf16.gmra.mrb[0].mxu0 %v5971
  %v6114 = vpop.f32.mrb[0].mxu0
  %v6115 = vadd.f32 0.0, %v6114
  %v6116 = vpop.f32.mrb[0].mxu0
  %v6117 = vadd.f32 0.0, %v6116
  %v6118 = vpop.f32.mrb[0].mxu0
  %v6119 = vadd.f32 0.0, %v6118
  %v6120 = vpop.f32.mrb[0].mxu0
  %v6121 = vadd.f32 0.0, %v6120
  %6122 = vdwg.mxu0
  %6123 = vmatprep.subr.bf16.mxu0 0
  %6124 = vmatpush1.bf16.msra.mxu0 %v5992
  %6125 = vmatprep.subr.bf16.mxu0 0
  %6126 = vmatpush1.bf16.msra.mxu0 0
  %6127 = vmatprep.subr.bf16.mxu0 0
  %6128 = vmatpush1.bf16.msra.mxu0 0
  %6129 = vmatprep.subr.bf16.mxu0 0
  %6130 = vmatpush1.bf16.msra.mxu0 0
  %6131 = vmatprep.subr.bf16.mxu0 0
  %6132 = vmatpush1.bf16.msra.mxu0 0
  %6133 = vmatprep.subr.bf16.mxu0 0
  %6134 = vmatpush1.bf16.msra.mxu0 0
  %6135 = vmatprep.subr.bf16.mxu0 0
  %6136 = vmatpush1.bf16.msra.mxu0 0
  %6137 = vmatprep.subr.bf16.mxu0 0
  %6138 = vmatpush1.bf16.msra.mxu0 0
  %6139 = vmatprep.subr.bf16.mxu0 0
  %6140 = vmatpush1.bf16.msra.mxu0 0
  %6141 = vmatprep.subr.bf16.mxu0 0
  %6142 = vmatpush1.bf16.msra.mxu0 0
  %6143 = vmatprep.subr.bf16.mxu0 0
  %6144 = vmatpush1.bf16.msra.mxu0 0
  %6145 = vmatprep.subr.bf16.mxu0 0
  %6146 = vmatpush1.bf16.msra.mxu0 0
  %6147 = vmatprep.subr.bf16.mxu0 0
  %6148 = vmatpush1.bf16.msra.mxu0 0
  %6149 = vmatprep.subr.bf16.mxu0 0
  %6150 = vmatpush1.bf16.msra.mxu0 0
  %6151 = vmatprep.subr.bf16.mxu0 0
  %6152 = vmatpush1.bf16.msra.mxu0 0
  %6153 = vmatprep.subr.bf16.mxu0 0
  %6154 = vmatpush1.bf16.msra.mxu0 0
  %6155 = vmatprep.mubr.bf16.mxu0 0
  %6156 = vmatmul.mubr.bf16.gmra.mrb[0].mxu0 %v5971
  %v6157 = vpop.f32.mrb[0].mxu0
  %v6158 = vadd.f32 0.0, %v6157
  %v6159 = vpop.f32.mrb[0].mxu0
  %v6160 = vpop.f32.mrb[0].mxu0
  %v6161 = vadd.f32 0.0, %v6160
  %v6162 = vpop.f32.mrb[0].mxu0
  %6163 = vdwg.mxu0
  %v6164 = vadd.f32 %v5922, %v6029
  %v6165 = vadd.f32 %v5923, %v6031
  %v6166 = vadd.f32 %v5924, %v6072
  %v6167 = vadd.f32 %v5925, %v6074
  %v6168 = vadd.f32 %v5926, %v6115
  %v6169 = vadd.f32 %v5927, %v6117
  %v6170 = vadd.f32 %v5928, %v6158
  %v6171 = vadd.f32 %v5929, %v6033
  %v6172 = vadd.f32 %v5930, %v6035
  %v6173 = vadd.f32 %v5931, %v6076
  %v6174 = vadd.f32 %v5932, %v6078
  %v6175 = vadd.f32 %v5933, %v6119
  %v6176 = vadd.f32 %v5934, %v6121
  %v6177 = vadd.f32 %v5935, %v6161
  %s6178 = scalar_lea.vmem %s3, 136
  %v6179 = vld [vmem:[%s6178] sm:$0xf]
  %v6180 = vld [vmem:[%s6178 + $0x4] sm:$0xf]
  %v6183 = vunpack.c.l.b16 %v6179
  %v6184 = vunpack.c.l.b16 %v6180
  %v6185 = vpack.c.b16 %v6184, %v6183
  %6186 = vrot.lane.b32.xlu0 %v2230, 40
  %v6187 = vpop.permute.xlu0 %6186
  %6188 = vrot.lane.b32.xlu0 %v2231, 40
  %v6189 = vpop.permute.xlu0 %6188
  %6190 = vrot.lane.b32.xlu0 %v2232, 40
  %v6191 = vpop.permute.xlu0 %6190
  %6192 = vrot.lane.b32.xlu0 %v2233, 40
  %v6193 = vpop.permute.xlu0 %6192
  %6194 = vrot.lane.b32.xlu0 %v2234, 40
  %v6195 = vpop.permute.xlu0 %6194
  %6196 = vrot.lane.b32.xlu0 %v3379, 40
  %v6197 = vpop.permute.xlu0 %6196
  %6198 = vrot.lane.b32.xlu0 %v4539, 40
  %v6199 = vpop.permute.xlu0 %6198
  %6200 = vrot.lane.b32.xlu0 %v5939, 40
  %v6201 = vpop.permute.xlu0 %6200
  %vm6202 = vcmask 326656
  %v6203 = vsel %vm6202, %v6187, %v6189
  %v6204 = vsel %vm6202, %v6189, %v6191
  %v6205 = vsel %vm6202, %v6191, %v6193
  %v6206 = vsel %vm6202, %v6193, %v6195
  %v6207 = vsel %vm6202, %v6195, %v6197
  %v6208 = vsel %vm6202, %v6197, %v6199
  %v6209 = vsel %vm6202, %v6199, %v6201
  %v6211 = vsel %vm1199, %v6185, 0
  %v6214 = vsel %vm2274, %v6203, 0
  %v6217 = vsel %vm2274, %v6204, 0
  %v6220 = vsel %vm2274, %v6205, 0
  %v6223 = vsel %vm2274, %v6206, 0
  %v6226 = vsel %vm2274, %v6207, 0
  %v6229 = vsel %vm2274, %v6208, 0
  %v6232 = vsel %vm2274, %v6209, 0
  %6234 = vmatprep.subr.bf16.mxu0 %v6217
  %6235 = vmatpush1.bf16.msra.mxu0 %v6214
  %6236 = vmatprep.subr.bf16.mxu0 0
  %6237 = vmatpush1.bf16.msra.mxu0 0
  %6238 = vmatprep.subr.bf16.mxu0 0
  %6239 = vmatpush1.bf16.msra.mxu0 0
  %6240 = vmatprep.subr.bf16.mxu0 0
  %6241 = vmatpush1.bf16.msra.mxu0 0
  %6242 = vmatprep.subr.bf16.mxu0 0
  %6243 = vmatpush1.bf16.msra.mxu0 0
  %6244 = vmatprep.subr.bf16.mxu0 0
  %6245 = vmatpush1.bf16.msra.mxu0 0
  %6246 = vmatprep.subr.bf16.mxu0 0
  %6247 = vmatpush1.bf16.msra.mxu0 0
  %6248 = vmatprep.subr.bf16.mxu0 0
  %6249 = vmatpush1.bf16.msra.mxu0 0
  %6250 = vmatprep.subr.bf16.mxu0 0
  %6251 = vmatpush1.bf16.msra.mxu0 0
  %6252 = vmatprep.subr.bf16.mxu0 0
  %6253 = vmatpush1.bf16.msra.mxu0 0
  %6254 = vmatprep.subr.bf16.mxu0 0
  %6255 = vmatpush1.bf16.msra.mxu0 0
  %6256 = vmatprep.subr.bf16.mxu0 0
  %6257 = vmatpush1.bf16.msra.mxu0 0
  %6258 = vmatprep.subr.bf16.mxu0 0
  %6259 = vmatpush1.bf16.msra.mxu0 0
  %6260 = vmatprep.subr.bf16.mxu0 0
  %6261 = vmatpush1.bf16.msra.mxu0 0
  %6262 = vmatprep.subr.bf16.mxu0 0
  %6263 = vmatpush1.bf16.msra.mxu0 0
  %6264 = vmatprep.subr.bf16.mxu0 0
  %6265 = vmatpush1.bf16.msra.mxu0 0
  %6266 = vmatprep.mubr.bf16.mxu0 0
  %6267 = vmatmul.mubr.bf16.gmra.mrb[0].mxu0 %v6211
  %v6268 = vpop.f32.mrb[0].mxu0
  %v6269 = vadd.f32 0.0, %v6268
  %v6270 = vpop.f32.mrb[0].mxu0
  %v6271 = vadd.f32 0.0, %v6270
  %v6272 = vpop.f32.mrb[0].mxu0
  %v6273 = vadd.f32 0.0, %v6272
  %v6274 = vpop.f32.mrb[0].mxu0
  %v6275 = vadd.f32 0.0, %v6274
  %6276 = vdwg.mxu0
  %6277 = vmatprep.subr.bf16.mxu0 %v6223
  %6278 = vmatpush1.bf16.msra.mxu0 %v6220
  %6279 = vmatprep.subr.bf16.mxu0 0
  %6280 = vmatpush1.bf16.msra.mxu0 0
  %6281 = vmatprep.subr.bf16.mxu0 0
  %6282 = vmatpush1.bf16.msra.mxu0 0
  %6283 = vmatprep.subr.bf16.mxu0 0
  %6284 = vmatpush1.bf16.msra.mxu0 0
  %6285 = vmatprep.subr.bf16.mxu0 0
  %6286 = vmatpush1.bf16.msra.mxu0 0
  %6287 = vmatprep.subr.bf16.mxu0 0
  %6288 = vmatpush1.bf16.msra.mxu0 0
  %6289 = vmatprep.subr.bf16.mxu0 0
  %6290 = vmatpush1.bf16.msra.mxu0 0
  %6291 = vmatprep.subr.bf16.mxu0 0
  %6292 = vmatpush1.bf16.msra.mxu0 0
  %6293 = vmatprep.subr.bf16.mxu0 0
  %6294 = vmatpush1.bf16.msra.mxu0 0
  %6295 = vmatprep.subr.bf16.mxu0 0
  %6296 = vmatpush1.bf16.msra.mxu0 0
  %6297 = vmatprep.subr.bf16.mxu0 0
  %6298 = vmatpush1.bf16.msra.mxu0 0
  %6299 = vmatprep.subr.bf16.mxu0 0
  %6300 = vmatpush1.bf16.msra.mxu0 0
  %6301 = vmatprep.subr.bf16.mxu0 0
  %6302 = vmatpush1.bf16.msra.mxu0 0
  %6303 = vmatprep.subr.bf16.mxu0 0
  %6304 = vmatpush1.bf16.msra.mxu0 0
  %6305 = vmatprep.subr.bf16.mxu0 0
  %6306 = vmatpush1.bf16.msra.mxu0 0
  %6307 = vmatprep.subr.bf16.mxu0 0
  %6308 = vmatpush1.bf16.msra.mxu0 0
  %6309 = vmatprep.mubr.bf16.mxu0 0
  %6310 = vmatmul.mubr.bf16.gmra.mrb[0].mxu0 %v6211
  %v6311 = vpop.f32.mrb[0].mxu0
  %v6312 = vadd.f32 0.0, %v6311
  %v6313 = vpop.f32.mrb[0].mxu0
  %v6314 = vadd.f32 0.0, %v6313
  %v6315 = vpop.f32.mrb[0].mxu0
  %v6316 = vadd.f32 0.0, %v6315
  %v6317 = vpop.f32.mrb[0].mxu0
  %v6318 = vadd.f32 0.0, %v6317
  %6319 = vdwg.mxu0
  %6320 = vmatprep.subr.bf16.mxu0 %v6229
  %6321 = vmatpush1.bf16.msra.mxu0 %v6226
  %6322 = vmatprep.subr.bf16.mxu0 0
  %6323 = vmatpush1.bf16.msra.mxu0 0
  %6324 = vmatprep.subr.bf16.mxu0 0
  %6325 = vmatpush1.bf16.msra.mxu0 0
  %6326 = vmatprep.subr.bf16.mxu0 0
  %6327 = vmatpush1.bf16.msra.mxu0 0
  %6328 = vmatprep.subr.bf16.mxu0 0
  %6329 = vmatpush1.bf16.msra.mxu0 0
  %6330 = vmatprep.subr.bf16.mxu0 0
  %6331 = vmatpush1.bf16.msra.mxu0 0
  %6332 = vmatprep.subr.bf16.mxu0 0
  %6333 = vmatpush1.bf16.msra.mxu0 0
  %6334 = vmatprep.subr.bf16.mxu0 0
  %6335 = vmatpush1.bf16.msra.mxu0 0
  %6336 = vmatprep.subr.bf16.mxu0 0
  %6337 = vmatpush1.bf16.msra.mxu0 0
  %6338 = vmatprep.subr.bf16.mxu0 0
  %6339 = vmatpush1.bf16.msra.mxu0 0
  %6340 = vmatprep.subr.bf16.mxu0 0
  %6341 = vmatpush1.bf16.msra.mxu0 0
  %6342 = vmatprep.subr.bf16.mxu0 0
  %6343 = vmatpush1.bf16.msra.mxu0 0
  %6344 = vmatprep.subr.bf16.mxu0 0
  %6345 = vmatpush1.bf16.msra.mxu0 0
  %6346 = vmatprep.subr.bf16.mxu0 0
  %6347 = vmatpush1.bf16.msra.mxu0 0
  %6348 = vmatprep.subr.bf16.mxu0 0
  %6349 = vmatpush1.bf16.msra.mxu0 0
  %6350 = vmatprep.subr.bf16.mxu0 0
  %6351 = vmatpush1.bf16.msra.mxu0 0
  %6352 = vmatprep.mubr.bf16.mxu0 0
  %6353 = vmatmul.mubr.bf16.gmra.mrb[0].mxu0 %v6211
  %v6354 = vpop.f32.mrb[0].mxu0
  %v6355 = vadd.f32 0.0, %v6354
  %v6356 = vpop.f32.mrb[0].mxu0
  %v6357 = vadd.f32 0.0, %v6356
  %v6358 = vpop.f32.mrb[0].mxu0
  %v6359 = vadd.f32 0.0, %v6358
  %v6360 = vpop.f32.mrb[0].mxu0
  %v6361 = vadd.f32 0.0, %v6360
  %6362 = vdwg.mxu0
  %6363 = vmatprep.subr.bf16.mxu0 0
  %6364 = vmatpush1.bf16.msra.mxu0 %v6232
  %6365 = vmatprep.subr.bf16.mxu0 0
  %6366 = vmatpush1.bf16.msra.mxu0 0
  %6367 = vmatprep.subr.bf16.mxu0 0
  %6368 = vmatpush1.bf16.msra.mxu0 0
  %6369 = vmatprep.subr.bf16.mxu0 0
  %6370 = vmatpush1.bf16.msra.mxu0 0
  %6371 = vmatprep.subr.bf16.mxu0 0
  %6372 = vmatpush1.bf16.msra.mxu0 0
  %6373 = vmatprep.subr.bf16.mxu0 0
  %6374 = vmatpush1.bf16.msra.mxu0 0
  %6375 = vmatprep.subr.bf16.mxu0 0
  %6376 = vmatpush1.bf16.msra.mxu0 0
  %6377 = vmatprep.subr.bf16.mxu0 0
  %6378 = vmatpush1.bf16.msra.mxu0 0
  %6379 = vmatprep.subr.bf16.mxu0 0
  %6380 = vmatpush1.bf16.msra.mxu0 0
  %6381 = vmatprep.subr.bf16.mxu0 0
  %6382 = vmatpush1.bf16.msra.mxu0 0
  %6383 = vmatprep.subr.bf16.mxu0 0
  %6384 = vmatpush1.bf16.msra.mxu0 0
  %6385 = vmatprep.subr.bf16.mxu0 0
  %6386 = vmatpush1.bf16.msra.mxu0 0
  %6387 = vmatprep.subr.bf16.mxu0 0
  %6388 = vmatpush1.bf16.msra.mxu0 0
  %6389 = vmatprep.subr.bf16.mxu0 0
  %6390 = vmatpush1.bf16.msra.mxu0 0
  %6391 = vmatprep.subr.bf16.mxu0 0
  %6392 = vmatpush1.bf16.msra.mxu0 0
  %6393 = vmatprep.subr.bf16.mxu0 0
  %6394 = vmatpush1.bf16.msra.mxu0 0
  %6395 = vmatprep.mubr.bf16.mxu0 0
  %6396 = vmatmul.mubr.bf16.gmra.mrb[0].mxu0 %v6211
  %v6397 = vpop.f32.mrb[0].mxu0
  %v6398 = vadd.f32 0.0, %v6397
  %v6399 = vpop.f32.mrb[0].mxu0
  %v6400 = vpop.f32.mrb[0].mxu0
  %v6401 = vadd.f32 0.0, %v6400
  %v6402 = vpop.f32.mrb[0].mxu0
  %6403 = vdwg.mxu0
  %v6404 = vadd.f32 %v6164, %v6269
  %v6405 = vadd.f32 %v6165, %v6271
  %v6406 = vadd.f32 %v6166, %v6312
  %v6407 = vadd.f32 %v6167, %v6314
  %v6408 = vadd.f32 %v6168, %v6355
  %v6409 = vadd.f32 %v6169, %v6357
  %v6410 = vadd.f32 %v6170, %v6398
  %v6411 = vadd.f32 %v6171, %v6273
  %v6412 = vadd.f32 %v6172, %v6275
  %v6413 = vadd.f32 %v6173, %v6316
  %v6414 = vadd.f32 %v6174, %v6318
  %v6415 = vadd.f32 %v6175, %v6359
  %v6416 = vadd.f32 %v6176, %v6361
  %v6417 = vadd.f32 %v6177, %v6401
  %s6418 = scalar_lea.vmem %s3, 144
  %v6419 = vld [vmem:[%s6418] sm:$0xf]
  %v6420 = vld [vmem:[%s6418 + $0x4] sm:$0xf]
  %v6423 = vunpack.c.l.b16 %v6419
  %v6424 = vunpack.c.l.b16 %v6420
  %v6425 = vpack.c.b16 %v6424, %v6423
  %6426 = vrot.lane.b32.xlu0 %v2230, 36
  %v6427 = vpop.permute.xlu0 %6426
  %6428 = vrot.lane.b32.xlu0 %v2231, 36
  %v6429 = vpop.permute.xlu0 %6428
  %6430 = vrot.lane.b32.xlu0 %v2232, 36
  %v6431 = vpop.permute.xlu0 %6430
  %6432 = vrot.lane.b32.xlu0 %v2233, 36
  %v6433 = vpop.permute.xlu0 %6432
  %6434 = vrot.lane.b32.xlu0 %v2234, 36
  %v6435 = vpop.permute.xlu0 %6434
  %6436 = vrot.lane.b32.xlu0 %v3379, 36
  %v6437 = vpop.permute.xlu0 %6436
  %6438 = vrot.lane.b32.xlu0 %v4539, 36
  %v6439 = vpop.permute.xlu0 %6438
  %6440 = vrot.lane.b32.xlu0 %v5939, 36
  %v6441 = vpop.permute.xlu0 %6440
  %vm6442 = vcmask 293888
  %v6443 = vsel %vm6442, %v6427, %v6429
  %v6444 = vsel %vm6442, %v6429, %v6431
  %v6445 = vsel %vm6442, %v6431, %v6433
  %v6446 = vsel %vm6442, %v6433, %v6435
  %v6447 = vsel %vm6442, %v6435, %v6437
  %v6448 = vsel %vm6442, %v6437, %v6439
  %v6449 = vsel %vm6442, %v6439, %v6441
  %v6451 = vsel %vm1199, %v6425, 0
  %v6454 = vsel %vm2274, %v6443, 0
  %v6457 = vsel %vm2274, %v6444, 0
  %v6460 = vsel %vm2274, %v6445, 0
  %v6463 = vsel %vm2274, %v6446, 0
  %v6466 = vsel %vm2274, %v6447, 0
  %v6469 = vsel %vm2274, %v6448, 0
  %v6472 = vsel %vm2274, %v6449, 0
  %6474 = vmatprep.subr.bf16.mxu0 %v6457
  %6475 = vmatpush1.bf16.msra.mxu0 %v6454
  %6476 = vmatprep.subr.bf16.mxu0 0
  %6477 = vmatpush1.bf16.msra.mxu0 0
  %6478 = vmatprep.subr.bf16.mxu0 0
  %6479 = vmatpush1.bf16.msra.mxu0 0
  %6480 = vmatprep.subr.bf16.mxu0 0
  %6481 = vmatpush1.bf16.msra.mxu0 0
  %6482 = vmatprep.subr.bf16.mxu0 0
  %6483 = vmatpush1.bf16.msra.mxu0 0
  %6484 = vmatprep.subr.bf16.mxu0 0
  %6485 = vmatpush1.bf16.msra.mxu0 0
  %6486 = vmatprep.subr.bf16.mxu0 0
  %6487 = vmatpush1.bf16.msra.mxu0 0
  %6488 = vmatprep.subr.bf16.mxu0 0
  %6489 = vmatpush1.bf16.msra.mxu0 0
  %6490 = vmatprep.subr.bf16.mxu0 0
  %6491 = vmatpush1.bf16.msra.mxu0 0
  %6492 = vmatprep.subr.bf16.mxu0 0
  %6493 = vmatpush1.bf16.msra.mxu0 0
  %6494 = vmatprep.subr.bf16.mxu0 0
  %6495 = vmatpush1.bf16.msra.mxu0 0
  %6496 = vmatprep.subr.bf16.mxu0 0
  %6497 = vmatpush1.bf16.msra.mxu0 0
  %6498 = vmatprep.subr.bf16.mxu0 0
  %6499 = vmatpush1.bf16.msra.mxu0 0
  %6500 = vmatprep.subr.bf16.mxu0 0
  %6501 = vmatpush1.bf16.msra.mxu0 0
  %6502 = vmatprep.subr.bf16.mxu0 0
  %6503 = vmatpush1.bf16.msra.mxu0 0
  %6504 = vmatprep.subr.bf16.mxu0 0
  %6505 = vmatpush1.bf16.msra.mxu0 0
  %6506 = vmatprep.mubr.bf16.mxu0 0
  %6507 = vmatmul.mubr.bf16.gmra.mrb[0].mxu0 %v6451
  %v6508 = vpop.f32.mrb[0].mxu0
  %v6509 = vadd.f32 0.0, %v6508
  %v6510 = vpop.f32.mrb[0].mxu0
  %v6511 = vadd.f32 0.0, %v6510
  %v6512 = vpop.f32.mrb[0].mxu0
  %v6513 = vadd.f32 0.0, %v6512
  %v6514 = vpop.f32.mrb[0].mxu0
  %v6515 = vadd.f32 0.0, %v6514
  %6516 = vdwg.mxu0
  %6517 = vmatprep.subr.bf16.mxu0 %v6463
  %6518 = vmatpush1.bf16.msra.mxu0 %v6460
  %6519 = vmatprep.subr.bf16.mxu0 0
  %6520 = vmatpush1.bf16.msra.mxu0 0
  %6521 = vmatprep.subr.bf16.mxu0 0
  %6522 = vmatpush1.bf16.msra.mxu0 0
  %6523 = vmatprep.subr.bf16.mxu0 0
  %6524 = vmatpush1.bf16.msra.mxu0 0
  %6525 = vmatprep.subr.bf16.mxu0 0
  %6526 = vmatpush1.bf16.msra.mxu0 0
  %6527 = vmatprep.subr.bf16.mxu0 0
  %6528 = vmatpush1.bf16.msra.mxu0 0
  %6529 = vmatprep.subr.bf16.mxu0 0
  %6530 = vmatpush1.bf16.msra.mxu0 0
  %6531 = vmatprep.subr.bf16.mxu0 0
  %6532 = vmatpush1.bf16.msra.mxu0 0
  %6533 = vmatprep.subr.bf16.mxu0 0
  %6534 = vmatpush1.bf16.msra.mxu0 0
  %6535 = vmatprep.subr.bf16.mxu0 0
  %6536 = vmatpush1.bf16.msra.mxu0 0
  %6537 = vmatprep.subr.bf16.mxu0 0
  %6538 = vmatpush1.bf16.msra.mxu0 0
  %6539 = vmatprep.subr.bf16.mxu0 0
  %6540 = vmatpush1.bf16.msra.mxu0 0
  %6541 = vmatprep.subr.bf16.mxu0 0
  %6542 = vmatpush1.bf16.msra.mxu0 0
  %6543 = vmatprep.subr.bf16.mxu0 0
  %6544 = vmatpush1.bf16.msra.mxu0 0
  %6545 = vmatprep.subr.bf16.mxu0 0
  %6546 = vmatpush1.bf16.msra.mxu0 0
  %6547 = vmatprep.subr.bf16.mxu0 0
  %6548 = vmatpush1.bf16.msra.mxu0 0
  %6549 = vmatprep.mubr.bf16.mxu0 0
  %6550 = vmatmul.mubr.bf16.gmra.mrb[0].mxu0 %v6451
  %v6551 = vpop.f32.mrb[0].mxu0
  %v6552 = vadd.f32 0.0, %v6551
  %v6553 = vpop.f32.mrb[0].mxu0
  %v6554 = vadd.f32 0.0, %v6553
  %v6555 = vpop.f32.mrb[0].mxu0
  %v6556 = vadd.f32 0.0, %v6555
  %v6557 = vpop.f32.mrb[0].mxu0
  %v6558 = vadd.f32 0.0, %v6557
  %6559 = vdwg.mxu0
  %6560 = vmatprep.subr.bf16.mxu0 %v6469
  %6561 = vmatpush1.bf16.msra.mxu0 %v6466
  %6562 = vmatprep.subr.bf16.mxu0 0
  %6563 = vmatpush1.bf16.msra.mxu0 0
  %6564 = vmatprep.subr.bf16.mxu0 0
  %6565 = vmatpush1.bf16.msra.mxu0 0
  %6566 = vmatprep.subr.bf16.mxu0 0
  %6567 = vmatpush1.bf16.msra.mxu0 0
  %6568 = vmatprep.subr.bf16.mxu0 0
  %6569 = vmatpush1.bf16.msra.mxu0 0
  %6570 = vmatprep.subr.bf16.mxu0 0
  %6571 = vmatpush1.bf16.msra.mxu0 0
  %6572 = vmatprep.subr.bf16.mxu0 0
  %6573 = vmatpush1.bf16.msra.mxu0 0
  %6574 = vmatprep.subr.bf16.mxu0 0
  %6575 = vmatpush1.bf16.msra.mxu0 0
  %6576 = vmatprep.subr.bf16.mxu0 0
  %6577 = vmatpush1.bf16.msra.mxu0 0
  %6578 = vmatprep.subr.bf16.mxu0 0
  %6579 = vmatpush1.bf16.msra.mxu0 0
  %6580 = vmatprep.subr.bf16.mxu0 0
  %6581 = vmatpush1.bf16.msra.mxu0 0
  %6582 = vmatprep.subr.bf16.mxu0 0
  %6583 = vmatpush1.bf16.msra.mxu0 0
  %6584 = vmatprep.subr.bf16.mxu0 0
  %6585 = vmatpush1.bf16.msra.mxu0 0
  %6586 = vmatprep.subr.bf16.mxu0 0
  %6587 = vmatpush1.bf16.msra.mxu0 0
  %6588 = vmatprep.subr.bf16.mxu0 0
  %6589 = vmatpush1.bf16.msra.mxu0 0
  %6590 = vmatprep.subr.bf16.mxu0 0
  %6591 = vmatpush1.bf16.msra.mxu0 0
  %6592 = vmatprep.mubr.bf16.mxu0 0
  %6593 = vmatmul.mubr.bf16.gmra.mrb[0].mxu0 %v6451
  %v6594 = vpop.f32.mrb[0].mxu0
  %v6595 = vadd.f32 0.0, %v6594
  %v6596 = vpop.f32.mrb[0].mxu0
  %v6597 = vadd.f32 0.0, %v6596
  %v6598 = vpop.f32.mrb[0].mxu0
  %v6599 = vadd.f32 0.0, %v6598
  %v6600 = vpop.f32.mrb[0].mxu0
  %v6601 = vadd.f32 0.0, %v6600
  %6602 = vdwg.mxu0
  %6603 = vmatprep.subr.bf16.mxu0 0
  %6604 = vmatpush1.bf16.msra.mxu0 %v6472
  %6605 = vmatprep.subr.bf16.mxu0 0
  %6606 = vmatpush1.bf16.msra.mxu0 0
  %6607 = vmatprep.subr.bf16.mxu0 0
  %6608 = vmatpush1.bf16.msra.mxu0 0
  %6609 = vmatprep.subr.bf16.mxu0 0
  %6610 = vmatpush1.bf16.msra.mxu0 0
  %6611 = vmatprep.subr.bf16.mxu0 0
  %6612 = vmatpush1.bf16.msra.mxu0 0
  %6613 = vmatprep.subr.bf16.mxu0 0
  %6614 = vmatpush1.bf16.msra.mxu0 0
  %6615 = vmatprep.subr.bf16.mxu0 0
  %6616 = vmatpush1.bf16.msra.mxu0 0
  %6617 = vmatprep.subr.bf16.mxu0 0
  %6618 = vmatpush1.bf16.msra.mxu0 0
  %6619 = vmatprep.subr.bf16.mxu0 0
  %6620 = vmatpush1.bf16.msra.mxu0 0
  %6621 = vmatprep.subr.bf16.mxu0 0
  %6622 = vmatpush1.bf16.msra.mxu0 0
  %6623 = vmatprep.subr.bf16.mxu0 0
  %6624 = vmatpush1.bf16.msra.mxu0 0
  %6625 = vmatprep.subr.bf16.mxu0 0
  %6626 = vmatpush1.bf16.msra.mxu0 0
  %6627 = vmatprep.subr.bf16.mxu0 0
  %6628 = vmatpush1.bf16.msra.mxu0 0
  %6629 = vmatprep.subr.bf16.mxu0 0
  %6630 = vmatpush1.bf16.msra.mxu0 0
  %6631 = vmatprep.subr.bf16.mxu0 0
  %6632 = vmatpush1.bf16.msra.mxu0 0
  %6633 = vmatprep.subr.bf16.mxu0 0
  %6634 = vmatpush1.bf16.msra.mxu0 0
  %6635 = vmatprep.mubr.bf16.mxu0 0
  %6636 = vmatmul.mubr.bf16.gmra.mrb[0].mxu0 %v6451
  %v6637 = vpop.f32.mrb[0].mxu0
  %v6638 = vadd.f32 0.0, %v6637
  %v6639 = vpop.f32.mrb[0].mxu0
  %v6640 = vpop.f32.mrb[0].mxu0
  %v6641 = vadd.f32 0.0, %v6640
  %v6642 = vpop.f32.mrb[0].mxu0
  %6643 = vdwg.mxu0
  %v6644 = vadd.f32 %v6404, %v6509
  %v6645 = vadd.f32 %v6405, %v6511
  %v6646 = vadd.f32 %v6406, %v6552
  %v6647 = vadd.f32 %v6407, %v6554
  %v6648 = vadd.f32 %v6408, %v6595
  %v6649 = vadd.f32 %v6409, %v6597
  %v6650 = vadd.f32 %v6410, %v6638
  %v6651 = vadd.f32 %v6411, %v6513
  %v6652 = vadd.f32 %v6412, %v6515
  %v6653 = vadd.f32 %v6413, %v6556
  %v6654 = vadd.f32 %v6414, %v6558
  %v6655 = vadd.f32 %v6415, %v6599
  %v6656 = vadd.f32 %v6416, %v6601
  %v6657 = vadd.f32 %v6417, %v6641
  %s6658 = scalar_lea.vmem %s3, 152
  %v6659 = vld [vmem:[%s6658] sm:$0xf]
  %v6660 = vld [vmem:[%s6658 + $0x4] sm:$0xf]
  %v6663 = vunpack.c.l.b16 %v6659
  %v6664 = vunpack.c.l.b16 %v6660
  %v6665 = vpack.c.b16 %v6664, %v6663
  %6666 = vrot.lane.b32.xlu0 %v5939, 32
  %v6667 = vpop.permute.xlu0 %6666
  %v6668 = vsel %vm4562, %v4561, %v6667
  %v6670 = vsel %vm1199, %v6665, 0
  %v6673 = vsel %vm2274, %v6668, 0
  %6675 = vmatprep.subr.bf16.mxu0 %v4580
  %6676 = vmatpush1.bf16.msra.mxu0 %v4577
  %6677 = vmatprep.subr.bf16.mxu0 0
  %6678 = vmatpush1.bf16.msra.mxu0 0
  %6679 = vmatprep.subr.bf16.mxu0 0
  %6680 = vmatpush1.bf16.msra.mxu0 0
  %6681 = vmatprep.subr.bf16.mxu0 0
  %6682 = vmatpush1.bf16.msra.mxu0 0
  %6683 = vmatprep.subr.bf16.mxu0 0
  %6684 = vmatpush1.bf16.msra.mxu0 0
  %6685 = vmatprep.subr.bf16.mxu0 0
  %6686 = vmatpush1.bf16.msra.mxu0 0
  %6687 = vmatprep.subr.bf16.mxu0 0
  %6688 = vmatpush1.bf16.msra.mxu0 0
  %6689 = vmatprep.subr.bf16.mxu0 0
  %6690 = vmatpush1.bf16.msra.mxu0 0
  %6691 = vmatprep.subr.bf16.mxu0 0
  %6692 = vmatpush1.bf16.msra.mxu0 0
  %6693 = vmatprep.subr.bf16.mxu0 0
  %6694 = vmatpush1.bf16.msra.mxu0 0
  %6695 = vmatprep.subr.bf16.mxu0 0
  %6696 = vmatpush1.bf16.msra.mxu0 0
  %6697 = vmatprep.subr.bf16.mxu0 0
  %6698 = vmatpush1.bf16.msra.mxu0 0
  %6699 = vmatprep.subr.bf16.mxu0 0
  %6700 = vmatpush1.bf16.msra.mxu0 0
  %6701 = vmatprep.subr.bf16.mxu0 0
  %6702 = vmatpush1.bf16.msra.mxu0 0
  %6703 = vmatprep.subr.bf16.mxu0 0
  %6704 = vmatpush1.bf16.msra.mxu0 0
  %6705 = vmatprep.subr.bf16.mxu0 0
  %6706 = vmatpush1.bf16.msra.mxu0 0
  %6707 = vmatprep.mubr.bf16.mxu0 0
  %6708 = vmatmul.mubr.bf16.gmra.mrb[0].mxu0 %v6670
  %v6709 = vpop.f32.mrb[0].mxu0
  %v6710 = vadd.f32 0.0, %v6709
  %v6711 = vpop.f32.mrb[0].mxu0
  %v6712 = vadd.f32 0.0, %v6711
  %v6713 = vpop.f32.mrb[0].mxu0
  %v6714 = vadd.f32 0.0, %v6713
  %v6715 = vpop.f32.mrb[0].mxu0
  %v6716 = vadd.f32 0.0, %v6715
  %6717 = vdwg.mxu0
  %6718 = vmatprep.subr.bf16.mxu0 %v4586
  %6719 = vmatpush1.bf16.msra.mxu0 %v4583
  %6720 = vmatprep.subr.bf16.mxu0 0
  %6721 = vmatpush1.bf16.msra.mxu0 0
  %6722 = vmatprep.subr.bf16.mxu0 0
  %6723 = vmatpush1.bf16.msra.mxu0 0
  %6724 = vmatprep.subr.bf16.mxu0 0
  %6725 = vmatpush1.bf16.msra.mxu0 0
  %6726 = vmatprep.subr.bf16.mxu0 0
  %6727 = vmatpush1.bf16.msra.mxu0 0
  %6728 = vmatprep.subr.bf16.mxu0 0
  %6729 = vmatpush1.bf16.msra.mxu0 0
  %6730 = vmatprep.subr.bf16.mxu0 0
  %6731 = vmatpush1.bf16.msra.mxu0 0
  %6732 = vmatprep.subr.bf16.mxu0 0
  %6733 = vmatpush1.bf16.msra.mxu0 0
  %6734 = vmatprep.subr.bf16.mxu0 0
  %6735 = vmatpush1.bf16.msra.mxu0 0
  %6736 = vmatprep.subr.bf16.mxu0 0
  %6737 = vmatpush1.bf16.msra.mxu0 0
  %6738 = vmatprep.subr.bf16.mxu0 0
  %6739 = vmatpush1.bf16.msra.mxu0 0
  %6740 = vmatprep.subr.bf16.mxu0 0
  %6741 = vmatpush1.bf16.msra.mxu0 0
  %6742 = vmatprep.subr.bf16.mxu0 0
  %6743 = vmatpush1.bf16.msra.mxu0 0
  %6744 = vmatprep.subr.bf16.mxu0 0
  %6745 = vmatpush1.bf16.msra.mxu0 0
  %6746 = vmatprep.subr.bf16.mxu0 0
  %6747 = vmatpush1.bf16.msra.mxu0 0
  %6748 = vmatprep.subr.bf16.mxu0 0
  %6749 = vmatpush1.bf16.msra.mxu0 0
  %6750 = vmatprep.mubr.bf16.mxu0 0
  %6751 = vmatmul.mubr.bf16.gmra.mrb[0].mxu0 %v6670
  %v6752 = vpop.f32.mrb[0].mxu0
  %v6753 = vadd.f32 0.0, %v6752
  %v6754 = vpop.f32.mrb[0].mxu0
  %v6755 = vadd.f32 0.0, %v6754
  %v6756 = vpop.f32.mrb[0].mxu0
  %v6757 = vadd.f32 0.0, %v6756
  %v6758 = vpop.f32.mrb[0].mxu0
  %v6759 = vadd.f32 0.0, %v6758
  %6760 = vdwg.mxu0
  %6761 = vmatprep.subr.bf16.mxu0 %v4592
  %6762 = vmatpush1.bf16.msra.mxu0 %v4589
  %6763 = vmatprep.subr.bf16.mxu0 0
  %6764 = vmatpush1.bf16.msra.mxu0 0
  %6765 = vmatprep.subr.bf16.mxu0 0
  %6766 = vmatpush1.bf16.msra.mxu0 0
  %6767 = vmatprep.subr.bf16.mxu0 0
  %6768 = vmatpush1.bf16.msra.mxu0 0
  %6769 = vmatprep.subr.bf16.mxu0 0
  %6770 = vmatpush1.bf16.msra.mxu0 0
  %6771 = vmatprep.subr.bf16.mxu0 0
  %6772 = vmatpush1.bf16.msra.mxu0 0
  %6773 = vmatprep.subr.bf16.mxu0 0
  %6774 = vmatpush1.bf16.msra.mxu0 0
  %6775 = vmatprep.subr.bf16.mxu0 0
  %6776 = vmatpush1.bf16.msra.mxu0 0
  %6777 = vmatprep.subr.bf16.mxu0 0
  %6778 = vmatpush1.bf16.msra.mxu0 0
  %6779 = vmatprep.subr.bf16.mxu0 0
  %6780 = vmatpush1.bf16.msra.mxu0 0
  %6781 = vmatprep.subr.bf16.mxu0 0
  %6782 = vmatpush1.bf16.msra.mxu0 0
  %6783 = vmatprep.subr.bf16.mxu0 0
  %6784 = vmatpush1.bf16.msra.mxu0 0
  %6785 = vmatprep.subr.bf16.mxu0 0
  %6786 = vmatpush1.bf16.msra.mxu0 0
  %6787 = vmatprep.subr.bf16.mxu0 0
  %6788 = vmatpush1.bf16.msra.mxu0 0
  %6789 = vmatprep.subr.bf16.mxu0 0
  %6790 = vmatpush1.bf16.msra.mxu0 0
  %6791 = vmatprep.subr.bf16.mxu0 0
  %6792 = vmatpush1.bf16.msra.mxu0 0
  %6793 = vmatprep.mubr.bf16.mxu0 0
  %6794 = vmatmul.mubr.bf16.gmra.mrb[0].mxu0 %v6670
  %v6795 = vpop.f32.mrb[0].mxu0
  %v6796 = vadd.f32 0.0, %v6795
  %v6797 = vpop.f32.mrb[0].mxu0
  %v6798 = vadd.f32 0.0, %v6797
  %v6799 = vpop.f32.mrb[0].mxu0
  %v6800 = vadd.f32 0.0, %v6799
  %v6801 = vpop.f32.mrb[0].mxu0
  %v6802 = vadd.f32 0.0, %v6801
  %6803 = vdwg.mxu0
  %6804 = vmatprep.subr.bf16.mxu0 0
  %6805 = vmatpush1.bf16.msra.mxu0 %v6673
  %6806 = vmatprep.subr.bf16.mxu0 0
  %6807 = vmatpush1.bf16.msra.mxu0 0
  %6808 = vmatprep.subr.bf16.mxu0 0
  %6809 = vmatpush1.bf16.msra.mxu0 0
  %6810 = vmatprep.subr.bf16.mxu0 0
  %6811 = vmatpush1.bf16.msra.mxu0 0
  %6812 = vmatprep.subr.bf16.mxu0 0
  %6813 = vmatpush1.bf16.msra.mxu0 0
  %6814 = vmatprep.subr.bf16.mxu0 0
  %6815 = vmatpush1.bf16.msra.mxu0 0
  %6816 = vmatprep.subr.bf16.mxu0 0
  %6817 = vmatpush1.bf16.msra.mxu0 0
  %6818 = vmatprep.subr.bf16.mxu0 0
  %6819 = vmatpush1.bf16.msra.mxu0 0
  %6820 = vmatprep.subr.bf16.mxu0 0
  %6821 = vmatpush1.bf16.msra.mxu0 0
  %6822 = vmatprep.subr.bf16.mxu0 0
  %6823 = vmatpush1.bf16.msra.mxu0 0
  %6824 = vmatprep.subr.bf16.mxu0 0
  %6825 = vmatpush1.bf16.msra.mxu0 0
  %6826 = vmatprep.subr.bf16.mxu0 0
  %6827 = vmatpush1.bf16.msra.mxu0 0
  %6828 = vmatprep.subr.bf16.mxu0 0
  %6829 = vmatpush1.bf16.msra.mxu0 0
  %6830 = vmatprep.subr.bf16.mxu0 0
  %6831 = vmatpush1.bf16.msra.mxu0 0
  %6832 = vmatprep.subr.bf16.mxu0 0
  %6833 = vmatpush1.bf16.msra.mxu0 0
  %6834 = vmatprep.subr.bf16.mxu0 0
  %6835 = vmatpush1.bf16.msra.mxu0 0
  %6836 = vmatprep.mubr.bf16.mxu0 0
  %6837 = vmatmul.mubr.bf16.gmra.mrb[0].mxu0 %v6670
  %v6838 = vpop.f32.mrb[0].mxu0
  %v6839 = vadd.f32 0.0, %v6838
  %v6840 = vpop.f32.mrb[0].mxu0
  %v6841 = vpop.f32.mrb[0].mxu0
  %v6842 = vadd.f32 0.0, %v6841
  %v6843 = vpop.f32.mrb[0].mxu0
  %6844 = vdwg.mxu0
  %v6845 = vadd.f32 %v6644, %v6710
  %v6846 = vadd.f32 %v6645, %v6712
  %v6847 = vadd.f32 %v6646, %v6753
  %v6848 = vadd.f32 %v6647, %v6755
  %v6849 = vadd.f32 %v6648, %v6796
  %v6850 = vadd.f32 %v6649, %v6798
  %v6851 = vadd.f32 %v6650, %v6839
  %v6852 = vadd.f32 %v6651, %v6714
  %v6853 = vadd.f32 %v6652, %v6716
  %v6854 = vadd.f32 %v6653, %v6757
  %v6855 = vadd.f32 %v6654, %v6759
  %v6856 = vadd.f32 %v6655, %v6800
  %v6857 = vadd.f32 %v6656, %v6802
  %v6858 = vadd.f32 %v6657, %v6842
  %s6859 = scalar_lea.vmem %s3, 160
  %v6860 = vld [vmem:[%s6859] sm:$0xf]
  %v6861 = vld [vmem:[%s6859 + $0x4] sm:$0xf]
  %v6864 = vunpack.c.l.b16 %v6860
  %v6865 = vunpack.c.l.b16 %v6861
  %v6866 = vpack.c.b16 %v6865, %v6864
  %6867 = vrot.lane.b32.xlu0 %v2231, 64
  %v6868 = vpop.permute.xlu0 %6867
  %6869 = vrot.lane.b32.xlu0 %v2232, 64
  %v6870 = vpop.permute.xlu0 %6869
  %6871 = vrot.lane.b32.xlu0 %v2233, 64
  %v6872 = vpop.permute.xlu0 %6871
  %6873 = vrot.lane.b32.xlu0 %v2234, 64
  %v6874 = vpop.permute.xlu0 %6873
  %6875 = vrot.lane.b32.xlu0 %v3379, 64
  %v6876 = vpop.permute.xlu0 %6875
  %6877 = vrot.lane.b32.xlu0 %v4539, 64
  %v6878 = vpop.permute.xlu0 %6877
  %6879 = vrot.lane.b32.xlu0 %v5939, 64
  %v6880 = vpop.permute.xlu0 %6879
  %vm6881 = vcmask 523264
  %v6882 = vsel %vm6881, %v6868, %v6870
  %v6883 = vsel %vm6881, %v6870, %v6872
  %v6884 = vsel %vm6881, %v6872, %v6874
  %v6885 = vsel %vm6881, %v6874, %v6876
  %v6886 = vsel %vm6881, %v6876, %v6878
  %v6887 = vsel %vm6881, %v6878, %v6880
  %v6889 = vsel %vm1199, %v6866, 0
  %v6892 = vsel %vm2274, %v6882, 0
  %v6895 = vsel %vm2274, %v6883, 0
  %v6898 = vsel %vm2274, %v6884, 0
  %v6901 = vsel %vm2274, %v6885, 0
  %v6904 = vsel %vm2274, %v6886, 0
  %v6907 = vsel %vm2274, %v6887, 0
  %v6910 = vsel %vm2274, %v6880, 0
  %6912 = vmatprep.subr.bf16.mxu0 %v6895
  %6913 = vmatpush1.bf16.msra.mxu0 %v6892
  %6914 = vmatprep.subr.bf16.mxu0 0
  %6915 = vmatpush1.bf16.msra.mxu0 0
  %6916 = vmatprep.subr.bf16.mxu0 0
  %6917 = vmatpush1.bf16.msra.mxu0 0
  %6918 = vmatprep.subr.bf16.mxu0 0
  %6919 = vmatpush1.bf16.msra.mxu0 0
  %6920 = vmatprep.subr.bf16.mxu0 0
  %6921 = vmatpush1.bf16.msra.mxu0 0
  %6922 = vmatprep.subr.bf16.mxu0 0
  %6923 = vmatpush1.bf16.msra.mxu0 0
  %6924 = vmatprep.subr.bf16.mxu0 0
  %6925 = vmatpush1.bf16.msra.mxu0 0
  %6926 = vmatprep.subr.bf16.mxu0 0
  %6927 = vmatpush1.bf16.msra.mxu0 0
  %6928 = vmatprep.subr.bf16.mxu0 0
  %6929 = vmatpush1.bf16.msra.mxu0 0
  %6930 = vmatprep.subr.bf16.mxu0 0
  %6931 = vmatpush1.bf16.msra.mxu0 0
  %6932 = vmatprep.subr.bf16.mxu0 0
  %6933 = vmatpush1.bf16.msra.mxu0 0
  %6934 = vmatprep.subr.bf16.mxu0 0
  %6935 = vmatpush1.bf16.msra.mxu0 0
  %6936 = vmatprep.subr.bf16.mxu0 0
  %6937 = vmatpush1.bf16.msra.mxu0 0
  %6938 = vmatprep.subr.bf16.mxu0 0
  %6939 = vmatpush1.bf16.msra.mxu0 0
  %6940 = vmatprep.subr.bf16.mxu0 0
  %6941 = vmatpush1.bf16.msra.mxu0 0
  %6942 = vmatprep.subr.bf16.mxu0 0
  %6943 = vmatpush1.bf16.msra.mxu0 0
  %6944 = vmatprep.mubr.bf16.mxu0 0
  %6945 = vmatmul.mubr.bf16.gmra.mrb[0].mxu0 %v6889
  %v6946 = vpop.f32.mrb[0].mxu0
  %v6947 = vadd.f32 0.0, %v6946
  %v6948 = vpop.f32.mrb[0].mxu0
  %v6949 = vadd.f32 0.0, %v6948
  %v6950 = vpop.f32.mrb[0].mxu0
  %v6951 = vadd.f32 0.0, %v6950
  %v6952 = vpop.f32.mrb[0].mxu0
  %v6953 = vadd.f32 0.0, %v6952
  %6954 = vdwg.mxu0
  %6955 = vmatprep.subr.bf16.mxu0 %v6901
  %6956 = vmatpush1.bf16.msra.mxu0 %v6898
  %6957 = vmatprep.subr.bf16.mxu0 0
  %6958 = vmatpush1.bf16.msra.mxu0 0
  %6959 = vmatprep.subr.bf16.mxu0 0
  %6960 = vmatpush1.bf16.msra.mxu0 0
  %6961 = vmatprep.subr.bf16.mxu0 0
  %6962 = vmatpush1.bf16.msra.mxu0 0
  %6963 = vmatprep.subr.bf16.mxu0 0
  %6964 = vmatpush1.bf16.msra.mxu0 0
  %6965 = vmatprep.subr.bf16.mxu0 0
  %6966 = vmatpush1.bf16.msra.mxu0 0
  %6967 = vmatprep.subr.bf16.mxu0 0
  %6968 = vmatpush1.bf16.msra.mxu0 0
  %6969 = vmatprep.subr.bf16.mxu0 0
  %6970 = vmatpush1.bf16.msra.mxu0 0
  %6971 = vmatprep.subr.bf16.mxu0 0
  %6972 = vmatpush1.bf16.msra.mxu0 0
  %6973 = vmatprep.subr.bf16.mxu0 0
  %6974 = vmatpush1.bf16.msra.mxu0 0
  %6975 = vmatprep.subr.bf16.mxu0 0
  %6976 = vmatpush1.bf16.msra.mxu0 0
  %6977 = vmatprep.subr.bf16.mxu0 0
  %6978 = vmatpush1.bf16.msra.mxu0 0
  %6979 = vmatprep.subr.bf16.mxu0 0
  %6980 = vmatpush1.bf16.msra.mxu0 0
  %6981 = vmatprep.subr.bf16.mxu0 0
  %6982 = vmatpush1.bf16.msra.mxu0 0
  %6983 = vmatprep.subr.bf16.mxu0 0
  %6984 = vmatpush1.bf16.msra.mxu0 0
  %6985 = vmatprep.subr.bf16.mxu0 0
  %6986 = vmatpush1.bf16.msra.mxu0 0
  %6987 = vmatprep.mubr.bf16.mxu0 0
  %6988 = vmatmul.mubr.bf16.gmra.mrb[0].mxu0 %v6889
  %v6989 = vpop.f32.mrb[0].mxu0
  %v6990 = vadd.f32 0.0, %v6989
  %v6991 = vpop.f32.mrb[0].mxu0
  %v6992 = vadd.f32 0.0, %v6991
  %v6993 = vpop.f32.mrb[0].mxu0
  %v6994 = vadd.f32 0.0, %v6993
  %v6995 = vpop.f32.mrb[0].mxu0
  %v6996 = vadd.f32 0.0, %v6995
  %6997 = vdwg.mxu0
  %6998 = vmatprep.subr.bf16.mxu0 %v6907
  %6999 = vmatpush1.bf16.msra.mxu0 %v6904
  %7000 = vmatprep.subr.bf16.mxu0 0
  %7001 = vmatpush1.bf16.msra.mxu0 0
  %7002 = vmatprep.subr.bf16.mxu0 0
  %7003 = vmatpush1.bf16.msra.mxu0 0
  %7004 = vmatprep.subr.bf16.mxu0 0
  %7005 = vmatpush1.bf16.msra.mxu0 0
  %7006 = vmatprep.subr.bf16.mxu0 0
  %7007 = vmatpush1.bf16.msra.mxu0 0
  %7008 = vmatprep.subr.bf16.mxu0 0
  %7009 = vmatpush1.bf16.msra.mxu0 0
  %7010 = vmatprep.subr.bf16.mxu0 0
  %7011 = vmatpush1.bf16.msra.mxu0 0
  %7012 = vmatprep.subr.bf16.mxu0 0
  %7013 = vmatpush1.bf16.msra.mxu0 0
  %7014 = vmatprep.subr.bf16.mxu0 0
  %7015 = vmatpush1.bf16.msra.mxu0 0
  %7016 = vmatprep.subr.bf16.mxu0 0
  %7017 = vmatpush1.bf16.msra.mxu0 0
  %7018 = vmatprep.subr.bf16.mxu0 0
  %7019 = vmatpush1.bf16.msra.mxu0 0
  %7020 = vmatprep.subr.bf16.mxu0 0
  %7021 = vmatpush1.bf16.msra.mxu0 0
  %7022 = vmatprep.subr.bf16.mxu0 0
  %7023 = vmatpush1.bf16.msra.mxu0 0
  %7024 = vmatprep.subr.bf16.mxu0 0
  %7025 = vmatpush1.bf16.msra.mxu0 0
  %7026 = vmatprep.subr.bf16.mxu0 0
  %7027 = vmatpush1.bf16.msra.mxu0 0
  %7028 = vmatprep.subr.bf16.mxu0 0
  %7029 = vmatpush1.bf16.msra.mxu0 0
  %7030 = vmatprep.mubr.bf16.mxu0 0
  %7031 = vmatmul.mubr.bf16.gmra.mrb[0].mxu0 %v6889
  %v7032 = vpop.f32.mrb[0].mxu0
  %v7033 = vadd.f32 0.0, %v7032
  %v7034 = vpop.f32.mrb[0].mxu0
  %v7035 = vadd.f32 0.0, %v7034
  %v7036 = vpop.f32.mrb[0].mxu0
  %v7037 = vadd.f32 0.0, %v7036
  %v7038 = vpop.f32.mrb[0].mxu0
  %v7039 = vadd.f32 0.0, %v7038
  %7040 = vdwg.mxu0
  %7041 = vmatprep.subr.bf16.mxu0 0
  %7042 = vmatpush1.bf16.msra.mxu0 %v6910
  %7043 = vmatprep.subr.bf16.mxu0 0
  %7044 = vmatpush1.bf16.msra.mxu0 0
  %7045 = vmatprep.subr.bf16.mxu0 0
  %7046 = vmatpush1.bf16.msra.mxu0 0
  %7047 = vmatprep.subr.bf16.mxu0 0
  %7048 = vmatpush1.bf16.msra.mxu0 0
  %7049 = vmatprep.subr.bf16.mxu0 0
  %7050 = vmatpush1.bf16.msra.mxu0 0
  %7051 = vmatprep.subr.bf16.mxu0 0
  %7052 = vmatpush1.bf16.msra.mxu0 0
  %7053 = vmatprep.subr.bf16.mxu0 0
  %7054 = vmatpush1.bf16.msra.mxu0 0
  %7055 = vmatprep.subr.bf16.mxu0 0
  %7056 = vmatpush1.bf16.msra.mxu0 0
  %7057 = vmatprep.subr.bf16.mxu0 0
  %7058 = vmatpush1.bf16.msra.mxu0 0
  %7059 = vmatprep.subr.bf16.mxu0 0
  %7060 = vmatpush1.bf16.msra.mxu0 0
  %7061 = vmatprep.subr.bf16.mxu0 0
  %7062 = vmatpush1.bf16.msra.mxu0 0
  %7063 = vmatprep.subr.bf16.mxu0 0
  %7064 = vmatpush1.bf16.msra.mxu0 0
  %7065 = vmatprep.subr.bf16.mxu0 0
  %7066 = vmatpush1.bf16.msra.mxu0 0
  %7067 = vmatprep.subr.bf16.mxu0 0
  %7068 = vmatpush1.bf16.msra.mxu0 0
  %7069 = vmatprep.subr.bf16.mxu0 0
  %7070 = vmatpush1.bf16.msra.mxu0 0
  %7071 = vmatprep.subr.bf16.mxu0 0
  %7072 = vmatpush1.bf16.msra.mxu0 0
  %7073 = vmatprep.mubr.bf16.mxu0 0
  %7074 = vmatmul.mubr.bf16.gmra.mrb[0].mxu0 %v6889
  %v7075 = vpop.f32.mrb[0].mxu0
  %v7076 = vadd.f32 0.0, %v7075
  %v7077 = vpop.f32.mrb[0].mxu0
  %v7078 = vpop.f32.mrb[0].mxu0
  %v7079 = vadd.f32 0.0, %v7078
  %v7080 = vpop.f32.mrb[0].mxu0
  %7081 = vdwg.mxu0
  %v7082 = vadd.f32 %v6845, %v6947
  %v7083 = vadd.f32 %v6846, %v6949
  %v7084 = vadd.f32 %v6847, %v6990
  %v7085 = vadd.f32 %v6848, %v6992
  %v7086 = vadd.f32 %v6849, %v7033
  %v7087 = vadd.f32 %v6850, %v7035
  %v7088 = vadd.f32 %v6851, %v7076
  %v7089 = vadd.f32 %v6852, %v6951
  %v7090 = vadd.f32 %v6853, %v6953
  %v7091 = vadd.f32 %v6854, %v6994
  %v7092 = vadd.f32 %v6855, %v6996
  %v7093 = vadd.f32 %v6856, %v7037
  %v7094 = vadd.f32 %v6857, %v7039
  %v7095 = vadd.f32 %v6858, %v7079
  %s7096 = scalar_lea.vmem %s3, 168
  %v7097 = vld [vmem:[%s7096] sm:$0xf]
  %v7098 = vld [vmem:[%s7096 + $0x4] sm:$0xf]
  %v7101 = vunpack.c.l.b16 %v7097
  %v7102 = vunpack.c.l.b16 %v7098
  %v7103 = vpack.c.b16 %v7102, %v7101
  %7104 = vrot.lane.b32.xlu0 %v2231, 60
  %v7105 = vpop.permute.xlu0 %7104
  %7106 = vrot.lane.b32.xlu0 %v2232, 60
  %v7107 = vpop.permute.xlu0 %7106
  %7108 = vrot.lane.b32.xlu0 %v2233, 60
  %v7109 = vpop.permute.xlu0 %7108
  %7110 = vrot.lane.b32.xlu0 %v2234, 60
  %v7111 = vpop.permute.xlu0 %7110
  %7112 = vrot.lane.b32.xlu0 %v3379, 60
  %v7113 = vpop.permute.xlu0 %7112
  %7114 = vrot.lane.b32.xlu0 %v4539, 60
  %v7115 = vpop.permute.xlu0 %7114
  %7116 = vrot.lane.b32.xlu0 %v5939, 60
  %v7117 = vpop.permute.xlu0 %7116
  %vm7118 = vcmask 490496
  %v7119 = vsel %vm7118, %v7105, %v7107
  %v7120 = vsel %vm7118, %v7107, %v7109
  %v7121 = vsel %vm7118, %v7109, %v7111
  %v7122 = vsel %vm7118, %v7111, %v7113
  %v7123 = vsel %vm7118, %v7113, %v7115
  %v7124 = vsel %vm7118, %v7115, %v7117
  %v7126 = vsel %vm1199, %v7103, 0
  %v7129 = vsel %vm2274, %v7119, 0
  %v7132 = vsel %vm2274, %v7120, 0
  %v7135 = vsel %vm2274, %v7121, 0
  %v7138 = vsel %vm2274, %v7122, 0
  %v7141 = vsel %vm2274, %v7123, 0
  %v7144 = vsel %vm2274, %v7124, 0
  %v7147 = vsel %vm2274, %v7117, 0
  %7149 = vmatprep.subr.bf16.mxu0 %v7132
  %7150 = vmatpush1.bf16.msra.mxu0 %v7129
  %7151 = vmatprep.subr.bf16.mxu0 0
  %7152 = vmatpush1.bf16.msra.mxu0 0
  %7153 = vmatprep.subr.bf16.mxu0 0
  %7154 = vmatpush1.bf16.msra.mxu0 0
  %7155 = vmatprep.subr.bf16.mxu0 0
  %7156 = vmatpush1.bf16.msra.mxu0 0
  %7157 = vmatprep.subr.bf16.mxu0 0
  %7158 = vmatpush1.bf16.msra.mxu0 0
  %7159 = vmatprep.subr.bf16.mxu0 0
  %7160 = vmatpush1.bf16.msra.mxu0 0
  %7161 = vmatprep.subr.bf16.mxu0 0
  %7162 = vmatpush1.bf16.msra.mxu0 0
  %7163 = vmatprep.subr.bf16.mxu0 0
  %7164 = vmatpush1.bf16.msra.mxu0 0
  %7165 = vmatprep.subr.bf16.mxu0 0
  %7166 = vmatpush1.bf16.msra.mxu0 0
  %7167 = vmatprep.subr.bf16.mxu0 0
  %7168 = vmatpush1.bf16.msra.mxu0 0
  %7169 = vmatprep.subr.bf16.mxu0 0
  %7170 = vmatpush1.bf16.msra.mxu0 0
  %7171 = vmatprep.subr.bf16.mxu0 0
  %7172 = vmatpush1.bf16.msra.mxu0 0
  %7173 = vmatprep.subr.bf16.mxu0 0
  %7174 = vmatpush1.bf16.msra.mxu0 0
  %7175 = vmatprep.subr.bf16.mxu0 0
  %7176 = vmatpush1.bf16.msra.mxu0 0
  %7177 = vmatprep.subr.bf16.mxu0 0
  %7178 = vmatpush1.bf16.msra.mxu0 0
  %7179 = vmatprep.subr.bf16.mxu0 0
  %7180 = vmatpush1.bf16.msra.mxu0 0
  %7181 = vmatprep.mubr.bf16.mxu0 0
  %7182 = vmatmul.mubr.bf16.gmra.mrb[0].mxu0 %v7126
  %v7183 = vpop.f32.mrb[0].mxu0
  %v7184 = vadd.f32 0.0, %v7183
  %v7185 = vpop.f32.mrb[0].mxu0
  %v7186 = vadd.f32 0.0, %v7185
  %v7187 = vpop.f32.mrb[0].mxu0
  %v7188 = vadd.f32 0.0, %v7187
  %v7189 = vpop.f32.mrb[0].mxu0
  %v7190 = vadd.f32 0.0, %v7189
  %7191 = vdwg.mxu0
  %7192 = vmatprep.subr.bf16.mxu0 %v7138
  %7193 = vmatpush1.bf16.msra.mxu0 %v7135
  %7194 = vmatprep.subr.bf16.mxu0 0
  %7195 = vmatpush1.bf16.msra.mxu0 0
  %7196 = vmatprep.subr.bf16.mxu0 0
  %7197 = vmatpush1.bf16.msra.mxu0 0
  %7198 = vmatprep.subr.bf16.mxu0 0
  %7199 = vmatpush1.bf16.msra.mxu0 0
  %7200 = vmatprep.subr.bf16.mxu0 0
  %7201 = vmatpush1.bf16.msra.mxu0 0
  %7202 = vmatprep.subr.bf16.mxu0 0
  %7203 = vmatpush1.bf16.msra.mxu0 0
  %7204 = vmatprep.subr.bf16.mxu0 0
  %7205 = vmatpush1.bf16.msra.mxu0 0
  %7206 = vmatprep.subr.bf16.mxu0 0
  %7207 = vmatpush1.bf16.msra.mxu0 0
  %7208 = vmatprep.subr.bf16.mxu0 0
  %7209 = vmatpush1.bf16.msra.mxu0 0
  %7210 = vmatprep.subr.bf16.mxu0 0
  %7211 = vmatpush1.bf16.msra.mxu0 0
  %7212 = vmatprep.subr.bf16.mxu0 0
  %7213 = vmatpush1.bf16.msra.mxu0 0
  %7214 = vmatprep.subr.bf16.mxu0 0
  %7215 = vmatpush1.bf16.msra.mxu0 0
  %7216 = vmatprep.subr.bf16.mxu0 0
  %7217 = vmatpush1.bf16.msra.mxu0 0
  %7218 = vmatprep.subr.bf16.mxu0 0
  %7219 = vmatpush1.bf16.msra.mxu0 0
  %7220 = vmatprep.subr.bf16.mxu0 0
  %7221 = vmatpush1.bf16.msra.mxu0 0
  %7222 = vmatprep.subr.bf16.mxu0 0
  %7223 = vmatpush1.bf16.msra.mxu0 0
  %7224 = vmatprep.mubr.bf16.mxu0 0
  %7225 = vmatmul.mubr.bf16.gmra.mrb[0].mxu0 %v7126
  %v7226 = vpop.f32.mrb[0].mxu0
  %v7227 = vadd.f32 0.0, %v7226
  %v7228 = vpop.f32.mrb[0].mxu0
  %v7229 = vadd.f32 0.0, %v7228
  %v7230 = vpop.f32.mrb[0].mxu0
  %v7231 = vadd.f32 0.0, %v7230
  %v7232 = vpop.f32.mrb[0].mxu0
  %v7233 = vadd.f32 0.0, %v7232
  %7234 = vdwg.mxu0
  %7235 = vmatprep.subr.bf16.mxu0 %v7144
  %7236 = vmatpush1.bf16.msra.mxu0 %v7141
  %7237 = vmatprep.subr.bf16.mxu0 0
  %7238 = vmatpush1.bf16.msra.mxu0 0
  %7239 = vmatprep.subr.bf16.mxu0 0
  %7240 = vmatpush1.bf16.msra.mxu0 0
  %7241 = vmatprep.subr.bf16.mxu0 0
  %7242 = vmatpush1.bf16.msra.mxu0 0
  %7243 = vmatprep.subr.bf16.mxu0 0
  %7244 = vmatpush1.bf16.msra.mxu0 0
  %7245 = vmatprep.subr.bf16.mxu0 0
  %7246 = vmatpush1.bf16.msra.mxu0 0
  %7247 = vmatprep.subr.bf16.mxu0 0
  %7248 = vmatpush1.bf16.msra.mxu0 0
  %7249 = vmatprep.subr.bf16.mxu0 0
  %7250 = vmatpush1.bf16.msra.mxu0 0
  %7251 = vmatprep.subr.bf16.mxu0 0
  %7252 = vmatpush1.bf16.msra.mxu0 0
  %7253 = vmatprep.subr.bf16.mxu0 0
  %7254 = vmatpush1.bf16.msra.mxu0 0
  %7255 = vmatprep.subr.bf16.mxu0 0
  %7256 = vmatpush1.bf16.msra.mxu0 0
  %7257 = vmatprep.subr.bf16.mxu0 0
  %7258 = vmatpush1.bf16.msra.mxu0 0
  %7259 = vmatprep.subr.bf16.mxu0 0
  %7260 = vmatpush1.bf16.msra.mxu0 0
  %7261 = vmatprep.subr.bf16.mxu0 0
  %7262 = vmatpush1.bf16.msra.mxu0 0
  %7263 = vmatprep.subr.bf16.mxu0 0
  %7264 = vmatpush1.bf16.msra.mxu0 0
  %7265 = vmatprep.subr.bf16.mxu0 0
  %7266 = vmatpush1.bf16.msra.mxu0 0
  %7267 = vmatprep.mubr.bf16.mxu0 0
  %7268 = vmatmul.mubr.bf16.gmra.mrb[0].mxu0 %v7126
  %v7269 = vpop.f32.mrb[0].mxu0
  %v7270 = vadd.f32 0.0, %v7269
  %v7271 = vpop.f32.mrb[0].mxu0
  %v7272 = vadd.f32 0.0, %v7271
  %v7273 = vpop.f32.mrb[0].mxu0
  %v7274 = vadd.f32 0.0, %v7273
  %v7275 = vpop.f32.mrb[0].mxu0
  %v7276 = vadd.f32 0.0, %v7275
  %7277 = vdwg.mxu0
  %7278 = vmatprep.subr.bf16.mxu0 0
  %7279 = vmatpush1.bf16.msra.mxu0 %v7147
  %7280 = vmatprep.subr.bf16.mxu0 0
  %7281 = vmatpush1.bf16.msra.mxu0 0
  %7282 = vmatprep.subr.bf16.mxu0 0
  %7283 = vmatpush1.bf16.msra.mxu0 0
  %7284 = vmatprep.subr.bf16.mxu0 0
  %7285 = vmatpush1.bf16.msra.mxu0 0
  %7286 = vmatprep.subr.bf16.mxu0 0
  %7287 = vmatpush1.bf16.msra.mxu0 0
  %7288 = vmatprep.subr.bf16.mxu0 0
  %7289 = vmatpush1.bf16.msra.mxu0 0
  %7290 = vmatprep.subr.bf16.mxu0 0
  %7291 = vmatpush1.bf16.msra.mxu0 0
  %7292 = vmatprep.subr.bf16.mxu0 0
  %7293 = vmatpush1.bf16.msra.mxu0 0
  %7294 = vmatprep.subr.bf16.mxu0 0
  %7295 = vmatpush1.bf16.msra.mxu0 0
  %7296 = vmatprep.subr.bf16.mxu0 0
  %7297 = vmatpush1.bf16.msra.mxu0 0
  %7298 = vmatprep.subr.bf16.mxu0 0
  %7299 = vmatpush1.bf16.msra.mxu0 0
  %7300 = vmatprep.subr.bf16.mxu0 0
  %7301 = vmatpush1.bf16.msra.mxu0 0
  %7302 = vmatprep.subr.bf16.mxu0 0
  %7303 = vmatpush1.bf16.msra.mxu0 0
  %7304 = vmatprep.subr.bf16.mxu0 0
  %7305 = vmatpush1.bf16.msra.mxu0 0
  %7306 = vmatprep.subr.bf16.mxu0 0
  %7307 = vmatpush1.bf16.msra.mxu0 0
  %7308 = vmatprep.subr.bf16.mxu0 0
  %7309 = vmatpush1.bf16.msra.mxu0 0
  %7310 = vmatprep.mubr.bf16.mxu0 0
  %7311 = vmatmul.mubr.bf16.gmra.mrb[0].mxu0 %v7126
  %v7312 = vpop.f32.mrb[0].mxu0
  %v7313 = vadd.f32 0.0, %v7312
  %v7314 = vpop.f32.mrb[0].mxu0
  %v7315 = vpop.f32.mrb[0].mxu0
  %v7316 = vadd.f32 0.0, %v7315
  %v7317 = vpop.f32.mrb[0].mxu0
  %7318 = vdwg.mxu0
  %v7319 = vadd.f32 %v7082, %v7184
  %v7320 = vadd.f32 %v7083, %v7186
  %v7321 = vadd.f32 %v7084, %v7227
  %v7322 = vadd.f32 %v7085, %v7229
  %v7323 = vadd.f32 %v7086, %v7270
  %v7324 = vadd.f32 %v7087, %v7272
  %v7325 = vadd.f32 %v7088, %v7313
  %v7326 = vadd.f32 %v7089, %v7188
  %v7327 = vadd.f32 %v7090, %v7190
  %v7328 = vadd.f32 %v7091, %v7231
  %v7329 = vadd.f32 %v7092, %v7233
  %v7330 = vadd.f32 %v7093, %v7274
  %v7331 = vadd.f32 %v7094, %v7276
  %v7332 = vadd.f32 %v7095, %v7316
  %s7333 = scalar_lea.vmem %s3, 176
  %v7334 = vld [vmem:[%s7333] sm:$0xf]
  %v7335 = vld [vmem:[%s7333 + $0x4] sm:$0xf]
  %v7338 = vunpack.c.l.b16 %v7334
  %v7339 = vunpack.c.l.b16 %v7335
  %v7340 = vpack.c.b16 %v7339, %v7338
  %7341 = vrot.lane.b32.xlu0 %v2231, 56
  %v7342 = vpop.permute.xlu0 %7341
  %7343 = vrot.lane.b32.xlu0 %v2232, 56
  %v7344 = vpop.permute.xlu0 %7343
  %7345 = vrot.lane.b32.xlu0 %v2233, 56
  %v7346 = vpop.permute.xlu0 %7345
  %7347 = vrot.lane.b32.xlu0 %v2234, 56
  %v7348 = vpop.permute.xlu0 %7347
  %7349 = vrot.lane.b32.xlu0 %v3379, 56
  %v7350 = vpop.permute.xlu0 %7349
  %7351 = vrot.lane.b32.xlu0 %v4539, 56
  %v7352 = vpop.permute.xlu0 %7351
  %7353 = vrot.lane.b32.xlu0 %v5939, 56
  %v7354 = vpop.permute.xlu0 %7353
  %vm7355 = vcmask 457728
  %v7356 = vsel %vm7355, %v7342, %v7344
  %v7357 = vsel %vm7355, %v7344, %v7346
  %v7358 = vsel %vm7355, %v7346, %v7348
  %v7359 = vsel %vm7355, %v7348, %v7350
  %v7360 = vsel %vm7355, %v7350, %v7352
  %v7361 = vsel %vm7355, %v7352, %v7354
  %v7363 = vsel %vm1199, %v7340, 0
  %v7366 = vsel %vm2274, %v7356, 0
  %v7369 = vsel %vm2274, %v7357, 0
  %v7372 = vsel %vm2274, %v7358, 0
  %v7375 = vsel %vm2274, %v7359, 0
  %v7378 = vsel %vm2274, %v7360, 0
  %v7381 = vsel %vm2274, %v7361, 0
  %v7384 = vsel %vm2274, %v7354, 0
  %7386 = vmatprep.subr.bf16.mxu0 %v7369
  %7387 = vmatpush1.bf16.msra.mxu0 %v7366
  %7388 = vmatprep.subr.bf16.mxu0 0
  %7389 = vmatpush1.bf16.msra.mxu0 0
  %7390 = vmatprep.subr.bf16.mxu0 0
  %7391 = vmatpush1.bf16.msra.mxu0 0
  %7392 = vmatprep.subr.bf16.mxu0 0
  %7393 = vmatpush1.bf16.msra.mxu0 0
  %7394 = vmatprep.subr.bf16.mxu0 0
  %7395 = vmatpush1.bf16.msra.mxu0 0
  %7396 = vmatprep.subr.bf16.mxu0 0
  %7397 = vmatpush1.bf16.msra.mxu0 0
  %7398 = vmatprep.subr.bf16.mxu0 0
  %7399 = vmatpush1.bf16.msra.mxu0 0
  %7400 = vmatprep.subr.bf16.mxu0 0
  %7401 = vmatpush1.bf16.msra.mxu0 0
  %7402 = vmatprep.subr.bf16.mxu0 0
  %7403 = vmatpush1.bf16.msra.mxu0 0
  %7404 = vmatprep.subr.bf16.mxu0 0
  %7405 = vmatpush1.bf16.msra.mxu0 0
  %7406 = vmatprep.subr.bf16.mxu0 0
  %7407 = vmatpush1.bf16.msra.mxu0 0
  %7408 = vmatprep.subr.bf16.mxu0 0
  %7409 = vmatpush1.bf16.msra.mxu0 0
  %7410 = vmatprep.subr.bf16.mxu0 0
  %7411 = vmatpush1.bf16.msra.mxu0 0
  %7412 = vmatprep.subr.bf16.mxu0 0
  %7413 = vmatpush1.bf16.msra.mxu0 0
  %7414 = vmatprep.subr.bf16.mxu0 0
  %7415 = vmatpush1.bf16.msra.mxu0 0
  %7416 = vmatprep.subr.bf16.mxu0 0
  %7417 = vmatpush1.bf16.msra.mxu0 0
  %7418 = vmatprep.mubr.bf16.mxu0 0
  %7419 = vmatmul.mubr.bf16.gmra.mrb[0].mxu0 %v7363
  %v7420 = vpop.f32.mrb[0].mxu0
  %v7421 = vadd.f32 0.0, %v7420
  %v7422 = vpop.f32.mrb[0].mxu0
  %v7423 = vadd.f32 0.0, %v7422
  %v7424 = vpop.f32.mrb[0].mxu0
  %v7425 = vadd.f32 0.0, %v7424
  %v7426 = vpop.f32.mrb[0].mxu0
  %v7427 = vadd.f32 0.0, %v7426
  %7428 = vdwg.mxu0
  %7429 = vmatprep.subr.bf16.mxu0 %v7375
  %7430 = vmatpush1.bf16.msra.mxu0 %v7372
  %7431 = vmatprep.subr.bf16.mxu0 0
  %7432 = vmatpush1.bf16.msra.mxu0 0
  %7433 = vmatprep.subr.bf16.mxu0 0
  %7434 = vmatpush1.bf16.msra.mxu0 0
  %7435 = vmatprep.subr.bf16.mxu0 0
  %7436 = vmatpush1.bf16.msra.mxu0 0
  %7437 = vmatprep.subr.bf16.mxu0 0
  %7438 = vmatpush1.bf16.msra.mxu0 0
  %7439 = vmatprep.subr.bf16.mxu0 0
  %7440 = vmatpush1.bf16.msra.mxu0 0
  %7441 = vmatprep.subr.bf16.mxu0 0
  %7442 = vmatpush1.bf16.msra.mxu0 0
  %7443 = vmatprep.subr.bf16.mxu0 0
  %7444 = vmatpush1.bf16.msra.mxu0 0
  %7445 = vmatprep.subr.bf16.mxu0 0
  %7446 = vmatpush1.bf16.msra.mxu0 0
  %7447 = vmatprep.subr.bf16.mxu0 0
  %7448 = vmatpush1.bf16.msra.mxu0 0
  %7449 = vmatprep.subr.bf16.mxu0 0
  %7450 = vmatpush1.bf16.msra.mxu0 0
  %7451 = vmatprep.subr.bf16.mxu0 0
  %7452 = vmatpush1.bf16.msra.mxu0 0
  %7453 = vmatprep.subr.bf16.mxu0 0
  %7454 = vmatpush1.bf16.msra.mxu0 0
  %7455 = vmatprep.subr.bf16.mxu0 0
  %7456 = vmatpush1.bf16.msra.mxu0 0
  %7457 = vmatprep.subr.bf16.mxu0 0
  %7458 = vmatpush1.bf16.msra.mxu0 0
  %7459 = vmatprep.subr.bf16.mxu0 0
  %7460 = vmatpush1.bf16.msra.mxu0 0
  %7461 = vmatprep.mubr.bf16.mxu0 0
  %7462 = vmatmul.mubr.bf16.gmra.mrb[0].mxu0 %v7363
  %v7463 = vpop.f32.mrb[0].mxu0
  %v7464 = vadd.f32 0.0, %v7463
  %v7465 = vpop.f32.mrb[0].mxu0
  %v7466 = vadd.f32 0.0, %v7465
  %v7467 = vpop.f32.mrb[0].mxu0
  %v7468 = vadd.f32 0.0, %v7467
  %v7469 = vpop.f32.mrb[0].mxu0
  %v7470 = vadd.f32 0.0, %v7469
  %7471 = vdwg.mxu0
  %7472 = vmatprep.subr.bf16.mxu0 %v7381
  %7473 = vmatpush1.bf16.msra.mxu0 %v7378
  %7474 = vmatprep.subr.bf16.mxu0 0
  %7475 = vmatpush1.bf16.msra.mxu0 0
  %7476 = vmatprep.subr.bf16.mxu0 0
  %7477 = vmatpush1.bf16.msra.mxu0 0
  %7478 = vmatprep.subr.bf16.mxu0 0
  %7479 = vmatpush1.bf16.msra.mxu0 0
  %7480 = vmatprep.subr.bf16.mxu0 0
  %7481 = vmatpush1.bf16.msra.mxu0 0
  %7482 = vmatprep.subr.bf16.mxu0 0
  %7483 = vmatpush1.bf16.msra.mxu0 0
  %7484 = vmatprep.subr.bf16.mxu0 0
  %7485 = vmatpush1.bf16.msra.mxu0 0
  %7486 = vmatprep.subr.bf16.mxu0 0
  %7487 = vmatpush1.bf16.msra.mxu0 0
  %7488 = vmatprep.subr.bf16.mxu0 0
  %7489 = vmatpush1.bf16.msra.mxu0 0
  %7490 = vmatprep.subr.bf16.mxu0 0
  %7491 = vmatpush1.bf16.msra.mxu0 0
  %7492 = vmatprep.subr.bf16.mxu0 0
  %7493 = vmatpush1.bf16.msra.mxu0 0
  %7494 = vmatprep.subr.bf16.mxu0 0
  %7495 = vmatpush1.bf16.msra.mxu0 0
  %7496 = vmatprep.subr.bf16.mxu0 0
  %7497 = vmatpush1.bf16.msra.mxu0 0
  %7498 = vmatprep.subr.bf16.mxu0 0
  %7499 = vmatpush1.bf16.msra.mxu0 0
  %7500 = vmatprep.subr.bf16.mxu0 0
  %7501 = vmatpush1.bf16.msra.mxu0 0
  %7502 = vmatprep.subr.bf16.mxu0 0
  %7503 = vmatpush1.bf16.msra.mxu0 0
  %7504 = vmatprep.mubr.bf16.mxu0 0
  %7505 = vmatmul.mubr.bf16.gmra.mrb[0].mxu0 %v7363
  %v7506 = vpop.f32.mrb[0].mxu0
  %v7507 = vadd.f32 0.0, %v7506
  %v7508 = vpop.f32.mrb[0].mxu0
  %v7509 = vadd.f32 0.0, %v7508
  %v7510 = vpop.f32.mrb[0].mxu0
  %v7511 = vadd.f32 0.0, %v7510
  %v7512 = vpop.f32.mrb[0].mxu0
  %v7513 = vadd.f32 0.0, %v7512
  %7514 = vdwg.mxu0
  %7515 = vmatprep.subr.bf16.mxu0 0
  %7516 = vmatpush1.bf16.msra.mxu0 %v7384
  %7517 = vmatprep.subr.bf16.mxu0 0
  %7518 = vmatpush1.bf16.msra.mxu0 0
  %7519 = vmatprep.subr.bf16.mxu0 0
  %7520 = vmatpush1.bf16.msra.mxu0 0
  %7521 = vmatprep.subr.bf16.mxu0 0
  %7522 = vmatpush1.bf16.msra.mxu0 0
  %7523 = vmatprep.subr.bf16.mxu0 0
  %7524 = vmatpush1.bf16.msra.mxu0 0
  %7525 = vmatprep.subr.bf16.mxu0 0
  %7526 = vmatpush1.bf16.msra.mxu0 0
  %7527 = vmatprep.subr.bf16.mxu0 0
  %7528 = vmatpush1.bf16.msra.mxu0 0
  %7529 = vmatprep.subr.bf16.mxu0 0
  %7530 = vmatpush1.bf16.msra.mxu0 0
  %7531 = vmatprep.subr.bf16.mxu0 0
  %7532 = vmatpush1.bf16.msra.mxu0 0
  %7533 = vmatprep.subr.bf16.mxu0 0
  %7534 = vmatpush1.bf16.msra.mxu0 0
  %7535 = vmatprep.subr.bf16.mxu0 0
  %7536 = vmatpush1.bf16.msra.mxu0 0
  %7537 = vmatprep.subr.bf16.mxu0 0
  %7538 = vmatpush1.bf16.msra.mxu0 0
  %7539 = vmatprep.subr.bf16.mxu0 0
  %7540 = vmatpush1.bf16.msra.mxu0 0
  %7541 = vmatprep.subr.bf16.mxu0 0
  %7542 = vmatpush1.bf16.msra.mxu0 0
  %7543 = vmatprep.subr.bf16.mxu0 0
  %7544 = vmatpush1.bf16.msra.mxu0 0
  %7545 = vmatprep.subr.bf16.mxu0 0
  %7546 = vmatpush1.bf16.msra.mxu0 0
  %7547 = vmatprep.mubr.bf16.mxu0 0
  %7548 = vmatmul.mubr.bf16.gmra.mrb[0].mxu0 %v7363
  %v7549 = vpop.f32.mrb[0].mxu0
  %v7550 = vadd.f32 0.0, %v7549
  %v7551 = vpop.f32.mrb[0].mxu0
  %v7552 = vpop.f32.mrb[0].mxu0
  %v7553 = vadd.f32 0.0, %v7552
  %v7554 = vpop.f32.mrb[0].mxu0
  %7555 = vdwg.mxu0
  %v7556 = vadd.f32 %v7319, %v7421
  %v7557 = vadd.f32 %v7320, %v7423
  %v7558 = vadd.f32 %v7321, %v7464
  %v7559 = vadd.f32 %v7322, %v7466
  %v7560 = vadd.f32 %v7323, %v7507
  %v7561 = vadd.f32 %v7324, %v7509
  %v7562 = vadd.f32 %v7325, %v7550
  %v7563 = vadd.f32 %v7326, %v7425
  %v7564 = vadd.f32 %v7327, %v7427
  %v7565 = vadd.f32 %v7328, %v7468
  %v7566 = vadd.f32 %v7329, %v7470
  %v7567 = vadd.f32 %v7330, %v7511
  %v7568 = vadd.f32 %v7331, %v7513
  %v7569 = vadd.f32 %v7332, %v7553
  %s7570 = scalar_lea.vmem %s3, 184
  %v7571 = vld [vmem:[%s7570] sm:$0xf]
  %v7572 = vld [vmem:[%s7570 + $0x4] sm:$0xf]
  %v7575 = vunpack.c.l.b16 %v7571
  %v7576 = vunpack.c.l.b16 %v7572
  %v7577 = vpack.c.b16 %v7576, %v7575
  %7578 = vrot.lane.b32.xlu0 %v2231, 52
  %v7579 = vpop.permute.xlu0 %7578
  %7580 = vrot.lane.b32.xlu0 %v2232, 52
  %v7581 = vpop.permute.xlu0 %7580
  %7582 = vrot.lane.b32.xlu0 %v2233, 52
  %v7583 = vpop.permute.xlu0 %7582
  %7584 = vrot.lane.b32.xlu0 %v2234, 52
  %v7585 = vpop.permute.xlu0 %7584
  %7586 = vrot.lane.b32.xlu0 %v3379, 52
  %v7587 = vpop.permute.xlu0 %7586
  %7588 = vrot.lane.b32.xlu0 %v4539, 52
  %v7589 = vpop.permute.xlu0 %7588
  %7590 = vrot.lane.b32.xlu0 %v5939, 52
  %v7591 = vpop.permute.xlu0 %7590
  %vm7592 = vcmask 424960
  %v7593 = vsel %vm7592, %v7579, %v7581
  %v7594 = vsel %vm7592, %v7581, %v7583
  %v7595 = vsel %vm7592, %v7583, %v7585
  %v7596 = vsel %vm7592, %v7585, %v7587
  %v7597 = vsel %vm7592, %v7587, %v7589
  %v7598 = vsel %vm7592, %v7589, %v7591
  %v7600 = vsel %vm1199, %v7577, 0
  %v7603 = vsel %vm2274, %v7593, 0
  %v7606 = vsel %vm2274, %v7594, 0
  %v7609 = vsel %vm2274, %v7595, 0
  %v7612 = vsel %vm2274, %v7596, 0
  %v7615 = vsel %vm2274, %v7597, 0
  %v7618 = vsel %vm2274, %v7598, 0
  %v7621 = vsel %vm2274, %v7591, 0
  %7623 = vmatprep.subr.bf16.mxu0 %v7606
  %7624 = vmatpush1.bf16.msra.mxu0 %v7603
  %7625 = vmatprep.subr.bf16.mxu0 0
  %7626 = vmatpush1.bf16.msra.mxu0 0
  %7627 = vmatprep.subr.bf16.mxu0 0
  %7628 = vmatpush1.bf16.msra.mxu0 0
  %7629 = vmatprep.subr.bf16.mxu0 0
  %7630 = vmatpush1.bf16.msra.mxu0 0
  %7631 = vmatprep.subr.bf16.mxu0 0
  %7632 = vmatpush1.bf16.msra.mxu0 0
  %7633 = vmatprep.subr.bf16.mxu0 0
  %7634 = vmatpush1.bf16.msra.mxu0 0
  %7635 = vmatprep.subr.bf16.mxu0 0
  %7636 = vmatpush1.bf16.msra.mxu0 0
  %7637 = vmatprep.subr.bf16.mxu0 0
  %7638 = vmatpush1.bf16.msra.mxu0 0
  %7639 = vmatprep.subr.bf16.mxu0 0
  %7640 = vmatpush1.bf16.msra.mxu0 0
  %7641 = vmatprep.subr.bf16.mxu0 0
  %7642 = vmatpush1.bf16.msra.mxu0 0
  %7643 = vmatprep.subr.bf16.mxu0 0
  %7644 = vmatpush1.bf16.msra.mxu0 0
  %7645 = vmatprep.subr.bf16.mxu0 0
  %7646 = vmatpush1.bf16.msra.mxu0 0
  %7647 = vmatprep.subr.bf16.mxu0 0
  %7648 = vmatpush1.bf16.msra.mxu0 0
  %7649 = vmatprep.subr.bf16.mxu0 0
  %7650 = vmatpush1.bf16.msra.mxu0 0
  %7651 = vmatprep.subr.bf16.mxu0 0
  %7652 = vmatpush1.bf16.msra.mxu0 0
  %7653 = vmatprep.subr.bf16.mxu0 0
  %7654 = vmatpush1.bf16.msra.mxu0 0
  %7655 = vmatprep.mubr.bf16.mxu0 0
  %7656 = vmatmul.mubr.bf16.gmra.mrb[0].mxu0 %v7600
  %v7657 = vpop.f32.mrb[0].mxu0
  %v7658 = vadd.f32 0.0, %v7657
  %v7659 = vpop.f32.mrb[0].mxu0
  %v7660 = vadd.f32 0.0, %v7659
  %v7661 = vpop.f32.mrb[0].mxu0
  %v7662 = vadd.f32 0.0, %v7661
  %v7663 = vpop.f32.mrb[0].mxu0
  %v7664 = vadd.f32 0.0, %v7663
  %7665 = vdwg.mxu0
  %7666 = vmatprep.subr.bf16.mxu0 %v7612
  %7667 = vmatpush1.bf16.msra.mxu0 %v7609
  %7668 = vmatprep.subr.bf16.mxu0 0
  %7669 = vmatpush1.bf16.msra.mxu0 0
  %7670 = vmatprep.subr.bf16.mxu0 0
  %7671 = vmatpush1.bf16.msra.mxu0 0
  %7672 = vmatprep.subr.bf16.mxu0 0
  %7673 = vmatpush1.bf16.msra.mxu0 0
  %7674 = vmatprep.subr.bf16.mxu0 0
  %7675 = vmatpush1.bf16.msra.mxu0 0
  %7676 = vmatprep.subr.bf16.mxu0 0
  %7677 = vmatpush1.bf16.msra.mxu0 0
  %7678 = vmatprep.subr.bf16.mxu0 0
  %7679 = vmatpush1.bf16.msra.mxu0 0
  %7680 = vmatprep.subr.bf16.mxu0 0
  %7681 = vmatpush1.bf16.msra.mxu0 0
  %7682 = vmatprep.subr.bf16.mxu0 0
  %7683 = vmatpush1.bf16.msra.mxu0 0
  %7684 = vmatprep.subr.bf16.mxu0 0
  %7685 = vmatpush1.bf16.msra.mxu0 0
  %7686 = vmatprep.subr.bf16.mxu0 0
  %7687 = vmatpush1.bf16.msra.mxu0 0
  %7688 = vmatprep.subr.bf16.mxu0 0
  %7689 = vmatpush1.bf16.msra.mxu0 0
  %7690 = vmatprep.subr.bf16.mxu0 0
  %7691 = vmatpush1.bf16.msra.mxu0 0
  %7692 = vmatprep.subr.bf16.mxu0 0
  %7693 = vmatpush1.bf16.msra.mxu0 0
  %7694 = vmatprep.subr.bf16.mxu0 0
  %7695 = vmatpush1.bf16.msra.mxu0 0
  %7696 = vmatprep.subr.bf16.mxu0 0
  %7697 = vmatpush1.bf16.msra.mxu0 0
  %7698 = vmatprep.mubr.bf16.mxu0 0
  %7699 = vmatmul.mubr.bf16.gmra.mrb[0].mxu0 %v7600
  %v7700 = vpop.f32.mrb[0].mxu0
  %v7701 = vadd.f32 0.0, %v7700
  %v7702 = vpop.f32.mrb[0].mxu0
  %v7703 = vadd.f32 0.0, %v7702
  %v7704 = vpop.f32.mrb[0].mxu0
  %v7705 = vadd.f32 0.0, %v7704
  %v7706 = vpop.f32.mrb[0].mxu0
  %v7707 = vadd.f32 0.0, %v7706
  %7708 = vdwg.mxu0
  %7709 = vmatprep.subr.bf16.mxu0 %v7618
  %7710 = vmatpush1.bf16.msra.mxu0 %v7615
  %7711 = vmatprep.subr.bf16.mxu0 0
  %7712 = vmatpush1.bf16.msra.mxu0 0
  %7713 = vmatprep.subr.bf16.mxu0 0
  %7714 = vmatpush1.bf16.msra.mxu0 0
  %7715 = vmatprep.subr.bf16.mxu0 0
  %7716 = vmatpush1.bf16.msra.mxu0 0
  %7717 = vmatprep.subr.bf16.mxu0 0
  %7718 = vmatpush1.bf16.msra.mxu0 0
  %7719 = vmatprep.subr.bf16.mxu0 0
  %7720 = vmatpush1.bf16.msra.mxu0 0
  %7721 = vmatprep.subr.bf16.mxu0 0
  %7722 = vmatpush1.bf16.msra.mxu0 0
  %7723 = vmatprep.subr.bf16.mxu0 0
  %7724 = vmatpush1.bf16.msra.mxu0 0
  %7725 = vmatprep.subr.bf16.mxu0 0
  %7726 = vmatpush1.bf16.msra.mxu0 0
  %7727 = vmatprep.subr.bf16.mxu0 0
  %7728 = vmatpush1.bf16.msra.mxu0 0
  %7729 = vmatprep.subr.bf16.mxu0 0
  %7730 = vmatpush1.bf16.msra.mxu0 0
  %7731 = vmatprep.subr.bf16.mxu0 0
  %7732 = vmatpush1.bf16.msra.mxu0 0
  %7733 = vmatprep.subr.bf16.mxu0 0
  %7734 = vmatpush1.bf16.msra.mxu0 0
  %7735 = vmatprep.subr.bf16.mxu0 0
  %7736 = vmatpush1.bf16.msra.mxu0 0
  %7737 = vmatprep.subr.bf16.mxu0 0
  %7738 = vmatpush1.bf16.msra.mxu0 0
  %7739 = vmatprep.subr.bf16.mxu0 0
  %7740 = vmatpush1.bf16.msra.mxu0 0
  %7741 = vmatprep.mubr.bf16.mxu0 0
  %7742 = vmatmul.mubr.bf16.gmra.mrb[0].mxu0 %v7600
  %v7743 = vpop.f32.mrb[0].mxu0
  %v7744 = vadd.f32 0.0, %v7743
  %v7745 = vpop.f32.mrb[0].mxu0
  %v7746 = vadd.f32 0.0, %v7745
  %v7747 = vpop.f32.mrb[0].mxu0
  %v7748 = vadd.f32 0.0, %v7747
  %v7749 = vpop.f32.mrb[0].mxu0
  %v7750 = vadd.f32 0.0, %v7749
  %7751 = vdwg.mxu0
  %7752 = vmatprep.subr.bf16.mxu0 0
  %7753 = vmatpush1.bf16.msra.mxu0 %v7621
  %7754 = vmatprep.subr.bf16.mxu0 0
  %7755 = vmatpush1.bf16.msra.mxu0 0
  %7756 = vmatprep.subr.bf16.mxu0 0
  %7757 = vmatpush1.bf16.msra.mxu0 0
  %7758 = vmatprep.subr.bf16.mxu0 0
  %7759 = vmatpush1.bf16.msra.mxu0 0
  %7760 = vmatprep.subr.bf16.mxu0 0
  %7761 = vmatpush1.bf16.msra.mxu0 0
  %7762 = vmatprep.subr.bf16.mxu0 0
  %7763 = vmatpush1.bf16.msra.mxu0 0
  %7764 = vmatprep.subr.bf16.mxu0 0
  %7765 = vmatpush1.bf16.msra.mxu0 0
  %7766 = vmatprep.subr.bf16.mxu0 0
  %7767 = vmatpush1.bf16.msra.mxu0 0
  %7768 = vmatprep.subr.bf16.mxu0 0
  %7769 = vmatpush1.bf16.msra.mxu0 0
  %7770 = vmatprep.subr.bf16.mxu0 0
  %7771 = vmatpush1.bf16.msra.mxu0 0
  %7772 = vmatprep.subr.bf16.mxu0 0
  %7773 = vmatpush1.bf16.msra.mxu0 0
  %7774 = vmatprep.subr.bf16.mxu0 0
  %7775 = vmatpush1.bf16.msra.mxu0 0
  %7776 = vmatprep.subr.bf16.mxu0 0
  %7777 = vmatpush1.bf16.msra.mxu0 0
  %7778 = vmatprep.subr.bf16.mxu0 0
  %7779 = vmatpush1.bf16.msra.mxu0 0
  %7780 = vmatprep.subr.bf16.mxu0 0
  %7781 = vmatpush1.bf16.msra.mxu0 0
  %7782 = vmatprep.subr.bf16.mxu0 0
  %7783 = vmatpush1.bf16.msra.mxu0 0
  %7784 = vmatprep.mubr.bf16.mxu0 0
  %7785 = vmatmul.mubr.bf16.gmra.mrb[0].mxu0 %v7600
  %v7786 = vpop.f32.mrb[0].mxu0
  %v7787 = vadd.f32 0.0, %v7786
  %v7788 = vpop.f32.mrb[0].mxu0
  %v7789 = vpop.f32.mrb[0].mxu0
  %v7790 = vadd.f32 0.0, %v7789
  %v7791 = vpop.f32.mrb[0].mxu0
  %7792 = vdwg.mxu0
  %v7793 = vadd.f32 %v7556, %v7658
  %v7794 = vadd.f32 %v7557, %v7660
  %v7795 = vadd.f32 %v7558, %v7701
  %v7796 = vadd.f32 %v7559, %v7703
  %v7797 = vadd.f32 %v7560, %v7744
  %v7798 = vadd.f32 %v7561, %v7746
  %v7799 = vadd.f32 %v7562, %v7787
  %v7800 = vadd.f32 %v7563, %v7662
  %v7801 = vadd.f32 %v7564, %v7664
  %v7802 = vadd.f32 %v7565, %v7705
  %v7803 = vadd.f32 %v7566, %v7707
  %v7804 = vadd.f32 %v7567, %v7748
  %v7805 = vadd.f32 %v7568, %v7750
  %v7806 = vadd.f32 %v7569, %v7790
  %s7807 = scalar_lea.vmem %s3, 192
  %v7808 = vld [vmem:[%s7807] sm:$0xf]
  %v7809 = vld [vmem:[%s7807 + $0x4] sm:$0xf]
  %v7812 = vunpack.c.l.b16 %v7808
  %v7813 = vunpack.c.l.b16 %v7809
  %v7814 = vpack.c.b16 %v7813, %v7812
  %7815 = vrot.lane.b32.xlu0 %v5939, 48
  %v7816 = vpop.permute.xlu0 %7815
  %v7817 = vsel %vm5721, %v5720, %v7816
  %v7819 = vsel %vm1199, %v7814, 0
  %v7822 = vsel %vm2274, %v7817, 0
  %v7825 = vsel %vm2274, %v7816, 0
  %7827 = vmatprep.subr.bf16.mxu0 %v5738
  %7828 = vmatpush1.bf16.msra.mxu0 %v5735
  %7829 = vmatprep.subr.bf16.mxu0 0
  %7830 = vmatpush1.bf16.msra.mxu0 0
  %7831 = vmatprep.subr.bf16.mxu0 0
  %7832 = vmatpush1.bf16.msra.mxu0 0
  %7833 = vmatprep.subr.bf16.mxu0 0
  %7834 = vmatpush1.bf16.msra.mxu0 0
  %7835 = vmatprep.subr.bf16.mxu0 0
  %7836 = vmatpush1.bf16.msra.mxu0 0
  %7837 = vmatprep.subr.bf16.mxu0 0
  %7838 = vmatpush1.bf16.msra.mxu0 0
  %7839 = vmatprep.subr.bf16.mxu0 0
  %7840 = vmatpush1.bf16.msra.mxu0 0
  %7841 = vmatprep.subr.bf16.mxu0 0
  %7842 = vmatpush1.bf16.msra.mxu0 0
  %7843 = vmatprep.subr.bf16.mxu0 0
  %7844 = vmatpush1.bf16.msra.mxu0 0
  %7845 = vmatprep.subr.bf16.mxu0 0
  %7846 = vmatpush1.bf16.msra.mxu0 0
  %7847 = vmatprep.subr.bf16.mxu0 0
  %7848 = vmatpush1.bf16.msra.mxu0 0
  %7849 = vmatprep.subr.bf16.mxu0 0
  %7850 = vmatpush1.bf16.msra.mxu0 0
  %7851 = vmatprep.subr.bf16.mxu0 0
  %7852 = vmatpush1.bf16.msra.mxu0 0
  %7853 = vmatprep.subr.bf16.mxu0 0
  %7854 = vmatpush1.bf16.msra.mxu0 0
  %7855 = vmatprep.subr.bf16.mxu0 0
  %7856 = vmatpush1.bf16.msra.mxu0 0
  %7857 = vmatprep.subr.bf16.mxu0 0
  %7858 = vmatpush1.bf16.msra.mxu0 0
  %7859 = vmatprep.mubr.bf16.mxu0 0
  %7860 = vmatmul.mubr.bf16.gmra.mrb[0].mxu0 %v7819
  %v7861 = vpop.f32.mrb[0].mxu0
  %v7862 = vadd.f32 0.0, %v7861
  %v7863 = vpop.f32.mrb[0].mxu0
  %v7864 = vadd.f32 0.0, %v7863
  %v7865 = vpop.f32.mrb[0].mxu0
  %v7866 = vadd.f32 0.0, %v7865
  %v7867 = vpop.f32.mrb[0].mxu0
  %v7868 = vadd.f32 0.0, %v7867
  %7869 = vdwg.mxu0
  %7870 = vmatprep.subr.bf16.mxu0 %v5744
  %7871 = vmatpush1.bf16.msra.mxu0 %v5741
  %7872 = vmatprep.subr.bf16.mxu0 0
  %7873 = vmatpush1.bf16.msra.mxu0 0
  %7874 = vmatprep.subr.bf16.mxu0 0
  %7875 = vmatpush1.bf16.msra.mxu0 0
  %7876 = vmatprep.subr.bf16.mxu0 0
  %7877 = vmatpush1.bf16.msra.mxu0 0
  %7878 = vmatprep.subr.bf16.mxu0 0
  %7879 = vmatpush1.bf16.msra.mxu0 0
  %7880 = vmatprep.subr.bf16.mxu0 0
  %7881 = vmatpush1.bf16.msra.mxu0 0
  %7882 = vmatprep.subr.bf16.mxu0 0
  %7883 = vmatpush1.bf16.msra.mxu0 0
  %7884 = vmatprep.subr.bf16.mxu0 0
  %7885 = vmatpush1.bf16.msra.mxu0 0
  %7886 = vmatprep.subr.bf16.mxu0 0
  %7887 = vmatpush1.bf16.msra.mxu0 0
  %7888 = vmatprep.subr.bf16.mxu0 0
  %7889 = vmatpush1.bf16.msra.mxu0 0
  %7890 = vmatprep.subr.bf16.mxu0 0
  %7891 = vmatpush1.bf16.msra.mxu0 0
  %7892 = vmatprep.subr.bf16.mxu0 0
  %7893 = vmatpush1.bf16.msra.mxu0 0
  %7894 = vmatprep.subr.bf16.mxu0 0
  %7895 = vmatpush1.bf16.msra.mxu0 0
  %7896 = vmatprep.subr.bf16.mxu0 0
  %7897 = vmatpush1.bf16.msra.mxu0 0
  %7898 = vmatprep.subr.bf16.mxu0 0
  %7899 = vmatpush1.bf16.msra.mxu0 0
  %7900 = vmatprep.subr.bf16.mxu0 0
  %7901 = vmatpush1.bf16.msra.mxu0 0
  %7902 = vmatprep.mubr.bf16.mxu0 0
  %7903 = vmatmul.mubr.bf16.gmra.mrb[0].mxu0 %v7819
  %v7904 = vpop.f32.mrb[0].mxu0
  %v7905 = vadd.f32 0.0, %v7904
  %v7906 = vpop.f32.mrb[0].mxu0
  %v7907 = vadd.f32 0.0, %v7906
  %v7908 = vpop.f32.mrb[0].mxu0
  %v7909 = vadd.f32 0.0, %v7908
  %v7910 = vpop.f32.mrb[0].mxu0
  %v7911 = vadd.f32 0.0, %v7910
  %7912 = vdwg.mxu0
  %7913 = vmatprep.subr.bf16.mxu0 %v7822
  %7914 = vmatpush1.bf16.msra.mxu0 %v5747
  %7915 = vmatprep.subr.bf16.mxu0 0
  %7916 = vmatpush1.bf16.msra.mxu0 0
  %7917 = vmatprep.subr.bf16.mxu0 0
  %7918 = vmatpush1.bf16.msra.mxu0 0
  %7919 = vmatprep.subr.bf16.mxu0 0
  %7920 = vmatpush1.bf16.msra.mxu0 0
  %7921 = vmatprep.subr.bf16.mxu0 0
  %7922 = vmatpush1.bf16.msra.mxu0 0
  %7923 = vmatprep.subr.bf16.mxu0 0
  %7924 = vmatpush1.bf16.msra.mxu0 0
  %7925 = vmatprep.subr.bf16.mxu0 0
  %7926 = vmatpush1.bf16.msra.mxu0 0
  %7927 = vmatprep.subr.bf16.mxu0 0
  %7928 = vmatpush1.bf16.msra.mxu0 0
  %7929 = vmatprep.subr.bf16.mxu0 0
  %7930 = vmatpush1.bf16.msra.mxu0 0
  %7931 = vmatprep.subr.bf16.mxu0 0
  %7932 = vmatpush1.bf16.msra.mxu0 0
  %7933 = vmatprep.subr.bf16.mxu0 0
  %7934 = vmatpush1.bf16.msra.mxu0 0
  %7935 = vmatprep.subr.bf16.mxu0 0
  %7936 = vmatpush1.bf16.msra.mxu0 0
  %7937 = vmatprep.subr.bf16.mxu0 0
  %7938 = vmatpush1.bf16.msra.mxu0 0
  %7939 = vmatprep.subr.bf16.mxu0 0
  %7940 = vmatpush1.bf16.msra.mxu0 0
  %7941 = vmatprep.subr.bf16.mxu0 0
  %7942 = vmatpush1.bf16.msra.mxu0 0
  %7943 = vmatprep.subr.bf16.mxu0 0
  %7944 = vmatpush1.bf16.msra.mxu0 0
  %7945 = vmatprep.mubr.bf16.mxu0 0
  %7946 = vmatmul.mubr.bf16.gmra.mrb[0].mxu0 %v7819
  %v7947 = vpop.f32.mrb[0].mxu0
  %v7948 = vadd.f32 0.0, %v7947
  %v7949 = vpop.f32.mrb[0].mxu0
  %v7950 = vadd.f32 0.0, %v7949
  %v7951 = vpop.f32.mrb[0].mxu0
  %v7952 = vadd.f32 0.0, %v7951
  %v7953 = vpop.f32.mrb[0].mxu0
  %v7954 = vadd.f32 0.0, %v7953
  %7955 = vdwg.mxu0
  %7956 = vmatprep.subr.bf16.mxu0 0
  %7957 = vmatpush1.bf16.msra.mxu0 %v7825
  %7958 = vmatprep.subr.bf16.mxu0 0
  %7959 = vmatpush1.bf16.msra.mxu0 0
  %7960 = vmatprep.subr.bf16.mxu0 0
  %7961 = vmatpush1.bf16.msra.mxu0 0
  %7962 = vmatprep.subr.bf16.mxu0 0
  %7963 = vmatpush1.bf16.msra.mxu0 0
  %7964 = vmatprep.subr.bf16.mxu0 0
  %7965 = vmatpush1.bf16.msra.mxu0 0
  %7966 = vmatprep.subr.bf16.mxu0 0
  %7967 = vmatpush1.bf16.msra.mxu0 0
  %7968 = vmatprep.subr.bf16.mxu0 0
  %7969 = vmatpush1.bf16.msra.mxu0 0
  %7970 = vmatprep.subr.bf16.mxu0 0
  %7971 = vmatpush1.bf16.msra.mxu0 0
  %7972 = vmatprep.subr.bf16.mxu0 0
  %7973 = vmatpush1.bf16.msra.mxu0 0
  %7974 = vmatprep.subr.bf16.mxu0 0
  %7975 = vmatpush1.bf16.msra.mxu0 0
  %7976 = vmatprep.subr.bf16.mxu0 0
  %7977 = vmatpush1.bf16.msra.mxu0 0
  %7978 = vmatprep.subr.bf16.mxu0 0
  %7979 = vmatpush1.bf16.msra.mxu0 0
  %7980 = vmatprep.subr.bf16.mxu0 0
  %7981 = vmatpush1.bf16.msra.mxu0 0
  %7982 = vmatprep.subr.bf16.mxu0 0
  %7983 = vmatpush1.bf16.msra.mxu0 0
  %7984 = vmatprep.subr.bf16.mxu0 0
  %7985 = vmatpush1.bf16.msra.mxu0 0
  %7986 = vmatprep.subr.bf16.mxu0 0
  %7987 = vmatpush1.bf16.msra.mxu0 0
  %7988 = vmatprep.mubr.bf16.mxu0 0
  %7989 = vmatmul.mubr.bf16.gmra.mrb[0].mxu0 %v7819
  %v7990 = vpop.f32.mrb[0].mxu0
  %v7991 = vadd.f32 0.0, %v7990
  %v7992 = vpop.f32.mrb[0].mxu0
  %v7993 = vpop.f32.mrb[0].mxu0
  %v7994 = vadd.f32 0.0, %v7993
  %v7995 = vpop.f32.mrb[0].mxu0
  %7996 = vdwg.mxu0
  %v7997 = vadd.f32 %v7793, %v7862
  %v7998 = vadd.f32 %v7794, %v7864
  %v7999 = vadd.f32 %v7795, %v7905
  %v8000 = vadd.f32 %v7796, %v7907
  %v8001 = vadd.f32 %v7797, %v7948
  %v8002 = vadd.f32 %v7798, %v7950
  %v8003 = vadd.f32 %v7799, %v7991
  %v8004 = vadd.f32 %v7800, %v7866
  %v8005 = vadd.f32 %v7801, %v7868
  %v8006 = vadd.f32 %v7802, %v7909
  %v8007 = vadd.f32 %v7803, %v7911
  %v8008 = vadd.f32 %v7804, %v7952
  %v8009 = vadd.f32 %v7805, %v7954
  %v8010 = vadd.f32 %v7806, %v7994
  %v8011 = vld [vmem:[%s4] sm:$0xff]
  %v8012 = vld [vmem:[%s4 + $0x8] sm:$0xff]
  %8014 = vset.pattern.permute.xlu0 0
  %8015 = vperm.xlu0 %8014, %v8011
  %v8016 = vpop.permute.xlu0 %8015
  %8019 = vset.pattern.permute.xlu0 0
  %8020 = vperm.xlu0 %8019, %v8012
  %v8021 = vpop.permute.xlu0 %8020
  %v8023 = vadd.f32 %v7997, %v8016
  %v8024 = vadd.f32 %v7998, %v8016
  %v8025 = vadd.f32 %v7999, %v8016
  %v8026 = vadd.f32 %v8000, %v8016
  %v8027 = vadd.f32 %v8001, %v8016
  %v8028 = vadd.f32 %v8002, %v8016
  %v8029 = vadd.f32 %v8003, %v8016
  %v8030 = vadd.f32 %v8004, %v8021
  %v8031 = vadd.f32 %v8005, %v8021
  %v8032 = vadd.f32 %v8006, %v8021
  %v8033 = vadd.f32 %v8007, %v8021
  %v8034 = vadd.f32 %v8008, %v8021
  %v8035 = vadd.f32 %v8009, %v8021
  %v8036 = vadd.f32 %v8010, %v8021
  %v8037 = vmax.f32 %v8023, 0.0
  %v8038 = vmax.f32 %v8024, 0.0
  %v8039 = vmax.f32 %v8025, 0.0
  %v8040 = vmax.f32 %v8026, 0.0
  %v8041 = vmax.f32 %v8027, 0.0
  %v8042 = vmax.f32 %v8028, 0.0
  %v8043 = vmax.f32 %v8029, 0.0
  %v8044 = vmax.f32 %v8030, 0.0
  %v8045 = vmax.f32 %v8031, 0.0
  %v8046 = vmax.f32 %v8032, 0.0
  %v8047 = vmax.f32 %v8033, 0.0
  %v8048 = vmax.f32 %v8034, 0.0
  %v8049 = vmax.f32 %v8035, 0.0
  %v8050 = vmax.f32 %v8036, 0.0
  %8063 = vrot.lane.b32.xlu0 %v8037, 124
  %v8064 = vpop.permute.xlu0 %8063
  %8065 = vrot.lane.b32.xlu0 %v8038, 124
  %v8066 = vpop.permute.xlu0 %8065
  %8067 = vrot.lane.b32.xlu0 %v8039, 124
  %v8068 = vpop.permute.xlu0 %8067
  %8069 = vrot.lane.b32.xlu0 %v8040, 124
  %v8070 = vpop.permute.xlu0 %8069
  %8071 = vrot.lane.b32.xlu0 %v8041, 124
  %v8072 = vpop.permute.xlu0 %8071
  %8073 = vrot.lane.b32.xlu0 %v8042, 124
  %v8074 = vpop.permute.xlu0 %8073
  %8075 = vrot.lane.b32.xlu0 %v8044, 124
  %v8076 = vpop.permute.xlu0 %8075
  %8077 = vrot.lane.b32.xlu0 %v8045, 124
  %v8078 = vpop.permute.xlu0 %8077
  %8079 = vrot.lane.b32.xlu0 %v8046, 124
  %v8080 = vpop.permute.xlu0 %8079
  %8081 = vrot.lane.b32.xlu0 %v8047, 124
  %v8082 = vpop.permute.xlu0 %8081
  %8083 = vrot.lane.b32.xlu0 %v8048, 124
  %v8084 = vpop.permute.xlu0 %8083
  %8085 = vrot.lane.b32.xlu0 %v8049, 124
  %v8086 = vpop.permute.xlu0 %8085
  %v8087 = vsel %vm203, %v8064, %v8066
  %v8088 = vsel %vm203, %v8066, %v8068
  %v8089 = vsel %vm203, %v8070, %v8072
  %v8090 = vsel %vm203, %v8076, %v8078
  %v8091 = vsel %vm203, %v8078, %v8080
  %v8092 = vsel %vm203, %v8082, %v8084
  %v8101 = vmax.f32 %v8037, %v8087
  %v8102 = vmax.f32 %v8038, %v8088
  %v8103 = vmax.f32 %v8040, %v8089
  %v8104 = vmax.f32 %v8042, %v8074
  %v8105 = vmax.f32 %v8044, %v8090
  %v8106 = vmax.f32 %v8045, %v8091
  %v8107 = vmax.f32 %v8047, %v8092
  %v8108 = vmax.f32 %v8049, %v8086
  %8111 = vrot.lane.b32.xlu0 %v8043, 124
  %v8112 = vpop.permute.xlu0 %8111
  %8113 = vrot.lane.b32.xlu0 %v8050, 124
  %v8114 = vpop.permute.xlu0 %8113
  %v8115 = vsel %vm203, %v8068, %v8070
  %v8116 = vsel %vm203, %v8072, %v8074
  %v8117 = vsel %vm203, %v8074, %v8112
  %v8118 = vsel %vm203, %v8080, %v8082
  %v8119 = vsel %vm203, %v8084, %v8086
  %v8120 = vsel %vm203, %v8086, %v8114
  %v8129 = vmax.f32 %v8039, %v8115
  %v8130 = vmax.f32 %v8041, %v8116
  %v8131 = vmax.f32 %v8042, %v8117
  %v8132 = vmax.f32 %v8043, %v8112
  %v8133 = vmax.f32 %v8046, %v8118
  %v8134 = vmax.f32 %v8048, %v8119
  %v8135 = vmax.f32 %v8049, %v8120
  %v8136 = vmax.f32 %v8050, %v8114
  %8151 = vrot.lane.b32.xlu0 %v8101, 16
  %v8152 = vpop.permute.xlu0 %8151
  %8153 = vrot.lane.b32.xlu0 %v8102, 16
  %v8154 = vpop.permute.xlu0 %8153
  %8155 = vrot.lane.b32.xlu0 %v8129, 16
  %v8156 = vpop.permute.xlu0 %8155
  %8157 = vrot.lane.b32.xlu0 %v8103, 16
  %v8158 = vpop.permute.xlu0 %8157
  %8159 = vrot.lane.b32.xlu0 %v8130, 16
  %v8160 = vpop.permute.xlu0 %8159
  %8161 = vrot.lane.b32.xlu0 %v8131, 16
  %v8162 = vpop.permute.xlu0 %8161
  %8163 = vrot.lane.b32.xlu0 %v8132, 16
  %v8164 = vpop.permute.xlu0 %8163
  %8165 = vrot.lane.b32.xlu0 %v8105, 16
  %v8166 = vpop.permute.xlu0 %8165
  %8167 = vrot.lane.b32.xlu0 %v8106, 16
  %v8168 = vpop.permute.xlu0 %8167
  %8169 = vrot.lane.b32.xlu0 %v8133, 16
  %v8170 = vpop.permute.xlu0 %8169
  %8171 = vrot.lane.b32.xlu0 %v8107, 16
  %v8172 = vpop.permute.xlu0 %8171
  %8173 = vrot.lane.b32.xlu0 %v8134, 16
  %v8174 = vpop.permute.xlu0 %8173
  %8175 = vrot.lane.b32.xlu0 %v8135, 16
  %v8176 = vpop.permute.xlu0 %8175
  %8177 = vrot.lane.b32.xlu0 %v8136, 16
  %v8178 = vpop.permute.xlu0 %8177
  %v8179 = vsel %vm855, %v8152, %v8154
  %v8180 = vsel %vm855, %v8154, %v8156
  %v8181 = vsel %vm855, %v8158, %v8160
  %v8182 = vsel %vm855, %v8162, %v8164
  %v8183 = vsel %vm855, %v8166, %v8168
  %v8184 = vsel %vm855, %v8168, %v8170
  %v8185 = vsel %vm855, %v8172, %v8174
  %v8186 = vsel %vm855, %v8176, %v8178
  %v8195 = vmax.f32 %v8101, %v8179
  %v8196 = vmax.f32 %v8102, %v8180
  %v8197 = vmax.f32 %v8103, %v8181
  %v8198 = vmax.f32 %v8104, %v8182
  %v8199 = vmax.f32 %v8105, %v8183
  %v8200 = vmax.f32 %v8106, %v8184
  %v8201 = vmax.f32 %v8107, %v8185
  %v8202 = vmax.f32 %v8108, %v8186
  %v8203 = vpack.c.bf16 %v8199, %v8195
  %vm8204 = vcmask 15360
  %8205 = vst.msk [vmem:[#allocation2] sm:$0xff] %vm8204, %v8203
  %8207 = vrot.lane.b32.xlu0 %v8203, 120
  %v8208 = vpop.permute.xlu0 %8207
  %8210 = vst.msk [vmem:[#allocation2 + $0x8] sm:$0xff] %vm8204, %v8208
  %8211 = vrot.lane.b32.xlu0 %v8203, 112
  %v8212 = vpop.permute.xlu0 %8211
  %8214 = vst.msk [vmem:[#allocation2 + $0x10] sm:$0xff] %vm8204, %v8212
  %8215 = vrot.lane.b32.xlu0 %v8203, 104
  %v8216 = vpop.permute.xlu0 %8215
  %8218 = vst.msk [vmem:[#allocation2 + $0x18] sm:$0xff] %vm8204, %v8216
  %v8219 = vpack.c.bf16 %v8200, %v8196
  %8221 = vrot.lane.b32.xlu0 %v8219, 32
  %v8222 = vpop.permute.xlu0 %8221
  %8224 = vst.msk [vmem:[#allocation2 + $0x20] sm:$0xff] %vm8204, %v8222
  %8225 = vrot.lane.b32.xlu0 %v8219, 24
  %v8226 = vpop.permute.xlu0 %8225
  %8228 = vst.msk [vmem:[#allocation2 + $0x28] sm:$0xff] %vm8204, %v8226
  %8229 = vrot.lane.b32.xlu0 %v8219, 16
  %v8230 = vpop.permute.xlu0 %8229
  %8232 = vst.msk [vmem:[#allocation2 + $0x30] sm:$0xff] %vm8204, %v8230
  %8233 = vrot.lane.b32.xlu0 %v8219, 8
  %v8234 = vpop.permute.xlu0 %8233
  %8236 = vst.msk [vmem:[#allocation2 + $0x38] sm:$0xff] %vm8204, %v8234
  %v8237 = vpack.c.bf16 %v8201, %v8197
  %8239 = vrot.lane.b32.xlu0 %v8237, 64
  %v8240 = vpop.permute.xlu0 %8239
  %8242 = vst.msk [vmem:[#allocation2 + $0x40] sm:$0xff] %vm8204, %v8240
  %8243 = vrot.lane.b32.xlu0 %v8237, 56
  %v8244 = vpop.permute.xlu0 %8243
  %8246 = vst.msk [vmem:[#allocation2 + $0x48] sm:$0xff] %vm8204, %v8244
  %8247 = vrot.lane.b32.xlu0 %v8237, 48
  %v8248 = vpop.permute.xlu0 %8247
  %8250 = vst.msk [vmem:[#allocation2 + $0x50] sm:$0xff] %vm8204, %v8248
  %8251 = vrot.lane.b32.xlu0 %v8237, 40
  %v8252 = vpop.permute.xlu0 %8251
  %8254 = vst.msk [vmem:[#allocation2 + $0x58] sm:$0xff] %vm8204, %v8252
  %v8255 = vpack.c.bf16 %v8202, %v8198
  %8257 = vrot.lane.b32.xlu0 %v8255, 96
  %v8258 = vpop.permute.xlu0 %8257
  %8260 = vst.msk [vmem:[#allocation2 + $0x60] sm:$0xff] %vm8204, %v8258
  %8261 = vrot.lane.b32.xlu0 %v8255, 88
  %v8262 = vpop.permute.xlu0 %8261
  %8264 = vst.msk [vmem:[#allocation2 + $0x68] sm:$0xff] %vm8204, %v8262
  %8265 = vrot.lane.b32.xlu0 %v8255, 80
  %v8266 = vpop.permute.xlu0 %8265
  %8268 = vst.msk [vmem:[#allocation2 + $0x70] sm:$0xff] %vm8204, %v8266
  %8269 = vrot.lane.b32.xlu0 %v8255, 72
  %v8270 = vpop.permute.xlu0 %8269
  %8272 = vst.msk [vmem:[#allocation2 + $0x78] sm:$0xff] %vm8204, %v8270
  %v8273 = vld [vmem:[%s5] sm:$0xff]
  %v8274 = vld [vmem:[%s5 + $0x8] sm:$0xff]
  %v8275 = vld [vmem:[%s5 + $0x10] sm:$0xff]
  %v8276 = vld [vmem:[%s5 + $0x18] sm:$0xff]
  %v8277 = vld [vmem:[#allocation2] sm:$0xff]
  %v8278 = vld [vmem:[#allocation2 + $0x8] sm:$0xff]
  %v8279 = vld [vmem:[#allocation2 + $0x10] sm:$0xff]
  %v8280 = vld [vmem:[#allocation2 + $0x18] sm:$0xff]
  %v8281 = vld [vmem:[#allocation2 + $0x20] sm:$0xff]
  %v8282 = vld [vmem:[#allocation2 + $0x28] sm:$0xff]
  %v8283 = vld [vmem:[#allocation2 + $0x30] sm:$0xff]
  %v8284 = vld [vmem:[#allocation2 + $0x38] sm:$0xff]
  %v8285 = vld [vmem:[#allocation2 + $0x40] sm:$0xff]
  %v8286 = vld [vmem:[#allocation2 + $0x48] sm:$0xff]
  %v8287 = vld [vmem:[#allocation2 + $0x50] sm:$0xff]
  %v8288 = vld [vmem:[#allocation2 + $0x58] sm:$0xff]
  %v8289 = vld [vmem:[#allocation2 + $0x60] sm:$0xff]
  %v8290 = vld [vmem:[#allocation2 + $0x68] sm:$0xff]
  %v8291 = vld [vmem:[#allocation2 + $0x70] sm:$0xff]
  %v8292 = vld [vmem:[#allocation2 + $0x78] sm:$0xff]
  %v8293 = vld [vmem:[%s6] sm:$0xff]
  %v8294 = vld [vmem:[%s6 + $0x8] sm:$0xff]
  %v8295 = vld [vmem:[%s6 + $0x10] sm:$0xff]
  %v8296 = vld [vmem:[%s6 + $0x18] sm:$0xff]
  %8298 = vset.pattern.permute.xlu0 0
  %8299 = vperm.xlu0 %8298, %v8293
  %v8300 = vpop.permute.xlu0 %8299
  %8303 = vset.pattern.permute.xlu0 0
  %8304 = vperm.xlu0 %8303, %v8294
  %v8305 = vpop.permute.xlu0 %8304
  %8308 = vset.pattern.permute.xlu0 0
  %8309 = vperm.xlu0 %8308, %v8295
  %v8310 = vpop.permute.xlu0 %8309
  %8313 = vset.pattern.permute.xlu0 0
  %8314 = vperm.xlu0 %8313, %v8296
  %v8315 = vpop.permute.xlu0 %8314
  %v8321 = vunpack.c.l.b16 %v8273
  %v8322 = vunpack.c.h.b16 %v8273
  %v8323 = vunpack.c.l.b16 %v8274
  %v8324 = vunpack.c.h.b16 %v8274
  %v8325 = vunpack.c.l.b16 %v8275
  %v8326 = vunpack.c.h.b16 %v8275
  %v8327 = vunpack.c.l.b16 %v8276
  %v8328 = vunpack.c.h.b16 %v8276
  %v8329 = vpack.c.b16 %v8323, %v8321
  %v8330 = vpack.c.b16 %v8324, %v8322
  %v8331 = vpack.c.b16 %v8327, %v8325
  %v8332 = vpack.c.b16 %v8328, %v8326
  %8337 = vmatprep.subr.bf16.mxu0 0
  %8338 = vmatpush1.bf16.msra.mxu0 %v8277
  %8339 = vmatprep.subr.bf16.mxu0 0
  %8340 = vmatpush1.bf16.msra.mxu0 %v8278
  %8341 = vmatprep.subr.bf16.mxu0 0
  %8342 = vmatpush1.bf16.msra.mxu0 %v8279
  %8343 = vmatprep.subr.bf16.mxu0 0
  %8344 = vmatpush1.bf16.msra.mxu0 %v8280
  %8345 = vmatprep.subr.bf16.mxu0 0
  %8346 = vmatpush1.bf16.msra.mxu0 %v8281
  %8347 = vmatprep.subr.bf16.mxu0 0
  %8348 = vmatpush1.bf16.msra.mxu0 %v8282
  %8349 = vmatprep.subr.bf16.mxu0 0
  %8350 = vmatpush1.bf16.msra.mxu0 %v8283
  %8351 = vmatprep.subr.bf16.mxu0 0
  %8352 = vmatpush1.bf16.msra.mxu0 %v8284
  %8353 = vmatprep.subr.bf16.mxu0 0
  %8354 = vmatpush1.bf16.msra.mxu0 %v8285
  %8355 = vmatprep.subr.bf16.mxu0 0
  %8356 = vmatpush1.bf16.msra.mxu0 %v8286
  %8357 = vmatprep.subr.bf16.mxu0 0
  %8358 = vmatpush1.bf16.msra.mxu0 %v8287
  %8359 = vmatprep.subr.bf16.mxu0 0
  %8360 = vmatpush1.bf16.msra.mxu0 %v8288
  %8361 = vmatprep.subr.bf16.mxu0 0
  %8362 = vmatpush1.bf16.msra.mxu0 %v8289
  %8363 = vmatprep.subr.bf16.mxu0 0
  %8364 = vmatpush1.bf16.msra.mxu0 %v8290
  %8365 = vmatprep.subr.bf16.mxu0 0
  %8366 = vmatpush1.bf16.msra.mxu0 %v8291
  %8367 = vmatprep.subr.bf16.mxu0 0
  %8368 = vmatpush1.bf16.msra.mxu0 %v8292
  %8369 = vmatprep.mubr.bf16.mxu0 %v8330
  %8370 = vmatmul.mubr.bf16.gmra.mrb[0].mxu0 %v8329
  %v8371 = vpop.f32.mrb[0].mxu0
  %v8372 = vadd.f32 %v8300, %v8371
  %v8373 = vpop.f32.mrb[0].mxu0
  %v8374 = vpop.f32.mrb[0].mxu0
  %v8375 = vadd.f32 %v8305, %v8374
  %v8376 = vpop.f32.mrb[0].mxu0
  %8377 = vmatprep.mubr.bf16.mxu0 %v8332
  %8378 = vmatmul.mubr.bf16.gmra.mrb[0].mxu0 %v8331
  %v8379 = vpop.f32.mrb[0].mxu0
  %v8380 = vadd.f32 %v8310, %v8379
  %v8381 = vpop.f32.mrb[0].mxu0
  %v8382 = vpop.f32.mrb[0].mxu0
  %v8383 = vadd.f32 %v8315, %v8382
  %v8384 = vpop.f32.mrb[0].mxu0
  %8385 = vdwg.mxu0
  %v8386 = vmax.f32 %v8372, 0.0
  %v8387 = vmax.f32 %v8375, 0.0
  %v8388 = vmax.f32 %v8380, 0.0
  %v8389 = vmax.f32 %v8383, 0.0
  %v8390 = vld [vmem:[%s7] sm:$0xff]
  %v8391 = vld [vmem:[%s7 + $0x8] sm:$0x3]
  %v8392 = vld [vmem:[%s8] sm:$0xff]
  %v8393 = vld [vmem:[%s8 + $0x8] sm:$0x3]
  %8395 = vset.pattern.permute.xlu0 0
  %8396 = vperm.xlu0 %8395, %v8392
  %v8397 = vpop.permute.xlu0 %8396
  %8400 = vset.pattern.permute.xlu0 0
  %8401 = vperm.xlu0 %8400, %v8393
  %v8402 = vpop.permute.xlu0 %8401
  %v8405 = vsel %vm1690, %v8390, 0
  %v8408 = vsel %vm1690, %v8391, 0
  %8410 = vmatprep.subr.mxu0 0.0
  %8411 = vmatpush1.msra.mxu0 %v8386
  %8412 = vmatprep.subr.mxu0 0.0
  %8413 = vmatpush1.msra.mxu0 %v8387
  %8414 = vmatprep.subr.mxu0 0.0
  %8415 = vmatpush1.msra.mxu0 %v8388
  %8416 = vmatprep.subr.mxu0 0.0
  %8417 = vmatpush1.msra.mxu0 %v8389
  %8418 = vmatprep.subr.mxu0 0.0
  %8419 = vmatpush1.msra.mxu0 0.0
  %8420 = vmatprep.subr.mxu0 0.0
  %8421 = vmatpush1.msra.mxu0 0.0
  %8422 = vmatprep.subr.mxu0 0.0
  %8423 = vmatpush1.msra.mxu0 0.0
  %8424 = vmatprep.subr.mxu0 0.0
  %8425 = vmatpush1.msra.mxu0 0.0
  %8426 = vmatprep.subr.mxu0 0.0
  %8427 = vmatpush1.msra.mxu0 0.0
  %8428 = vmatprep.subr.mxu0 0.0
  %8429 = vmatpush1.msra.mxu0 0.0
  %8430 = vmatprep.subr.mxu0 0.0
  %8431 = vmatpush1.msra.mxu0 0.0
  %8432 = vmatprep.subr.mxu0 0.0
  %8433 = vmatpush1.msra.mxu0 0.0
  %8434 = vmatprep.subr.mxu0 0.0
  %8435 = vmatpush1.msra.mxu0 0.0
  %8436 = vmatprep.subr.mxu0 0.0
  %8437 = vmatpush1.msra.mxu0 0.0
  %8438 = vmatprep.subr.mxu0 0.0
  %8439 = vmatpush1.msra.mxu0 0.0
  %8440 = vmatprep.subr.mxu0 0.0
  %8441 = vmatpush1.msra.mxu0 0.0
  %8442 = vmatprep.subr.mxu0 0.0
  %8443 = vmatpush1.msra.mxu0 0.0
  %8444 = vmatprep.subr.mxu0 0.0
  %8445 = vmatpush1.msra.mxu0 0.0
  %8446 = vmatprep.subr.mxu0 0.0
  %8447 = vmatpush1.msra.mxu0 0.0
  %8448 = vmatprep.subr.mxu0 0.0
  %8449 = vmatpush1.msra.mxu0 0.0
  %8450 = vmatprep.subr.mxu0 0.0
  %8451 = vmatpush1.msra.mxu0 0.0
  %8452 = vmatprep.subr.mxu0 0.0
  %8453 = vmatpush1.msra.mxu0 0.0
  %8454 = vmatprep.subr.mxu0 0.0
  %8455 = vmatpush1.msra.mxu0 0.0
  %8456 = vmatprep.subr.mxu0 0.0
  %8457 = vmatpush1.msra.mxu0 0.0
  %8458 = vmatprep.subr.mxu0 0.0
  %8459 = vmatpush1.msra.mxu0 0.0
  %8460 = vmatprep.subr.mxu0 0.0
  %8461 = vmatpush1.msra.mxu0 0.0
  %8462 = vmatprep.subr.mxu0 0.0
  %8463 = vmatpush1.msra.mxu0 0.0
  %8464 = vmatprep.subr.mxu0 0.0
  %8465 = vmatpush1.msra.mxu0 0.0
  %8466 = vmatprep.subr.mxu0 0.0
  %8467 = vmatpush1.msra.mxu0 0.0
  %8468 = vmatprep.subr.mxu0 0.0
  %8469 = vmatpush1.msra.mxu0 0.0
  %8470 = vmatprep.subr.mxu0 0.0
  %8471 = vmatpush1.msra.mxu0 0.0
  %8472 = vmatprep.subr.mxu0 0.0
  %8473 = vmatpush1.msra.mxu0 0.0
  %8474 = vmatprep.mubr.f32.mxu0 0.0
  %8475 = vmatmul.mubr.f32.gmra.mrb[0].mxu0 %v8405
  %v8476 = vpop.f32.mrb[0].mxu0
  %v8477 = vadd.f32 %v8397, %v8476
  %v8478 = vpop.f32.mrb[0].mxu0
  %8479 = vmatprep.mubr.f32.mxu0 0.0
  %8480 = vmatmul.mubr.f32.gmra.mrb[0].mxu0 %v8408
  %v8481 = vpop.f32.mrb[0].mxu0
  %v8482 = vadd.f32 %v8402, %v8481
  %v8483 = vpop.f32.mrb[0].mxu0
  %8484 = vdwg.mxu0
  %8485 = vst.msk [vmem:[%s9] sm:$0xff] %vm8204, %v8477
  %vm8486 = vcmask 9216
  %8487 = vst.msk [vmem:[%s9 + $0x8] sm:$0x3] %vm8486, %v8482
  // Predicated region
  $region38: #{lenet5_forward.1} parent=0 // pred_check
    _
  $region39: #{lenet5_forward.1} parent=0 // pred_check_branch
    %8489 = sbr.rel (0) target = $region41
  $region40: #{lenet5_forward.1} parent=0 // pred_region
    _
  $region41: #{lenet5_forward.1} parent=0 // pred_fallthru
    _
  // Predicated region
  $region42: #{lenet5_forward.1} parent=0 // pred_check
    _
  $region43: #{lenet5_forward.1} parent=0 // pred_check_branch
    %8491 = sbr.rel (0) target = $region45
  $region44: #{lenet5_forward.1} parent=0 // pred_region
    _
  $region45: #{lenet5_forward.1} parent=0 // pred_fallthru
    _

</llo_original>
